<compile_context>
chip_gen: v7x
topology: tpu7x:2x2x1
jax: 0.10.0
libtpu: 0.0.40
codegen_flags: <defaults>
</compile_context>

<pallas_src>
import functools

import jax
import jax.numpy as jnp
from jax.experimental import pallas as pl
from jax.experimental.pallas import tpu as pltpu

HIDDEN = 1024
LANES = 128


def _round_up(x, m):
    return ((x + m - 1) // m) * m


def dqn_kernel(x_ref, w1_ref, b1_ref, w2_ref, b2_ref, w3_ref, b3_ref,
               w4_ref, b4_ref, out_ref):
    # One fused forward pass for a (tile, n_obs_p) batch tile.  All weights are
    # VMEM-resident (constant index maps); bf16 operands, f32 accumulation.
    h = jnp.dot(x_ref[...], w1_ref[...], preferred_element_type=jnp.float32)
    h = jnp.maximum(h + b1_ref[...], 0.0).astype(jnp.bfloat16)
    h = jnp.dot(h, w2_ref[...], preferred_element_type=jnp.float32)
    h = jnp.maximum(h + b2_ref[...], 0.0).astype(jnp.bfloat16)
    h = jnp.dot(h, w3_ref[...], preferred_element_type=jnp.float32)
    h = jnp.maximum(h + b3_ref[...], 0.0).astype(jnp.bfloat16)
    out_ref[...] = (
        jnp.dot(h, w4_ref[...], preferred_element_type=jnp.float32) + b4_ref[...]
    )


@functools.partial(jax.jit, static_argnames=("batch_tile",))
def dqn_forward(x, params, *, batch_tile=128):
    (w1, b1), (w2, b2), (w3, b3), (w4, b4) = params
    B, n_obs = x.shape
    n_act = w4.shape[1]

    # ---- tiling / padding choices ------------------------------------------
    # Lane-pad obs and actions to 128 (lane-dense loads/stores, full MXU
    # columns on the last layer).  Batch tile fills the MXU M dimension; tiny
    # batches run as a single grid step, larger batches keep multiple
    # "parallel" steps for megacore sharding.
    n_obs_p = _round_up(n_obs, LANES)
    n_act_p = _round_up(n_act, LANES)
    tile = min(batch_tile, _round_up(B, 8))
    B_p = _round_up(B, tile)
    n_tiles = B_p // tile

    # ---- operand prep (bf16 weights/activations, f32 biases) ---------------
    xp = jnp.pad(x, ((0, B_p - B), (0, n_obs_p - n_obs))).astype(jnp.bfloat16)
    w1p = jnp.pad(w1, ((0, n_obs_p - n_obs), (0, 0))).astype(jnp.bfloat16)
    w2p = w2.astype(jnp.bfloat16)
    w3p = w3.astype(jnp.bfloat16)
    w4p = jnp.pad(w4, ((0, 0), (0, n_act_p - n_act))).astype(jnp.bfloat16)
    b4p = jnp.pad(b4, ((0, 0), (0, n_act_p - n_act)))

    full = lambda i: (0, 0)  # weights/biases: single resident block

    # ---- VMEM budget & cost estimate ---------------------------------------
    weight_bytes = 2 * (w1p.size + w2p.size + w3p.size + w4p.size)   # bf16
    bias_bytes = 4 * (b1.size + b2.size + b3.size + b4p.size)        # f32
    act_bytes = tile * n_obs_p * 2 + tile * n_act_p * 4
    # Budget double buffers for everything plus headroom (weights are actually
    # fetched only once since their block index never changes).
    vmem_limit = int(2 * (weight_bytes + bias_bytes + act_bytes) * 1.25) + (4 << 20)

    flops = 2 * B_p * (n_obs_p * HIDDEN + 2 * HIDDEN * HIDDEN + HIDDEN * n_act_p)
    bytes_accessed = int(
        xp.size * 2 + weight_bytes + bias_bytes + B_p * n_act_p * 4)

    out = pl.pallas_call(
        dqn_kernel,
        out_shape=jax.ShapeDtypeStruct((B_p, n_act_p), jnp.float32),
        grid_spec=pltpu.PrefetchScalarGridSpec(
            num_scalar_prefetch=0,
            grid=(n_tiles,),
            in_specs=[
                pl.BlockSpec((tile, n_obs_p), lambda i: (i, 0)),   # x tile (bf16)
                pl.BlockSpec((n_obs_p, HIDDEN), full),             # W1 (bf16)
                pl.BlockSpec((1, HIDDEN), full),                   # b1 (f32)
                pl.BlockSpec((HIDDEN, HIDDEN), full),              # W2 (bf16)
                pl.BlockSpec((1, HIDDEN), full),                   # b2 (f32)
                pl.BlockSpec((HIDDEN, HIDDEN), full),              # W3 (bf16)
                pl.BlockSpec((1, HIDDEN), full),                   # b3 (f32)
                pl.BlockSpec((HIDDEN, n_act_p), full),             # W4 (bf16)
                pl.BlockSpec((1, n_act_p), full),                  # b4 (f32)
            ],
            out_specs=pl.BlockSpec((tile, n_act_p), lambda i: (i, 0)),
        ),
        compiler_params=pltpu.CompilerParams(
            dimension_semantics=("parallel",),
            vmem_limit_bytes=vmem_limit,
        ),
        cost_estimate=pl.CostEstimate(
            flops=flops, transcendentals=0, bytes_accessed=bytes_accessed),
    )(xp, w1p, b1, w2p, b2, w3p, b3, w4p, b4p)

    return out[:B, :n_act]


def init_linear(key, fan_in, fan_out):
    # Mirrors PyTorch nn.Linear default init: U(-1/sqrt(fan_in), 1/sqrt(fan_in))
    # for both weight and bias.  Weight stored transposed as (in, out).
    kw, kb = jax.random.split(key)
    bound = 1.0 / jnp.sqrt(jnp.float32(fan_in))
    w = jax.random.uniform(kw, (fan_in, fan_out), jnp.float32, -bound, bound)
    b = jax.random.uniform(kb, (1, fan_out), jnp.float32, -bound, bound)
    return w, b


def init_dqn_params(key, n_observations, n_actions):
    k1, k2, k3, k4 = jax.random.split(key, 4)
    return (
        init_linear(k1, n_observations, HIDDEN),
        init_linear(k2, HIDDEN, HIDDEN),
        init_linear(k3, HIDDEN, HIDDEN),
        init_linear(k4, HIDDEN, n_actions),
    )


def dqn_reference(x, params):
    # Pure-JAX reference emulating the kernel's bf16-operand / f32-accum math.
    def q(a):
        return a.astype(jnp.bfloat16).astype(jnp.float32)
    (w1, b1), (w2, b2), (w3, b3), (w4, b4) = params
    h = jnp.maximum(q(x) @ q(w1) + b1, 0.0)
    h = jnp.maximum(q(h) @ q(w2) + b2, 0.0)
    h = jnp.maximum(q(h) @ q(w3) + b3, 0.0)
    return q(h) @ q(w4) + b4


if __name__ == "__main__":
    n_observations = 8
    n_actions = 4

    key = jax.random.PRNGKey(0)
    kx, kp = jax.random.split(key)
    params = init_dqn_params(kp, n_observations, n_actions)

    # Small batch: collapses to a single grid step, all operands resident.
    x_small = jax.random.normal(kx, (8, n_observations), jnp.float32)
    out_small = jax.block_until_ready(dqn_forward(x_small, params))
    ref_small = dqn_reference(x_small, params)
    assert out_small.shape == (8, n_actions)
    assert jnp.allclose(out_small, ref_small, atol=2e-2, rtol=2e-2), "mismatch (small)"

    # Ragged larger batch: exercises batch padding + a multi-step parallel grid.
    x_large = jax.random.normal(kx, (200, n_observations), jnp.float32)
    out_large = jax.block_until_ready(dqn_forward(x_large, params, batch_tile=128))
    ref_large = dqn_reference(x_large, params)
    assert out_large.shape == (200, n_actions)
    assert jnp.allclose(out_large, ref_large, atol=2e-2, rtol=2e-2), "mismatch (large)"

    print("KERNEL_OK")
</pallas_src>

<mosaic_0001>
module attributes {stable_mosaic.version = 11 : i64} {
  func.func @dqn_kernel(%arg0: i32, %arg1: memref<8x128xbf16, #tpu.memory_space<vmem>>, %arg2: memref<128x1024xbf16, #tpu.memory_space<vmem>>, %arg3: memref<1x1024xf32, #tpu.memory_space<vmem>>, %arg4: memref<1024x1024xbf16, #tpu.memory_space<vmem>>, %arg5: memref<1x1024xf32, #tpu.memory_space<vmem>>, %arg6: memref<1024x1024xbf16, #tpu.memory_space<vmem>>, %arg7: memref<1x1024xf32, #tpu.memory_space<vmem>>, %arg8: memref<1024x128xbf16, #tpu.memory_space<vmem>>, %arg9: memref<1x128xf32, #tpu.memory_space<vmem>>, %arg10: memref<8x128xf32, #tpu.memory_space<vmem>>) attributes {dimension_semantics = [#tpu.dimension_semantics<parallel>], iteration_bounds = array<i64: 1>, scalar_prefetch = 0 : i64, scratch_operands = 0 : i64, tpu.core_type = #tpu.core_type<tc>, window_params = [{transform_indices = @transform_0, window_bounds = array<i64: 8, 128>}, {pipeline_mode = #tpu.pipeline_mode<synchronous>, transform_indices = @transform_1, window_bounds = array<i64: 128, 1024>}, {pipeline_mode = #tpu.pipeline_mode<synchronous>, transform_indices = @transform_2, window_bounds = array<i64: 1, 1024>}, {pipeline_mode = #tpu.pipeline_mode<synchronous>, transform_indices = @transform_3, window_bounds = array<i64: 1024, 1024>}, {pipeline_mode = #tpu.pipeline_mode<synchronous>, transform_indices = @transform_4, window_bounds = array<i64: 1, 1024>}, {pipeline_mode = #tpu.pipeline_mode<synchronous>, transform_indices = @transform_5, window_bounds = array<i64: 1024, 1024>}, {pipeline_mode = #tpu.pipeline_mode<synchronous>, transform_indices = @transform_6, window_bounds = array<i64: 1, 1024>}, {pipeline_mode = #tpu.pipeline_mode<synchronous>, transform_indices = @transform_7, window_bounds = array<i64: 1024, 128>}, {pipeline_mode = #tpu.pipeline_mode<synchronous>, transform_indices = @transform_8, window_bounds = array<i64: 1, 128>}, {transform_indices = @transform_9, window_bounds = array<i64: 8, 128>}]} {
    %c0 = arith.constant 0 : index
    %c0_0 = arith.constant 0 : index
    %0 = vector.load %arg1[%c0, %c0_0] : memref<8x128xbf16, #tpu.memory_space<vmem>>, vector<8x128xbf16>
    %c0_1 = arith.constant 0 : index
    %c0_2 = arith.constant 0 : index
    %1 = vector.load %arg2[%c0_1, %c0_2] : memref<128x1024xbf16, #tpu.memory_space<vmem>>, vector<128x1024xbf16>
    %cst = arith.constant dense<0.000000e+00> : vector<8x1024xf32>
    %2 = tpu.matmul %0, %1, %cst {dimension_numbers = #tpu.dot_dimension_numbers<[1], [0], [0], [1], [0, 0, 1, 1], [], []>} : vector<8x128xbf16>, vector<128x1024xbf16>, vector<8x1024xf32> -> vector<8x1024xf32>
    %c0_3 = arith.constant 0 : index
    %c0_4 = arith.constant 0 : index
    %3 = vector.load %arg3[%c0_3, %c0_4] : memref<1x1024xf32, #tpu.memory_space<vmem>>, vector<1x1024xf32>
    %4 = vector.broadcast %3 : vector<1x1024xf32> to vector<8x1024xf32>
    %5 = arith.addf %2, %4 : vector<8x1024xf32>
    %cst_5 = arith.constant 0.000000e+00 : f32
    %6 = vector.broadcast %cst_5 : f32 to vector<8x1024xf32>
    %7 = arith.maximumf %5, %6 : vector<8x1024xf32>
    %8 = arith.truncf %7 : vector<8x1024xf32> to vector<8x1024xbf16>
    %c0_6 = arith.constant 0 : index
    %c0_7 = arith.constant 0 : index
    %9 = vector.load %arg4[%c0_6, %c0_7] : memref<1024x1024xbf16, #tpu.memory_space<vmem>>, vector<1024x1024xbf16>
    %cst_8 = arith.constant dense<0.000000e+00> : vector<8x1024xf32>
    %10 = tpu.matmul %8, %9, %cst_8 {dimension_numbers = #tpu.dot_dimension_numbers<[1], [0], [0], [1], [0, 0, 1, 1], [], []>} : vector<8x1024xbf16>, vector<1024x1024xbf16>, vector<8x1024xf32> -> vector<8x1024xf32>
    %c0_9 = arith.constant 0 : index
    %c0_10 = arith.constant 0 : index
    %11 = vector.load %arg5[%c0_9, %c0_10] : memref<1x1024xf32, #tpu.memory_space<vmem>>, vector<1x1024xf32>
    %12 = vector.broadcast %11 : vector<1x1024xf32> to vector<8x1024xf32>
    %13 = arith.addf %10, %12 : vector<8x1024xf32>
    %cst_11 = arith.constant 0.000000e+00 : f32
    %14 = vector.broadcast %cst_11 : f32 to vector<8x1024xf32>
    %15 = arith.maximumf %13, %14 : vector<8x1024xf32>
    %16 = arith.truncf %15 : vector<8x1024xf32> to vector<8x1024xbf16>
    %c0_12 = arith.constant 0 : index
    %c0_13 = arith.constant 0 : index
    %17 = vector.load %arg6[%c0_12, %c0_13] : memref<1024x1024xbf16, #tpu.memory_space<vmem>>, vector<1024x1024xbf16>
    %cst_14 = arith.constant dense<0.000000e+00> : vector<8x1024xf32>
    %18 = tpu.matmul %16, %17, %cst_14 {dimension_numbers = #tpu.dot_dimension_numbers<[1], [0], [0], [1], [0, 0, 1, 1], [], []>} : vector<8x1024xbf16>, vector<1024x1024xbf16>, vector<8x1024xf32> -> vector<8x1024xf32>
    %c0_15 = arith.constant 0 : index
    %c0_16 = arith.constant 0 : index
    %19 = vector.load %arg7[%c0_15, %c0_16] : memref<1x1024xf32, #tpu.memory_space<vmem>>, vector<1x1024xf32>
    %20 = vector.broadcast %19 : vector<1x1024xf32> to vector<8x1024xf32>
    %21 = arith.addf %18, %20 : vector<8x1024xf32>
    %cst_17 = arith.constant 0.000000e+00 : f32
    %22 = vector.broadcast %cst_17 : f32 to vector<8x1024xf32>
    %23 = arith.maximumf %21, %22 : vector<8x1024xf32>
    %24 = arith.truncf %23 : vector<8x1024xf32> to vector<8x1024xbf16>
    %c0_18 = arith.constant 0 : index
    %c0_19 = arith.constant 0 : index
    %25 = vector.load %arg8[%c0_18, %c0_19] : memref<1024x128xbf16, #tpu.memory_space<vmem>>, vector<1024x128xbf16>
    %cst_20 = arith.constant dense<0.000000e+00> : vector<8x128xf32>
    %26 = tpu.matmul %24, %25, %cst_20 {dimension_numbers = #tpu.dot_dimension_numbers<[1], [0], [0], [1], [0, 0, 1, 1], [], []>} : vector<8x1024xbf16>, vector<1024x128xbf16>, vector<8x128xf32> -> vector<8x128xf32>
    %c0_21 = arith.constant 0 : index
    %c0_22 = arith.constant 0 : index
    %27 = vector.load %arg9[%c0_21, %c0_22] : memref<1x128xf32, #tpu.memory_space<vmem>>, vector<1x128xf32>
    %28 = vector.broadcast %27 : vector<1x128xf32> to vector<8x128xf32>
    %29 = arith.addf %26, %28 : vector<8x128xf32>
    %c0_23 = arith.constant 0 : index
    %c0_24 = arith.constant 0 : index
    %30 = vector.load %arg10[%c0_23, %c0_24] : memref<8x128xf32, #tpu.memory_space<vmem>>, vector<8x128xf32>
    tpu.vector_store %arg10[%c0_23, %c0_24], %29 {strides = array<i32>} : memref<8x128xf32, #tpu.memory_space<vmem>>, vector<8x128xf32>,
    return
  }
  func.func @transform_0(%arg0: i32) -> (i32, i32) {
    %c0_i32 = arith.constant 0 : i32
    %c0_i32_0 = arith.constant 0 : i32
    return %arg0, %c0_i32 : i32, i32
  }
  func.func @transform_1(%arg0: i32) -> (i32, i32) {
    %c0_i32 = arith.constant 0 : i32
    %c0_i32_0 = arith.constant 0 : i32
    %c0_i32_1 = arith.constant 0 : i32
    return %c0_i32, %c0_i32_0 : i32, i32
  }
  func.func @transform_2(%arg0: i32) -> (i32, i32) {
    %c0_i32 = arith.constant 0 : i32
    %c0_i32_0 = arith.constant 0 : i32
    %c0_i32_1 = arith.constant 0 : i32
    return %c0_i32, %c0_i32_0 : i32, i32
  }
  func.func @transform_3(%arg0: i32) -> (i32, i32) {
    %c0_i32 = arith.constant 0 : i32
    %c0_i32_0 = arith.constant 0 : i32
    %c0_i32_1 = arith.constant 0 : i32
    return %c0_i32, %c0_i32_0 : i32, i32
  }
  func.func @transform_4(%arg0: i32) -> (i32, i32) {
    %c0_i32 = arith.constant 0 : i32
    %c0_i32_0 = arith.constant 0 : i32
    %c0_i32_1 = arith.constant 0 : i32
    return %c0_i32, %c0_i32_0 : i32, i32
  }
  func.func @transform_5(%arg0: i32) -> (i32, i32) {
    %c0_i32 = arith.constant 0 : i32
    %c0_i32_0 = arith.constant 0 : i32
    %c0_i32_1 = arith.constant 0 : i32
    return %c0_i32, %c0_i32_0 : i32, i32
  }
  func.func @transform_6(%arg0: i32) -> (i32, i32) {
    %c0_i32 = arith.constant 0 : i32
    %c0_i32_0 = arith.constant 0 : i32
    %c0_i32_1 = arith.constant 0 : i32
    return %c0_i32, %c0_i32_0 : i32, i32
  }
  func.func @transform_7(%arg0: i32) -> (i32, i32) {
    %c0_i32 = arith.constant 0 : i32
    %c0_i32_0 = arith.constant 0 : i32
    %c0_i32_1 = arith.constant 0 : i32
    return %c0_i32, %c0_i32_0 : i32, i32
  }
  func.func @transform_8(%arg0: i32) -> (i32, i32) {
    %c0_i32 = arith.constant 0 : i32
    %c0_i32_0 = arith.constant 0 : i32
    %c0_i32_1 = arith.constant 0 : i32
    return %c0_i32, %c0_i32_0 : i32, i32
  }
  func.func @transform_9(%arg0: i32) -> (i32, i32) {
    %c0_i32 = arith.constant 0 : i32
    %c0_i32_0 = arith.constant 0 : i32
    return %arg0, %c0_i32 : i32, i32
  }
}

</mosaic_0001>

<llo_original>
// kernel: dqn_forward.1
$region0: #{dqn_forward.1}
  #allocation0 [shape = 'u32[]', space=smem, size = 0x4, offset = 0x4, fixed_abs, tag = 'smem constant byte address 0x4 - core index']
  #allocation1 [shape = 'u32[144,128]{1,0:T(1,128)}', space=vmem, size = 0x12000, scoped, tag = 'internal scratch']
  %s0 = inlined_call_operand.vmem [shape: bf16[8,128], index: 0, kind: input, shape index: {}]
  %s1 = inlined_call_operand.vmem [shape: bf16[128,1024], index: 1, kind: input, shape index: {}]
  %s2 = inlined_call_operand.vmem [shape: f32[1,1024], index: 2, kind: input, shape index: {}]
  %s3 = inlined_call_operand.vmem [shape: bf16[1024,1024], index: 3, kind: input, shape index: {}]
  %s4 = inlined_call_operand.vmem [shape: f32[1,1024], index: 4, kind: input, shape index: {}]
  %s5 = inlined_call_operand.vmem [shape: bf16[1024,1024], index: 5, kind: input, shape index: {}]
  %s6 = inlined_call_operand.vmem [shape: f32[1,1024], index: 6, kind: input, shape index: {}]
  %s7 = inlined_call_operand.vmem [shape: bf16[1024,128], index: 7, kind: input, shape index: {}]
  %s8 = inlined_call_operand.vmem [shape: f32[1,128], index: 8, kind: input, shape index: {}]
  %s9 = inlined_call_operand.vmem [shape: f32[8,128], index: 9, kind: output, shape index: {}]
  %s10 = sld [smem:[#allocation0]]
  $region46: #{dqn_forward.1} parent=0
    _
  %s12 = ssub.s32 1, %s10
  %s13 = scalar_select 0, %s12, %s10
  // Predicated region
  $region2: #{dqn_forward.1} parent=0 // pred_check
    _
  $region3: #{dqn_forward.1} parent=0 // pred_check_branch
    %15 = sbr.rel (0) target = $region5
  $region4: #{dqn_forward.1} parent=0 // pred_region
    _
  $region5: #{dqn_forward.1} parent=0 // pred_fallthru
    _
  // Predicated region
  $region6: #{dqn_forward.1} parent=0 // pred_check
    _
  $region7: #{dqn_forward.1} parent=0 // pred_check_branch
    %17 = sbr.rel (0) target = $region9
  $region8: #{dqn_forward.1} parent=0 // pred_region
    _
  $region9: #{dqn_forward.1} parent=0 // pred_fallthru
    _
  // Predicated region
  $region10: #{dqn_forward.1} parent=0 // pred_check
    _
  $region11: #{dqn_forward.1} parent=0 // pred_check_branch
    %19 = sbr.rel (0) target = $region13
  $region12: #{dqn_forward.1} parent=0 // pred_region
    _
  $region13: #{dqn_forward.1} parent=0 // pred_fallthru
    _
  // Predicated region
  $region14: #{dqn_forward.1} parent=0 // pred_check
    _
  $region15: #{dqn_forward.1} parent=0 // pred_check_branch
    %21 = sbr.rel (0) target = $region17
  $region16: #{dqn_forward.1} parent=0 // pred_region
    _
  $region17: #{dqn_forward.1} parent=0 // pred_fallthru
    _
  // Predicated region
  $region18: #{dqn_forward.1} parent=0 // pred_check
    _
  $region19: #{dqn_forward.1} parent=0 // pred_check_branch
    %23 = sbr.rel (0) target = $region21
  $region20: #{dqn_forward.1} parent=0 // pred_region
    _
  $region21: #{dqn_forward.1} parent=0 // pred_fallthru
    _
  // Predicated region
  $region22: #{dqn_forward.1} parent=0 // pred_check
    _
  $region23: #{dqn_forward.1} parent=0 // pred_check_branch
    %25 = sbr.rel (0) target = $region25
  $region24: #{dqn_forward.1} parent=0 // pred_region
    _
  $region25: #{dqn_forward.1} parent=0 // pred_fallthru
    _
  // Predicated region
  $region26: #{dqn_forward.1} parent=0 // pred_check
    _
  $region27: #{dqn_forward.1} parent=0 // pred_check_branch
    %27 = sbr.rel (0) target = $region29
  $region28: #{dqn_forward.1} parent=0 // pred_region
    _
  $region29: #{dqn_forward.1} parent=0 // pred_fallthru
    _
  // Predicated region
  $region30: #{dqn_forward.1} parent=0 // pred_check
    _
  $region31: #{dqn_forward.1} parent=0 // pred_check_branch
    %29 = sbr.rel (0) target = $region33
  $region32: #{dqn_forward.1} parent=0 // pred_region
    _
  $region33: #{dqn_forward.1} parent=0 // pred_fallthru
    _
  // Predicated region
  $region34: #{dqn_forward.1} parent=0 // pred_check
    _
  $region35: #{dqn_forward.1} parent=0 // pred_check_branch
    %31 = sbr.rel (0) target = $region37
  $region36: #{dqn_forward.1} parent=0 // pred_region
    _
  $region37: #{dqn_forward.1} parent=0 // pred_fallthru
    _
  %v33 = vld [vmem:[%s0] sm:$0xf]
  %v34 = vld [vmem:[%s1] sm:$0xff]
  %v35 = vld [vmem:[%s1 + $0x8] sm:$0xff]
  %v36 = vld [vmem:[%s1 + $0x10] sm:$0xff]
  %v37 = vld [vmem:[%s1 + $0x18] sm:$0xff]
  %v38 = vld [vmem:[%s1 + $0x20] sm:$0xff]
  %v39 = vld [vmem:[%s1 + $0x28] sm:$0xff]
  %v40 = vld [vmem:[%s1 + $0x30] sm:$0xff]
  %v41 = vld [vmem:[%s1 + $0x38] sm:$0xff]
  %v42 = vld [vmem:[%s1 + $0x40] sm:$0xff]
  %v43 = vld [vmem:[%s1 + $0x48] sm:$0xff]
  %v44 = vld [vmem:[%s1 + $0x50] sm:$0xff]
  %v45 = vld [vmem:[%s1 + $0x58] sm:$0xff]
  %v46 = vld [vmem:[%s1 + $0x60] sm:$0xff]
  %v47 = vld [vmem:[%s1 + $0x68] sm:$0xff]
  %v48 = vld [vmem:[%s1 + $0x70] sm:$0xff]
  %v49 = vld [vmem:[%s1 + $0x78] sm:$0xff]
  %v50 = vld [vmem:[%s1 + $0x80] sm:$0xff]
  %v51 = vld [vmem:[%s1 + $0x88] sm:$0xff]
  %v52 = vld [vmem:[%s1 + $0x90] sm:$0xff]
  %v53 = vld [vmem:[%s1 + $0x98] sm:$0xff]
  %v54 = vld [vmem:[%s1 + $0xa0] sm:$0xff]
  %v55 = vld [vmem:[%s1 + $0xa8] sm:$0xff]
  %v56 = vld [vmem:[%s1 + $0xb0] sm:$0xff]
  %v57 = vld [vmem:[%s1 + $0xb8] sm:$0xff]
  %v58 = vld [vmem:[%s1 + $0xc0] sm:$0xff]
  %v59 = vld [vmem:[%s1 + $0xc8] sm:$0xff]
  %v60 = vld [vmem:[%s1 + $0xd0] sm:$0xff]
  %v61 = vld [vmem:[%s1 + $0xd8] sm:$0xff]
  %v62 = vld [vmem:[%s1 + $0xe0] sm:$0xff]
  %v63 = vld [vmem:[%s1 + $0xe8] sm:$0xff]
  %v64 = vld [vmem:[%s1 + $0xf0] sm:$0xff]
  %v65 = vld [vmem:[%s1 + $0xf8] sm:$0xff]
  %v66 = vld [vmem:[%s1 + $0x100] sm:$0xff]
  %v67 = vld [vmem:[%s1 + $0x108] sm:$0xff]
  %v68 = vld [vmem:[%s1 + $0x110] sm:$0xff]
  %v69 = vld [vmem:[%s1 + $0x118] sm:$0xff]
  %v70 = vld [vmem:[%s1 + $0x120] sm:$0xff]
  %v71 = vld [vmem:[%s1 + $0x128] sm:$0xff]
  %v72 = vld [vmem:[%s1 + $0x130] sm:$0xff]
  %v73 = vld [vmem:[%s1 + $0x138] sm:$0xff]
  %v74 = vld [vmem:[%s1 + $0x140] sm:$0xff]
  %v75 = vld [vmem:[%s1 + $0x148] sm:$0xff]
  %v76 = vld [vmem:[%s1 + $0x150] sm:$0xff]
  %v77 = vld [vmem:[%s1 + $0x158] sm:$0xff]
  %v78 = vld [vmem:[%s1 + $0x160] sm:$0xff]
  %v79 = vld [vmem:[%s1 + $0x168] sm:$0xff]
  %v80 = vld [vmem:[%s1 + $0x170] sm:$0xff]
  %v81 = vld [vmem:[%s1 + $0x178] sm:$0xff]
  %v82 = vld [vmem:[%s1 + $0x180] sm:$0xff]
  %v83 = vld [vmem:[%s1 + $0x188] sm:$0xff]
  %v84 = vld [vmem:[%s1 + $0x190] sm:$0xff]
  %v85 = vld [vmem:[%s1 + $0x198] sm:$0xff]
  %v86 = vld [vmem:[%s1 + $0x1a0] sm:$0xff]
  %v87 = vld [vmem:[%s1 + $0x1a8] sm:$0xff]
  %v88 = vld [vmem:[%s1 + $0x1b0] sm:$0xff]
  %v89 = vld [vmem:[%s1 + $0x1b8] sm:$0xff]
  %v90 = vld [vmem:[%s1 + $0x1c0] sm:$0xff]
  %v91 = vld [vmem:[%s1 + $0x1c8] sm:$0xff]
  %v92 = vld [vmem:[%s1 + $0x1d0] sm:$0xff]
  %v93 = vld [vmem:[%s1 + $0x1d8] sm:$0xff]
  %v94 = vld [vmem:[%s1 + $0x1e0] sm:$0xff]
  %v95 = vld [vmem:[%s1 + $0x1e8] sm:$0xff]
  %v96 = vld [vmem:[%s1 + $0x1f0] sm:$0xff]
  %v97 = vld [vmem:[%s1 + $0x1f8] sm:$0xff]
  %v98 = vld [vmem:[%s2] sm:$0xff]
  %v100 = vlaneseq
  %v101 = vshrl.u32 %v100, 7
  %v102 = vsub.s32 0, %v101
  %v103 = vrot.slane %v98, %v102
  %v104 = vlaneseq
  %v105 = vshrl.u32 %v104, 7
  %v106 = vsub.s32 1, %v105
  %v107 = vrot.slane %v98, %v106
  %v108 = vlaneseq
  %v109 = vshrl.u32 %v108, 7
  %v110 = vsub.s32 2, %v109
  %v111 = vrot.slane %v98, %v110
  %v112 = vlaneseq
  %v113 = vshrl.u32 %v112, 7
  %v114 = vsub.s32 3, %v113
  %v115 = vrot.slane %v98, %v114
  %v116 = vlaneseq
  %v117 = vshrl.u32 %v116, 7
  %v118 = vsub.s32 4, %v117
  %v119 = vrot.slane %v98, %v118
  %v120 = vlaneseq
  %v121 = vshrl.u32 %v120, 7
  %v122 = vsub.s32 5, %v121
  %v123 = vrot.slane %v98, %v122
  %v124 = vlaneseq
  %v125 = vshrl.u32 %v124, 7
  %v126 = vsub.s32 6, %v125
  %v127 = vrot.slane %v98, %v126
  %v128 = vlaneseq
  %v129 = vshrl.u32 %v128, 7
  %v130 = vsub.s32 7, %v129
  %v131 = vrot.slane %v98, %v130
  %v204 = vunpack.c.l.b16 %v34
  %v205 = vunpack.c.h.b16 %v34
  %v206 = vunpack.c.l.b16 %v35
  %v207 = vunpack.c.h.b16 %v35
  %v208 = vunpack.c.l.b16 %v36
  %v209 = vunpack.c.h.b16 %v36
  %v210 = vunpack.c.l.b16 %v37
  %v211 = vunpack.c.h.b16 %v37
  %v212 = vunpack.c.l.b16 %v38
  %v213 = vunpack.c.h.b16 %v38
  %v214 = vunpack.c.l.b16 %v39
  %v215 = vunpack.c.h.b16 %v39
  %v216 = vunpack.c.l.b16 %v40
  %v217 = vunpack.c.h.b16 %v40
  %v218 = vunpack.c.l.b16 %v41
  %v219 = vunpack.c.h.b16 %v41
  %v220 = vunpack.c.l.b16 %v42
  %v221 = vunpack.c.h.b16 %v42
  %v222 = vunpack.c.l.b16 %v43
  %v223 = vunpack.c.h.b16 %v43
  %v224 = vunpack.c.l.b16 %v44
  %v225 = vunpack.c.h.b16 %v44
  %v226 = vunpack.c.l.b16 %v45
  %v227 = vunpack.c.h.b16 %v45
  %v228 = vunpack.c.l.b16 %v46
  %v229 = vunpack.c.h.b16 %v46
  %v230 = vunpack.c.l.b16 %v47
  %v231 = vunpack.c.h.b16 %v47
  %v232 = vunpack.c.l.b16 %v48
  %v233 = vunpack.c.h.b16 %v48
  %v234 = vunpack.c.l.b16 %v49
  %v235 = vunpack.c.h.b16 %v49
  %v236 = vunpack.c.l.b16 %v50
  %v237 = vunpack.c.h.b16 %v50
  %v238 = vunpack.c.l.b16 %v51
  %v239 = vunpack.c.h.b16 %v51
  %v240 = vunpack.c.l.b16 %v52
  %v241 = vunpack.c.h.b16 %v52
  %v242 = vunpack.c.l.b16 %v53
  %v243 = vunpack.c.h.b16 %v53
  %v244 = vunpack.c.l.b16 %v54
  %v245 = vunpack.c.h.b16 %v54
  %v246 = vunpack.c.l.b16 %v55
  %v247 = vunpack.c.h.b16 %v55
  %v248 = vunpack.c.l.b16 %v56
  %v249 = vunpack.c.h.b16 %v56
  %v250 = vunpack.c.l.b16 %v57
  %v251 = vunpack.c.h.b16 %v57
  %v252 = vunpack.c.l.b16 %v58
  %v253 = vunpack.c.h.b16 %v58
  %v254 = vunpack.c.l.b16 %v59
  %v255 = vunpack.c.h.b16 %v59
  %v256 = vunpack.c.l.b16 %v60
  %v257 = vunpack.c.h.b16 %v60
  %v258 = vunpack.c.l.b16 %v61
  %v259 = vunpack.c.h.b16 %v61
  %v260 = vunpack.c.l.b16 %v62
  %v261 = vunpack.c.h.b16 %v62
  %v262 = vunpack.c.l.b16 %v63
  %v263 = vunpack.c.h.b16 %v63
  %v264 = vunpack.c.l.b16 %v64
  %v265 = vunpack.c.h.b16 %v64
  %v266 = vunpack.c.l.b16 %v65
  %v267 = vunpack.c.h.b16 %v65
  %v268 = vunpack.c.l.b16 %v66
  %v269 = vunpack.c.h.b16 %v66
  %v270 = vunpack.c.l.b16 %v67
  %v271 = vunpack.c.h.b16 %v67
  %v272 = vunpack.c.l.b16 %v68
  %v273 = vunpack.c.h.b16 %v68
  %v274 = vunpack.c.l.b16 %v69
  %v275 = vunpack.c.h.b16 %v69
  %v276 = vunpack.c.l.b16 %v70
  %v277 = vunpack.c.h.b16 %v70
  %v278 = vunpack.c.l.b16 %v71
  %v279 = vunpack.c.h.b16 %v71
  %v280 = vunpack.c.l.b16 %v72
  %v281 = vunpack.c.h.b16 %v72
  %v282 = vunpack.c.l.b16 %v73
  %v283 = vunpack.c.h.b16 %v73
  %v284 = vunpack.c.l.b16 %v74
  %v285 = vunpack.c.h.b16 %v74
  %v286 = vunpack.c.l.b16 %v75
  %v287 = vunpack.c.h.b16 %v75
  %v288 = vunpack.c.l.b16 %v76
  %v289 = vunpack.c.h.b16 %v76
  %v290 = vunpack.c.l.b16 %v77
  %v291 = vunpack.c.h.b16 %v77
  %v292 = vunpack.c.l.b16 %v78
  %v293 = vunpack.c.h.b16 %v78
  %v294 = vunpack.c.l.b16 %v79
  %v295 = vunpack.c.h.b16 %v79
  %v296 = vunpack.c.l.b16 %v80
  %v297 = vunpack.c.h.b16 %v80
  %v298 = vunpack.c.l.b16 %v81
  %v299 = vunpack.c.h.b16 %v81
  %v300 = vunpack.c.l.b16 %v82
  %v301 = vunpack.c.h.b16 %v82
  %v302 = vunpack.c.l.b16 %v83
  %v303 = vunpack.c.h.b16 %v83
  %v304 = vunpack.c.l.b16 %v84
  %v305 = vunpack.c.h.b16 %v84
  %v306 = vunpack.c.l.b16 %v85
  %v307 = vunpack.c.h.b16 %v85
  %v308 = vunpack.c.l.b16 %v86
  %v309 = vunpack.c.h.b16 %v86
  %v310 = vunpack.c.l.b16 %v87
  %v311 = vunpack.c.h.b16 %v87
  %v312 = vunpack.c.l.b16 %v88
  %v313 = vunpack.c.h.b16 %v88
  %v314 = vunpack.c.l.b16 %v89
  %v315 = vunpack.c.h.b16 %v89
  %v316 = vunpack.c.l.b16 %v90
  %v317 = vunpack.c.h.b16 %v90
  %v318 = vunpack.c.l.b16 %v91
  %v319 = vunpack.c.h.b16 %v91
  %v320 = vunpack.c.l.b16 %v92
  %v321 = vunpack.c.h.b16 %v92
  %v322 = vunpack.c.l.b16 %v93
  %v323 = vunpack.c.h.b16 %v93
  %v324 = vunpack.c.l.b16 %v94
  %v325 = vunpack.c.h.b16 %v94
  %v326 = vunpack.c.l.b16 %v95
  %v327 = vunpack.c.h.b16 %v95
  %v328 = vunpack.c.l.b16 %v96
  %v329 = vunpack.c.h.b16 %v96
  %v330 = vunpack.c.l.b16 %v97
  %v331 = vunpack.c.h.b16 %v97
  %v332 = vpack.c.b16 %v212, %v204
  %v333 = vpack.c.b16 %v213, %v205
  %v334 = vpack.c.b16 %v214, %v206
  %v335 = vpack.c.b16 %v215, %v207
  %v336 = vpack.c.b16 %v216, %v208
  %v337 = vpack.c.b16 %v217, %v209
  %v338 = vpack.c.b16 %v218, %v210
  %v339 = vpack.c.b16 %v219, %v211
  %v340 = vpack.c.b16 %v228, %v220
  %v341 = vpack.c.b16 %v229, %v221
  %v342 = vpack.c.b16 %v230, %v222
  %v343 = vpack.c.b16 %v231, %v223
  %v344 = vpack.c.b16 %v232, %v224
  %v345 = vpack.c.b16 %v233, %v225
  %v346 = vpack.c.b16 %v234, %v226
  %v347 = vpack.c.b16 %v235, %v227
  %v348 = vpack.c.b16 %v244, %v236
  %v349 = vpack.c.b16 %v245, %v237
  %v350 = vpack.c.b16 %v246, %v238
  %v351 = vpack.c.b16 %v247, %v239
  %v352 = vpack.c.b16 %v248, %v240
  %v353 = vpack.c.b16 %v249, %v241
  %v354 = vpack.c.b16 %v250, %v242
  %v355 = vpack.c.b16 %v251, %v243
  %v356 = vpack.c.b16 %v260, %v252
  %v357 = vpack.c.b16 %v261, %v253
  %v358 = vpack.c.b16 %v262, %v254
  %v359 = vpack.c.b16 %v263, %v255
  %v360 = vpack.c.b16 %v264, %v256
  %v361 = vpack.c.b16 %v265, %v257
  %v362 = vpack.c.b16 %v266, %v258
  %v363 = vpack.c.b16 %v267, %v259
  %v364 = vpack.c.b16 %v276, %v268
  %v365 = vpack.c.b16 %v277, %v269
  %v366 = vpack.c.b16 %v278, %v270
  %v367 = vpack.c.b16 %v279, %v271
  %v368 = vpack.c.b16 %v280, %v272
  %v369 = vpack.c.b16 %v281, %v273
  %v370 = vpack.c.b16 %v282, %v274
  %v371 = vpack.c.b16 %v283, %v275
  %v372 = vpack.c.b16 %v292, %v284
  %v373 = vpack.c.b16 %v293, %v285
  %v374 = vpack.c.b16 %v294, %v286
  %v375 = vpack.c.b16 %v295, %v287
  %v376 = vpack.c.b16 %v296, %v288
  %v377 = vpack.c.b16 %v297, %v289
  %v378 = vpack.c.b16 %v298, %v290
  %v379 = vpack.c.b16 %v299, %v291
  %v380 = vpack.c.b16 %v308, %v300
  %v381 = vpack.c.b16 %v309, %v301
  %v382 = vpack.c.b16 %v310, %v302
  %v383 = vpack.c.b16 %v311, %v303
  %v384 = vpack.c.b16 %v312, %v304
  %v385 = vpack.c.b16 %v313, %v305
  %v386 = vpack.c.b16 %v314, %v306
  %v387 = vpack.c.b16 %v315, %v307
  %v388 = vpack.c.b16 %v324, %v316
  %v389 = vpack.c.b16 %v325, %v317
  %v390 = vpack.c.b16 %v326, %v318
  %v391 = vpack.c.b16 %v327, %v319
  %v392 = vpack.c.b16 %v328, %v320
  %v393 = vpack.c.b16 %v329, %v321
  %v394 = vpack.c.b16 %v330, %v322
  %v395 = vpack.c.b16 %v331, %v323
  %460 = vmatprep.subr.bf16.mxu0 %v333
  %461 = vmatpush1.bf16.msra.mxu0 %v332
  %462 = vmatprep.subr.bf16.mxu0 %v341
  %463 = vmatpush1.bf16.msra.mxu0 %v340
  %464 = vmatprep.subr.bf16.mxu0 %v349
  %465 = vmatpush1.bf16.msra.mxu0 %v348
  %466 = vmatprep.subr.bf16.mxu0 %v357
  %467 = vmatpush1.bf16.msra.mxu0 %v356
  %468 = vmatprep.subr.bf16.mxu0 %v365
  %469 = vmatpush1.bf16.msra.mxu0 %v364
  %470 = vmatprep.subr.bf16.mxu0 %v373
  %471 = vmatpush1.bf16.msra.mxu0 %v372
  %472 = vmatprep.subr.bf16.mxu0 %v381
  %473 = vmatpush1.bf16.msra.mxu0 %v380
  %474 = vmatprep.subr.bf16.mxu0 %v389
  %475 = vmatpush1.bf16.msra.mxu0 %v388
  %476 = vmatprep.subr.bf16.mxu0 0
  %477 = vmatpush1.bf16.msra.mxu0 0
  %478 = vmatprep.subr.bf16.mxu0 0
  %479 = vmatpush1.bf16.msra.mxu0 0
  %480 = vmatprep.subr.bf16.mxu0 0
  %481 = vmatpush1.bf16.msra.mxu0 0
  %482 = vmatprep.subr.bf16.mxu0 0
  %483 = vmatpush1.bf16.msra.mxu0 0
  %484 = vmatprep.subr.bf16.mxu0 0
  %485 = vmatpush1.bf16.msra.mxu0 0
  %486 = vmatprep.subr.bf16.mxu0 0
  %487 = vmatpush1.bf16.msra.mxu0 0
  %488 = vmatprep.subr.bf16.mxu0 0
  %489 = vmatpush1.bf16.msra.mxu0 0
  %490 = vmatprep.subr.bf16.mxu0 0
  %491 = vmatpush1.bf16.msra.mxu0 0
  %492 = vmatprep.mubr.bf16.mxu0 0
  %493 = vmatmul.mubr.bf16.gmra.mrb[0].mxu0 %v33
  %v494 = vpop.f32.mrb[0].mxu0
  %v495 = vadd.f32 %v103, %v494
  %v496 = vpop.f32.mrb[0].mxu0
  %v497 = vadd.f32 %v107, %v496
  %v498 = vpop.f32.mrb[0].mxu0
  %v499 = vpop.f32.mrb[0].mxu0
  %500 = vdwg.mxu0
  %501 = vmatprep.subr.bf16.mxu0 %v335
  %502 = vmatpush1.bf16.msra.mxu0 %v334
  %503 = vmatprep.subr.bf16.mxu0 %v343
  %504 = vmatpush1.bf16.msra.mxu0 %v342
  %505 = vmatprep.subr.bf16.mxu0 %v351
  %506 = vmatpush1.bf16.msra.mxu0 %v350
  %507 = vmatprep.subr.bf16.mxu0 %v359
  %508 = vmatpush1.bf16.msra.mxu0 %v358
  %509 = vmatprep.subr.bf16.mxu0 %v367
  %510 = vmatpush1.bf16.msra.mxu0 %v366
  %511 = vmatprep.subr.bf16.mxu0 %v375
  %512 = vmatpush1.bf16.msra.mxu0 %v374
  %513 = vmatprep.subr.bf16.mxu0 %v383
  %514 = vmatpush1.bf16.msra.mxu0 %v382
  %515 = vmatprep.subr.bf16.mxu0 %v391
  %516 = vmatpush1.bf16.msra.mxu0 %v390
  %517 = vmatprep.subr.bf16.mxu0 0
  %518 = vmatpush1.bf16.msra.mxu0 0
  %519 = vmatprep.subr.bf16.mxu0 0
  %520 = vmatpush1.bf16.msra.mxu0 0
  %521 = vmatprep.subr.bf16.mxu0 0
  %522 = vmatpush1.bf16.msra.mxu0 0
  %523 = vmatprep.subr.bf16.mxu0 0
  %524 = vmatpush1.bf16.msra.mxu0 0
  %525 = vmatprep.subr.bf16.mxu0 0
  %526 = vmatpush1.bf16.msra.mxu0 0
  %527 = vmatprep.subr.bf16.mxu0 0
  %528 = vmatpush1.bf16.msra.mxu0 0
  %529 = vmatprep.subr.bf16.mxu0 0
  %530 = vmatpush1.bf16.msra.mxu0 0
  %531 = vmatprep.subr.bf16.mxu0 0
  %532 = vmatpush1.bf16.msra.mxu0 0
  %533 = vmatprep.mubr.bf16.mxu0 0
  %534 = vmatmul.mubr.bf16.gmra.mrb[0].mxu0 %v33
  %v535 = vpop.f32.mrb[0].mxu0
  %v536 = vadd.f32 %v111, %v535
  %v537 = vpop.f32.mrb[0].mxu0
  %v538 = vadd.f32 %v115, %v537
  %v539 = vpop.f32.mrb[0].mxu0
  %v540 = vpop.f32.mrb[0].mxu0
  %541 = vdwg.mxu0
  %542 = vmatprep.subr.bf16.mxu0 %v337
  %543 = vmatpush1.bf16.msra.mxu0 %v336
  %544 = vmatprep.subr.bf16.mxu0 %v345
  %545 = vmatpush1.bf16.msra.mxu0 %v344
  %546 = vmatprep.subr.bf16.mxu0 %v353
  %547 = vmatpush1.bf16.msra.mxu0 %v352
  %548 = vmatprep.subr.bf16.mxu0 %v361
  %549 = vmatpush1.bf16.msra.mxu0 %v360
  %550 = vmatprep.subr.bf16.mxu0 %v369
  %551 = vmatpush1.bf16.msra.mxu0 %v368
  %552 = vmatprep.subr.bf16.mxu0 %v377
  %553 = vmatpush1.bf16.msra.mxu0 %v376
  %554 = vmatprep.subr.bf16.mxu0 %v385
  %555 = vmatpush1.bf16.msra.mxu0 %v384
  %556 = vmatprep.subr.bf16.mxu0 %v393
  %557 = vmatpush1.bf16.msra.mxu0 %v392
  %558 = vmatprep.subr.bf16.mxu0 0
  %559 = vmatpush1.bf16.msra.mxu0 0
  %560 = vmatprep.subr.bf16.mxu0 0
  %561 = vmatpush1.bf16.msra.mxu0 0
  %562 = vmatprep.subr.bf16.mxu0 0
  %563 = vmatpush1.bf16.msra.mxu0 0
  %564 = vmatprep.subr.bf16.mxu0 0
  %565 = vmatpush1.bf16.msra.mxu0 0
  %566 = vmatprep.subr.bf16.mxu0 0
  %567 = vmatpush1.bf16.msra.mxu0 0
  %568 = vmatprep.subr.bf16.mxu0 0
  %569 = vmatpush1.bf16.msra.mxu0 0
  %570 = vmatprep.subr.bf16.mxu0 0
  %571 = vmatpush1.bf16.msra.mxu0 0
  %572 = vmatprep.subr.bf16.mxu0 0
  %573 = vmatpush1.bf16.msra.mxu0 0
  %574 = vmatprep.mubr.bf16.mxu0 0
  %575 = vmatmul.mubr.bf16.gmra.mrb[0].mxu0 %v33
  %v576 = vpop.f32.mrb[0].mxu0
  %v577 = vadd.f32 %v119, %v576
  %v578 = vpop.f32.mrb[0].mxu0
  %v579 = vadd.f32 %v123, %v578
  %v580 = vpop.f32.mrb[0].mxu0
  %v581 = vpop.f32.mrb[0].mxu0
  %582 = vdwg.mxu0
  %583 = vmatprep.subr.bf16.mxu0 %v339
  %584 = vmatpush1.bf16.msra.mxu0 %v338
  %585 = vmatprep.subr.bf16.mxu0 %v347
  %586 = vmatpush1.bf16.msra.mxu0 %v346
  %587 = vmatprep.subr.bf16.mxu0 %v355
  %588 = vmatpush1.bf16.msra.mxu0 %v354
  %589 = vmatprep.subr.bf16.mxu0 %v363
  %590 = vmatpush1.bf16.msra.mxu0 %v362
  %591 = vmatprep.subr.bf16.mxu0 %v371
  %592 = vmatpush1.bf16.msra.mxu0 %v370
  %593 = vmatprep.subr.bf16.mxu0 %v379
  %594 = vmatpush1.bf16.msra.mxu0 %v378
  %595 = vmatprep.subr.bf16.mxu0 %v387
  %596 = vmatpush1.bf16.msra.mxu0 %v386
  %597 = vmatprep.subr.bf16.mxu0 %v395
  %598 = vmatpush1.bf16.msra.mxu0 %v394
  %599 = vmatprep.subr.bf16.mxu0 0
  %600 = vmatpush1.bf16.msra.mxu0 0
  %601 = vmatprep.subr.bf16.mxu0 0
  %602 = vmatpush1.bf16.msra.mxu0 0
  %603 = vmatprep.subr.bf16.mxu0 0
  %604 = vmatpush1.bf16.msra.mxu0 0
  %605 = vmatprep.subr.bf16.mxu0 0
  %606 = vmatpush1.bf16.msra.mxu0 0
  %607 = vmatprep.subr.bf16.mxu0 0
  %608 = vmatpush1.bf16.msra.mxu0 0
  %609 = vmatprep.subr.bf16.mxu0 0
  %610 = vmatpush1.bf16.msra.mxu0 0
  %611 = vmatprep.subr.bf16.mxu0 0
  %612 = vmatpush1.bf16.msra.mxu0 0
  %613 = vmatprep.subr.bf16.mxu0 0
  %614 = vmatpush1.bf16.msra.mxu0 0
  %615 = vmatprep.mubr.bf16.mxu0 0
  %616 = vmatmul.mubr.bf16.gmra.mrb[0].mxu0 %v33
  %v617 = vpop.f32.mrb[0].mxu0
  %v618 = vadd.f32 %v127, %v617
  %v619 = vpop.f32.mrb[0].mxu0
  %v620 = vadd.f32 %v131, %v619
  %v621 = vpop.f32.mrb[0].mxu0
  %v622 = vpop.f32.mrb[0].mxu0
  %623 = vdwg.mxu0
  %v624 = vmax.f32 %v495, 0.0
  %v625 = vmax.f32 %v497, 0.0
  %v626 = vmax.f32 %v536, 0.0
  %v627 = vmax.f32 %v538, 0.0
  %v628 = vmax.f32 %v577, 0.0
  %v629 = vmax.f32 %v579, 0.0
  %v630 = vmax.f32 %v618, 0.0
  %v631 = vmax.f32 %v620, 0.0
  %v632 = vpack.c.bf16 %v624, %v624
  %v633 = vpack.c.bf16 %v625, %v625
  %v634 = vpack.c.bf16 %v626, %v626
  %v635 = vpack.c.bf16 %v627, %v627
  %v636 = vpack.c.bf16 %v628, %v628
  %v637 = vpack.c.bf16 %v629, %v629
  %v638 = vpack.c.bf16 %v630, %v630
  %v639 = vpack.c.bf16 %v631, %v631
  %v640 = vld [vmem:[%s3] sm:$0xff]
  %v641 = vld [vmem:[%s3 + $0x8] sm:$0xff]
  %v642 = vld [vmem:[%s3 + $0x10] sm:$0xff]
  %v643 = vld [vmem:[%s3 + $0x18] sm:$0xff]
  %v644 = vld [vmem:[%s3 + $0x20] sm:$0xff]
  %v645 = vld [vmem:[%s3 + $0x28] sm:$0xff]
  %v646 = vld [vmem:[%s3 + $0x30] sm:$0xff]
  %v647 = vld [vmem:[%s3 + $0x38] sm:$0xff]
  %v648 = vld [vmem:[%s3 + $0x40] sm:$0xff]
  %v649 = vld [vmem:[%s3 + $0x48] sm:$0xff]
  %v650 = vld [vmem:[%s3 + $0x50] sm:$0xff]
  %v651 = vld [vmem:[%s3 + $0x58] sm:$0xff]
  %v652 = vld [vmem:[%s3 + $0x60] sm:$0xff]
  %v653 = vld [vmem:[%s3 + $0x68] sm:$0xff]
  %v654 = vld [vmem:[%s3 + $0x70] sm:$0xff]
  %v655 = vld [vmem:[%s3 + $0x78] sm:$0xff]
  %v656 = vld [vmem:[%s3 + $0x80] sm:$0xff]
  %v657 = vld [vmem:[%s3 + $0x88] sm:$0xff]
  %v658 = vld [vmem:[%s3 + $0x90] sm:$0xff]
  %v659 = vld [vmem:[%s3 + $0x98] sm:$0xff]
  %v660 = vld [vmem:[%s3 + $0xa0] sm:$0xff]
  %v661 = vld [vmem:[%s3 + $0xa8] sm:$0xff]
  %v662 = vld [vmem:[%s3 + $0xb0] sm:$0xff]
  %v663 = vld [vmem:[%s3 + $0xb8] sm:$0xff]
  %v664 = vld [vmem:[%s3 + $0xc0] sm:$0xff]
  %v665 = vld [vmem:[%s3 + $0xc8] sm:$0xff]
  %v666 = vld [vmem:[%s3 + $0xd0] sm:$0xff]
  %v667 = vld [vmem:[%s3 + $0xd8] sm:$0xff]
  %v668 = vld [vmem:[%s3 + $0xe0] sm:$0xff]
  %v669 = vld [vmem:[%s3 + $0xe8] sm:$0xff]
  %v670 = vld [vmem:[%s3 + $0xf0] sm:$0xff]
  %v671 = vld [vmem:[%s3 + $0xf8] sm:$0xff]
  %v672 = vld [vmem:[%s3 + $0x100] sm:$0xff]
  %v673 = vld [vmem:[%s3 + $0x108] sm:$0xff]
  %v674 = vld [vmem:[%s3 + $0x110] sm:$0xff]
  %v675 = vld [vmem:[%s3 + $0x118] sm:$0xff]
  %v676 = vld [vmem:[%s3 + $0x120] sm:$0xff]
  %v677 = vld [vmem:[%s3 + $0x128] sm:$0xff]
  %v678 = vld [vmem:[%s3 + $0x130] sm:$0xff]
  %v679 = vld [vmem:[%s3 + $0x138] sm:$0xff]
  %v680 = vld [vmem:[%s3 + $0x140] sm:$0xff]
  %v681 = vld [vmem:[%s3 + $0x148] sm:$0xff]
  %v682 = vld [vmem:[%s3 + $0x150] sm:$0xff]
  %v683 = vld [vmem:[%s3 + $0x158] sm:$0xff]
  %v684 = vld [vmem:[%s3 + $0x160] sm:$0xff]
  %v685 = vld [vmem:[%s3 + $0x168] sm:$0xff]
  %v686 = vld [vmem:[%s3 + $0x170] sm:$0xff]
  %v687 = vld [vmem:[%s3 + $0x178] sm:$0xff]
  %v688 = vld [vmem:[%s3 + $0x180] sm:$0xff]
  %v689 = vld [vmem:[%s3 + $0x188] sm:$0xff]
  %v690 = vld [vmem:[%s3 + $0x190] sm:$0xff]
  %v691 = vld [vmem:[%s3 + $0x198] sm:$0xff]
  %v692 = vld [vmem:[%s3 + $0x1a0] sm:$0xff]
  %v693 = vld [vmem:[%s3 + $0x1a8] sm:$0xff]
  %v694 = vld [vmem:[%s3 + $0x1b0] sm:$0xff]
  %v695 = vld [vmem:[%s3 + $0x1b8] sm:$0xff]
  %v696 = vld [vmem:[%s3 + $0x1c0] sm:$0xff]
  %v697 = vld [vmem:[%s3 + $0x1c8] sm:$0xff]
  %v698 = vld [vmem:[%s3 + $0x1d0] sm:$0xff]
  %v699 = vld [vmem:[%s3 + $0x1d8] sm:$0xff]
  %v700 = vld [vmem:[%s3 + $0x1e0] sm:$0xff]
  %v701 = vld [vmem:[%s3 + $0x1e8] sm:$0xff]
  %v702 = vld [vmem:[%s3 + $0x1f0] sm:$0xff]
  %v703 = vld [vmem:[%s3 + $0x1f8] sm:$0xff]
  %v704 = vld [vmem:[%s3 + $0x200] sm:$0xff]
  %v705 = vld [vmem:[%s3 + $0x208] sm:$0xff]
  %v706 = vld [vmem:[%s3 + $0x210] sm:$0xff]
  %v707 = vld [vmem:[%s3 + $0x218] sm:$0xff]
  %v708 = vld [vmem:[%s3 + $0x220] sm:$0xff]
  %v709 = vld [vmem:[%s3 + $0x228] sm:$0xff]
  %v710 = vld [vmem:[%s3 + $0x230] sm:$0xff]
  %v711 = vld [vmem:[%s3 + $0x238] sm:$0xff]
  %v712 = vld [vmem:[%s3 + $0x240] sm:$0xff]
  %v713 = vld [vmem:[%s3 + $0x248] sm:$0xff]
  %v714 = vld [vmem:[%s3 + $0x250] sm:$0xff]
  %v715 = vld [vmem:[%s3 + $0x258] sm:$0xff]
  %v716 = vld [vmem:[%s3 + $0x260] sm:$0xff]
  %v717 = vld [vmem:[%s3 + $0x268] sm:$0xff]
  %v718 = vld [vmem:[%s3 + $0x270] sm:$0xff]
  %v719 = vld [vmem:[%s3 + $0x278] sm:$0xff]
  %v720 = vld [vmem:[%s3 + $0x280] sm:$0xff]
  %v721 = vld [vmem:[%s3 + $0x288] sm:$0xff]
  %v722 = vld [vmem:[%s3 + $0x290] sm:$0xff]
  %v723 = vld [vmem:[%s3 + $0x298] sm:$0xff]
  %v724 = vld [vmem:[%s3 + $0x2a0] sm:$0xff]
  %v725 = vld [vmem:[%s3 + $0x2a8] sm:$0xff]
  %v726 = vld [vmem:[%s3 + $0x2b0] sm:$0xff]
  %v727 = vld [vmem:[%s3 + $0x2b8] sm:$0xff]
  %v728 = vld [vmem:[%s3 + $0x2c0] sm:$0xff]
  %v729 = vld [vmem:[%s3 + $0x2c8] sm:$0xff]
  %v730 = vld [vmem:[%s3 + $0x2d0] sm:$0xff]
  %v731 = vld [vmem:[%s3 + $0x2d8] sm:$0xff]
  %v732 = vld [vmem:[%s3 + $0x2e0] sm:$0xff]
  %v733 = vld [vmem:[%s3 + $0x2e8] sm:$0xff]
  %v734 = vld [vmem:[%s3 + $0x2f0] sm:$0xff]
  %v735 = vld [vmem:[%s3 + $0x2f8] sm:$0xff]
  %v736 = vld [vmem:[%s3 + $0x300] sm:$0xff]
  %v737 = vld [vmem:[%s3 + $0x308] sm:$0xff]
  %v738 = vld [vmem:[%s3 + $0x310] sm:$0xff]
  %v739 = vld [vmem:[%s3 + $0x318] sm:$0xff]
  %v740 = vld [vmem:[%s3 + $0x320] sm:$0xff]
  %v741 = vld [vmem:[%s3 + $0x328] sm:$0xff]
  %v742 = vld [vmem:[%s3 + $0x330] sm:$0xff]
  %v743 = vld [vmem:[%s3 + $0x338] sm:$0xff]
  %v744 = vld [vmem:[%s3 + $0x340] sm:$0xff]
  %v745 = vld [vmem:[%s3 + $0x348] sm:$0xff]
  %v746 = vld [vmem:[%s3 + $0x350] sm:$0xff]
  %v747 = vld [vmem:[%s3 + $0x358] sm:$0xff]
  %v748 = vld [vmem:[%s3 + $0x360] sm:$0xff]
  %v749 = vld [vmem:[%s3 + $0x368] sm:$0xff]
  %v750 = vld [vmem:[%s3 + $0x370] sm:$0xff]
  %v751 = vld [vmem:[%s3 + $0x378] sm:$0xff]
  %v752 = vld [vmem:[%s3 + $0x380] sm:$0xff]
  %v753 = vld [vmem:[%s3 + $0x388] sm:$0xff]
  %v754 = vld [vmem:[%s3 + $0x390] sm:$0xff]
  %v755 = vld [vmem:[%s3 + $0x398] sm:$0xff]
  %v756 = vld [vmem:[%s3 + $0x3a0] sm:$0xff]
  %v757 = vld [vmem:[%s3 + $0x3a8] sm:$0xff]
  %v758 = vld [vmem:[%s3 + $0x3b0] sm:$0xff]
  %v759 = vld [vmem:[%s3 + $0x3b8] sm:$0xff]
  %v760 = vld [vmem:[%s3 + $0x3c0] sm:$0xff]
  %v761 = vld [vmem:[%s3 + $0x3c8] sm:$0xff]
  %v762 = vld [vmem:[%s3 + $0x3d0] sm:$0xff]
  %v763 = vld [vmem:[%s3 + $0x3d8] sm:$0xff]
  %v764 = vld [vmem:[%s3 + $0x3e0] sm:$0xff]
  %v765 = vld [vmem:[%s3 + $0x3e8] sm:$0xff]
  %v766 = vld [vmem:[%s3 + $0x3f0] sm:$0xff]
  %v767 = vld [vmem:[%s3 + $0x3f8] sm:$0xff]
  %v768 = vld [vmem:[%s3 + $0x400] sm:$0xff]
  %v769 = vld [vmem:[%s3 + $0x408] sm:$0xff]
  %v770 = vld [vmem:[%s3 + $0x410] sm:$0xff]
  %v771 = vld [vmem:[%s3 + $0x418] sm:$0xff]
  %v772 = vld [vmem:[%s3 + $0x420] sm:$0xff]
  %v773 = vld [vmem:[%s3 + $0x428] sm:$0xff]
  %v774 = vld [vmem:[%s3 + $0x430] sm:$0xff]
  %v775 = vld [vmem:[%s3 + $0x438] sm:$0xff]
  %v776 = vld [vmem:[%s3 + $0x440] sm:$0xff]
  %v777 = vld [vmem:[%s3 + $0x448] sm:$0xff]
  %v778 = vld [vmem:[%s3 + $0x450] sm:$0xff]
  %v779 = vld [vmem:[%s3 + $0x458] sm:$0xff]
  %v780 = vld [vmem:[%s3 + $0x460] sm:$0xff]
  %v781 = vld [vmem:[%s3 + $0x468] sm:$0xff]
  %v782 = vld [vmem:[%s3 + $0x470] sm:$0xff]
  %v783 = vld [vmem:[%s3 + $0x478] sm:$0xff]
  %v784 = vld [vmem:[%s3 + $0x480] sm:$0xff]
  %v785 = vld [vmem:[%s3 + $0x488] sm:$0xff]
  %v786 = vld [vmem:[%s3 + $0x490] sm:$0xff]
  %v787 = vld [vmem:[%s3 + $0x498] sm:$0xff]
  %v788 = vld [vmem:[%s3 + $0x4a0] sm:$0xff]
  %v789 = vld [vmem:[%s3 + $0x4a8] sm:$0xff]
  %v790 = vld [vmem:[%s3 + $0x4b0] sm:$0xff]
  %v791 = vld [vmem:[%s3 + $0x4b8] sm:$0xff]
  %v792 = vld [vmem:[%s3 + $0x4c0] sm:$0xff]
  %v793 = vld [vmem:[%s3 + $0x4c8] sm:$0xff]
  %v794 = vld [vmem:[%s3 + $0x4d0] sm:$0xff]
  %v795 = vld [vmem:[%s3 + $0x4d8] sm:$0xff]
  %v796 = vld [vmem:[%s3 + $0x4e0] sm:$0xff]
  %v797 = vld [vmem:[%s3 + $0x4e8] sm:$0xff]
  %v798 = vld [vmem:[%s3 + $0x4f0] sm:$0xff]
  %v799 = vld [vmem:[%s3 + $0x4f8] sm:$0xff]
  %v800 = vld [vmem:[%s3 + $0x500] sm:$0xff]
  %v801 = vld [vmem:[%s3 + $0x508] sm:$0xff]
  %v802 = vld [vmem:[%s3 + $0x510] sm:$0xff]
  %v803 = vld [vmem:[%s3 + $0x518] sm:$0xff]
  %v804 = vld [vmem:[%s3 + $0x520] sm:$0xff]
  %v805 = vld [vmem:[%s3 + $0x528] sm:$0xff]
  %v806 = vld [vmem:[%s3 + $0x530] sm:$0xff]
  %v807 = vld [vmem:[%s3 + $0x538] sm:$0xff]
  %v808 = vld [vmem:[%s3 + $0x540] sm:$0xff]
  %v809 = vld [vmem:[%s3 + $0x548] sm:$0xff]
  %v810 = vld [vmem:[%s3 + $0x550] sm:$0xff]
  %v811 = vld [vmem:[%s3 + $0x558] sm:$0xff]
  %v812 = vld [vmem:[%s3 + $0x560] sm:$0xff]
  %v813 = vld [vmem:[%s3 + $0x568] sm:$0xff]
  %v814 = vld [vmem:[%s3 + $0x570] sm:$0xff]
  %v815 = vld [vmem:[%s3 + $0x578] sm:$0xff]
  %v816 = vld [vmem:[%s3 + $0x580] sm:$0xff]
  %v817 = vld [vmem:[%s3 + $0x588] sm:$0xff]
  %v818 = vld [vmem:[%s3 + $0x590] sm:$0xff]
  %v819 = vld [vmem:[%s3 + $0x598] sm:$0xff]
  %v820 = vld [vmem:[%s3 + $0x5a0] sm:$0xff]
  %v821 = vld [vmem:[%s3 + $0x5a8] sm:$0xff]
  %v822 = vld [vmem:[%s3 + $0x5b0] sm:$0xff]
  %v823 = vld [vmem:[%s3 + $0x5b8] sm:$0xff]
  %v824 = vld [vmem:[%s3 + $0x5c0] sm:$0xff]
  %v825 = vld [vmem:[%s3 + $0x5c8] sm:$0xff]
  %v826 = vld [vmem:[%s3 + $0x5d0] sm:$0xff]
  %v827 = vld [vmem:[%s3 + $0x5d8] sm:$0xff]
  %v828 = vld [vmem:[%s3 + $0x5e0] sm:$0xff]
  %v829 = vld [vmem:[%s3 + $0x5e8] sm:$0xff]
  %v830 = vld [vmem:[%s3 + $0x5f0] sm:$0xff]
  %v831 = vld [vmem:[%s3 + $0x5f8] sm:$0xff]
  %v832 = vld [vmem:[%s3 + $0x600] sm:$0xff]
  %v833 = vld [vmem:[%s3 + $0x608] sm:$0xff]
  %v834 = vld [vmem:[%s3 + $0x610] sm:$0xff]
  %v835 = vld [vmem:[%s3 + $0x618] sm:$0xff]
  %v836 = vld [vmem:[%s3 + $0x620] sm:$0xff]
  %v837 = vld [vmem:[%s3 + $0x628] sm:$0xff]
  %v838 = vld [vmem:[%s3 + $0x630] sm:$0xff]
  %v839 = vld [vmem:[%s3 + $0x638] sm:$0xff]
  %v840 = vld [vmem:[%s3 + $0x640] sm:$0xff]
  %v841 = vld [vmem:[%s3 + $0x648] sm:$0xff]
  %v842 = vld [vmem:[%s3 + $0x650] sm:$0xff]
  %v843 = vld [vmem:[%s3 + $0x658] sm:$0xff]
  %v844 = vld [vmem:[%s3 + $0x660] sm:$0xff]
  %v845 = vld [vmem:[%s3 + $0x668] sm:$0xff]
  %v846 = vld [vmem:[%s3 + $0x670] sm:$0xff]
  %v847 = vld [vmem:[%s3 + $0x678] sm:$0xff]
  %v848 = vld [vmem:[%s3 + $0x680] sm:$0xff]
  %v849 = vld [vmem:[%s3 + $0x688] sm:$0xff]
  %v850 = vld [vmem:[%s3 + $0x690] sm:$0xff]
  %v851 = vld [vmem:[%s3 + $0x698] sm:$0xff]
  %v852 = vld [vmem:[%s3 + $0x6a0] sm:$0xff]
  %v853 = vld [vmem:[%s3 + $0x6a8] sm:$0xff]
  %v854 = vld [vmem:[%s3 + $0x6b0] sm:$0xff]
  %v855 = vld [vmem:[%s3 + $0x6b8] sm:$0xff]
  %v856 = vld [vmem:[%s3 + $0x6c0] sm:$0xff]
  %v857 = vld [vmem:[%s3 + $0x6c8] sm:$0xff]
  %v858 = vld [vmem:[%s3 + $0x6d0] sm:$0xff]
  %v859 = vld [vmem:[%s3 + $0x6d8] sm:$0xff]
  %v860 = vld [vmem:[%s3 + $0x6e0] sm:$0xff]
  %v861 = vld [vmem:[%s3 + $0x6e8] sm:$0xff]
  %v862 = vld [vmem:[%s3 + $0x6f0] sm:$0xff]
  %v863 = vld [vmem:[%s3 + $0x6f8] sm:$0xff]
  %v864 = vld [vmem:[%s3 + $0x700] sm:$0xff]
  %v865 = vld [vmem:[%s3 + $0x708] sm:$0xff]
  %v866 = vld [vmem:[%s3 + $0x710] sm:$0xff]
  %v867 = vld [vmem:[%s3 + $0x718] sm:$0xff]
  %v868 = vld [vmem:[%s3 + $0x720] sm:$0xff]
  %v869 = vld [vmem:[%s3 + $0x728] sm:$0xff]
  %v870 = vld [vmem:[%s3 + $0x730] sm:$0xff]
  %v871 = vld [vmem:[%s3 + $0x738] sm:$0xff]
  %v872 = vld [vmem:[%s3 + $0x740] sm:$0xff]
  %v873 = vld [vmem:[%s3 + $0x748] sm:$0xff]
  %v874 = vld [vmem:[%s3 + $0x750] sm:$0xff]
  %v875 = vld [vmem:[%s3 + $0x758] sm:$0xff]
  %v876 = vld [vmem:[%s3 + $0x760] sm:$0xff]
  %v877 = vld [vmem:[%s3 + $0x768] sm:$0xff]
  %v878 = vld [vmem:[%s3 + $0x770] sm:$0xff]
  %v879 = vld [vmem:[%s3 + $0x778] sm:$0xff]
  %v880 = vld [vmem:[%s3 + $0x780] sm:$0xff]
  %v881 = vld [vmem:[%s3 + $0x788] sm:$0xff]
  %v882 = vld [vmem:[%s3 + $0x790] sm:$0xff]
  %v883 = vld [vmem:[%s3 + $0x798] sm:$0xff]
  %v884 = vld [vmem:[%s3 + $0x7a0] sm:$0xff]
  %v885 = vld [vmem:[%s3 + $0x7a8] sm:$0xff]
  %v886 = vld [vmem:[%s3 + $0x7b0] sm:$0xff]
  %v887 = vld [vmem:[%s3 + $0x7b8] sm:$0xff]
  %v888 = vld [vmem:[%s3 + $0x7c0] sm:$0xff]
  %v889 = vld [vmem:[%s3 + $0x7c8] sm:$0xff]
  %v890 = vld [vmem:[%s3 + $0x7d0] sm:$0xff]
  %v891 = vld [vmem:[%s3 + $0x7d8] sm:$0xff]
  %v892 = vld [vmem:[%s3 + $0x7e0] sm:$0xff]
  %v893 = vld [vmem:[%s3 + $0x7e8] sm:$0xff]
  %v894 = vld [vmem:[%s3 + $0x7f0] sm:$0xff]
  %v895 = vld [vmem:[%s3 + $0x7f8] sm:$0xff]
  %v896 = vld [vmem:[%s3 + $0x800] sm:$0xff]
  %v897 = vld [vmem:[%s3 + $0x808] sm:$0xff]
  %v898 = vld [vmem:[%s3 + $0x810] sm:$0xff]
  %v899 = vld [vmem:[%s3 + $0x818] sm:$0xff]
  %v900 = vld [vmem:[%s3 + $0x820] sm:$0xff]
  %v901 = vld [vmem:[%s3 + $0x828] sm:$0xff]
  %v902 = vld [vmem:[%s3 + $0x830] sm:$0xff]
  %v903 = vld [vmem:[%s3 + $0x838] sm:$0xff]
  %v904 = vld [vmem:[%s3 + $0x840] sm:$0xff]
  %v905 = vld [vmem:[%s3 + $0x848] sm:$0xff]
  %v906 = vld [vmem:[%s3 + $0x850] sm:$0xff]
  %v907 = vld [vmem:[%s3 + $0x858] sm:$0xff]
  %v908 = vld [vmem:[%s3 + $0x860] sm:$0xff]
  %v909 = vld [vmem:[%s3 + $0x868] sm:$0xff]
  %v910 = vld [vmem:[%s3 + $0x870] sm:$0xff]
  %v911 = vld [vmem:[%s3 + $0x878] sm:$0xff]
  %v912 = vld [vmem:[%s3 + $0x880] sm:$0xff]
  %v913 = vld [vmem:[%s3 + $0x888] sm:$0xff]
  %v914 = vld [vmem:[%s3 + $0x890] sm:$0xff]
  %v915 = vld [vmem:[%s3 + $0x898] sm:$0xff]
  %v916 = vld [vmem:[%s3 + $0x8a0] sm:$0xff]
  %v917 = vld [vmem:[%s3 + $0x8a8] sm:$0xff]
  %v918 = vld [vmem:[%s3 + $0x8b0] sm:$0xff]
  %v919 = vld [vmem:[%s3 + $0x8b8] sm:$0xff]
  %v920 = vld [vmem:[%s3 + $0x8c0] sm:$0xff]
  %v921 = vld [vmem:[%s3 + $0x8c8] sm:$0xff]
  %v922 = vld [vmem:[%s3 + $0x8d0] sm:$0xff]
  %v923 = vld [vmem:[%s3 + $0x8d8] sm:$0xff]
  %v924 = vld [vmem:[%s3 + $0x8e0] sm:$0xff]
  %v925 = vld [vmem:[%s3 + $0x8e8] sm:$0xff]
  %v926 = vld [vmem:[%s3 + $0x8f0] sm:$0xff]
  %v927 = vld [vmem:[%s3 + $0x8f8] sm:$0xff]
  %v928 = vld [vmem:[%s3 + $0x900] sm:$0xff]
  %v929 = vld [vmem:[%s3 + $0x908] sm:$0xff]
  %v930 = vld [vmem:[%s3 + $0x910] sm:$0xff]
  %v931 = vld [vmem:[%s3 + $0x918] sm:$0xff]
  %v932 = vld [vmem:[%s3 + $0x920] sm:$0xff]
  %v933 = vld [vmem:[%s3 + $0x928] sm:$0xff]
  %v934 = vld [vmem:[%s3 + $0x930] sm:$0xff]
  %v935 = vld [vmem:[%s3 + $0x938] sm:$0xff]
  %v936 = vld [vmem:[%s3 + $0x940] sm:$0xff]
  %v937 = vld [vmem:[%s3 + $0x948] sm:$0xff]
  %v938 = vld [vmem:[%s3 + $0x950] sm:$0xff]
  %v939 = vld [vmem:[%s3 + $0x958] sm:$0xff]
  %v940 = vld [vmem:[%s3 + $0x960] sm:$0xff]
  %v941 = vld [vmem:[%s3 + $0x968] sm:$0xff]
  %v942 = vld [vmem:[%s3 + $0x970] sm:$0xff]
  %v943 = vld [vmem:[%s3 + $0x978] sm:$0xff]
  %v944 = vld [vmem:[%s3 + $0x980] sm:$0xff]
  %v945 = vld [vmem:[%s3 + $0x988] sm:$0xff]
  %v946 = vld [vmem:[%s3 + $0x990] sm:$0xff]
  %v947 = vld [vmem:[%s3 + $0x998] sm:$0xff]
  %v948 = vld [vmem:[%s3 + $0x9a0] sm:$0xff]
  %v949 = vld [vmem:[%s3 + $0x9a8] sm:$0xff]
  %v950 = vld [vmem:[%s3 + $0x9b0] sm:$0xff]
  %v951 = vld [vmem:[%s3 + $0x9b8] sm:$0xff]
  %v952 = vld [vmem:[%s3 + $0x9c0] sm:$0xff]
  %v953 = vld [vmem:[%s3 + $0x9c8] sm:$0xff]
  %v954 = vld [vmem:[%s3 + $0x9d0] sm:$0xff]
  %v955 = vld [vmem:[%s3 + $0x9d8] sm:$0xff]
  %v956 = vld [vmem:[%s3 + $0x9e0] sm:$0xff]
  %v957 = vld [vmem:[%s3 + $0x9e8] sm:$0xff]
  %v958 = vld [vmem:[%s3 + $0x9f0] sm:$0xff]
  %v959 = vld [vmem:[%s3 + $0x9f8] sm:$0xff]
  %v960 = vld [vmem:[%s3 + $0xa00] sm:$0xff]
  %v961 = vld [vmem:[%s3 + $0xa08] sm:$0xff]
  %v962 = vld [vmem:[%s3 + $0xa10] sm:$0xff]
  %v963 = vld [vmem:[%s3 + $0xa18] sm:$0xff]
  %v964 = vld [vmem:[%s3 + $0xa20] sm:$0xff]
  %v965 = vld [vmem:[%s3 + $0xa28] sm:$0xff]
  %v966 = vld [vmem:[%s3 + $0xa30] sm:$0xff]
  %v967 = vld [vmem:[%s3 + $0xa38] sm:$0xff]
  %v968 = vld [vmem:[%s3 + $0xa40] sm:$0xff]
  %v969 = vld [vmem:[%s3 + $0xa48] sm:$0xff]
  %v970 = vld [vmem:[%s3 + $0xa50] sm:$0xff]
  %v971 = vld [vmem:[%s3 + $0xa58] sm:$0xff]
  %v972 = vld [vmem:[%s3 + $0xa60] sm:$0xff]
  %v973 = vld [vmem:[%s3 + $0xa68] sm:$0xff]
  %v974 = vld [vmem:[%s3 + $0xa70] sm:$0xff]
  %v975 = vld [vmem:[%s3 + $0xa78] sm:$0xff]
  %v976 = vld [vmem:[%s3 + $0xa80] sm:$0xff]
  %v977 = vld [vmem:[%s3 + $0xa88] sm:$0xff]
  %v978 = vld [vmem:[%s3 + $0xa90] sm:$0xff]
  %v979 = vld [vmem:[%s3 + $0xa98] sm:$0xff]
  %v980 = vld [vmem:[%s3 + $0xaa0] sm:$0xff]
  %v981 = vld [vmem:[%s3 + $0xaa8] sm:$0xff]
  %v982 = vld [vmem:[%s3 + $0xab0] sm:$0xff]
  %v983 = vld [vmem:[%s3 + $0xab8] sm:$0xff]
  %v984 = vld [vmem:[%s3 + $0xac0] sm:$0xff]
  %v985 = vld [vmem:[%s3 + $0xac8] sm:$0xff]
  %v986 = vld [vmem:[%s3 + $0xad0] sm:$0xff]
  %v987 = vld [vmem:[%s3 + $0xad8] sm:$0xff]
  %v988 = vld [vmem:[%s3 + $0xae0] sm:$0xff]
  %v989 = vld [vmem:[%s3 + $0xae8] sm:$0xff]
  %v990 = vld [vmem:[%s3 + $0xaf0] sm:$0xff]
  %v991 = vld [vmem:[%s3 + $0xaf8] sm:$0xff]
  %v992 = vld [vmem:[%s3 + $0xb00] sm:$0xff]
  %v993 = vld [vmem:[%s3 + $0xb08] sm:$0xff]
  %v994 = vld [vmem:[%s3 + $0xb10] sm:$0xff]
  %v995 = vld [vmem:[%s3 + $0xb18] sm:$0xff]
  %v996 = vld [vmem:[%s3 + $0xb20] sm:$0xff]
  %v997 = vld [vmem:[%s3 + $0xb28] sm:$0xff]
  %v998 = vld [vmem:[%s3 + $0xb30] sm:$0xff]
  %v999 = vld [vmem:[%s3 + $0xb38] sm:$0xff]
  %v1000 = vld [vmem:[%s3 + $0xb40] sm:$0xff]
  %v1001 = vld [vmem:[%s3 + $0xb48] sm:$0xff]
  %v1002 = vld [vmem:[%s3 + $0xb50] sm:$0xff]
  %v1003 = vld [vmem:[%s3 + $0xb58] sm:$0xff]
  %v1004 = vld [vmem:[%s3 + $0xb60] sm:$0xff]
  %v1005 = vld [vmem:[%s3 + $0xb68] sm:$0xff]
  %v1006 = vld [vmem:[%s3 + $0xb70] sm:$0xff]
  %v1007 = vld [vmem:[%s3 + $0xb78] sm:$0xff]
  %v1008 = vld [vmem:[%s3 + $0xb80] sm:$0xff]
  %v1009 = vld [vmem:[%s3 + $0xb88] sm:$0xff]
  %v1010 = vld [vmem:[%s3 + $0xb90] sm:$0xff]
  %v1011 = vld [vmem:[%s3 + $0xb98] sm:$0xff]
  %v1012 = vld [vmem:[%s3 + $0xba0] sm:$0xff]
  %v1013 = vld [vmem:[%s3 + $0xba8] sm:$0xff]
  %v1014 = vld [vmem:[%s3 + $0xbb0] sm:$0xff]
  %v1015 = vld [vmem:[%s3 + $0xbb8] sm:$0xff]
  %v1016 = vld [vmem:[%s3 + $0xbc0] sm:$0xff]
  %v1017 = vld [vmem:[%s3 + $0xbc8] sm:$0xff]
  %v1018 = vld [vmem:[%s3 + $0xbd0] sm:$0xff]
  %v1019 = vld [vmem:[%s3 + $0xbd8] sm:$0xff]
  %v1020 = vld [vmem:[%s3 + $0xbe0] sm:$0xff]
  %v1021 = vld [vmem:[%s3 + $0xbe8] sm:$0xff]
  %v1022 = vld [vmem:[%s3 + $0xbf0] sm:$0xff]
  %v1023 = vld [vmem:[%s3 + $0xbf8] sm:$0xff]
  %v1024 = vld [vmem:[%s3 + $0xc00] sm:$0xff]
  %v1025 = vld [vmem:[%s3 + $0xc08] sm:$0xff]
  %v1026 = vld [vmem:[%s3 + $0xc10] sm:$0xff]
  %v1027 = vld [vmem:[%s3 + $0xc18] sm:$0xff]
  %v1028 = vld [vmem:[%s3 + $0xc20] sm:$0xff]
  %v1029 = vld [vmem:[%s3 + $0xc28] sm:$0xff]
  %v1030 = vld [vmem:[%s3 + $0xc30] sm:$0xff]
  %v1031 = vld [vmem:[%s3 + $0xc38] sm:$0xff]
  %v1032 = vld [vmem:[%s3 + $0xc40] sm:$0xff]
  %v1033 = vld [vmem:[%s3 + $0xc48] sm:$0xff]
  %v1034 = vld [vmem:[%s3 + $0xc50] sm:$0xff]
  %v1035 = vld [vmem:[%s3 + $0xc58] sm:$0xff]
  %v1036 = vld [vmem:[%s3 + $0xc60] sm:$0xff]
  %v1037 = vld [vmem:[%s3 + $0xc68] sm:$0xff]
  %v1038 = vld [vmem:[%s3 + $0xc70] sm:$0xff]
  %v1039 = vld [vmem:[%s3 + $0xc78] sm:$0xff]
  %v1040 = vld [vmem:[%s3 + $0xc80] sm:$0xff]
  %v1041 = vld [vmem:[%s3 + $0xc88] sm:$0xff]
  %v1042 = vld [vmem:[%s3 + $0xc90] sm:$0xff]
  %v1043 = vld [vmem:[%s3 + $0xc98] sm:$0xff]
  %v1044 = vld [vmem:[%s3 + $0xca0] sm:$0xff]
  %v1045 = vld [vmem:[%s3 + $0xca8] sm:$0xff]
  %v1046 = vld [vmem:[%s3 + $0xcb0] sm:$0xff]
  %v1047 = vld [vmem:[%s3 + $0xcb8] sm:$0xff]
  %v1048 = vld [vmem:[%s3 + $0xcc0] sm:$0xff]
  %v1049 = vld [vmem:[%s3 + $0xcc8] sm:$0xff]
  %v1050 = vld [vmem:[%s3 + $0xcd0] sm:$0xff]
  %v1051 = vld [vmem:[%s3 + $0xcd8] sm:$0xff]
  %v1052 = vld [vmem:[%s3 + $0xce0] sm:$0xff]
  %v1053 = vld [vmem:[%s3 + $0xce8] sm:$0xff]
  %v1054 = vld [vmem:[%s3 + $0xcf0] sm:$0xff]
  %v1055 = vld [vmem:[%s3 + $0xcf8] sm:$0xff]
  %v1056 = vld [vmem:[%s3 + $0xd00] sm:$0xff]
  %v1057 = vld [vmem:[%s3 + $0xd08] sm:$0xff]
  %v1058 = vld [vmem:[%s3 + $0xd10] sm:$0xff]
  %v1059 = vld [vmem:[%s3 + $0xd18] sm:$0xff]
  %v1060 = vld [vmem:[%s3 + $0xd20] sm:$0xff]
  %v1061 = vld [vmem:[%s3 + $0xd28] sm:$0xff]
  %v1062 = vld [vmem:[%s3 + $0xd30] sm:$0xff]
  %v1063 = vld [vmem:[%s3 + $0xd38] sm:$0xff]
  %v1064 = vld [vmem:[%s3 + $0xd40] sm:$0xff]
  %v1065 = vld [vmem:[%s3 + $0xd48] sm:$0xff]
  %v1066 = vld [vmem:[%s3 + $0xd50] sm:$0xff]
  %v1067 = vld [vmem:[%s3 + $0xd58] sm:$0xff]
  %v1068 = vld [vmem:[%s3 + $0xd60] sm:$0xff]
  %v1069 = vld [vmem:[%s3 + $0xd68] sm:$0xff]
  %v1070 = vld [vmem:[%s3 + $0xd70] sm:$0xff]
  %v1071 = vld [vmem:[%s3 + $0xd78] sm:$0xff]
  %v1072 = vld [vmem:[%s3 + $0xd80] sm:$0xff]
  %v1073 = vld [vmem:[%s3 + $0xd88] sm:$0xff]
  %v1074 = vld [vmem:[%s3 + $0xd90] sm:$0xff]
  %v1075 = vld [vmem:[%s3 + $0xd98] sm:$0xff]
  %v1076 = vld [vmem:[%s3 + $0xda0] sm:$0xff]
  %v1077 = vld [vmem:[%s3 + $0xda8] sm:$0xff]
  %v1078 = vld [vmem:[%s3 + $0xdb0] sm:$0xff]
  %v1079 = vld [vmem:[%s3 + $0xdb8] sm:$0xff]
  %v1080 = vld [vmem:[%s3 + $0xdc0] sm:$0xff]
  %v1081 = vld [vmem:[%s3 + $0xdc8] sm:$0xff]
  %v1082 = vld [vmem:[%s3 + $0xdd0] sm:$0xff]
  %v1083 = vld [vmem:[%s3 + $0xdd8] sm:$0xff]
  %v1084 = vld [vmem:[%s3 + $0xde0] sm:$0xff]
  %v1085 = vld [vmem:[%s3 + $0xde8] sm:$0xff]
  %v1086 = vld [vmem:[%s3 + $0xdf0] sm:$0xff]
  %v1087 = vld [vmem:[%s3 + $0xdf8] sm:$0xff]
  %v1088 = vld [vmem:[%s3 + $0xe00] sm:$0xff]
  %v1089 = vld [vmem:[%s3 + $0xe08] sm:$0xff]
  %v1090 = vld [vmem:[%s3 + $0xe10] sm:$0xff]
  %v1091 = vld [vmem:[%s3 + $0xe18] sm:$0xff]
  %v1092 = vld [vmem:[%s3 + $0xe20] sm:$0xff]
  %v1093 = vld [vmem:[%s3 + $0xe28] sm:$0xff]
  %v1094 = vld [vmem:[%s3 + $0xe30] sm:$0xff]
  %v1095 = vld [vmem:[%s3 + $0xe38] sm:$0xff]
  %v1096 = vld [vmem:[%s3 + $0xe40] sm:$0xff]
  %v1097 = vld [vmem:[%s3 + $0xe48] sm:$0xff]
  %v1098 = vld [vmem:[%s3 + $0xe50] sm:$0xff]
  %v1099 = vld [vmem:[%s3 + $0xe58] sm:$0xff]
  %v1100 = vld [vmem:[%s3 + $0xe60] sm:$0xff]
  %v1101 = vld [vmem:[%s3 + $0xe68] sm:$0xff]
  %v1102 = vld [vmem:[%s3 + $0xe70] sm:$0xff]
  %v1103 = vld [vmem:[%s3 + $0xe78] sm:$0xff]
  %v1104 = vld [vmem:[%s3 + $0xe80] sm:$0xff]
  %v1105 = vld [vmem:[%s3 + $0xe88] sm:$0xff]
  %v1106 = vld [vmem:[%s3 + $0xe90] sm:$0xff]
  %v1107 = vld [vmem:[%s3 + $0xe98] sm:$0xff]
  %v1108 = vld [vmem:[%s3 + $0xea0] sm:$0xff]
  %v1109 = vld [vmem:[%s3 + $0xea8] sm:$0xff]
  %v1110 = vld [vmem:[%s3 + $0xeb0] sm:$0xff]
  %v1111 = vld [vmem:[%s3 + $0xeb8] sm:$0xff]
  %v1112 = vld [vmem:[%s3 + $0xec0] sm:$0xff]
  %v1113 = vld [vmem:[%s3 + $0xec8] sm:$0xff]
  %v1114 = vld [vmem:[%s3 + $0xed0] sm:$0xff]
  %v1115 = vld [vmem:[%s3 + $0xed8] sm:$0xff]
  %v1116 = vld [vmem:[%s3 + $0xee0] sm:$0xff]
  %v1117 = vld [vmem:[%s3 + $0xee8] sm:$0xff]
  %v1118 = vld [vmem:[%s3 + $0xef0] sm:$0xff]
  %v1119 = vld [vmem:[%s3 + $0xef8] sm:$0xff]
  %v1120 = vld [vmem:[%s3 + $0xf00] sm:$0xff]
  %v1121 = vld [vmem:[%s3 + $0xf08] sm:$0xff]
  %v1122 = vld [vmem:[%s3 + $0xf10] sm:$0xff]
  %v1123 = vld [vmem:[%s3 + $0xf18] sm:$0xff]
  %v1124 = vld [vmem:[%s3 + $0xf20] sm:$0xff]
  %v1125 = vld [vmem:[%s3 + $0xf28] sm:$0xff]
  %v1126 = vld [vmem:[%s3 + $0xf30] sm:$0xff]
  %v1127 = vld [vmem:[%s3 + $0xf38] sm:$0xff]
  %v1128 = vld [vmem:[%s3 + $0xf40] sm:$0xff]
  %v1129 = vld [vmem:[%s3 + $0xf48] sm:$0xff]
  %v1130 = vld [vmem:[%s3 + $0xf50] sm:$0xff]
  %v1131 = vld [vmem:[%s3 + $0xf58] sm:$0xff]
  %v1132 = vld [vmem:[%s3 + $0xf60] sm:$0xff]
  %v1133 = vld [vmem:[%s3 + $0xf68] sm:$0xff]
  %v1134 = vld [vmem:[%s3 + $0xf70] sm:$0xff]
  %v1135 = vld [vmem:[%s3 + $0xf78] sm:$0xff]
  %v1136 = vld [vmem:[%s3 + $0xf80] sm:$0xff]
  %v1137 = vld [vmem:[%s3 + $0xf88] sm:$0xff]
  %v1138 = vld [vmem:[%s3 + $0xf90] sm:$0xff]
  %v1139 = vld [vmem:[%s3 + $0xf98] sm:$0xff]
  %v1140 = vld [vmem:[%s3 + $0xfa0] sm:$0xff]
  %v1141 = vld [vmem:[%s3 + $0xfa8] sm:$0xff]
  %v1142 = vld [vmem:[%s3 + $0xfb0] sm:$0xff]
  %v1143 = vld [vmem:[%s3 + $0xfb8] sm:$0xff]
  %v1144 = vld [vmem:[%s3 + $0xfc0] sm:$0xff]
  %v1145 = vld [vmem:[%s3 + $0xfc8] sm:$0xff]
  %v1146 = vld [vmem:[%s3 + $0xfd0] sm:$0xff]
  %v1147 = vld [vmem:[%s3 + $0xfd8] sm:$0xff]
  %v1148 = vld [vmem:[%s3 + $0xfe0] sm:$0xff]
  %v1149 = vld [vmem:[%s3 + $0xfe8] sm:$0xff]
  %v1150 = vld [vmem:[%s3 + $0xff0] sm:$0xff]
  %v1151 = vld [vmem:[%s3 + $0xff8] sm:$0xff]
  %v1152 = vld [vmem:[%s4] sm:$0xff]
  %v1154 = vlaneseq
  %v1155 = vshrl.u32 %v1154, 7
  %v1156 = vsub.s32 0, %v1155
  %v1157 = vrot.slane %v1152, %v1156
  %v1158 = vlaneseq
  %v1159 = vshrl.u32 %v1158, 7
  %v1160 = vsub.s32 1, %v1159
  %v1161 = vrot.slane %v1152, %v1160
  %v1162 = vlaneseq
  %v1163 = vshrl.u32 %v1162, 7
  %v1164 = vsub.s32 2, %v1163
  %v1165 = vrot.slane %v1152, %v1164
  %v1166 = vlaneseq
  %v1167 = vshrl.u32 %v1166, 7
  %v1168 = vsub.s32 3, %v1167
  %v1169 = vrot.slane %v1152, %v1168
  %v1170 = vlaneseq
  %v1171 = vshrl.u32 %v1170, 7
  %v1172 = vsub.s32 4, %v1171
  %v1173 = vrot.slane %v1152, %v1172
  %v1174 = vlaneseq
  %v1175 = vshrl.u32 %v1174, 7
  %v1176 = vsub.s32 5, %v1175
  %v1177 = vrot.slane %v1152, %v1176
  %v1178 = vlaneseq
  %v1179 = vshrl.u32 %v1178, 7
  %v1180 = vsub.s32 6, %v1179
  %v1181 = vrot.slane %v1152, %v1180
  %v1182 = vlaneseq
  %v1183 = vshrl.u32 %v1182, 7
  %v1184 = vsub.s32 7, %v1183
  %v1185 = vrot.slane %v1152, %v1184
  %v1706 = vunpack.c.l.b16 %v640
  %v1707 = vunpack.c.h.b16 %v640
  %v1708 = vunpack.c.l.b16 %v641
  %v1709 = vunpack.c.h.b16 %v641
  %v1710 = vunpack.c.l.b16 %v642
  %v1711 = vunpack.c.h.b16 %v642
  %v1712 = vunpack.c.l.b16 %v643
  %v1713 = vunpack.c.h.b16 %v643
  %v1714 = vunpack.c.l.b16 %v644
  %v1715 = vunpack.c.h.b16 %v644
  %v1716 = vunpack.c.l.b16 %v645
  %v1717 = vunpack.c.h.b16 %v645
  %v1718 = vunpack.c.l.b16 %v646
  %v1719 = vunpack.c.h.b16 %v646
  %v1720 = vunpack.c.l.b16 %v647
  %v1721 = vunpack.c.h.b16 %v647
  %v1722 = vunpack.c.l.b16 %v648
  %v1723 = vunpack.c.h.b16 %v648
  %v1724 = vunpack.c.l.b16 %v649
  %v1725 = vunpack.c.h.b16 %v649
  %v1726 = vunpack.c.l.b16 %v650
  %v1727 = vunpack.c.h.b16 %v650
  %v1728 = vunpack.c.l.b16 %v651
  %v1729 = vunpack.c.h.b16 %v651
  %v1730 = vunpack.c.l.b16 %v652
  %v1731 = vunpack.c.h.b16 %v652
  %v1732 = vunpack.c.l.b16 %v653
  %v1733 = vunpack.c.h.b16 %v653
  %v1734 = vunpack.c.l.b16 %v654
  %v1735 = vunpack.c.h.b16 %v654
  %v1736 = vunpack.c.l.b16 %v655
  %v1737 = vunpack.c.h.b16 %v655
  %v1738 = vunpack.c.l.b16 %v656
  %v1739 = vunpack.c.h.b16 %v656
  %v1740 = vunpack.c.l.b16 %v657
  %v1741 = vunpack.c.h.b16 %v657
  %v1742 = vunpack.c.l.b16 %v658
  %v1743 = vunpack.c.h.b16 %v658
  %v1744 = vunpack.c.l.b16 %v659
  %v1745 = vunpack.c.h.b16 %v659
  %v1746 = vunpack.c.l.b16 %v660
  %v1747 = vunpack.c.h.b16 %v660
  %v1748 = vunpack.c.l.b16 %v661
  %v1749 = vunpack.c.h.b16 %v661
  %v1750 = vunpack.c.l.b16 %v662
  %v1751 = vunpack.c.h.b16 %v662
  %v1752 = vunpack.c.l.b16 %v663
  %v1753 = vunpack.c.h.b16 %v663
  %v1754 = vunpack.c.l.b16 %v664
  %v1755 = vunpack.c.h.b16 %v664
  %v1756 = vunpack.c.l.b16 %v665
  %v1757 = vunpack.c.h.b16 %v665
  %v1758 = vunpack.c.l.b16 %v666
  %v1759 = vunpack.c.h.b16 %v666
  %v1760 = vunpack.c.l.b16 %v667
  %v1761 = vunpack.c.h.b16 %v667
  %v1762 = vunpack.c.l.b16 %v668
  %v1763 = vunpack.c.h.b16 %v668
  %v1764 = vunpack.c.l.b16 %v669
  %v1765 = vunpack.c.h.b16 %v669
  %v1766 = vunpack.c.l.b16 %v670
  %v1767 = vunpack.c.h.b16 %v670
  %v1768 = vunpack.c.l.b16 %v671
  %v1769 = vunpack.c.h.b16 %v671
  %v1770 = vunpack.c.l.b16 %v672
  %v1771 = vunpack.c.h.b16 %v672
  %v1772 = vunpack.c.l.b16 %v673
  %v1773 = vunpack.c.h.b16 %v673
  %v1774 = vunpack.c.l.b16 %v674
  %v1775 = vunpack.c.h.b16 %v674
  %v1776 = vunpack.c.l.b16 %v675
  %v1777 = vunpack.c.h.b16 %v675
  %v1778 = vunpack.c.l.b16 %v676
  %v1779 = vunpack.c.h.b16 %v676
  %v1780 = vunpack.c.l.b16 %v677
  %v1781 = vunpack.c.h.b16 %v677
  %v1782 = vunpack.c.l.b16 %v678
  %v1783 = vunpack.c.h.b16 %v678
  %v1784 = vunpack.c.l.b16 %v679
  %v1785 = vunpack.c.h.b16 %v679
  %v1786 = vunpack.c.l.b16 %v680
  %v1787 = vunpack.c.h.b16 %v680
  %v1788 = vunpack.c.l.b16 %v681
  %v1789 = vunpack.c.h.b16 %v681
  %v1790 = vunpack.c.l.b16 %v682
  %v1791 = vunpack.c.h.b16 %v682
  %v1792 = vunpack.c.l.b16 %v683
  %v1793 = vunpack.c.h.b16 %v683
  %v1794 = vunpack.c.l.b16 %v684
  %v1795 = vunpack.c.h.b16 %v684
  %v1796 = vunpack.c.l.b16 %v685
  %v1797 = vunpack.c.h.b16 %v685
  %v1798 = vunpack.c.l.b16 %v686
  %v1799 = vunpack.c.h.b16 %v686
  %v1800 = vunpack.c.l.b16 %v687
  %v1801 = vunpack.c.h.b16 %v687
  %v1802 = vunpack.c.l.b16 %v688
  %v1803 = vunpack.c.h.b16 %v688
  %v1804 = vunpack.c.l.b16 %v689
  %v1805 = vunpack.c.h.b16 %v689
  %v1806 = vunpack.c.l.b16 %v690
  %v1807 = vunpack.c.h.b16 %v690
  %v1808 = vunpack.c.l.b16 %v691
  %v1809 = vunpack.c.h.b16 %v691
  %v1810 = vunpack.c.l.b16 %v692
  %v1811 = vunpack.c.h.b16 %v692
  %v1812 = vunpack.c.l.b16 %v693
  %v1813 = vunpack.c.h.b16 %v693
  %v1814 = vunpack.c.l.b16 %v694
  %v1815 = vunpack.c.h.b16 %v694
  %v1816 = vunpack.c.l.b16 %v695
  %v1817 = vunpack.c.h.b16 %v695
  %v1818 = vunpack.c.l.b16 %v696
  %v1819 = vunpack.c.h.b16 %v696
  %v1820 = vunpack.c.l.b16 %v697
  %v1821 = vunpack.c.h.b16 %v697
  %v1822 = vunpack.c.l.b16 %v698
  %v1823 = vunpack.c.h.b16 %v698
  %v1824 = vunpack.c.l.b16 %v699
  %v1825 = vunpack.c.h.b16 %v699
  %v1826 = vunpack.c.l.b16 %v700
  %v1827 = vunpack.c.h.b16 %v700
  %v1828 = vunpack.c.l.b16 %v701
  %v1829 = vunpack.c.h.b16 %v701
  %v1830 = vunpack.c.l.b16 %v702
  %v1831 = vunpack.c.h.b16 %v702
  %v1832 = vunpack.c.l.b16 %v703
  %v1833 = vunpack.c.h.b16 %v703
  %v1834 = vunpack.c.l.b16 %v704
  %v1835 = vunpack.c.h.b16 %v704
  %v1836 = vunpack.c.l.b16 %v705
  %v1837 = vunpack.c.h.b16 %v705
  %v1838 = vunpack.c.l.b16 %v706
  %v1839 = vunpack.c.h.b16 %v706
  %v1840 = vunpack.c.l.b16 %v707
  %v1841 = vunpack.c.h.b16 %v707
  %v1842 = vunpack.c.l.b16 %v708
  %v1843 = vunpack.c.h.b16 %v708
  %v1844 = vunpack.c.l.b16 %v709
  %v1845 = vunpack.c.h.b16 %v709
  %v1846 = vunpack.c.l.b16 %v710
  %v1847 = vunpack.c.h.b16 %v710
  %v1848 = vunpack.c.l.b16 %v711
  %v1849 = vunpack.c.h.b16 %v711
  %v1850 = vunpack.c.l.b16 %v712
  %v1851 = vunpack.c.h.b16 %v712
  %v1852 = vunpack.c.l.b16 %v713
  %v1853 = vunpack.c.h.b16 %v713
  %v1854 = vunpack.c.l.b16 %v714
  %v1855 = vunpack.c.h.b16 %v714
  %v1856 = vunpack.c.l.b16 %v715
  %v1857 = vunpack.c.h.b16 %v715
  %v1858 = vunpack.c.l.b16 %v716
  %v1859 = vunpack.c.h.b16 %v716
  %v1860 = vunpack.c.l.b16 %v717
  %v1861 = vunpack.c.h.b16 %v717
  %v1862 = vunpack.c.l.b16 %v718
  %v1863 = vunpack.c.h.b16 %v718
  %v1864 = vunpack.c.l.b16 %v719
  %v1865 = vunpack.c.h.b16 %v719
  %v1866 = vunpack.c.l.b16 %v720
  %v1867 = vunpack.c.h.b16 %v720
  %v1868 = vunpack.c.l.b16 %v721
  %v1869 = vunpack.c.h.b16 %v721
  %v1870 = vunpack.c.l.b16 %v722
  %v1871 = vunpack.c.h.b16 %v722
  %v1872 = vunpack.c.l.b16 %v723
  %v1873 = vunpack.c.h.b16 %v723
  %v1874 = vunpack.c.l.b16 %v724
  %v1875 = vunpack.c.h.b16 %v724
  %v1876 = vunpack.c.l.b16 %v725
  %v1877 = vunpack.c.h.b16 %v725
  %v1878 = vunpack.c.l.b16 %v726
  %v1879 = vunpack.c.h.b16 %v726
  %v1880 = vunpack.c.l.b16 %v727
  %v1881 = vunpack.c.h.b16 %v727
  %v1882 = vunpack.c.l.b16 %v728
  %v1883 = vunpack.c.h.b16 %v728
  %v1884 = vunpack.c.l.b16 %v729
  %v1885 = vunpack.c.h.b16 %v729
  %v1886 = vunpack.c.l.b16 %v730
  %v1887 = vunpack.c.h.b16 %v730
  %v1888 = vunpack.c.l.b16 %v731
  %v1889 = vunpack.c.h.b16 %v731
  %v1890 = vunpack.c.l.b16 %v732
  %v1891 = vunpack.c.h.b16 %v732
  %v1892 = vunpack.c.l.b16 %v733
  %v1893 = vunpack.c.h.b16 %v733
  %v1894 = vunpack.c.l.b16 %v734
  %v1895 = vunpack.c.h.b16 %v734
  %v1896 = vunpack.c.l.b16 %v735
  %v1897 = vunpack.c.h.b16 %v735
  %v1898 = vunpack.c.l.b16 %v736
  %v1899 = vunpack.c.h.b16 %v736
  %v1900 = vunpack.c.l.b16 %v737
  %v1901 = vunpack.c.h.b16 %v737
  %v1902 = vunpack.c.l.b16 %v738
  %v1903 = vunpack.c.h.b16 %v738
  %v1904 = vunpack.c.l.b16 %v739
  %v1905 = vunpack.c.h.b16 %v739
  %v1906 = vunpack.c.l.b16 %v740
  %v1907 = vunpack.c.h.b16 %v740
  %v1908 = vunpack.c.l.b16 %v741
  %v1909 = vunpack.c.h.b16 %v741
  %v1910 = vunpack.c.l.b16 %v742
  %v1911 = vunpack.c.h.b16 %v742
  %v1912 = vunpack.c.l.b16 %v743
  %v1913 = vunpack.c.h.b16 %v743
  %v1914 = vunpack.c.l.b16 %v744
  %v1915 = vunpack.c.h.b16 %v744
  %v1916 = vunpack.c.l.b16 %v745
  %v1917 = vunpack.c.h.b16 %v745
  %v1918 = vunpack.c.l.b16 %v746
  %v1919 = vunpack.c.h.b16 %v746
  %v1920 = vunpack.c.l.b16 %v747
  %v1921 = vunpack.c.h.b16 %v747
  %v1922 = vunpack.c.l.b16 %v748
  %v1923 = vunpack.c.h.b16 %v748
  %v1924 = vunpack.c.l.b16 %v749
  %v1925 = vunpack.c.h.b16 %v749
  %v1926 = vunpack.c.l.b16 %v750
  %v1927 = vunpack.c.h.b16 %v750
  %v1928 = vunpack.c.l.b16 %v751
  %v1929 = vunpack.c.h.b16 %v751
  %v1930 = vunpack.c.l.b16 %v752
  %v1931 = vunpack.c.h.b16 %v752
  %v1932 = vunpack.c.l.b16 %v753
  %v1933 = vunpack.c.h.b16 %v753
  %v1934 = vunpack.c.l.b16 %v754
  %v1935 = vunpack.c.h.b16 %v754
  %v1936 = vunpack.c.l.b16 %v755
  %v1937 = vunpack.c.h.b16 %v755
  %v1938 = vunpack.c.l.b16 %v756
  %v1939 = vunpack.c.h.b16 %v756
  %v1940 = vunpack.c.l.b16 %v757
  %v1941 = vunpack.c.h.b16 %v757
  %v1942 = vunpack.c.l.b16 %v758
  %v1943 = vunpack.c.h.b16 %v758
  %v1944 = vunpack.c.l.b16 %v759
  %v1945 = vunpack.c.h.b16 %v759
  %v1946 = vunpack.c.l.b16 %v760
  %v1947 = vunpack.c.h.b16 %v760
  %v1948 = vunpack.c.l.b16 %v761
  %v1949 = vunpack.c.h.b16 %v761
  %v1950 = vunpack.c.l.b16 %v762
  %v1951 = vunpack.c.h.b16 %v762
  %v1952 = vunpack.c.l.b16 %v763
  %v1953 = vunpack.c.h.b16 %v763
  %v1954 = vunpack.c.l.b16 %v764
  %v1955 = vunpack.c.h.b16 %v764
  %v1956 = vunpack.c.l.b16 %v765
  %v1957 = vunpack.c.h.b16 %v765
  %v1958 = vunpack.c.l.b16 %v766
  %v1959 = vunpack.c.h.b16 %v766
  %v1960 = vunpack.c.l.b16 %v767
  %v1961 = vunpack.c.h.b16 %v767
  %v1962 = vunpack.c.l.b16 %v768
  %v1963 = vunpack.c.h.b16 %v768
  %v1964 = vunpack.c.l.b16 %v769
  %v1965 = vunpack.c.h.b16 %v769
  %v1966 = vunpack.c.l.b16 %v770
  %v1967 = vunpack.c.h.b16 %v770
  %v1968 = vunpack.c.l.b16 %v771
  %v1969 = vunpack.c.h.b16 %v771
  %v1970 = vunpack.c.l.b16 %v772
  %v1971 = vunpack.c.h.b16 %v772
  %v1972 = vunpack.c.l.b16 %v773
  %v1973 = vunpack.c.h.b16 %v773
  %v1974 = vunpack.c.l.b16 %v774
  %v1975 = vunpack.c.h.b16 %v774
  %v1976 = vunpack.c.l.b16 %v775
  %v1977 = vunpack.c.h.b16 %v775
  %v1978 = vunpack.c.l.b16 %v776
  %v1979 = vunpack.c.h.b16 %v776
  %v1980 = vunpack.c.l.b16 %v777
  %v1981 = vunpack.c.h.b16 %v777
  %v1982 = vunpack.c.l.b16 %v778
  %v1983 = vunpack.c.h.b16 %v778
  %v1984 = vunpack.c.l.b16 %v779
  %v1985 = vunpack.c.h.b16 %v779
  %v1986 = vunpack.c.l.b16 %v780
  %v1987 = vunpack.c.h.b16 %v780
  %v1988 = vunpack.c.l.b16 %v781
  %v1989 = vunpack.c.h.b16 %v781
  %v1990 = vunpack.c.l.b16 %v782
  %v1991 = vunpack.c.h.b16 %v782
  %v1992 = vunpack.c.l.b16 %v783
  %v1993 = vunpack.c.h.b16 %v783
  %v1994 = vunpack.c.l.b16 %v784
  %v1995 = vunpack.c.h.b16 %v784
  %v1996 = vunpack.c.l.b16 %v785
  %v1997 = vunpack.c.h.b16 %v785
  %v1998 = vunpack.c.l.b16 %v786
  %v1999 = vunpack.c.h.b16 %v786
  %v2000 = vunpack.c.l.b16 %v787
  %v2001 = vunpack.c.h.b16 %v787
  %v2002 = vunpack.c.l.b16 %v788
  %v2003 = vunpack.c.h.b16 %v788
  %v2004 = vunpack.c.l.b16 %v789
  %v2005 = vunpack.c.h.b16 %v789
  %v2006 = vunpack.c.l.b16 %v790
  %v2007 = vunpack.c.h.b16 %v790
  %v2008 = vunpack.c.l.b16 %v791
  %v2009 = vunpack.c.h.b16 %v791
  %v2010 = vunpack.c.l.b16 %v792
  %v2011 = vunpack.c.h.b16 %v792
  %v2012 = vunpack.c.l.b16 %v793
  %v2013 = vunpack.c.h.b16 %v793
  %v2014 = vunpack.c.l.b16 %v794
  %v2015 = vunpack.c.h.b16 %v794
  %v2016 = vunpack.c.l.b16 %v795
  %v2017 = vunpack.c.h.b16 %v795
  %v2018 = vunpack.c.l.b16 %v796
  %v2019 = vunpack.c.h.b16 %v796
  %v2020 = vunpack.c.l.b16 %v797
  %v2021 = vunpack.c.h.b16 %v797
  %v2022 = vunpack.c.l.b16 %v798
  %v2023 = vunpack.c.h.b16 %v798
  %v2024 = vunpack.c.l.b16 %v799
  %v2025 = vunpack.c.h.b16 %v799
  %v2026 = vunpack.c.l.b16 %v800
  %v2027 = vunpack.c.h.b16 %v800
  %v2028 = vunpack.c.l.b16 %v801
  %v2029 = vunpack.c.h.b16 %v801
  %v2030 = vunpack.c.l.b16 %v802
  %v2031 = vunpack.c.h.b16 %v802
  %v2032 = vunpack.c.l.b16 %v803
  %v2033 = vunpack.c.h.b16 %v803
  %v2034 = vunpack.c.l.b16 %v804
  %v2035 = vunpack.c.h.b16 %v804
  %v2036 = vunpack.c.l.b16 %v805
  %v2037 = vunpack.c.h.b16 %v805
  %v2038 = vunpack.c.l.b16 %v806
  %v2039 = vunpack.c.h.b16 %v806
  %v2040 = vunpack.c.l.b16 %v807
  %v2041 = vunpack.c.h.b16 %v807
  %v2042 = vunpack.c.l.b16 %v808
  %v2043 = vunpack.c.h.b16 %v808
  %v2044 = vunpack.c.l.b16 %v809
  %v2045 = vunpack.c.h.b16 %v809
  %v2046 = vunpack.c.l.b16 %v810
  %v2047 = vunpack.c.h.b16 %v810
  %v2048 = vunpack.c.l.b16 %v811
  %v2049 = vunpack.c.h.b16 %v811
  %v2050 = vunpack.c.l.b16 %v812
  %v2051 = vunpack.c.h.b16 %v812
  %v2052 = vunpack.c.l.b16 %v813
  %v2053 = vunpack.c.h.b16 %v813
  %v2054 = vunpack.c.l.b16 %v814
  %v2055 = vunpack.c.h.b16 %v814
  %v2056 = vunpack.c.l.b16 %v815
  %v2057 = vunpack.c.h.b16 %v815
  %v2058 = vunpack.c.l.b16 %v816
  %v2059 = vunpack.c.h.b16 %v816
  %v2060 = vunpack.c.l.b16 %v817
  %v2061 = vunpack.c.h.b16 %v817
  %v2062 = vunpack.c.l.b16 %v818
  %v2063 = vunpack.c.h.b16 %v818
  %v2064 = vunpack.c.l.b16 %v819
  %v2065 = vunpack.c.h.b16 %v819
  %v2066 = vunpack.c.l.b16 %v820
  %v2067 = vunpack.c.h.b16 %v820
  %v2068 = vunpack.c.l.b16 %v821
  %v2069 = vunpack.c.h.b16 %v821
  %v2070 = vunpack.c.l.b16 %v822
  %v2071 = vunpack.c.h.b16 %v822
  %v2072 = vunpack.c.l.b16 %v823
  %v2073 = vunpack.c.h.b16 %v823
  %v2074 = vunpack.c.l.b16 %v824
  %v2075 = vunpack.c.h.b16 %v824
  %v2076 = vunpack.c.l.b16 %v825
  %v2077 = vunpack.c.h.b16 %v825
  %v2078 = vunpack.c.l.b16 %v826
  %v2079 = vunpack.c.h.b16 %v826
  %v2080 = vunpack.c.l.b16 %v827
  %v2081 = vunpack.c.h.b16 %v827
  %v2082 = vunpack.c.l.b16 %v828
  %v2083 = vunpack.c.h.b16 %v828
  %v2084 = vunpack.c.l.b16 %v829
  %v2085 = vunpack.c.h.b16 %v829
  %v2086 = vunpack.c.l.b16 %v830
  %v2087 = vunpack.c.h.b16 %v830
  %v2088 = vunpack.c.l.b16 %v831
  %v2089 = vunpack.c.h.b16 %v831
  %v2090 = vunpack.c.l.b16 %v832
  %v2091 = vunpack.c.h.b16 %v832
  %v2092 = vunpack.c.l.b16 %v833
  %v2093 = vunpack.c.h.b16 %v833
  %v2094 = vunpack.c.l.b16 %v834
  %v2095 = vunpack.c.h.b16 %v834
  %v2096 = vunpack.c.l.b16 %v835
  %v2097 = vunpack.c.h.b16 %v835
  %v2098 = vunpack.c.l.b16 %v836
  %v2099 = vunpack.c.h.b16 %v836
  %v2100 = vunpack.c.l.b16 %v837
  %v2101 = vunpack.c.h.b16 %v837
  %v2102 = vunpack.c.l.b16 %v838
  %v2103 = vunpack.c.h.b16 %v838
  %v2104 = vunpack.c.l.b16 %v839
  %v2105 = vunpack.c.h.b16 %v839
  %v2106 = vunpack.c.l.b16 %v840
  %v2107 = vunpack.c.h.b16 %v840
  %v2108 = vunpack.c.l.b16 %v841
  %v2109 = vunpack.c.h.b16 %v841
  %v2110 = vunpack.c.l.b16 %v842
  %v2111 = vunpack.c.h.b16 %v842
  %v2112 = vunpack.c.l.b16 %v843
  %v2113 = vunpack.c.h.b16 %v843
  %v2114 = vunpack.c.l.b16 %v844
  %v2115 = vunpack.c.h.b16 %v844
  %v2116 = vunpack.c.l.b16 %v845
  %v2117 = vunpack.c.h.b16 %v845
  %v2118 = vunpack.c.l.b16 %v846
  %v2119 = vunpack.c.h.b16 %v846
  %v2120 = vunpack.c.l.b16 %v847
  %v2121 = vunpack.c.h.b16 %v847
  %v2122 = vunpack.c.l.b16 %v848
  %v2123 = vunpack.c.h.b16 %v848
  %v2124 = vunpack.c.l.b16 %v849
  %v2125 = vunpack.c.h.b16 %v849
  %v2126 = vunpack.c.l.b16 %v850
  %v2127 = vunpack.c.h.b16 %v850
  %v2128 = vunpack.c.l.b16 %v851
  %v2129 = vunpack.c.h.b16 %v851
  %v2130 = vunpack.c.l.b16 %v852
  %v2131 = vunpack.c.h.b16 %v852
  %v2132 = vunpack.c.l.b16 %v853
  %v2133 = vunpack.c.h.b16 %v853
  %v2134 = vunpack.c.l.b16 %v854
  %v2135 = vunpack.c.h.b16 %v854
  %v2136 = vunpack.c.l.b16 %v855
  %v2137 = vunpack.c.h.b16 %v855
  %v2138 = vunpack.c.l.b16 %v856
  %v2139 = vunpack.c.h.b16 %v856
  %v2140 = vunpack.c.l.b16 %v857
  %v2141 = vunpack.c.h.b16 %v857
  %v2142 = vunpack.c.l.b16 %v858
  %v2143 = vunpack.c.h.b16 %v858
  %v2144 = vunpack.c.l.b16 %v859
  %v2145 = vunpack.c.h.b16 %v859
  %v2146 = vunpack.c.l.b16 %v860
  %v2147 = vunpack.c.h.b16 %v860
  %v2148 = vunpack.c.l.b16 %v861
  %v2149 = vunpack.c.h.b16 %v861
  %v2150 = vunpack.c.l.b16 %v862
  %v2151 = vunpack.c.h.b16 %v862
  %v2152 = vunpack.c.l.b16 %v863
  %v2153 = vunpack.c.h.b16 %v863
  %v2154 = vunpack.c.l.b16 %v864
  %v2155 = vunpack.c.h.b16 %v864
  %v2156 = vunpack.c.l.b16 %v865
  %v2157 = vunpack.c.h.b16 %v865
  %v2158 = vunpack.c.l.b16 %v866
  %v2159 = vunpack.c.h.b16 %v866
  %v2160 = vunpack.c.l.b16 %v867
  %v2161 = vunpack.c.h.b16 %v867
  %v2162 = vunpack.c.l.b16 %v868
  %v2163 = vunpack.c.h.b16 %v868
  %v2164 = vunpack.c.l.b16 %v869
  %v2165 = vunpack.c.h.b16 %v869
  %v2166 = vunpack.c.l.b16 %v870
  %v2167 = vunpack.c.h.b16 %v870
  %v2168 = vunpack.c.l.b16 %v871
  %v2169 = vunpack.c.h.b16 %v871
  %v2170 = vunpack.c.l.b16 %v872
  %v2171 = vunpack.c.h.b16 %v872
  %v2172 = vunpack.c.l.b16 %v873
  %v2173 = vunpack.c.h.b16 %v873
  %v2174 = vunpack.c.l.b16 %v874
  %v2175 = vunpack.c.h.b16 %v874
  %v2176 = vunpack.c.l.b16 %v875
  %v2177 = vunpack.c.h.b16 %v875
  %v2178 = vunpack.c.l.b16 %v876
  %v2179 = vunpack.c.h.b16 %v876
  %v2180 = vunpack.c.l.b16 %v877
  %v2181 = vunpack.c.h.b16 %v877
  %v2182 = vunpack.c.l.b16 %v878
  %v2183 = vunpack.c.h.b16 %v878
  %v2184 = vunpack.c.l.b16 %v879
  %v2185 = vunpack.c.h.b16 %v879
  %v2186 = vunpack.c.l.b16 %v880
  %v2187 = vunpack.c.h.b16 %v880
  %v2188 = vunpack.c.l.b16 %v881
  %v2189 = vunpack.c.h.b16 %v881
  %v2190 = vunpack.c.l.b16 %v882
  %v2191 = vunpack.c.h.b16 %v882
  %v2192 = vunpack.c.l.b16 %v883
  %v2193 = vunpack.c.h.b16 %v883
  %v2194 = vunpack.c.l.b16 %v884
  %v2195 = vunpack.c.h.b16 %v884
  %v2196 = vunpack.c.l.b16 %v885
  %v2197 = vunpack.c.h.b16 %v885
  %v2198 = vunpack.c.l.b16 %v886
  %v2199 = vunpack.c.h.b16 %v886
  %v2200 = vunpack.c.l.b16 %v887
  %v2201 = vunpack.c.h.b16 %v887
  %v2202 = vunpack.c.l.b16 %v888
  %v2203 = vunpack.c.h.b16 %v888
  %v2204 = vunpack.c.l.b16 %v889
  %v2205 = vunpack.c.h.b16 %v889
  %v2206 = vunpack.c.l.b16 %v890
  %v2207 = vunpack.c.h.b16 %v890
  %v2208 = vunpack.c.l.b16 %v891
  %v2209 = vunpack.c.h.b16 %v891
  %v2210 = vunpack.c.l.b16 %v892
  %v2211 = vunpack.c.h.b16 %v892
  %v2212 = vunpack.c.l.b16 %v893
  %v2213 = vunpack.c.h.b16 %v893
  %v2214 = vunpack.c.l.b16 %v894
  %v2215 = vunpack.c.h.b16 %v894
  %v2216 = vunpack.c.l.b16 %v895
  %v2217 = vunpack.c.h.b16 %v895
  %v2218 = vunpack.c.l.b16 %v896
  %v2219 = vunpack.c.h.b16 %v896
  %v2220 = vunpack.c.l.b16 %v897
  %v2221 = vunpack.c.h.b16 %v897
  %v2222 = vunpack.c.l.b16 %v898
  %v2223 = vunpack.c.h.b16 %v898
  %v2224 = vunpack.c.l.b16 %v899
  %v2225 = vunpack.c.h.b16 %v899
  %v2226 = vunpack.c.l.b16 %v900
  %v2227 = vunpack.c.h.b16 %v900
  %v2228 = vunpack.c.l.b16 %v901
  %v2229 = vunpack.c.h.b16 %v901
  %v2230 = vunpack.c.l.b16 %v902
  %v2231 = vunpack.c.h.b16 %v902
  %v2232 = vunpack.c.l.b16 %v903
  %v2233 = vunpack.c.h.b16 %v903
  %v2234 = vunpack.c.l.b16 %v904
  %v2235 = vunpack.c.h.b16 %v904
  %v2236 = vunpack.c.l.b16 %v905
  %v2237 = vunpack.c.h.b16 %v905
  %v2238 = vunpack.c.l.b16 %v906
  %v2239 = vunpack.c.h.b16 %v906
  %v2240 = vunpack.c.l.b16 %v907
  %v2241 = vunpack.c.h.b16 %v907
  %v2242 = vunpack.c.l.b16 %v908
  %v2243 = vunpack.c.h.b16 %v908
  %v2244 = vunpack.c.l.b16 %v909
  %v2245 = vunpack.c.h.b16 %v909
  %v2246 = vunpack.c.l.b16 %v910
  %v2247 = vunpack.c.h.b16 %v910
  %v2248 = vunpack.c.l.b16 %v911
  %v2249 = vunpack.c.h.b16 %v911
  %v2250 = vunpack.c.l.b16 %v912
  %v2251 = vunpack.c.h.b16 %v912
  %v2252 = vunpack.c.l.b16 %v913
  %v2253 = vunpack.c.h.b16 %v913
  %v2254 = vunpack.c.l.b16 %v914
  %v2255 = vunpack.c.h.b16 %v914
  %v2256 = vunpack.c.l.b16 %v915
  %v2257 = vunpack.c.h.b16 %v915
  %v2258 = vunpack.c.l.b16 %v916
  %v2259 = vunpack.c.h.b16 %v916
  %v2260 = vunpack.c.l.b16 %v917
  %v2261 = vunpack.c.h.b16 %v917
  %v2262 = vunpack.c.l.b16 %v918
  %v2263 = vunpack.c.h.b16 %v918
  %v2264 = vunpack.c.l.b16 %v919
  %v2265 = vunpack.c.h.b16 %v919
  %v2266 = vunpack.c.l.b16 %v920
  %v2267 = vunpack.c.h.b16 %v920
  %v2268 = vunpack.c.l.b16 %v921
  %v2269 = vunpack.c.h.b16 %v921
  %v2270 = vunpack.c.l.b16 %v922
  %v2271 = vunpack.c.h.b16 %v922
  %v2272 = vunpack.c.l.b16 %v923
  %v2273 = vunpack.c.h.b16 %v923
  %v2274 = vunpack.c.l.b16 %v924
  %v2275 = vunpack.c.h.b16 %v924
  %v2276 = vunpack.c.l.b16 %v925
  %v2277 = vunpack.c.h.b16 %v925
  %v2278 = vunpack.c.l.b16 %v926
  %v2279 = vunpack.c.h.b16 %v926
  %v2280 = vunpack.c.l.b16 %v927
  %v2281 = vunpack.c.h.b16 %v927
  %v2282 = vunpack.c.l.b16 %v928
  %v2283 = vunpack.c.h.b16 %v928
  %v2284 = vunpack.c.l.b16 %v929
  %v2285 = vunpack.c.h.b16 %v929
  %v2286 = vunpack.c.l.b16 %v930
  %v2287 = vunpack.c.h.b16 %v930
  %v2288 = vunpack.c.l.b16 %v931
  %v2289 = vunpack.c.h.b16 %v931
  %v2290 = vunpack.c.l.b16 %v932
  %v2291 = vunpack.c.h.b16 %v932
  %v2292 = vunpack.c.l.b16 %v933
  %v2293 = vunpack.c.h.b16 %v933
  %v2294 = vunpack.c.l.b16 %v934
  %v2295 = vunpack.c.h.b16 %v934
  %v2296 = vunpack.c.l.b16 %v935
  %v2297 = vunpack.c.h.b16 %v935
  %v2298 = vunpack.c.l.b16 %v936
  %v2299 = vunpack.c.h.b16 %v936
  %v2300 = vunpack.c.l.b16 %v937
  %v2301 = vunpack.c.h.b16 %v937
  %v2302 = vunpack.c.l.b16 %v938
  %v2303 = vunpack.c.h.b16 %v938
  %v2304 = vunpack.c.l.b16 %v939
  %v2305 = vunpack.c.h.b16 %v939
  %v2306 = vunpack.c.l.b16 %v940
  %v2307 = vunpack.c.h.b16 %v940
  %v2308 = vunpack.c.l.b16 %v941
  %v2309 = vunpack.c.h.b16 %v941
  %v2310 = vunpack.c.l.b16 %v942
  %v2311 = vunpack.c.h.b16 %v942
  %v2312 = vunpack.c.l.b16 %v943
  %v2313 = vunpack.c.h.b16 %v943
  %v2314 = vunpack.c.l.b16 %v944
  %v2315 = vunpack.c.h.b16 %v944
  %v2316 = vunpack.c.l.b16 %v945
  %v2317 = vunpack.c.h.b16 %v945
  %v2318 = vunpack.c.l.b16 %v946
  %v2319 = vunpack.c.h.b16 %v946
  %v2320 = vunpack.c.l.b16 %v947
  %v2321 = vunpack.c.h.b16 %v947
  %v2322 = vunpack.c.l.b16 %v948
  %v2323 = vunpack.c.h.b16 %v948
  %v2324 = vunpack.c.l.b16 %v949
  %v2325 = vunpack.c.h.b16 %v949
  %v2326 = vunpack.c.l.b16 %v950
  %v2327 = vunpack.c.h.b16 %v950
  %v2328 = vunpack.c.l.b16 %v951
  %v2329 = vunpack.c.h.b16 %v951
  %v2330 = vunpack.c.l.b16 %v952
  %v2331 = vunpack.c.h.b16 %v952
  %v2332 = vunpack.c.l.b16 %v953
  %v2333 = vunpack.c.h.b16 %v953
  %v2334 = vunpack.c.l.b16 %v954
  %v2335 = vunpack.c.h.b16 %v954
  %v2336 = vunpack.c.l.b16 %v955
  %v2337 = vunpack.c.h.b16 %v955
  %v2338 = vunpack.c.l.b16 %v956
  %v2339 = vunpack.c.h.b16 %v956
  %v2340 = vunpack.c.l.b16 %v957
  %v2341 = vunpack.c.h.b16 %v957
  %v2342 = vunpack.c.l.b16 %v958
  %v2343 = vunpack.c.h.b16 %v958
  %v2344 = vunpack.c.l.b16 %v959
  %v2345 = vunpack.c.h.b16 %v959
  %v2346 = vunpack.c.l.b16 %v960
  %v2347 = vunpack.c.h.b16 %v960
  %v2348 = vunpack.c.l.b16 %v961
  %v2349 = vunpack.c.h.b16 %v961
  %v2350 = vunpack.c.l.b16 %v962
  %v2351 = vunpack.c.h.b16 %v962
  %v2352 = vunpack.c.l.b16 %v963
  %v2353 = vunpack.c.h.b16 %v963
  %v2354 = vunpack.c.l.b16 %v964
  %v2355 = vunpack.c.h.b16 %v964
  %v2356 = vunpack.c.l.b16 %v965
  %v2357 = vunpack.c.h.b16 %v965
  %v2358 = vunpack.c.l.b16 %v966
  %v2359 = vunpack.c.h.b16 %v966
  %v2360 = vunpack.c.l.b16 %v967
  %v2361 = vunpack.c.h.b16 %v967
  %v2362 = vunpack.c.l.b16 %v968
  %v2363 = vunpack.c.h.b16 %v968
  %v2364 = vunpack.c.l.b16 %v969
  %v2365 = vunpack.c.h.b16 %v969
  %v2366 = vunpack.c.l.b16 %v970
  %v2367 = vunpack.c.h.b16 %v970
  %v2368 = vunpack.c.l.b16 %v971
  %v2369 = vunpack.c.h.b16 %v971
  %v2370 = vunpack.c.l.b16 %v972
  %v2371 = vunpack.c.h.b16 %v972
  %v2372 = vunpack.c.l.b16 %v973
  %v2373 = vunpack.c.h.b16 %v973
  %v2374 = vunpack.c.l.b16 %v974
  %v2375 = vunpack.c.h.b16 %v974
  %v2376 = vunpack.c.l.b16 %v975
  %v2377 = vunpack.c.h.b16 %v975
  %v2378 = vunpack.c.l.b16 %v976
  %v2379 = vunpack.c.h.b16 %v976
  %v2380 = vunpack.c.l.b16 %v977
  %v2381 = vunpack.c.h.b16 %v977
  %v2382 = vunpack.c.l.b16 %v978
  %v2383 = vunpack.c.h.b16 %v978
  %v2384 = vunpack.c.l.b16 %v979
  %v2385 = vunpack.c.h.b16 %v979
  %v2386 = vunpack.c.l.b16 %v980
  %v2387 = vunpack.c.h.b16 %v980
  %v2388 = vunpack.c.l.b16 %v981
  %v2389 = vunpack.c.h.b16 %v981
  %v2390 = vunpack.c.l.b16 %v982
  %v2391 = vunpack.c.h.b16 %v982
  %v2392 = vunpack.c.l.b16 %v983
  %v2393 = vunpack.c.h.b16 %v983
  %v2394 = vunpack.c.l.b16 %v984
  %v2395 = vunpack.c.h.b16 %v984
  %v2396 = vunpack.c.l.b16 %v985
  %v2397 = vunpack.c.h.b16 %v985
  %v2398 = vunpack.c.l.b16 %v986
  %v2399 = vunpack.c.h.b16 %v986
  %v2400 = vunpack.c.l.b16 %v987
  %v2401 = vunpack.c.h.b16 %v987
  %v2402 = vunpack.c.l.b16 %v988
  %v2403 = vunpack.c.h.b16 %v988
  %v2404 = vunpack.c.l.b16 %v989
  %v2405 = vunpack.c.h.b16 %v989
  %v2406 = vunpack.c.l.b16 %v990
  %v2407 = vunpack.c.h.b16 %v990
  %v2408 = vunpack.c.l.b16 %v991
  %v2409 = vunpack.c.h.b16 %v991
  %v2410 = vunpack.c.l.b16 %v992
  %v2411 = vunpack.c.h.b16 %v992
  %v2412 = vunpack.c.l.b16 %v993
  %v2413 = vunpack.c.h.b16 %v993
  %v2414 = vunpack.c.l.b16 %v994
  %v2415 = vunpack.c.h.b16 %v994
  %v2416 = vunpack.c.l.b16 %v995
  %v2417 = vunpack.c.h.b16 %v995
  %v2418 = vunpack.c.l.b16 %v996
  %v2419 = vunpack.c.h.b16 %v996
  %v2420 = vunpack.c.l.b16 %v997
  %v2421 = vunpack.c.h.b16 %v997
  %v2422 = vunpack.c.l.b16 %v998
  %v2423 = vunpack.c.h.b16 %v998
  %v2424 = vunpack.c.l.b16 %v999
  %v2425 = vunpack.c.h.b16 %v999
  %v2426 = vunpack.c.l.b16 %v1000
  %v2427 = vunpack.c.h.b16 %v1000
  %v2428 = vunpack.c.l.b16 %v1001
  %v2429 = vunpack.c.h.b16 %v1001
  %v2430 = vunpack.c.l.b16 %v1002
  %v2431 = vunpack.c.h.b16 %v1002
  %v2432 = vunpack.c.l.b16 %v1003
  %v2433 = vunpack.c.h.b16 %v1003
  %v2434 = vunpack.c.l.b16 %v1004
  %v2435 = vunpack.c.h.b16 %v1004
  %v2436 = vunpack.c.l.b16 %v1005
  %v2437 = vunpack.c.h.b16 %v1005
  %v2438 = vunpack.c.l.b16 %v1006
  %v2439 = vunpack.c.h.b16 %v1006
  %v2440 = vunpack.c.l.b16 %v1007
  %v2441 = vunpack.c.h.b16 %v1007
  %v2442 = vunpack.c.l.b16 %v1008
  %v2443 = vunpack.c.h.b16 %v1008
  %v2444 = vunpack.c.l.b16 %v1009
  %v2445 = vunpack.c.h.b16 %v1009
  %v2446 = vunpack.c.l.b16 %v1010
  %v2447 = vunpack.c.h.b16 %v1010
  %v2448 = vunpack.c.l.b16 %v1011
  %v2449 = vunpack.c.h.b16 %v1011
  %v2450 = vunpack.c.l.b16 %v1012
  %v2451 = vunpack.c.h.b16 %v1012
  %v2452 = vunpack.c.l.b16 %v1013
  %v2453 = vunpack.c.h.b16 %v1013
  %v2454 = vunpack.c.l.b16 %v1014
  %v2455 = vunpack.c.h.b16 %v1014
  %v2456 = vunpack.c.l.b16 %v1015
  %v2457 = vunpack.c.h.b16 %v1015
  %v2458 = vunpack.c.l.b16 %v1016
  %v2459 = vunpack.c.h.b16 %v1016
  %v2460 = vunpack.c.l.b16 %v1017
  %v2461 = vunpack.c.h.b16 %v1017
  %v2462 = vunpack.c.l.b16 %v1018
  %v2463 = vunpack.c.h.b16 %v1018
  %v2464 = vunpack.c.l.b16 %v1019
  %v2465 = vunpack.c.h.b16 %v1019
  %v2466 = vunpack.c.l.b16 %v1020
  %v2467 = vunpack.c.h.b16 %v1020
  %v2468 = vunpack.c.l.b16 %v1021
  %v2469 = vunpack.c.h.b16 %v1021
  %v2470 = vunpack.c.l.b16 %v1022
  %v2471 = vunpack.c.h.b16 %v1022
  %v2472 = vunpack.c.l.b16 %v1023
  %v2473 = vunpack.c.h.b16 %v1023
  %v2474 = vunpack.c.l.b16 %v1024
  %v2475 = vunpack.c.h.b16 %v1024
  %v2476 = vunpack.c.l.b16 %v1025
  %v2477 = vunpack.c.h.b16 %v1025
  %v2478 = vunpack.c.l.b16 %v1026
  %v2479 = vunpack.c.h.b16 %v1026
  %v2480 = vunpack.c.l.b16 %v1027
  %v2481 = vunpack.c.h.b16 %v1027
  %v2482 = vunpack.c.l.b16 %v1028
  %v2483 = vunpack.c.h.b16 %v1028
  %v2484 = vunpack.c.l.b16 %v1029
  %v2485 = vunpack.c.h.b16 %v1029
  %v2486 = vunpack.c.l.b16 %v1030
  %v2487 = vunpack.c.h.b16 %v1030
  %v2488 = vunpack.c.l.b16 %v1031
  %v2489 = vunpack.c.h.b16 %v1031
  %v2490 = vunpack.c.l.b16 %v1032
  %v2491 = vunpack.c.h.b16 %v1032
  %v2492 = vunpack.c.l.b16 %v1033
  %v2493 = vunpack.c.h.b16 %v1033
  %v2494 = vunpack.c.l.b16 %v1034
  %v2495 = vunpack.c.h.b16 %v1034
  %v2496 = vunpack.c.l.b16 %v1035
  %v2497 = vunpack.c.h.b16 %v1035
  %v2498 = vunpack.c.l.b16 %v1036
  %v2499 = vunpack.c.h.b16 %v1036
  %v2500 = vunpack.c.l.b16 %v1037
  %v2501 = vunpack.c.h.b16 %v1037
  %v2502 = vunpack.c.l.b16 %v1038
  %v2503 = vunpack.c.h.b16 %v1038
  %v2504 = vunpack.c.l.b16 %v1039
  %v2505 = vunpack.c.h.b16 %v1039
  %v2506 = vunpack.c.l.b16 %v1040
  %v2507 = vunpack.c.h.b16 %v1040
  %v2508 = vunpack.c.l.b16 %v1041
  %v2509 = vunpack.c.h.b16 %v1041
  %v2510 = vunpack.c.l.b16 %v1042
  %v2511 = vunpack.c.h.b16 %v1042
  %v2512 = vunpack.c.l.b16 %v1043
  %v2513 = vunpack.c.h.b16 %v1043
  %v2514 = vunpack.c.l.b16 %v1044
  %v2515 = vunpack.c.h.b16 %v1044
  %v2516 = vunpack.c.l.b16 %v1045
  %v2517 = vunpack.c.h.b16 %v1045
  %v2518 = vunpack.c.l.b16 %v1046
  %v2519 = vunpack.c.h.b16 %v1046
  %v2520 = vunpack.c.l.b16 %v1047
  %v2521 = vunpack.c.h.b16 %v1047
  %v2522 = vunpack.c.l.b16 %v1048
  %v2523 = vunpack.c.h.b16 %v1048
  %v2524 = vunpack.c.l.b16 %v1049
  %v2525 = vunpack.c.h.b16 %v1049
  %v2526 = vunpack.c.l.b16 %v1050
  %v2527 = vunpack.c.h.b16 %v1050
  %v2528 = vunpack.c.l.b16 %v1051
  %v2529 = vunpack.c.h.b16 %v1051
  %v2530 = vunpack.c.l.b16 %v1052
  %v2531 = vunpack.c.h.b16 %v1052
  %v2532 = vunpack.c.l.b16 %v1053
  %v2533 = vunpack.c.h.b16 %v1053
  %v2534 = vunpack.c.l.b16 %v1054
  %v2535 = vunpack.c.h.b16 %v1054
  %v2536 = vunpack.c.l.b16 %v1055
  %v2537 = vunpack.c.h.b16 %v1055
  %v2538 = vunpack.c.l.b16 %v1056
  %v2539 = vunpack.c.h.b16 %v1056
  %v2540 = vunpack.c.l.b16 %v1057
  %v2541 = vunpack.c.h.b16 %v1057
  %v2542 = vunpack.c.l.b16 %v1058
  %v2543 = vunpack.c.h.b16 %v1058
  %v2544 = vunpack.c.l.b16 %v1059
  %v2545 = vunpack.c.h.b16 %v1059
  %v2546 = vunpack.c.l.b16 %v1060
  %v2547 = vunpack.c.h.b16 %v1060
  %v2548 = vunpack.c.l.b16 %v1061
  %v2549 = vunpack.c.h.b16 %v1061
  %v2550 = vunpack.c.l.b16 %v1062
  %v2551 = vunpack.c.h.b16 %v1062
  %v2552 = vunpack.c.l.b16 %v1063
  %v2553 = vunpack.c.h.b16 %v1063
  %v2554 = vunpack.c.l.b16 %v1064
  %v2555 = vunpack.c.h.b16 %v1064
  %v2556 = vunpack.c.l.b16 %v1065
  %v2557 = vunpack.c.h.b16 %v1065
  %v2558 = vunpack.c.l.b16 %v1066
  %v2559 = vunpack.c.h.b16 %v1066
  %v2560 = vunpack.c.l.b16 %v1067
  %v2561 = vunpack.c.h.b16 %v1067
  %v2562 = vunpack.c.l.b16 %v1068
  %v2563 = vunpack.c.h.b16 %v1068
  %v2564 = vunpack.c.l.b16 %v1069
  %v2565 = vunpack.c.h.b16 %v1069
  %v2566 = vunpack.c.l.b16 %v1070
  %v2567 = vunpack.c.h.b16 %v1070
  %v2568 = vunpack.c.l.b16 %v1071
  %v2569 = vunpack.c.h.b16 %v1071
  %v2570 = vunpack.c.l.b16 %v1072
  %v2571 = vunpack.c.h.b16 %v1072
  %v2572 = vunpack.c.l.b16 %v1073
  %v2573 = vunpack.c.h.b16 %v1073
  %v2574 = vunpack.c.l.b16 %v1074
  %v2575 = vunpack.c.h.b16 %v1074
  %v2576 = vunpack.c.l.b16 %v1075
  %v2577 = vunpack.c.h.b16 %v1075
  %v2578 = vunpack.c.l.b16 %v1076
  %v2579 = vunpack.c.h.b16 %v1076
  %v2580 = vunpack.c.l.b16 %v1077
  %v2581 = vunpack.c.h.b16 %v1077
  %v2582 = vunpack.c.l.b16 %v1078
  %v2583 = vunpack.c.h.b16 %v1078
  %v2584 = vunpack.c.l.b16 %v1079
  %v2585 = vunpack.c.h.b16 %v1079
  %v2586 = vunpack.c.l.b16 %v1080
  %v2587 = vunpack.c.h.b16 %v1080
  %v2588 = vunpack.c.l.b16 %v1081
  %v2589 = vunpack.c.h.b16 %v1081
  %v2590 = vunpack.c.l.b16 %v1082
  %v2591 = vunpack.c.h.b16 %v1082
  %v2592 = vunpack.c.l.b16 %v1083
  %v2593 = vunpack.c.h.b16 %v1083
  %v2594 = vunpack.c.l.b16 %v1084
  %v2595 = vunpack.c.h.b16 %v1084
  %v2596 = vunpack.c.l.b16 %v1085
  %v2597 = vunpack.c.h.b16 %v1085
  %v2598 = vunpack.c.l.b16 %v1086
  %v2599 = vunpack.c.h.b16 %v1086
  %v2600 = vunpack.c.l.b16 %v1087
  %v2601 = vunpack.c.h.b16 %v1087
  %v2602 = vunpack.c.l.b16 %v1088
  %v2603 = vunpack.c.h.b16 %v1088
  %v2604 = vunpack.c.l.b16 %v1089
  %v2605 = vunpack.c.h.b16 %v1089
  %v2606 = vunpack.c.l.b16 %v1090
  %v2607 = vunpack.c.h.b16 %v1090
  %v2608 = vunpack.c.l.b16 %v1091
  %v2609 = vunpack.c.h.b16 %v1091
  %v2610 = vunpack.c.l.b16 %v1092
  %v2611 = vunpack.c.h.b16 %v1092
  %v2612 = vunpack.c.l.b16 %v1093
  %v2613 = vunpack.c.h.b16 %v1093
  %v2614 = vunpack.c.l.b16 %v1094
  %v2615 = vunpack.c.h.b16 %v1094
  %v2616 = vunpack.c.l.b16 %v1095
  %v2617 = vunpack.c.h.b16 %v1095
  %v2618 = vunpack.c.l.b16 %v1096
  %v2619 = vunpack.c.h.b16 %v1096
  %v2620 = vunpack.c.l.b16 %v1097
  %v2621 = vunpack.c.h.b16 %v1097
  %v2622 = vunpack.c.l.b16 %v1098
  %v2623 = vunpack.c.h.b16 %v1098
  %v2624 = vunpack.c.l.b16 %v1099
  %v2625 = vunpack.c.h.b16 %v1099
  %v2626 = vunpack.c.l.b16 %v1100
  %v2627 = vunpack.c.h.b16 %v1100
  %v2628 = vunpack.c.l.b16 %v1101
  %v2629 = vunpack.c.h.b16 %v1101
  %v2630 = vunpack.c.l.b16 %v1102
  %v2631 = vunpack.c.h.b16 %v1102
  %v2632 = vunpack.c.l.b16 %v1103
  %v2633 = vunpack.c.h.b16 %v1103
  %v2634 = vunpack.c.l.b16 %v1104
  %v2635 = vunpack.c.h.b16 %v1104
  %v2636 = vunpack.c.l.b16 %v1105
  %v2637 = vunpack.c.h.b16 %v1105
  %v2638 = vunpack.c.l.b16 %v1106
  %v2639 = vunpack.c.h.b16 %v1106
  %v2640 = vunpack.c.l.b16 %v1107
  %v2641 = vunpack.c.h.b16 %v1107
  %v2642 = vunpack.c.l.b16 %v1108
  %v2643 = vunpack.c.h.b16 %v1108
  %v2644 = vunpack.c.l.b16 %v1109
  %v2645 = vunpack.c.h.b16 %v1109
  %v2646 = vunpack.c.l.b16 %v1110
  %v2647 = vunpack.c.h.b16 %v1110
  %v2648 = vunpack.c.l.b16 %v1111
  %v2649 = vunpack.c.h.b16 %v1111
  %v2650 = vunpack.c.l.b16 %v1112
  %v2651 = vunpack.c.h.b16 %v1112
  %v2652 = vunpack.c.l.b16 %v1113
  %v2653 = vunpack.c.h.b16 %v1113
  %v2654 = vunpack.c.l.b16 %v1114
  %v2655 = vunpack.c.h.b16 %v1114
  %v2656 = vunpack.c.l.b16 %v1115
  %v2657 = vunpack.c.h.b16 %v1115
  %v2658 = vunpack.c.l.b16 %v1116
  %v2659 = vunpack.c.h.b16 %v1116
  %v2660 = vunpack.c.l.b16 %v1117
  %v2661 = vunpack.c.h.b16 %v1117
  %v2662 = vunpack.c.l.b16 %v1118
  %v2663 = vunpack.c.h.b16 %v1118
  %v2664 = vunpack.c.l.b16 %v1119
  %v2665 = vunpack.c.h.b16 %v1119
  %v2666 = vunpack.c.l.b16 %v1120
  %v2667 = vunpack.c.h.b16 %v1120
  %v2668 = vunpack.c.l.b16 %v1121
  %v2669 = vunpack.c.h.b16 %v1121
  %v2670 = vunpack.c.l.b16 %v1122
  %v2671 = vunpack.c.h.b16 %v1122
  %v2672 = vunpack.c.l.b16 %v1123
  %v2673 = vunpack.c.h.b16 %v1123
  %v2674 = vunpack.c.l.b16 %v1124
  %v2675 = vunpack.c.h.b16 %v1124
  %v2676 = vunpack.c.l.b16 %v1125
  %v2677 = vunpack.c.h.b16 %v1125
  %v2678 = vunpack.c.l.b16 %v1126
  %v2679 = vunpack.c.h.b16 %v1126
  %v2680 = vunpack.c.l.b16 %v1127
  %v2681 = vunpack.c.h.b16 %v1127
  %v2682 = vunpack.c.l.b16 %v1128
  %v2683 = vunpack.c.h.b16 %v1128
  %v2684 = vunpack.c.l.b16 %v1129
  %v2685 = vunpack.c.h.b16 %v1129
  %v2686 = vunpack.c.l.b16 %v1130
  %v2687 = vunpack.c.h.b16 %v1130
  %v2688 = vunpack.c.l.b16 %v1131
  %v2689 = vunpack.c.h.b16 %v1131
  %v2690 = vunpack.c.l.b16 %v1132
  %v2691 = vunpack.c.h.b16 %v1132
  %v2692 = vunpack.c.l.b16 %v1133
  %v2693 = vunpack.c.h.b16 %v1133
  %v2694 = vunpack.c.l.b16 %v1134
  %v2695 = vunpack.c.h.b16 %v1134
  %v2696 = vunpack.c.l.b16 %v1135
  %v2697 = vunpack.c.h.b16 %v1135
  %v2698 = vunpack.c.l.b16 %v1136
  %v2699 = vunpack.c.h.b16 %v1136
  %v2700 = vunpack.c.l.b16 %v1137
  %v2701 = vunpack.c.h.b16 %v1137
  %v2702 = vunpack.c.l.b16 %v1138
  %v2703 = vunpack.c.h.b16 %v1138
  %v2704 = vunpack.c.l.b16 %v1139
  %v2705 = vunpack.c.h.b16 %v1139
  %v2706 = vunpack.c.l.b16 %v1140
  %v2707 = vunpack.c.h.b16 %v1140
  %v2708 = vunpack.c.l.b16 %v1141
  %v2709 = vunpack.c.h.b16 %v1141
  %v2710 = vunpack.c.l.b16 %v1142
  %v2711 = vunpack.c.h.b16 %v1142
  %v2712 = vunpack.c.l.b16 %v1143
  %v2713 = vunpack.c.h.b16 %v1143
  %v2714 = vunpack.c.l.b16 %v1144
  %v2715 = vunpack.c.h.b16 %v1144
  %v2716 = vunpack.c.l.b16 %v1145
  %v2717 = vunpack.c.h.b16 %v1145
  %v2718 = vunpack.c.l.b16 %v1146
  %v2719 = vunpack.c.h.b16 %v1146
  %v2720 = vunpack.c.l.b16 %v1147
  %v2721 = vunpack.c.h.b16 %v1147
  %v2722 = vunpack.c.l.b16 %v1148
  %v2723 = vunpack.c.h.b16 %v1148
  %v2724 = vunpack.c.l.b16 %v1149
  %v2725 = vunpack.c.h.b16 %v1149
  %v2726 = vunpack.c.l.b16 %v1150
  %v2727 = vunpack.c.h.b16 %v1150
  %v2728 = vunpack.c.l.b16 %v1151
  %v2729 = vunpack.c.h.b16 %v1151
  %v2730 = vpack.c.b16 %v1714, %v1706
  %v2731 = vpack.c.b16 %v1715, %v1707
  %v2732 = vpack.c.b16 %v1716, %v1708
  %v2733 = vpack.c.b16 %v1717, %v1709
  %v2734 = vpack.c.b16 %v1718, %v1710
  %v2735 = vpack.c.b16 %v1719, %v1711
  %v2736 = vpack.c.b16 %v1720, %v1712
  %v2737 = vpack.c.b16 %v1721, %v1713
  %v2738 = vpack.c.b16 %v1730, %v1722
  %v2739 = vpack.c.b16 %v1731, %v1723
  %v2740 = vpack.c.b16 %v1732, %v1724
  %v2741 = vpack.c.b16 %v1733, %v1725
  %v2742 = vpack.c.b16 %v1734, %v1726
  %v2743 = vpack.c.b16 %v1735, %v1727
  %v2744 = vpack.c.b16 %v1736, %v1728
  %v2745 = vpack.c.b16 %v1737, %v1729
  %v2746 = vpack.c.b16 %v1746, %v1738
  %v2747 = vpack.c.b16 %v1747, %v1739
  %v2748 = vpack.c.b16 %v1748, %v1740
  %v2749 = vpack.c.b16 %v1749, %v1741
  %v2750 = vpack.c.b16 %v1750, %v1742
  %v2751 = vpack.c.b16 %v1751, %v1743
  %v2752 = vpack.c.b16 %v1752, %v1744
  %v2753 = vpack.c.b16 %v1753, %v1745
  %v2754 = vpack.c.b16 %v1762, %v1754
  %v2755 = vpack.c.b16 %v1763, %v1755
  %v2756 = vpack.c.b16 %v1764, %v1756
  %v2757 = vpack.c.b16 %v1765, %v1757
  %v2758 = vpack.c.b16 %v1766, %v1758
  %v2759 = vpack.c.b16 %v1767, %v1759
  %v2760 = vpack.c.b16 %v1768, %v1760
  %v2761 = vpack.c.b16 %v1769, %v1761
  %v2762 = vpack.c.b16 %v1778, %v1770
  %v2763 = vpack.c.b16 %v1779, %v1771
  %v2764 = vpack.c.b16 %v1780, %v1772
  %v2765 = vpack.c.b16 %v1781, %v1773
  %v2766 = vpack.c.b16 %v1782, %v1774
  %v2767 = vpack.c.b16 %v1783, %v1775
  %v2768 = vpack.c.b16 %v1784, %v1776
  %v2769 = vpack.c.b16 %v1785, %v1777
  %v2770 = vpack.c.b16 %v1794, %v1786
  %v2771 = vpack.c.b16 %v1795, %v1787
  %v2772 = vpack.c.b16 %v1796, %v1788
  %v2773 = vpack.c.b16 %v1797, %v1789
  %v2774 = vpack.c.b16 %v1798, %v1790
  %v2775 = vpack.c.b16 %v1799, %v1791
  %v2776 = vpack.c.b16 %v1800, %v1792
  %v2777 = vpack.c.b16 %v1801, %v1793
  %v2778 = vpack.c.b16 %v1810, %v1802
  %v2779 = vpack.c.b16 %v1811, %v1803
  %v2780 = vpack.c.b16 %v1812, %v1804
  %v2781 = vpack.c.b16 %v1813, %v1805
  %v2782 = vpack.c.b16 %v1814, %v1806
  %v2783 = vpack.c.b16 %v1815, %v1807
  %v2784 = vpack.c.b16 %v1816, %v1808
  %v2785 = vpack.c.b16 %v1817, %v1809
  %v2786 = vpack.c.b16 %v1826, %v1818
  %v2787 = vpack.c.b16 %v1827, %v1819
  %v2788 = vpack.c.b16 %v1828, %v1820
  %v2789 = vpack.c.b16 %v1829, %v1821
  %v2790 = vpack.c.b16 %v1830, %v1822
  %v2791 = vpack.c.b16 %v1831, %v1823
  %v2792 = vpack.c.b16 %v1832, %v1824
  %v2793 = vpack.c.b16 %v1833, %v1825
  %v2794 = vpack.c.b16 %v1842, %v1834
  %v2795 = vpack.c.b16 %v1843, %v1835
  %v2796 = vpack.c.b16 %v1844, %v1836
  %v2797 = vpack.c.b16 %v1845, %v1837
  %v2798 = vpack.c.b16 %v1846, %v1838
  %v2799 = vpack.c.b16 %v1847, %v1839
  %v2800 = vpack.c.b16 %v1848, %v1840
  %v2801 = vpack.c.b16 %v1849, %v1841
  %v2802 = vpack.c.b16 %v1858, %v1850
  %v2803 = vpack.c.b16 %v1859, %v1851
  %v2804 = vpack.c.b16 %v1860, %v1852
  %v2805 = vpack.c.b16 %v1861, %v1853
  %v2806 = vpack.c.b16 %v1862, %v1854
  %v2807 = vpack.c.b16 %v1863, %v1855
  %v2808 = vpack.c.b16 %v1864, %v1856
  %v2809 = vpack.c.b16 %v1865, %v1857
  %v2810 = vpack.c.b16 %v1874, %v1866
  %v2811 = vpack.c.b16 %v1875, %v1867
  %v2812 = vpack.c.b16 %v1876, %v1868
  %v2813 = vpack.c.b16 %v1877, %v1869
  %v2814 = vpack.c.b16 %v1878, %v1870
  %v2815 = vpack.c.b16 %v1879, %v1871
  %v2816 = vpack.c.b16 %v1880, %v1872
  %v2817 = vpack.c.b16 %v1881, %v1873
  %v2818 = vpack.c.b16 %v1890, %v1882
  %v2819 = vpack.c.b16 %v1891, %v1883
  %v2820 = vpack.c.b16 %v1892, %v1884
  %v2821 = vpack.c.b16 %v1893, %v1885
  %v2822 = vpack.c.b16 %v1894, %v1886
  %v2823 = vpack.c.b16 %v1895, %v1887
  %v2824 = vpack.c.b16 %v1896, %v1888
  %v2825 = vpack.c.b16 %v1897, %v1889
  %v2826 = vpack.c.b16 %v1906, %v1898
  %v2827 = vpack.c.b16 %v1907, %v1899
  %v2828 = vpack.c.b16 %v1908, %v1900
  %v2829 = vpack.c.b16 %v1909, %v1901
  %v2830 = vpack.c.b16 %v1910, %v1902
  %v2831 = vpack.c.b16 %v1911, %v1903
  %v2832 = vpack.c.b16 %v1912, %v1904
  %v2833 = vpack.c.b16 %v1913, %v1905
  %v2834 = vpack.c.b16 %v1922, %v1914
  %v2835 = vpack.c.b16 %v1923, %v1915
  %v2836 = vpack.c.b16 %v1924, %v1916
  %v2837 = vpack.c.b16 %v1925, %v1917
  %v2838 = vpack.c.b16 %v1926, %v1918
  %v2839 = vpack.c.b16 %v1927, %v1919
  %v2840 = vpack.c.b16 %v1928, %v1920
  %v2841 = vpack.c.b16 %v1929, %v1921
  %v2842 = vpack.c.b16 %v1938, %v1930
  %v2843 = vpack.c.b16 %v1939, %v1931
  %v2844 = vpack.c.b16 %v1940, %v1932
  %v2845 = vpack.c.b16 %v1941, %v1933
  %v2846 = vpack.c.b16 %v1942, %v1934
  %v2847 = vpack.c.b16 %v1943, %v1935
  %v2848 = vpack.c.b16 %v1944, %v1936
  %v2849 = vpack.c.b16 %v1945, %v1937
  %v2850 = vpack.c.b16 %v1954, %v1946
  %v2851 = vpack.c.b16 %v1955, %v1947
  %v2852 = vpack.c.b16 %v1956, %v1948
  %v2853 = vpack.c.b16 %v1957, %v1949
  %v2854 = vpack.c.b16 %v1958, %v1950
  %v2855 = vpack.c.b16 %v1959, %v1951
  %v2856 = vpack.c.b16 %v1960, %v1952
  %v2857 = vpack.c.b16 %v1961, %v1953
  %v2858 = vpack.c.b16 %v1970, %v1962
  %v2859 = vpack.c.b16 %v1971, %v1963
  %v2860 = vpack.c.b16 %v1972, %v1964
  %v2861 = vpack.c.b16 %v1973, %v1965
  %v2862 = vpack.c.b16 %v1974, %v1966
  %v2863 = vpack.c.b16 %v1975, %v1967
  %v2864 = vpack.c.b16 %v1976, %v1968
  %v2865 = vpack.c.b16 %v1977, %v1969
  %v2866 = vpack.c.b16 %v1986, %v1978
  %v2867 = vpack.c.b16 %v1987, %v1979
  %v2868 = vpack.c.b16 %v1988, %v1980
  %v2869 = vpack.c.b16 %v1989, %v1981
  %v2870 = vpack.c.b16 %v1990, %v1982
  %v2871 = vpack.c.b16 %v1991, %v1983
  %v2872 = vpack.c.b16 %v1992, %v1984
  %v2873 = vpack.c.b16 %v1993, %v1985
  %v2874 = vpack.c.b16 %v2002, %v1994
  %v2875 = vpack.c.b16 %v2003, %v1995
  %v2876 = vpack.c.b16 %v2004, %v1996
  %v2877 = vpack.c.b16 %v2005, %v1997
  %v2878 = vpack.c.b16 %v2006, %v1998
  %v2879 = vpack.c.b16 %v2007, %v1999
  %v2880 = vpack.c.b16 %v2008, %v2000
  %v2881 = vpack.c.b16 %v2009, %v2001
  %v2882 = vpack.c.b16 %v2018, %v2010
  %v2883 = vpack.c.b16 %v2019, %v2011
  %v2884 = vpack.c.b16 %v2020, %v2012
  %v2885 = vpack.c.b16 %v2021, %v2013
  %v2886 = vpack.c.b16 %v2022, %v2014
  %v2887 = vpack.c.b16 %v2023, %v2015
  %v2888 = vpack.c.b16 %v2024, %v2016
  %v2889 = vpack.c.b16 %v2025, %v2017
  %v2890 = vpack.c.b16 %v2034, %v2026
  %v2891 = vpack.c.b16 %v2035, %v2027
  %v2892 = vpack.c.b16 %v2036, %v2028
  %v2893 = vpack.c.b16 %v2037, %v2029
  %v2894 = vpack.c.b16 %v2038, %v2030
  %v2895 = vpack.c.b16 %v2039, %v2031
  %v2896 = vpack.c.b16 %v2040, %v2032
  %v2897 = vpack.c.b16 %v2041, %v2033
  %v2898 = vpack.c.b16 %v2050, %v2042
  %v2899 = vpack.c.b16 %v2051, %v2043
  %v2900 = vpack.c.b16 %v2052, %v2044
  %v2901 = vpack.c.b16 %v2053, %v2045
  %v2902 = vpack.c.b16 %v2054, %v2046
  %v2903 = vpack.c.b16 %v2055, %v2047
  %v2904 = vpack.c.b16 %v2056, %v2048
  %v2905 = vpack.c.b16 %v2057, %v2049
  %v2906 = vpack.c.b16 %v2066, %v2058
  %v2907 = vpack.c.b16 %v2067, %v2059
  %v2908 = vpack.c.b16 %v2068, %v2060
  %v2909 = vpack.c.b16 %v2069, %v2061
  %v2910 = vpack.c.b16 %v2070, %v2062
  %v2911 = vpack.c.b16 %v2071, %v2063
  %v2912 = vpack.c.b16 %v2072, %v2064
  %v2913 = vpack.c.b16 %v2073, %v2065
  %v2914 = vpack.c.b16 %v2082, %v2074
  %v2915 = vpack.c.b16 %v2083, %v2075
  %v2916 = vpack.c.b16 %v2084, %v2076
  %v2917 = vpack.c.b16 %v2085, %v2077
  %v2918 = vpack.c.b16 %v2086, %v2078
  %v2919 = vpack.c.b16 %v2087, %v2079
  %v2920 = vpack.c.b16 %v2088, %v2080
  %v2921 = vpack.c.b16 %v2089, %v2081
  %v2922 = vpack.c.b16 %v2098, %v2090
  %v2923 = vpack.c.b16 %v2099, %v2091
  %v2924 = vpack.c.b16 %v2100, %v2092
  %v2925 = vpack.c.b16 %v2101, %v2093
  %v2926 = vpack.c.b16 %v2102, %v2094
  %v2927 = vpack.c.b16 %v2103, %v2095
  %v2928 = vpack.c.b16 %v2104, %v2096
  %v2929 = vpack.c.b16 %v2105, %v2097
  %v2930 = vpack.c.b16 %v2114, %v2106
  %v2931 = vpack.c.b16 %v2115, %v2107
  %v2932 = vpack.c.b16 %v2116, %v2108
  %v2933 = vpack.c.b16 %v2117, %v2109
  %v2934 = vpack.c.b16 %v2118, %v2110
  %v2935 = vpack.c.b16 %v2119, %v2111
  %v2936 = vpack.c.b16 %v2120, %v2112
  %v2937 = vpack.c.b16 %v2121, %v2113
  %v2938 = vpack.c.b16 %v2130, %v2122
  %v2939 = vpack.c.b16 %v2131, %v2123
  %v2940 = vpack.c.b16 %v2132, %v2124
  %v2941 = vpack.c.b16 %v2133, %v2125
  %v2942 = vpack.c.b16 %v2134, %v2126
  %v2943 = vpack.c.b16 %v2135, %v2127
  %v2944 = vpack.c.b16 %v2136, %v2128
  %v2945 = vpack.c.b16 %v2137, %v2129
  %v2946 = vpack.c.b16 %v2146, %v2138
  %v2947 = vpack.c.b16 %v2147, %v2139
  %v2948 = vpack.c.b16 %v2148, %v2140
  %v2949 = vpack.c.b16 %v2149, %v2141
  %v2950 = vpack.c.b16 %v2150, %v2142
  %v2951 = vpack.c.b16 %v2151, %v2143
  %v2952 = vpack.c.b16 %v2152, %v2144
  %v2953 = vpack.c.b16 %v2153, %v2145
  %v2954 = vpack.c.b16 %v2162, %v2154
  %v2955 = vpack.c.b16 %v2163, %v2155
  %v2956 = vpack.c.b16 %v2164, %v2156
  %v2957 = vpack.c.b16 %v2165, %v2157
  %v2958 = vpack.c.b16 %v2166, %v2158
  %v2959 = vpack.c.b16 %v2167, %v2159
  %v2960 = vpack.c.b16 %v2168, %v2160
  %v2961 = vpack.c.b16 %v2169, %v2161
  %v2962 = vpack.c.b16 %v2178, %v2170
  %v2963 = vpack.c.b16 %v2179, %v2171
  %v2964 = vpack.c.b16 %v2180, %v2172
  %v2965 = vpack.c.b16 %v2181, %v2173
  %v2966 = vpack.c.b16 %v2182, %v2174
  %v2967 = vpack.c.b16 %v2183, %v2175
  %v2968 = vpack.c.b16 %v2184, %v2176
  %v2969 = vpack.c.b16 %v2185, %v2177
  %v2970 = vpack.c.b16 %v2194, %v2186
  %v2971 = vpack.c.b16 %v2195, %v2187
  %v2972 = vpack.c.b16 %v2196, %v2188
  %v2973 = vpack.c.b16 %v2197, %v2189
  %v2974 = vpack.c.b16 %v2198, %v2190
  %v2975 = vpack.c.b16 %v2199, %v2191
  %v2976 = vpack.c.b16 %v2200, %v2192
  %v2977 = vpack.c.b16 %v2201, %v2193
  %v2978 = vpack.c.b16 %v2210, %v2202
  %v2979 = vpack.c.b16 %v2211, %v2203
  %v2980 = vpack.c.b16 %v2212, %v2204
  %v2981 = vpack.c.b16 %v2213, %v2205
  %v2982 = vpack.c.b16 %v2214, %v2206
  %v2983 = vpack.c.b16 %v2215, %v2207
  %v2984 = vpack.c.b16 %v2216, %v2208
  %v2985 = vpack.c.b16 %v2217, %v2209
  %v2986 = vpack.c.b16 %v2226, %v2218
  %v2987 = vpack.c.b16 %v2227, %v2219
  %v2988 = vpack.c.b16 %v2228, %v2220
  %v2989 = vpack.c.b16 %v2229, %v2221
  %v2990 = vpack.c.b16 %v2230, %v2222
  %v2991 = vpack.c.b16 %v2231, %v2223
  %v2992 = vpack.c.b16 %v2232, %v2224
  %v2993 = vpack.c.b16 %v2233, %v2225
  %v2994 = vpack.c.b16 %v2242, %v2234
  %v2995 = vpack.c.b16 %v2243, %v2235
  %v2996 = vpack.c.b16 %v2244, %v2236
  %v2997 = vpack.c.b16 %v2245, %v2237
  %v2998 = vpack.c.b16 %v2246, %v2238
  %v2999 = vpack.c.b16 %v2247, %v2239
  %v3000 = vpack.c.b16 %v2248, %v2240
  %v3001 = vpack.c.b16 %v2249, %v2241
  %v3002 = vpack.c.b16 %v2258, %v2250
  %v3003 = vpack.c.b16 %v2259, %v2251
  %v3004 = vpack.c.b16 %v2260, %v2252
  %v3005 = vpack.c.b16 %v2261, %v2253
  %v3006 = vpack.c.b16 %v2262, %v2254
  %v3007 = vpack.c.b16 %v2263, %v2255
  %v3008 = vpack.c.b16 %v2264, %v2256
  %v3009 = vpack.c.b16 %v2265, %v2257
  %v3010 = vpack.c.b16 %v2274, %v2266
  %v3011 = vpack.c.b16 %v2275, %v2267
  %v3012 = vpack.c.b16 %v2276, %v2268
  %v3013 = vpack.c.b16 %v2277, %v2269
  %v3014 = vpack.c.b16 %v2278, %v2270
  %v3015 = vpack.c.b16 %v2279, %v2271
  %v3016 = vpack.c.b16 %v2280, %v2272
  %v3017 = vpack.c.b16 %v2281, %v2273
  %v3018 = vpack.c.b16 %v2290, %v2282
  %v3019 = vpack.c.b16 %v2291, %v2283
  %v3020 = vpack.c.b16 %v2292, %v2284
  %v3021 = vpack.c.b16 %v2293, %v2285
  %v3022 = vpack.c.b16 %v2294, %v2286
  %v3023 = vpack.c.b16 %v2295, %v2287
  %v3024 = vpack.c.b16 %v2296, %v2288
  %v3025 = vpack.c.b16 %v2297, %v2289
  %v3026 = vpack.c.b16 %v2306, %v2298
  %v3027 = vpack.c.b16 %v2307, %v2299
  %v3028 = vpack.c.b16 %v2308, %v2300
  %v3029 = vpack.c.b16 %v2309, %v2301
  %v3030 = vpack.c.b16 %v2310, %v2302
  %v3031 = vpack.c.b16 %v2311, %v2303
  %v3032 = vpack.c.b16 %v2312, %v2304
  %v3033 = vpack.c.b16 %v2313, %v2305
  %v3034 = vpack.c.b16 %v2322, %v2314
  %v3035 = vpack.c.b16 %v2323, %v2315
  %v3036 = vpack.c.b16 %v2324, %v2316
  %v3037 = vpack.c.b16 %v2325, %v2317
  %v3038 = vpack.c.b16 %v2326, %v2318
  %v3039 = vpack.c.b16 %v2327, %v2319
  %v3040 = vpack.c.b16 %v2328, %v2320
  %v3041 = vpack.c.b16 %v2329, %v2321
  %v3042 = vpack.c.b16 %v2338, %v2330
  %v3043 = vpack.c.b16 %v2339, %v2331
  %v3044 = vpack.c.b16 %v2340, %v2332
  %v3045 = vpack.c.b16 %v2341, %v2333
  %v3046 = vpack.c.b16 %v2342, %v2334
  %v3047 = vpack.c.b16 %v2343, %v2335
  %v3048 = vpack.c.b16 %v2344, %v2336
  %v3049 = vpack.c.b16 %v2345, %v2337
  %v3050 = vpack.c.b16 %v2354, %v2346
  %v3051 = vpack.c.b16 %v2355, %v2347
  %v3052 = vpack.c.b16 %v2356, %v2348
  %v3053 = vpack.c.b16 %v2357, %v2349
  %v3054 = vpack.c.b16 %v2358, %v2350
  %v3055 = vpack.c.b16 %v2359, %v2351
  %v3056 = vpack.c.b16 %v2360, %v2352
  %v3057 = vpack.c.b16 %v2361, %v2353
  %v3058 = vpack.c.b16 %v2370, %v2362
  %v3059 = vpack.c.b16 %v2371, %v2363
  %v3060 = vpack.c.b16 %v2372, %v2364
  %v3061 = vpack.c.b16 %v2373, %v2365
  %v3062 = vpack.c.b16 %v2374, %v2366
  %v3063 = vpack.c.b16 %v2375, %v2367
  %v3064 = vpack.c.b16 %v2376, %v2368
  %v3065 = vpack.c.b16 %v2377, %v2369
  %v3066 = vpack.c.b16 %v2386, %v2378
  %v3067 = vpack.c.b16 %v2387, %v2379
  %v3068 = vpack.c.b16 %v2388, %v2380
  %v3069 = vpack.c.b16 %v2389, %v2381
  %v3070 = vpack.c.b16 %v2390, %v2382
  %v3071 = vpack.c.b16 %v2391, %v2383
  %v3072 = vpack.c.b16 %v2392, %v2384
  %v3073 = vpack.c.b16 %v2393, %v2385
  %v3074 = vpack.c.b16 %v2402, %v2394
  %v3075 = vpack.c.b16 %v2403, %v2395
  %v3076 = vpack.c.b16 %v2404, %v2396
  %v3077 = vpack.c.b16 %v2405, %v2397
  %v3078 = vpack.c.b16 %v2406, %v2398
  %v3079 = vpack.c.b16 %v2407, %v2399
  %v3080 = vpack.c.b16 %v2408, %v2400
  %v3081 = vpack.c.b16 %v2409, %v2401
  %v3082 = vpack.c.b16 %v2418, %v2410
  %v3083 = vpack.c.b16 %v2419, %v2411
  %v3084 = vpack.c.b16 %v2420, %v2412
  %v3085 = vpack.c.b16 %v2421, %v2413
  %v3086 = vpack.c.b16 %v2422, %v2414
  %v3087 = vpack.c.b16 %v2423, %v2415
  %v3088 = vpack.c.b16 %v2424, %v2416
  %v3089 = vpack.c.b16 %v2425, %v2417
  %v3090 = vpack.c.b16 %v2434, %v2426
  %v3091 = vpack.c.b16 %v2435, %v2427
  %v3092 = vpack.c.b16 %v2436, %v2428
  %v3093 = vpack.c.b16 %v2437, %v2429
  %v3094 = vpack.c.b16 %v2438, %v2430
  %v3095 = vpack.c.b16 %v2439, %v2431
  %v3096 = vpack.c.b16 %v2440, %v2432
  %v3097 = vpack.c.b16 %v2441, %v2433
  %v3098 = vpack.c.b16 %v2450, %v2442
  %v3099 = vpack.c.b16 %v2451, %v2443
  %v3100 = vpack.c.b16 %v2452, %v2444
  %v3101 = vpack.c.b16 %v2453, %v2445
  %v3102 = vpack.c.b16 %v2454, %v2446
  %v3103 = vpack.c.b16 %v2455, %v2447
  %v3104 = vpack.c.b16 %v2456, %v2448
  %v3105 = vpack.c.b16 %v2457, %v2449
  %v3106 = vpack.c.b16 %v2466, %v2458
  %v3107 = vpack.c.b16 %v2467, %v2459
  %v3108 = vpack.c.b16 %v2468, %v2460
  %v3109 = vpack.c.b16 %v2469, %v2461
  %v3110 = vpack.c.b16 %v2470, %v2462
  %v3111 = vpack.c.b16 %v2471, %v2463
  %v3112 = vpack.c.b16 %v2472, %v2464
  %v3113 = vpack.c.b16 %v2473, %v2465
  %v3114 = vpack.c.b16 %v2482, %v2474
  %v3115 = vpack.c.b16 %v2483, %v2475
  %v3116 = vpack.c.b16 %v2484, %v2476
  %v3117 = vpack.c.b16 %v2485, %v2477
  %v3118 = vpack.c.b16 %v2486, %v2478
  %v3119 = vpack.c.b16 %v2487, %v2479
  %v3120 = vpack.c.b16 %v2488, %v2480
  %v3121 = vpack.c.b16 %v2489, %v2481
  %v3122 = vpack.c.b16 %v2498, %v2490
  %v3123 = vpack.c.b16 %v2499, %v2491
  %v3124 = vpack.c.b16 %v2500, %v2492
  %v3125 = vpack.c.b16 %v2501, %v2493
  %v3126 = vpack.c.b16 %v2502, %v2494
  %v3127 = vpack.c.b16 %v2503, %v2495
  %v3128 = vpack.c.b16 %v2504, %v2496
  %v3129 = vpack.c.b16 %v2505, %v2497
  %v3130 = vpack.c.b16 %v2514, %v2506
  %v3131 = vpack.c.b16 %v2515, %v2507
  %v3132 = vpack.c.b16 %v2516, %v2508
  %v3133 = vpack.c.b16 %v2517, %v2509
  %v3134 = vpack.c.b16 %v2518, %v2510
  %v3135 = vpack.c.b16 %v2519, %v2511
  %v3136 = vpack.c.b16 %v2520, %v2512
  %v3137 = vpack.c.b16 %v2521, %v2513
  %v3138 = vpack.c.b16 %v2530, %v2522
  %v3139 = vpack.c.b16 %v2531, %v2523
  %v3140 = vpack.c.b16 %v2532, %v2524
  %v3141 = vpack.c.b16 %v2533, %v2525
  %v3142 = vpack.c.b16 %v2534, %v2526
  %v3143 = vpack.c.b16 %v2535, %v2527
  %v3144 = vpack.c.b16 %v2536, %v2528
  %v3145 = vpack.c.b16 %v2537, %v2529
  %v3146 = vpack.c.b16 %v2546, %v2538
  %v3147 = vpack.c.b16 %v2547, %v2539
  %v3148 = vpack.c.b16 %v2548, %v2540
  %v3149 = vpack.c.b16 %v2549, %v2541
  %v3150 = vpack.c.b16 %v2550, %v2542
  %v3151 = vpack.c.b16 %v2551, %v2543
  %v3152 = vpack.c.b16 %v2552, %v2544
  %v3153 = vpack.c.b16 %v2553, %v2545
  %v3154 = vpack.c.b16 %v2562, %v2554
  %v3155 = vpack.c.b16 %v2563, %v2555
  %v3156 = vpack.c.b16 %v2564, %v2556
  %v3157 = vpack.c.b16 %v2565, %v2557
  %v3158 = vpack.c.b16 %v2566, %v2558
  %v3159 = vpack.c.b16 %v2567, %v2559
  %v3160 = vpack.c.b16 %v2568, %v2560
  %v3161 = vpack.c.b16 %v2569, %v2561
  %v3162 = vpack.c.b16 %v2578, %v2570
  %v3163 = vpack.c.b16 %v2579, %v2571
  %v3164 = vpack.c.b16 %v2580, %v2572
  %v3165 = vpack.c.b16 %v2581, %v2573
  %v3166 = vpack.c.b16 %v2582, %v2574
  %v3167 = vpack.c.b16 %v2583, %v2575
  %v3168 = vpack.c.b16 %v2584, %v2576
  %v3169 = vpack.c.b16 %v2585, %v2577
  %v3170 = vpack.c.b16 %v2594, %v2586
  %v3171 = vpack.c.b16 %v2595, %v2587
  %v3172 = vpack.c.b16 %v2596, %v2588
  %v3173 = vpack.c.b16 %v2597, %v2589
  %v3174 = vpack.c.b16 %v2598, %v2590
  %v3175 = vpack.c.b16 %v2599, %v2591
  %v3176 = vpack.c.b16 %v2600, %v2592
  %v3177 = vpack.c.b16 %v2601, %v2593
  %v3178 = vpack.c.b16 %v2610, %v2602
  %v3179 = vpack.c.b16 %v2611, %v2603
  %v3180 = vpack.c.b16 %v2612, %v2604
  %v3181 = vpack.c.b16 %v2613, %v2605
  %v3182 = vpack.c.b16 %v2614, %v2606
  %v3183 = vpack.c.b16 %v2615, %v2607
  %v3184 = vpack.c.b16 %v2616, %v2608
  %v3185 = vpack.c.b16 %v2617, %v2609
  %v3186 = vpack.c.b16 %v2626, %v2618
  %v3187 = vpack.c.b16 %v2627, %v2619
  %v3188 = vpack.c.b16 %v2628, %v2620
  %v3189 = vpack.c.b16 %v2629, %v2621
  %v3190 = vpack.c.b16 %v2630, %v2622
  %v3191 = vpack.c.b16 %v2631, %v2623
  %v3192 = vpack.c.b16 %v2632, %v2624
  %v3193 = vpack.c.b16 %v2633, %v2625
  %v3194 = vpack.c.b16 %v2642, %v2634
  %v3195 = vpack.c.b16 %v2643, %v2635
  %v3196 = vpack.c.b16 %v2644, %v2636
  %v3197 = vpack.c.b16 %v2645, %v2637
  %v3198 = vpack.c.b16 %v2646, %v2638
  %v3199 = vpack.c.b16 %v2647, %v2639
  %v3200 = vpack.c.b16 %v2648, %v2640
  %v3201 = vpack.c.b16 %v2649, %v2641
  %v3202 = vpack.c.b16 %v2658, %v2650
  %v3203 = vpack.c.b16 %v2659, %v2651
  %v3204 = vpack.c.b16 %v2660, %v2652
  %v3205 = vpack.c.b16 %v2661, %v2653
  %v3206 = vpack.c.b16 %v2662, %v2654
  %v3207 = vpack.c.b16 %v2663, %v2655
  %v3208 = vpack.c.b16 %v2664, %v2656
  %v3209 = vpack.c.b16 %v2665, %v2657
  %v3210 = vpack.c.b16 %v2674, %v2666
  %v3211 = vpack.c.b16 %v2675, %v2667
  %v3212 = vpack.c.b16 %v2676, %v2668
  %v3213 = vpack.c.b16 %v2677, %v2669
  %v3214 = vpack.c.b16 %v2678, %v2670
  %v3215 = vpack.c.b16 %v2679, %v2671
  %v3216 = vpack.c.b16 %v2680, %v2672
  %v3217 = vpack.c.b16 %v2681, %v2673
  %v3218 = vpack.c.b16 %v2690, %v2682
  %v3219 = vpack.c.b16 %v2691, %v2683
  %v3220 = vpack.c.b16 %v2692, %v2684
  %v3221 = vpack.c.b16 %v2693, %v2685
  %v3222 = vpack.c.b16 %v2694, %v2686
  %v3223 = vpack.c.b16 %v2695, %v2687
  %v3224 = vpack.c.b16 %v2696, %v2688
  %v3225 = vpack.c.b16 %v2697, %v2689
  %v3226 = vpack.c.b16 %v2706, %v2698
  %v3227 = vpack.c.b16 %v2707, %v2699
  %v3228 = vpack.c.b16 %v2708, %v2700
  %v3229 = vpack.c.b16 %v2709, %v2701
  %v3230 = vpack.c.b16 %v2710, %v2702
  %v3231 = vpack.c.b16 %v2711, %v2703
  %v3232 = vpack.c.b16 %v2712, %v2704
  %v3233 = vpack.c.b16 %v2713, %v2705
  %v3234 = vpack.c.b16 %v2722, %v2714
  %v3235 = vpack.c.b16 %v2723, %v2715
  %v3236 = vpack.c.b16 %v2724, %v2716
  %v3237 = vpack.c.b16 %v2725, %v2717
  %v3238 = vpack.c.b16 %v2726, %v2718
  %v3239 = vpack.c.b16 %v2727, %v2719
  %v3240 = vpack.c.b16 %v2728, %v2720
  %v3241 = vpack.c.b16 %v2729, %v2721
  %3754 = vmatprep.subr.bf16.mxu0 %v2731
  %3755 = vmatpush1.bf16.msra.mxu0 %v2730
  %3756 = vmatprep.subr.bf16.mxu0 %v2739
  %3757 = vmatpush1.bf16.msra.mxu0 %v2738
  %3758 = vmatprep.subr.bf16.mxu0 %v2747
  %3759 = vmatpush1.bf16.msra.mxu0 %v2746
  %3760 = vmatprep.subr.bf16.mxu0 %v2755
  %3761 = vmatpush1.bf16.msra.mxu0 %v2754
  %3762 = vmatprep.subr.bf16.mxu0 %v2763
  %3763 = vmatpush1.bf16.msra.mxu0 %v2762
  %3764 = vmatprep.subr.bf16.mxu0 %v2771
  %3765 = vmatpush1.bf16.msra.mxu0 %v2770
  %3766 = vmatprep.subr.bf16.mxu0 %v2779
  %3767 = vmatpush1.bf16.msra.mxu0 %v2778
  %3768 = vmatprep.subr.bf16.mxu0 %v2787
  %3769 = vmatpush1.bf16.msra.mxu0 %v2786
  %3770 = vmatprep.subr.bf16.mxu0 %v2795
  %3771 = vmatpush1.bf16.msra.mxu0 %v2794
  %3772 = vmatprep.subr.bf16.mxu0 %v2803
  %3773 = vmatpush1.bf16.msra.mxu0 %v2802
  %3774 = vmatprep.subr.bf16.mxu0 %v2811
  %3775 = vmatpush1.bf16.msra.mxu0 %v2810
  %3776 = vmatprep.subr.bf16.mxu0 %v2819
  %3777 = vmatpush1.bf16.msra.mxu0 %v2818
  %3778 = vmatprep.subr.bf16.mxu0 %v2827
  %3779 = vmatpush1.bf16.msra.mxu0 %v2826
  %3780 = vmatprep.subr.bf16.mxu0 %v2835
  %3781 = vmatpush1.bf16.msra.mxu0 %v2834
  %3782 = vmatprep.subr.bf16.mxu0 %v2843
  %3783 = vmatpush1.bf16.msra.mxu0 %v2842
  %3784 = vmatprep.subr.bf16.mxu0 %v2851
  %3785 = vmatpush1.bf16.msra.mxu0 %v2850
  %3786 = vmatprep.mubr.bf16.mxu0 %v633
  %3787 = vmatmul.mubr.bf16.gmra.mrb[0].mxu0 %v632
  %v3788 = vpop.f32.mrb[0].mxu0
  %v3789 = vadd.f32 %v1157, %v3788
  %v3790 = vpop.f32.mrb[0].mxu0
  %v3791 = vadd.f32 %v1161, %v3790
  %v3792 = vpop.f32.mrb[0].mxu0
  %v3793 = vpop.f32.mrb[0].mxu0
  %3794 = vdwg.mxu0
  %3795 = vmatprep.subr.bf16.mxu0 %v2859
  %3796 = vmatpush1.bf16.msra.mxu0 %v2858
  %3797 = vmatprep.subr.bf16.mxu0 %v2867
  %3798 = vmatpush1.bf16.msra.mxu0 %v2866
  %3799 = vmatprep.subr.bf16.mxu0 %v2875
  %3800 = vmatpush1.bf16.msra.mxu0 %v2874
  %3801 = vmatprep.subr.bf16.mxu0 %v2883
  %3802 = vmatpush1.bf16.msra.mxu0 %v2882
  %3803 = vmatprep.subr.bf16.mxu0 %v2891
  %3804 = vmatpush1.bf16.msra.mxu0 %v2890
  %3805 = vmatprep.subr.bf16.mxu0 %v2899
  %3806 = vmatpush1.bf16.msra.mxu0 %v2898
  %3807 = vmatprep.subr.bf16.mxu0 %v2907
  %3808 = vmatpush1.bf16.msra.mxu0 %v2906
  %3809 = vmatprep.subr.bf16.mxu0 %v2915
  %3810 = vmatpush1.bf16.msra.mxu0 %v2914
  %3811 = vmatprep.subr.bf16.mxu0 %v2923
  %3812 = vmatpush1.bf16.msra.mxu0 %v2922
  %3813 = vmatprep.subr.bf16.mxu0 %v2931
  %3814 = vmatpush1.bf16.msra.mxu0 %v2930
  %3815 = vmatprep.subr.bf16.mxu0 %v2939
  %3816 = vmatpush1.bf16.msra.mxu0 %v2938
  %3817 = vmatprep.subr.bf16.mxu0 %v2947
  %3818 = vmatpush1.bf16.msra.mxu0 %v2946
  %3819 = vmatprep.subr.bf16.mxu0 %v2955
  %3820 = vmatpush1.bf16.msra.mxu0 %v2954
  %3821 = vmatprep.subr.bf16.mxu0 %v2963
  %3822 = vmatpush1.bf16.msra.mxu0 %v2962
  %3823 = vmatprep.subr.bf16.mxu0 %v2971
  %3824 = vmatpush1.bf16.msra.mxu0 %v2970
  %3825 = vmatprep.subr.bf16.mxu0 %v2979
  %3826 = vmatpush1.bf16.msra.mxu0 %v2978
  %3827 = vmatprep.mubr.bf16.mxu0 %v635
  %3828 = vmatmul.mubr.bf16.gmra.mrb[0].mxu0 %v634
  %v3829 = vpop.f32.mrb[0].mxu0
  %v3830 = vadd.f32 %v3789, %v3829
  %v3831 = vpop.f32.mrb[0].mxu0
  %v3832 = vadd.f32 %v3791, %v3831
  %v3833 = vpop.f32.mrb[0].mxu0
  %v3834 = vpop.f32.mrb[0].mxu0
  %3835 = vdwg.mxu0
  %3836 = vmatprep.subr.bf16.mxu0 %v2987
  %3837 = vmatpush1.bf16.msra.mxu0 %v2986
  %3838 = vmatprep.subr.bf16.mxu0 %v2995
  %3839 = vmatpush1.bf16.msra.mxu0 %v2994
  %3840 = vmatprep.subr.bf16.mxu0 %v3003
  %3841 = vmatpush1.bf16.msra.mxu0 %v3002
  %3842 = vmatprep.subr.bf16.mxu0 %v3011
  %3843 = vmatpush1.bf16.msra.mxu0 %v3010
  %3844 = vmatprep.subr.bf16.mxu0 %v3019
  %3845 = vmatpush1.bf16.msra.mxu0 %v3018
  %3846 = vmatprep.subr.bf16.mxu0 %v3027
  %3847 = vmatpush1.bf16.msra.mxu0 %v3026
  %3848 = vmatprep.subr.bf16.mxu0 %v3035
  %3849 = vmatpush1.bf16.msra.mxu0 %v3034
  %3850 = vmatprep.subr.bf16.mxu0 %v3043
  %3851 = vmatpush1.bf16.msra.mxu0 %v3042
  %3852 = vmatprep.subr.bf16.mxu0 %v3051
  %3853 = vmatpush1.bf16.msra.mxu0 %v3050
  %3854 = vmatprep.subr.bf16.mxu0 %v3059
  %3855 = vmatpush1.bf16.msra.mxu0 %v3058
  %3856 = vmatprep.subr.bf16.mxu0 %v3067
  %3857 = vmatpush1.bf16.msra.mxu0 %v3066
  %3858 = vmatprep.subr.bf16.mxu0 %v3075
  %3859 = vmatpush1.bf16.msra.mxu0 %v3074
  %3860 = vmatprep.subr.bf16.mxu0 %v3083
  %3861 = vmatpush1.bf16.msra.mxu0 %v3082
  %3862 = vmatprep.subr.bf16.mxu0 %v3091
  %3863 = vmatpush1.bf16.msra.mxu0 %v3090
  %3864 = vmatprep.subr.bf16.mxu0 %v3099
  %3865 = vmatpush1.bf16.msra.mxu0 %v3098
  %3866 = vmatprep.subr.bf16.mxu0 %v3107
  %3867 = vmatpush1.bf16.msra.mxu0 %v3106
  %3868 = vmatprep.mubr.bf16.mxu0 %v637
  %3869 = vmatmul.mubr.bf16.gmra.mrb[0].mxu0 %v636
  %v3870 = vpop.f32.mrb[0].mxu0
  %v3871 = vadd.f32 %v3830, %v3870
  %v3872 = vpop.f32.mrb[0].mxu0
  %v3873 = vadd.f32 %v3832, %v3872
  %v3874 = vpop.f32.mrb[0].mxu0
  %v3875 = vpop.f32.mrb[0].mxu0
  %3876 = vdwg.mxu0
  %3877 = vmatprep.subr.bf16.mxu0 %v3115
  %3878 = vmatpush1.bf16.msra.mxu0 %v3114
  %3879 = vmatprep.subr.bf16.mxu0 %v3123
  %3880 = vmatpush1.bf16.msra.mxu0 %v3122
  %3881 = vmatprep.subr.bf16.mxu0 %v3131
  %3882 = vmatpush1.bf16.msra.mxu0 %v3130
  %3883 = vmatprep.subr.bf16.mxu0 %v3139
  %3884 = vmatpush1.bf16.msra.mxu0 %v3138
  %3885 = vmatprep.subr.bf16.mxu0 %v3147
  %3886 = vmatpush1.bf16.msra.mxu0 %v3146
  %3887 = vmatprep.subr.bf16.mxu0 %v3155
  %3888 = vmatpush1.bf16.msra.mxu0 %v3154
  %3889 = vmatprep.subr.bf16.mxu0 %v3163
  %3890 = vmatpush1.bf16.msra.mxu0 %v3162
  %3891 = vmatprep.subr.bf16.mxu0 %v3171
  %3892 = vmatpush1.bf16.msra.mxu0 %v3170
  %3893 = vmatprep.subr.bf16.mxu0 %v3179
  %3894 = vmatpush1.bf16.msra.mxu0 %v3178
  %3895 = vmatprep.subr.bf16.mxu0 %v3187
  %3896 = vmatpush1.bf16.msra.mxu0 %v3186
  %3897 = vmatprep.subr.bf16.mxu0 %v3195
  %3898 = vmatpush1.bf16.msra.mxu0 %v3194
  %3899 = vmatprep.subr.bf16.mxu0 %v3203
  %3900 = vmatpush1.bf16.msra.mxu0 %v3202
  %3901 = vmatprep.subr.bf16.mxu0 %v3211
  %3902 = vmatpush1.bf16.msra.mxu0 %v3210
  %3903 = vmatprep.subr.bf16.mxu0 %v3219
  %3904 = vmatpush1.bf16.msra.mxu0 %v3218
  %3905 = vmatprep.subr.bf16.mxu0 %v3227
  %3906 = vmatpush1.bf16.msra.mxu0 %v3226
  %3907 = vmatprep.subr.bf16.mxu0 %v3235
  %3908 = vmatpush1.bf16.msra.mxu0 %v3234
  %3909 = vmatprep.mubr.bf16.mxu0 %v639
  %3910 = vmatmul.mubr.bf16.gmra.mrb[0].mxu0 %v638
  %v3911 = vpop.f32.mrb[0].mxu0
  %v3912 = vadd.f32 %v3871, %v3911
  %v3913 = vpop.f32.mrb[0].mxu0
  %v3914 = vadd.f32 %v3873, %v3913
  %v3915 = vpop.f32.mrb[0].mxu0
  %v3916 = vpop.f32.mrb[0].mxu0
  %3917 = vdwg.mxu0
  %3918 = vmatprep.subr.bf16.mxu0 %v2733
  %3919 = vmatpush1.bf16.msra.mxu0 %v2732
  %3920 = vmatprep.subr.bf16.mxu0 %v2741
  %3921 = vmatpush1.bf16.msra.mxu0 %v2740
  %3922 = vmatprep.subr.bf16.mxu0 %v2749
  %3923 = vmatpush1.bf16.msra.mxu0 %v2748
  %3924 = vmatprep.subr.bf16.mxu0 %v2757
  %3925 = vmatpush1.bf16.msra.mxu0 %v2756
  %3926 = vmatprep.subr.bf16.mxu0 %v2765
  %3927 = vmatpush1.bf16.msra.mxu0 %v2764
  %3928 = vmatprep.subr.bf16.mxu0 %v2773
  %3929 = vmatpush1.bf16.msra.mxu0 %v2772
  %3930 = vmatprep.subr.bf16.mxu0 %v2781
  %3931 = vmatpush1.bf16.msra.mxu0 %v2780
  %3932 = vmatprep.subr.bf16.mxu0 %v2789
  %3933 = vmatpush1.bf16.msra.mxu0 %v2788
  %3934 = vmatprep.subr.bf16.mxu0 %v2797
  %3935 = vmatpush1.bf16.msra.mxu0 %v2796
  %3936 = vmatprep.subr.bf16.mxu0 %v2805
  %3937 = vmatpush1.bf16.msra.mxu0 %v2804
  %3938 = vmatprep.subr.bf16.mxu0 %v2813
  %3939 = vmatpush1.bf16.msra.mxu0 %v2812
  %3940 = vmatprep.subr.bf16.mxu0 %v2821
  %3941 = vmatpush1.bf16.msra.mxu0 %v2820
  %3942 = vmatprep.subr.bf16.mxu0 %v2829
  %3943 = vmatpush1.bf16.msra.mxu0 %v2828
  %3944 = vmatprep.subr.bf16.mxu0 %v2837
  %3945 = vmatpush1.bf16.msra.mxu0 %v2836
  %3946 = vmatprep.subr.bf16.mxu0 %v2845
  %3947 = vmatpush1.bf16.msra.mxu0 %v2844
  %3948 = vmatprep.subr.bf16.mxu0 %v2853
  %3949 = vmatpush1.bf16.msra.mxu0 %v2852
  %3950 = vmatprep.mubr.bf16.mxu0 %v633
  %3951 = vmatmul.mubr.bf16.gmra.mrb[0].mxu0 %v632
  %v3952 = vpop.f32.mrb[0].mxu0
  %v3953 = vadd.f32 %v1165, %v3952
  %v3954 = vpop.f32.mrb[0].mxu0
  %v3955 = vadd.f32 %v1169, %v3954
  %v3956 = vpop.f32.mrb[0].mxu0
  %v3957 = vpop.f32.mrb[0].mxu0
  %3958 = vdwg.mxu0
  %3959 = vmatprep.subr.bf16.mxu0 %v2861
  %3960 = vmatpush1.bf16.msra.mxu0 %v2860
  %3961 = vmatprep.subr.bf16.mxu0 %v2869
  %3962 = vmatpush1.bf16.msra.mxu0 %v2868
  %3963 = vmatprep.subr.bf16.mxu0 %v2877
  %3964 = vmatpush1.bf16.msra.mxu0 %v2876
  %3965 = vmatprep.subr.bf16.mxu0 %v2885
  %3966 = vmatpush1.bf16.msra.mxu0 %v2884
  %3967 = vmatprep.subr.bf16.mxu0 %v2893
  %3968 = vmatpush1.bf16.msra.mxu0 %v2892
  %3969 = vmatprep.subr.bf16.mxu0 %v2901
  %3970 = vmatpush1.bf16.msra.mxu0 %v2900
  %3971 = vmatprep.subr.bf16.mxu0 %v2909
  %3972 = vmatpush1.bf16.msra.mxu0 %v2908
  %3973 = vmatprep.subr.bf16.mxu0 %v2917
  %3974 = vmatpush1.bf16.msra.mxu0 %v2916
  %3975 = vmatprep.subr.bf16.mxu0 %v2925
  %3976 = vmatpush1.bf16.msra.mxu0 %v2924
  %3977 = vmatprep.subr.bf16.mxu0 %v2933
  %3978 = vmatpush1.bf16.msra.mxu0 %v2932
  %3979 = vmatprep.subr.bf16.mxu0 %v2941
  %3980 = vmatpush1.bf16.msra.mxu0 %v2940
  %3981 = vmatprep.subr.bf16.mxu0 %v2949
  %3982 = vmatpush1.bf16.msra.mxu0 %v2948
  %3983 = vmatprep.subr.bf16.mxu0 %v2957
  %3984 = vmatpush1.bf16.msra.mxu0 %v2956
  %3985 = vmatprep.subr.bf16.mxu0 %v2965
  %3986 = vmatpush1.bf16.msra.mxu0 %v2964
  %3987 = vmatprep.subr.bf16.mxu0 %v2973
  %3988 = vmatpush1.bf16.msra.mxu0 %v2972
  %3989 = vmatprep.subr.bf16.mxu0 %v2981
  %3990 = vmatpush1.bf16.msra.mxu0 %v2980
  %3991 = vmatprep.mubr.bf16.mxu0 %v635
  %3992 = vmatmul.mubr.bf16.gmra.mrb[0].mxu0 %v634
  %v3993 = vpop.f32.mrb[0].mxu0
  %v3994 = vadd.f32 %v3953, %v3993
  %v3995 = vpop.f32.mrb[0].mxu0
  %v3996 = vadd.f32 %v3955, %v3995
  %v3997 = vpop.f32.mrb[0].mxu0
  %v3998 = vpop.f32.mrb[0].mxu0
  %3999 = vdwg.mxu0
  %4000 = vmatprep.subr.bf16.mxu0 %v2989
  %4001 = vmatpush1.bf16.msra.mxu0 %v2988
  %4002 = vmatprep.subr.bf16.mxu0 %v2997
  %4003 = vmatpush1.bf16.msra.mxu0 %v2996
  %4004 = vmatprep.subr.bf16.mxu0 %v3005
  %4005 = vmatpush1.bf16.msra.mxu0 %v3004
  %4006 = vmatprep.subr.bf16.mxu0 %v3013
  %4007 = vmatpush1.bf16.msra.mxu0 %v3012
  %4008 = vmatprep.subr.bf16.mxu0 %v3021
  %4009 = vmatpush1.bf16.msra.mxu0 %v3020
  %4010 = vmatprep.subr.bf16.mxu0 %v3029
  %4011 = vmatpush1.bf16.msra.mxu0 %v3028
  %4012 = vmatprep.subr.bf16.mxu0 %v3037
  %4013 = vmatpush1.bf16.msra.mxu0 %v3036
  %4014 = vmatprep.subr.bf16.mxu0 %v3045
  %4015 = vmatpush1.bf16.msra.mxu0 %v3044
  %4016 = vmatprep.subr.bf16.mxu0 %v3053
  %4017 = vmatpush1.bf16.msra.mxu0 %v3052
  %4018 = vmatprep.subr.bf16.mxu0 %v3061
  %4019 = vmatpush1.bf16.msra.mxu0 %v3060
  %4020 = vmatprep.subr.bf16.mxu0 %v3069
  %4021 = vmatpush1.bf16.msra.mxu0 %v3068
  %4022 = vmatprep.subr.bf16.mxu0 %v3077
  %4023 = vmatpush1.bf16.msra.mxu0 %v3076
  %4024 = vmatprep.subr.bf16.mxu0 %v3085
  %4025 = vmatpush1.bf16.msra.mxu0 %v3084
  %4026 = vmatprep.subr.bf16.mxu0 %v3093
  %4027 = vmatpush1.bf16.msra.mxu0 %v3092
  %4028 = vmatprep.subr.bf16.mxu0 %v3101
  %4029 = vmatpush1.bf16.msra.mxu0 %v3100
  %4030 = vmatprep.subr.bf16.mxu0 %v3109
  %4031 = vmatpush1.bf16.msra.mxu0 %v3108
  %4032 = vmatprep.mubr.bf16.mxu0 %v637
  %4033 = vmatmul.mubr.bf16.gmra.mrb[0].mxu0 %v636
  %v4034 = vpop.f32.mrb[0].mxu0
  %v4035 = vadd.f32 %v3994, %v4034
  %v4036 = vpop.f32.mrb[0].mxu0
  %v4037 = vadd.f32 %v3996, %v4036
  %v4038 = vpop.f32.mrb[0].mxu0
  %v4039 = vpop.f32.mrb[0].mxu0
  %4040 = vdwg.mxu0
  %4041 = vmatprep.subr.bf16.mxu0 %v3117
  %4042 = vmatpush1.bf16.msra.mxu0 %v3116
  %4043 = vmatprep.subr.bf16.mxu0 %v3125
  %4044 = vmatpush1.bf16.msra.mxu0 %v3124
  %4045 = vmatprep.subr.bf16.mxu0 %v3133
  %4046 = vmatpush1.bf16.msra.mxu0 %v3132
  %4047 = vmatprep.subr.bf16.mxu0 %v3141
  %4048 = vmatpush1.bf16.msra.mxu0 %v3140
  %4049 = vmatprep.subr.bf16.mxu0 %v3149
  %4050 = vmatpush1.bf16.msra.mxu0 %v3148
  %4051 = vmatprep.subr.bf16.mxu0 %v3157
  %4052 = vmatpush1.bf16.msra.mxu0 %v3156
  %4053 = vmatprep.subr.bf16.mxu0 %v3165
  %4054 = vmatpush1.bf16.msra.mxu0 %v3164
  %4055 = vmatprep.subr.bf16.mxu0 %v3173
  %4056 = vmatpush1.bf16.msra.mxu0 %v3172
  %4057 = vmatprep.subr.bf16.mxu0 %v3181
  %4058 = vmatpush1.bf16.msra.mxu0 %v3180
  %4059 = vmatprep.subr.bf16.mxu0 %v3189
  %4060 = vmatpush1.bf16.msra.mxu0 %v3188
  %4061 = vmatprep.subr.bf16.mxu0 %v3197
  %4062 = vmatpush1.bf16.msra.mxu0 %v3196
  %4063 = vmatprep.subr.bf16.mxu0 %v3205
  %4064 = vmatpush1.bf16.msra.mxu0 %v3204
  %4065 = vmatprep.subr.bf16.mxu0 %v3213
  %4066 = vmatpush1.bf16.msra.mxu0 %v3212
  %4067 = vmatprep.subr.bf16.mxu0 %v3221
  %4068 = vmatpush1.bf16.msra.mxu0 %v3220
  %4069 = vmatprep.subr.bf16.mxu0 %v3229
  %4070 = vmatpush1.bf16.msra.mxu0 %v3228
  %4071 = vmatprep.subr.bf16.mxu0 %v3237
  %4072 = vmatpush1.bf16.msra.mxu0 %v3236
  %4073 = vmatprep.mubr.bf16.mxu0 %v639
  %4074 = vmatmul.mubr.bf16.gmra.mrb[0].mxu0 %v638
  %v4075 = vpop.f32.mrb[0].mxu0
  %v4076 = vadd.f32 %v4035, %v4075
  %v4077 = vpop.f32.mrb[0].mxu0
  %v4078 = vadd.f32 %v4037, %v4077
  %v4079 = vpop.f32.mrb[0].mxu0
  %v4080 = vpop.f32.mrb[0].mxu0
  %4081 = vdwg.mxu0
  %4082 = vmatprep.subr.bf16.mxu0 %v2735
  %4083 = vmatpush1.bf16.msra.mxu0 %v2734
  %4084 = vmatprep.subr.bf16.mxu0 %v2743
  %4085 = vmatpush1.bf16.msra.mxu0 %v2742
  %4086 = vmatprep.subr.bf16.mxu0 %v2751
  %4087 = vmatpush1.bf16.msra.mxu0 %v2750
  %4088 = vmatprep.subr.bf16.mxu0 %v2759
  %4089 = vmatpush1.bf16.msra.mxu0 %v2758
  %4090 = vmatprep.subr.bf16.mxu0 %v2767
  %4091 = vmatpush1.bf16.msra.mxu0 %v2766
  %4092 = vmatprep.subr.bf16.mxu0 %v2775
  %4093 = vmatpush1.bf16.msra.mxu0 %v2774
  %4094 = vmatprep.subr.bf16.mxu0 %v2783
  %4095 = vmatpush1.bf16.msra.mxu0 %v2782
  %4096 = vmatprep.subr.bf16.mxu0 %v2791
  %4097 = vmatpush1.bf16.msra.mxu0 %v2790
  %4098 = vmatprep.subr.bf16.mxu0 %v2799
  %4099 = vmatpush1.bf16.msra.mxu0 %v2798
  %4100 = vmatprep.subr.bf16.mxu0 %v2807
  %4101 = vmatpush1.bf16.msra.mxu0 %v2806
  %4102 = vmatprep.subr.bf16.mxu0 %v2815
  %4103 = vmatpush1.bf16.msra.mxu0 %v2814
  %4104 = vmatprep.subr.bf16.mxu0 %v2823
  %4105 = vmatpush1.bf16.msra.mxu0 %v2822
  %4106 = vmatprep.subr.bf16.mxu0 %v2831
  %4107 = vmatpush1.bf16.msra.mxu0 %v2830
  %4108 = vmatprep.subr.bf16.mxu0 %v2839
  %4109 = vmatpush1.bf16.msra.mxu0 %v2838
  %4110 = vmatprep.subr.bf16.mxu0 %v2847
  %4111 = vmatpush1.bf16.msra.mxu0 %v2846
  %4112 = vmatprep.subr.bf16.mxu0 %v2855
  %4113 = vmatpush1.bf16.msra.mxu0 %v2854
  %4114 = vmatprep.mubr.bf16.mxu0 %v633
  %4115 = vmatmul.mubr.bf16.gmra.mrb[0].mxu0 %v632
  %v4116 = vpop.f32.mrb[0].mxu0
  %v4117 = vadd.f32 %v1173, %v4116
  %v4118 = vpop.f32.mrb[0].mxu0
  %v4119 = vadd.f32 %v1177, %v4118
  %v4120 = vpop.f32.mrb[0].mxu0
  %v4121 = vpop.f32.mrb[0].mxu0
  %4122 = vdwg.mxu0
  %4123 = vmatprep.subr.bf16.mxu0 %v2863
  %4124 = vmatpush1.bf16.msra.mxu0 %v2862
  %4125 = vmatprep.subr.bf16.mxu0 %v2871
  %4126 = vmatpush1.bf16.msra.mxu0 %v2870
  %4127 = vmatprep.subr.bf16.mxu0 %v2879
  %4128 = vmatpush1.bf16.msra.mxu0 %v2878
  %4129 = vmatprep.subr.bf16.mxu0 %v2887
  %4130 = vmatpush1.bf16.msra.mxu0 %v2886
  %4131 = vmatprep.subr.bf16.mxu0 %v2895
  %4132 = vmatpush1.bf16.msra.mxu0 %v2894
  %4133 = vmatprep.subr.bf16.mxu0 %v2903
  %4134 = vmatpush1.bf16.msra.mxu0 %v2902
  %4135 = vmatprep.subr.bf16.mxu0 %v2911
  %4136 = vmatpush1.bf16.msra.mxu0 %v2910
  %4137 = vmatprep.subr.bf16.mxu0 %v2919
  %4138 = vmatpush1.bf16.msra.mxu0 %v2918
  %4139 = vmatprep.subr.bf16.mxu0 %v2927
  %4140 = vmatpush1.bf16.msra.mxu0 %v2926
  %4141 = vmatprep.subr.bf16.mxu0 %v2935
  %4142 = vmatpush1.bf16.msra.mxu0 %v2934
  %4143 = vmatprep.subr.bf16.mxu0 %v2943
  %4144 = vmatpush1.bf16.msra.mxu0 %v2942
  %4145 = vmatprep.subr.bf16.mxu0 %v2951
  %4146 = vmatpush1.bf16.msra.mxu0 %v2950
  %4147 = vmatprep.subr.bf16.mxu0 %v2959
  %4148 = vmatpush1.bf16.msra.mxu0 %v2958
  %4149 = vmatprep.subr.bf16.mxu0 %v2967
  %4150 = vmatpush1.bf16.msra.mxu0 %v2966
  %4151 = vmatprep.subr.bf16.mxu0 %v2975
  %4152 = vmatpush1.bf16.msra.mxu0 %v2974
  %4153 = vmatprep.subr.bf16.mxu0 %v2983
  %4154 = vmatpush1.bf16.msra.mxu0 %v2982
  %4155 = vmatprep.mubr.bf16.mxu0 %v635
  %4156 = vmatmul.mubr.bf16.gmra.mrb[0].mxu0 %v634
  %v4157 = vpop.f32.mrb[0].mxu0
  %v4158 = vadd.f32 %v4117, %v4157
  %v4159 = vpop.f32.mrb[0].mxu0
  %v4160 = vadd.f32 %v4119, %v4159
  %v4161 = vpop.f32.mrb[0].mxu0
  %v4162 = vpop.f32.mrb[0].mxu0
  %4163 = vdwg.mxu0
  %4164 = vmatprep.subr.bf16.mxu0 %v2991
  %4165 = vmatpush1.bf16.msra.mxu0 %v2990
  %4166 = vmatprep.subr.bf16.mxu0 %v2999
  %4167 = vmatpush1.bf16.msra.mxu0 %v2998
  %4168 = vmatprep.subr.bf16.mxu0 %v3007
  %4169 = vmatpush1.bf16.msra.mxu0 %v3006
  %4170 = vmatprep.subr.bf16.mxu0 %v3015
  %4171 = vmatpush1.bf16.msra.mxu0 %v3014
  %4172 = vmatprep.subr.bf16.mxu0 %v3023
  %4173 = vmatpush1.bf16.msra.mxu0 %v3022
  %4174 = vmatprep.subr.bf16.mxu0 %v3031
  %4175 = vmatpush1.bf16.msra.mxu0 %v3030
  %4176 = vmatprep.subr.bf16.mxu0 %v3039
  %4177 = vmatpush1.bf16.msra.mxu0 %v3038
  %4178 = vmatprep.subr.bf16.mxu0 %v3047
  %4179 = vmatpush1.bf16.msra.mxu0 %v3046
  %4180 = vmatprep.subr.bf16.mxu0 %v3055
  %4181 = vmatpush1.bf16.msra.mxu0 %v3054
  %4182 = vmatprep.subr.bf16.mxu0 %v3063
  %4183 = vmatpush1.bf16.msra.mxu0 %v3062
  %4184 = vmatprep.subr.bf16.mxu0 %v3071
  %4185 = vmatpush1.bf16.msra.mxu0 %v3070
  %4186 = vmatprep.subr.bf16.mxu0 %v3079
  %4187 = vmatpush1.bf16.msra.mxu0 %v3078
  %4188 = vmatprep.subr.bf16.mxu0 %v3087
  %4189 = vmatpush1.bf16.msra.mxu0 %v3086
  %4190 = vmatprep.subr.bf16.mxu0 %v3095
  %4191 = vmatpush1.bf16.msra.mxu0 %v3094
  %4192 = vmatprep.subr.bf16.mxu0 %v3103
  %4193 = vmatpush1.bf16.msra.mxu0 %v3102
  %4194 = vmatprep.subr.bf16.mxu0 %v3111
  %4195 = vmatpush1.bf16.msra.mxu0 %v3110
  %4196 = vmatprep.mubr.bf16.mxu0 %v637
  %4197 = vmatmul.mubr.bf16.gmra.mrb[0].mxu0 %v636
  %v4198 = vpop.f32.mrb[0].mxu0
  %v4199 = vadd.f32 %v4158, %v4198
  %v4200 = vpop.f32.mrb[0].mxu0
  %v4201 = vadd.f32 %v4160, %v4200
  %v4202 = vpop.f32.mrb[0].mxu0
  %v4203 = vpop.f32.mrb[0].mxu0
  %4204 = vdwg.mxu0
  %4205 = vmatprep.subr.bf16.mxu0 %v3119
  %4206 = vmatpush1.bf16.msra.mxu0 %v3118
  %4207 = vmatprep.subr.bf16.mxu0 %v3127
  %4208 = vmatpush1.bf16.msra.mxu0 %v3126
  %4209 = vmatprep.subr.bf16.mxu0 %v3135
  %4210 = vmatpush1.bf16.msra.mxu0 %v3134
  %4211 = vmatprep.subr.bf16.mxu0 %v3143
  %4212 = vmatpush1.bf16.msra.mxu0 %v3142
  %4213 = vmatprep.subr.bf16.mxu0 %v3151
  %4214 = vmatpush1.bf16.msra.mxu0 %v3150
  %4215 = vmatprep.subr.bf16.mxu0 %v3159
  %4216 = vmatpush1.bf16.msra.mxu0 %v3158
  %4217 = vmatprep.subr.bf16.mxu0 %v3167
  %4218 = vmatpush1.bf16.msra.mxu0 %v3166
  %4219 = vmatprep.subr.bf16.mxu0 %v3175
  %4220 = vmatpush1.bf16.msra.mxu0 %v3174
  %4221 = vmatprep.subr.bf16.mxu0 %v3183
  %4222 = vmatpush1.bf16.msra.mxu0 %v3182
  %4223 = vmatprep.subr.bf16.mxu0 %v3191
  %4224 = vmatpush1.bf16.msra.mxu0 %v3190
  %4225 = vmatprep.subr.bf16.mxu0 %v3199
  %4226 = vmatpush1.bf16.msra.mxu0 %v3198
  %4227 = vmatprep.subr.bf16.mxu0 %v3207
  %4228 = vmatpush1.bf16.msra.mxu0 %v3206
  %4229 = vmatprep.subr.bf16.mxu0 %v3215
  %4230 = vmatpush1.bf16.msra.mxu0 %v3214
  %4231 = vmatprep.subr.bf16.mxu0 %v3223
  %4232 = vmatpush1.bf16.msra.mxu0 %v3222
  %4233 = vmatprep.subr.bf16.mxu0 %v3231
  %4234 = vmatpush1.bf16.msra.mxu0 %v3230
  %4235 = vmatprep.subr.bf16.mxu0 %v3239
  %4236 = vmatpush1.bf16.msra.mxu0 %v3238
  %4237 = vmatprep.mubr.bf16.mxu0 %v639
  %4238 = vmatmul.mubr.bf16.gmra.mrb[0].mxu0 %v638
  %v4239 = vpop.f32.mrb[0].mxu0
  %v4240 = vadd.f32 %v4199, %v4239
  %v4241 = vpop.f32.mrb[0].mxu0
  %v4242 = vadd.f32 %v4201, %v4241
  %v4243 = vpop.f32.mrb[0].mxu0
  %v4244 = vpop.f32.mrb[0].mxu0
  %4245 = vdwg.mxu0
  %4246 = vmatprep.subr.bf16.mxu0 %v2737
  %4247 = vmatpush1.bf16.msra.mxu0 %v2736
  %4248 = vmatprep.subr.bf16.mxu0 %v2745
  %4249 = vmatpush1.bf16.msra.mxu0 %v2744
  %4250 = vmatprep.subr.bf16.mxu0 %v2753
  %4251 = vmatpush1.bf16.msra.mxu0 %v2752
  %4252 = vmatprep.subr.bf16.mxu0 %v2761
  %4253 = vmatpush1.bf16.msra.mxu0 %v2760
  %4254 = vmatprep.subr.bf16.mxu0 %v2769
  %4255 = vmatpush1.bf16.msra.mxu0 %v2768
  %4256 = vmatprep.subr.bf16.mxu0 %v2777
  %4257 = vmatpush1.bf16.msra.mxu0 %v2776
  %4258 = vmatprep.subr.bf16.mxu0 %v2785
  %4259 = vmatpush1.bf16.msra.mxu0 %v2784
  %4260 = vmatprep.subr.bf16.mxu0 %v2793
  %4261 = vmatpush1.bf16.msra.mxu0 %v2792
  %4262 = vmatprep.subr.bf16.mxu0 %v2801
  %4263 = vmatpush1.bf16.msra.mxu0 %v2800
  %4264 = vmatprep.subr.bf16.mxu0 %v2809
  %4265 = vmatpush1.bf16.msra.mxu0 %v2808
  %4266 = vmatprep.subr.bf16.mxu0 %v2817
  %4267 = vmatpush1.bf16.msra.mxu0 %v2816
  %4268 = vmatprep.subr.bf16.mxu0 %v2825
  %4269 = vmatpush1.bf16.msra.mxu0 %v2824
  %4270 = vmatprep.subr.bf16.mxu0 %v2833
  %4271 = vmatpush1.bf16.msra.mxu0 %v2832
  %4272 = vmatprep.subr.bf16.mxu0 %v2841
  %4273 = vmatpush1.bf16.msra.mxu0 %v2840
  %4274 = vmatprep.subr.bf16.mxu0 %v2849
  %4275 = vmatpush1.bf16.msra.mxu0 %v2848
  %4276 = vmatprep.subr.bf16.mxu0 %v2857
  %4277 = vmatpush1.bf16.msra.mxu0 %v2856
  %4278 = vmatprep.mubr.bf16.mxu0 %v633
  %4279 = vmatmul.mubr.bf16.gmra.mrb[0].mxu0 %v632
  %v4280 = vpop.f32.mrb[0].mxu0
  %v4281 = vadd.f32 %v1181, %v4280
  %v4282 = vpop.f32.mrb[0].mxu0
  %v4283 = vadd.f32 %v1185, %v4282
  %v4284 = vpop.f32.mrb[0].mxu0
  %v4285 = vpop.f32.mrb[0].mxu0
  %4286 = vdwg.mxu0
  %4287 = vmatprep.subr.bf16.mxu0 %v2865
  %4288 = vmatpush1.bf16.msra.mxu0 %v2864
  %4289 = vmatprep.subr.bf16.mxu0 %v2873
  %4290 = vmatpush1.bf16.msra.mxu0 %v2872
  %4291 = vmatprep.subr.bf16.mxu0 %v2881
  %4292 = vmatpush1.bf16.msra.mxu0 %v2880
  %4293 = vmatprep.subr.bf16.mxu0 %v2889
  %4294 = vmatpush1.bf16.msra.mxu0 %v2888
  %4295 = vmatprep.subr.bf16.mxu0 %v2897
  %4296 = vmatpush1.bf16.msra.mxu0 %v2896
  %4297 = vmatprep.subr.bf16.mxu0 %v2905
  %4298 = vmatpush1.bf16.msra.mxu0 %v2904
  %4299 = vmatprep.subr.bf16.mxu0 %v2913
  %4300 = vmatpush1.bf16.msra.mxu0 %v2912
  %4301 = vmatprep.subr.bf16.mxu0 %v2921
  %4302 = vmatpush1.bf16.msra.mxu0 %v2920
  %4303 = vmatprep.subr.bf16.mxu0 %v2929
  %4304 = vmatpush1.bf16.msra.mxu0 %v2928
  %4305 = vmatprep.subr.bf16.mxu0 %v2937
  %4306 = vmatpush1.bf16.msra.mxu0 %v2936
  %4307 = vmatprep.subr.bf16.mxu0 %v2945
  %4308 = vmatpush1.bf16.msra.mxu0 %v2944
  %4309 = vmatprep.subr.bf16.mxu0 %v2953
  %4310 = vmatpush1.bf16.msra.mxu0 %v2952
  %4311 = vmatprep.subr.bf16.mxu0 %v2961
  %4312 = vmatpush1.bf16.msra.mxu0 %v2960
  %4313 = vmatprep.subr.bf16.mxu0 %v2969
  %4314 = vmatpush1.bf16.msra.mxu0 %v2968
  %4315 = vmatprep.subr.bf16.mxu0 %v2977
  %4316 = vmatpush1.bf16.msra.mxu0 %v2976
  %4317 = vmatprep.subr.bf16.mxu0 %v2985
  %4318 = vmatpush1.bf16.msra.mxu0 %v2984
  %4319 = vmatprep.mubr.bf16.mxu0 %v635
  %4320 = vmatmul.mubr.bf16.gmra.mrb[0].mxu0 %v634
  %v4321 = vpop.f32.mrb[0].mxu0
  %v4322 = vadd.f32 %v4281, %v4321
  %v4323 = vpop.f32.mrb[0].mxu0
  %v4324 = vadd.f32 %v4283, %v4323
  %v4325 = vpop.f32.mrb[0].mxu0
  %v4326 = vpop.f32.mrb[0].mxu0
  %4327 = vdwg.mxu0
  %4328 = vmatprep.subr.bf16.mxu0 %v2993
  %4329 = vmatpush1.bf16.msra.mxu0 %v2992
  %4330 = vmatprep.subr.bf16.mxu0 %v3001
  %4331 = vmatpush1.bf16.msra.mxu0 %v3000
  %4332 = vmatprep.subr.bf16.mxu0 %v3009
  %4333 = vmatpush1.bf16.msra.mxu0 %v3008
  %4334 = vmatprep.subr.bf16.mxu0 %v3017
  %4335 = vmatpush1.bf16.msra.mxu0 %v3016
  %4336 = vmatprep.subr.bf16.mxu0 %v3025
  %4337 = vmatpush1.bf16.msra.mxu0 %v3024
  %4338 = vmatprep.subr.bf16.mxu0 %v3033
  %4339 = vmatpush1.bf16.msra.mxu0 %v3032
  %4340 = vmatprep.subr.bf16.mxu0 %v3041
  %4341 = vmatpush1.bf16.msra.mxu0 %v3040
  %4342 = vmatprep.subr.bf16.mxu0 %v3049
  %4343 = vmatpush1.bf16.msra.mxu0 %v3048
  %4344 = vmatprep.subr.bf16.mxu0 %v3057
  %4345 = vmatpush1.bf16.msra.mxu0 %v3056
  %4346 = vmatprep.subr.bf16.mxu0 %v3065
  %4347 = vmatpush1.bf16.msra.mxu0 %v3064
  %4348 = vmatprep.subr.bf16.mxu0 %v3073
  %4349 = vmatpush1.bf16.msra.mxu0 %v3072
  %4350 = vmatprep.subr.bf16.mxu0 %v3081
  %4351 = vmatpush1.bf16.msra.mxu0 %v3080
  %4352 = vmatprep.subr.bf16.mxu0 %v3089
  %4353 = vmatpush1.bf16.msra.mxu0 %v3088
  %4354 = vmatprep.subr.bf16.mxu0 %v3097
  %4355 = vmatpush1.bf16.msra.mxu0 %v3096
  %4356 = vmatprep.subr.bf16.mxu0 %v3105
  %4357 = vmatpush1.bf16.msra.mxu0 %v3104
  %4358 = vmatprep.subr.bf16.mxu0 %v3113
  %4359 = vmatpush1.bf16.msra.mxu0 %v3112
  %4360 = vmatprep.mubr.bf16.mxu0 %v637
  %4361 = vmatmul.mubr.bf16.gmra.mrb[0].mxu0 %v636
  %v4362 = vpop.f32.mrb[0].mxu0
  %v4363 = vadd.f32 %v4322, %v4362
  %v4364 = vpop.f32.mrb[0].mxu0
  %v4365 = vadd.f32 %v4324, %v4364
  %v4366 = vpop.f32.mrb[0].mxu0
  %v4367 = vpop.f32.mrb[0].mxu0
  %4368 = vdwg.mxu0
  %4369 = vmatprep.subr.bf16.mxu0 %v3121
  %4370 = vmatpush1.bf16.msra.mxu0 %v3120
  %4371 = vmatprep.subr.bf16.mxu0 %v3129
  %4372 = vmatpush1.bf16.msra.mxu0 %v3128
  %4373 = vmatprep.subr.bf16.mxu0 %v3137
  %4374 = vmatpush1.bf16.msra.mxu0 %v3136
  %4375 = vmatprep.subr.bf16.mxu0 %v3145
  %4376 = vmatpush1.bf16.msra.mxu0 %v3144
  %4377 = vmatprep.subr.bf16.mxu0 %v3153
  %4378 = vmatpush1.bf16.msra.mxu0 %v3152
  %4379 = vmatprep.subr.bf16.mxu0 %v3161
  %4380 = vmatpush1.bf16.msra.mxu0 %v3160
  %4381 = vmatprep.subr.bf16.mxu0 %v3169
  %4382 = vmatpush1.bf16.msra.mxu0 %v3168
  %4383 = vmatprep.subr.bf16.mxu0 %v3177
  %4384 = vmatpush1.bf16.msra.mxu0 %v3176
  %4385 = vmatprep.subr.bf16.mxu0 %v3185
  %4386 = vmatpush1.bf16.msra.mxu0 %v3184
  %4387 = vmatprep.subr.bf16.mxu0 %v3193
  %4388 = vmatpush1.bf16.msra.mxu0 %v3192
  %4389 = vmatprep.subr.bf16.mxu0 %v3201
  %4390 = vmatpush1.bf16.msra.mxu0 %v3200
  %4391 = vmatprep.subr.bf16.mxu0 %v3209
  %4392 = vmatpush1.bf16.msra.mxu0 %v3208
  %4393 = vmatprep.subr.bf16.mxu0 %v3217
  %4394 = vmatpush1.bf16.msra.mxu0 %v3216
  %4395 = vmatprep.subr.bf16.mxu0 %v3225
  %4396 = vmatpush1.bf16.msra.mxu0 %v3224
  %4397 = vmatprep.subr.bf16.mxu0 %v3233
  %4398 = vmatpush1.bf16.msra.mxu0 %v3232
  %4399 = vmatprep.subr.bf16.mxu0 %v3241
  %4400 = vmatpush1.bf16.msra.mxu0 %v3240
  %4401 = vmatprep.mubr.bf16.mxu0 %v639
  %4402 = vmatmul.mubr.bf16.gmra.mrb[0].mxu0 %v638
  %v4403 = vpop.f32.mrb[0].mxu0
  %v4404 = vadd.f32 %v4363, %v4403
  %v4405 = vpop.f32.mrb[0].mxu0
  %v4406 = vadd.f32 %v4365, %v4405
  %v4407 = vpop.f32.mrb[0].mxu0
  %v4408 = vpop.f32.mrb[0].mxu0
  %4409 = vdwg.mxu0
  %v4410 = vmax.f32 %v3912, 0.0
  %v4411 = vmax.f32 %v3914, 0.0
  %v4412 = vmax.f32 %v4076, 0.0
  %v4413 = vmax.f32 %v4078, 0.0
  %v4414 = vmax.f32 %v4240, 0.0
  %v4415 = vmax.f32 %v4242, 0.0
  %v4416 = vmax.f32 %v4404, 0.0
  %v4417 = vmax.f32 %v4406, 0.0
  %v4418 = vpack.c.bf16 %v4410, %v4410
  %v4419 = vpack.c.bf16 %v4411, %v4411
  %v4420 = vpack.c.bf16 %v4412, %v4412
  %v4421 = vpack.c.bf16 %v4413, %v4413
  %v4422 = vpack.c.bf16 %v4414, %v4414
  %v4423 = vpack.c.bf16 %v4415, %v4415
  %v4424 = vpack.c.bf16 %v4416, %v4416
  %v4425 = vpack.c.bf16 %v4417, %v4417
  %v4426 = vld [vmem:[%s5] sm:$0xff]
  %v4427 = vld [vmem:[%s5 + $0x8] sm:$0xff]
  %v4428 = vld [vmem:[%s5 + $0x10] sm:$0xff]
  %v4429 = vld [vmem:[%s5 + $0x18] sm:$0xff]
  %v4430 = vld [vmem:[%s5 + $0x20] sm:$0xff]
  %v4431 = vld [vmem:[%s5 + $0x28] sm:$0xff]
  %v4432 = vld [vmem:[%s5 + $0x30] sm:$0xff]
  %v4433 = vld [vmem:[%s5 + $0x38] sm:$0xff]
  %v4434 = vld [vmem:[%s5 + $0x40] sm:$0xff]
  %v4435 = vld [vmem:[%s5 + $0x48] sm:$0xff]
  %v4436 = vld [vmem:[%s5 + $0x50] sm:$0xff]
  %v4437 = vld [vmem:[%s5 + $0x58] sm:$0xff]
  %v4438 = vld [vmem:[%s5 + $0x60] sm:$0xff]
  %v4439 = vld [vmem:[%s5 + $0x68] sm:$0xff]
  %v4440 = vld [vmem:[%s5 + $0x70] sm:$0xff]
  %v4441 = vld [vmem:[%s5 + $0x78] sm:$0xff]
  %v4442 = vld [vmem:[%s5 + $0x80] sm:$0xff]
  %v4443 = vld [vmem:[%s5 + $0x88] sm:$0xff]
  %v4444 = vld [vmem:[%s5 + $0x90] sm:$0xff]
  %v4445 = vld [vmem:[%s5 + $0x98] sm:$0xff]
  %v4446 = vld [vmem:[%s5 + $0xa0] sm:$0xff]
  %v4447 = vld [vmem:[%s5 + $0xa8] sm:$0xff]
  %v4448 = vld [vmem:[%s5 + $0xb0] sm:$0xff]
  %v4449 = vld [vmem:[%s5 + $0xb8] sm:$0xff]
  %v4450 = vld [vmem:[%s5 + $0xc0] sm:$0xff]
  %v4451 = vld [vmem:[%s5 + $0xc8] sm:$0xff]
  %v4452 = vld [vmem:[%s5 + $0xd0] sm:$0xff]
  %v4453 = vld [vmem:[%s5 + $0xd8] sm:$0xff]
  %v4454 = vld [vmem:[%s5 + $0xe0] sm:$0xff]
  %v4455 = vld [vmem:[%s5 + $0xe8] sm:$0xff]
  %v4456 = vld [vmem:[%s5 + $0xf0] sm:$0xff]
  %v4457 = vld [vmem:[%s5 + $0xf8] sm:$0xff]
  %v4458 = vld [vmem:[%s5 + $0x100] sm:$0xff]
  %v4459 = vld [vmem:[%s5 + $0x108] sm:$0xff]
  %v4460 = vld [vmem:[%s5 + $0x110] sm:$0xff]
  %v4461 = vld [vmem:[%s5 + $0x118] sm:$0xff]
  %v4462 = vld [vmem:[%s5 + $0x120] sm:$0xff]
  %v4463 = vld [vmem:[%s5 + $0x128] sm:$0xff]
  %v4464 = vld [vmem:[%s5 + $0x130] sm:$0xff]
  %v4465 = vld [vmem:[%s5 + $0x138] sm:$0xff]
  %v4466 = vld [vmem:[%s5 + $0x140] sm:$0xff]
  %v4467 = vld [vmem:[%s5 + $0x148] sm:$0xff]
  %v4468 = vld [vmem:[%s5 + $0x150] sm:$0xff]
  %v4469 = vld [vmem:[%s5 + $0x158] sm:$0xff]
  %v4470 = vld [vmem:[%s5 + $0x160] sm:$0xff]
  %v4471 = vld [vmem:[%s5 + $0x168] sm:$0xff]
  %v4472 = vld [vmem:[%s5 + $0x170] sm:$0xff]
  %v4473 = vld [vmem:[%s5 + $0x178] sm:$0xff]
  %v4474 = vld [vmem:[%s5 + $0x180] sm:$0xff]
  %v4475 = vld [vmem:[%s5 + $0x188] sm:$0xff]
  %v4476 = vld [vmem:[%s5 + $0x190] sm:$0xff]
  %v4477 = vld [vmem:[%s5 + $0x198] sm:$0xff]
  %v4478 = vld [vmem:[%s5 + $0x1a0] sm:$0xff]
  %v4479 = vld [vmem:[%s5 + $0x1a8] sm:$0xff]
  %v4480 = vld [vmem:[%s5 + $0x1b0] sm:$0xff]
  %v4481 = vld [vmem:[%s5 + $0x1b8] sm:$0xff]
  %v4482 = vld [vmem:[%s5 + $0x1c0] sm:$0xff]
  %v4483 = vld [vmem:[%s5 + $0x1c8] sm:$0xff]
  %v4484 = vld [vmem:[%s5 + $0x1d0] sm:$0xff]
  %v4485 = vld [vmem:[%s5 + $0x1d8] sm:$0xff]
  %v4486 = vld [vmem:[%s5 + $0x1e0] sm:$0xff]
  %v4487 = vld [vmem:[%s5 + $0x1e8] sm:$0xff]
  %v4488 = vld [vmem:[%s5 + $0x1f0] sm:$0xff]
  %v4489 = vld [vmem:[%s5 + $0x1f8] sm:$0xff]
  %v4490 = vld [vmem:[%s5 + $0x200] sm:$0xff]
  %v4491 = vld [vmem:[%s5 + $0x208] sm:$0xff]
  %v4492 = vld [vmem:[%s5 + $0x210] sm:$0xff]
  %v4493 = vld [vmem:[%s5 + $0x218] sm:$0xff]
  %v4494 = vld [vmem:[%s5 + $0x220] sm:$0xff]
  %v4495 = vld [vmem:[%s5 + $0x228] sm:$0xff]
  %v4496 = vld [vmem:[%s5 + $0x230] sm:$0xff]
  %v4497 = vld [vmem:[%s5 + $0x238] sm:$0xff]
  %v4498 = vld [vmem:[%s5 + $0x240] sm:$0xff]
  %v4499 = vld [vmem:[%s5 + $0x248] sm:$0xff]
  %v4500 = vld [vmem:[%s5 + $0x250] sm:$0xff]
  %v4501 = vld [vmem:[%s5 + $0x258] sm:$0xff]
  %v4502 = vld [vmem:[%s5 + $0x260] sm:$0xff]
  %v4503 = vld [vmem:[%s5 + $0x268] sm:$0xff]
  %v4504 = vld [vmem:[%s5 + $0x270] sm:$0xff]
  %v4505 = vld [vmem:[%s5 + $0x278] sm:$0xff]
  %v4506 = vld [vmem:[%s5 + $0x280] sm:$0xff]
  %v4507 = vld [vmem:[%s5 + $0x288] sm:$0xff]
  %v4508 = vld [vmem:[%s5 + $0x290] sm:$0xff]
  %v4509 = vld [vmem:[%s5 + $0x298] sm:$0xff]
  %v4510 = vld [vmem:[%s5 + $0x2a0] sm:$0xff]
  %v4511 = vld [vmem:[%s5 + $0x2a8] sm:$0xff]
  %v4512 = vld [vmem:[%s5 + $0x2b0] sm:$0xff]
  %v4513 = vld [vmem:[%s5 + $0x2b8] sm:$0xff]
  %v4514 = vld [vmem:[%s5 + $0x2c0] sm:$0xff]
  %v4515 = vld [vmem:[%s5 + $0x2c8] sm:$0xff]
  %v4516 = vld [vmem:[%s5 + $0x2d0] sm:$0xff]
  %v4517 = vld [vmem:[%s5 + $0x2d8] sm:$0xff]
  %v4518 = vld [vmem:[%s5 + $0x2e0] sm:$0xff]
  %v4519 = vld [vmem:[%s5 + $0x2e8] sm:$0xff]
  %v4520 = vld [vmem:[%s5 + $0x2f0] sm:$0xff]
  %v4521 = vld [vmem:[%s5 + $0x2f8] sm:$0xff]
  %v4522 = vld [vmem:[%s5 + $0x300] sm:$0xff]
  %v4523 = vld [vmem:[%s5 + $0x308] sm:$0xff]
  %v4524 = vld [vmem:[%s5 + $0x310] sm:$0xff]
  %v4525 = vld [vmem:[%s5 + $0x318] sm:$0xff]
  %v4526 = vld [vmem:[%s5 + $0x320] sm:$0xff]
  %v4527 = vld [vmem:[%s5 + $0x328] sm:$0xff]
  %v4528 = vld [vmem:[%s5 + $0x330] sm:$0xff]
  %v4529 = vld [vmem:[%s5 + $0x338] sm:$0xff]
  %v4530 = vld [vmem:[%s5 + $0x340] sm:$0xff]
  %v4531 = vld [vmem:[%s5 + $0x348] sm:$0xff]
  %v4532 = vld [vmem:[%s5 + $0x350] sm:$0xff]
  %v4533 = vld [vmem:[%s5 + $0x358] sm:$0xff]
  %v4534 = vld [vmem:[%s5 + $0x360] sm:$0xff]
  %v4535 = vld [vmem:[%s5 + $0x368] sm:$0xff]
  %v4536 = vld [vmem:[%s5 + $0x370] sm:$0xff]
  %v4537 = vld [vmem:[%s5 + $0x378] sm:$0xff]
  %v4538 = vld [vmem:[%s5 + $0x380] sm:$0xff]
  %v4539 = vld [vmem:[%s5 + $0x388] sm:$0xff]
  %v4540 = vld [vmem:[%s5 + $0x390] sm:$0xff]
  %v4541 = vld [vmem:[%s5 + $0x398] sm:$0xff]
  %v4542 = vld [vmem:[%s5 + $0x3a0] sm:$0xff]
  %v4543 = vld [vmem:[%s5 + $0x3a8] sm:$0xff]
  %v4544 = vld [vmem:[%s5 + $0x3b0] sm:$0xff]
  %v4545 = vld [vmem:[%s5 + $0x3b8] sm:$0xff]
  %v4546 = vld [vmem:[%s5 + $0x3c0] sm:$0xff]
  %v4547 = vld [vmem:[%s5 + $0x3c8] sm:$0xff]
  %v4548 = vld [vmem:[%s5 + $0x3d0] sm:$0xff]
  %v4549 = vld [vmem:[%s5 + $0x3d8] sm:$0xff]
  %v4550 = vld [vmem:[%s5 + $0x3e0] sm:$0xff]
  %v4551 = vld [vmem:[%s5 + $0x3e8] sm:$0xff]
  %v4552 = vld [vmem:[%s5 + $0x3f0] sm:$0xff]
  %v4553 = vld [vmem:[%s5 + $0x3f8] sm:$0xff]
  %v4554 = vld [vmem:[%s5 + $0x400] sm:$0xff]
  %v4555 = vld [vmem:[%s5 + $0x408] sm:$0xff]
  %v4556 = vld [vmem:[%s5 + $0x410] sm:$0xff]
  %v4557 = vld [vmem:[%s5 + $0x418] sm:$0xff]
  %v4558 = vld [vmem:[%s5 + $0x420] sm:$0xff]
  %v4559 = vld [vmem:[%s5 + $0x428] sm:$0xff]
  %v4560 = vld [vmem:[%s5 + $0x430] sm:$0xff]
  %v4561 = vld [vmem:[%s5 + $0x438] sm:$0xff]
  %v4562 = vld [vmem:[%s5 + $0x440] sm:$0xff]
  %v4563 = vld [vmem:[%s5 + $0x448] sm:$0xff]
  %v4564 = vld [vmem:[%s5 + $0x450] sm:$0xff]
  %v4565 = vld [vmem:[%s5 + $0x458] sm:$0xff]
  %v4566 = vld [vmem:[%s5 + $0x460] sm:$0xff]
  %v4567 = vld [vmem:[%s5 + $0x468] sm:$0xff]
  %v4568 = vld [vmem:[%s5 + $0x470] sm:$0xff]
  %v4569 = vld [vmem:[%s5 + $0x478] sm:$0xff]
  %v4570 = vld [vmem:[%s5 + $0x480] sm:$0xff]
  %v4571 = vld [vmem:[%s5 + $0x488] sm:$0xff]
  %v4572 = vld [vmem:[%s5 + $0x490] sm:$0xff]
  %v4573 = vld [vmem:[%s5 + $0x498] sm:$0xff]
  %v4574 = vld [vmem:[%s5 + $0x4a0] sm:$0xff]
  %v4575 = vld [vmem:[%s5 + $0x4a8] sm:$0xff]
  %v4576 = vld [vmem:[%s5 + $0x4b0] sm:$0xff]
  %v4577 = vld [vmem:[%s5 + $0x4b8] sm:$0xff]
  %v4578 = vld [vmem:[%s5 + $0x4c0] sm:$0xff]
  %v4579 = vld [vmem:[%s5 + $0x4c8] sm:$0xff]
  %v4580 = vld [vmem:[%s5 + $0x4d0] sm:$0xff]
  %v4581 = vld [vmem:[%s5 + $0x4d8] sm:$0xff]
  %v4582 = vld [vmem:[%s5 + $0x4e0] sm:$0xff]
  %v4583 = vld [vmem:[%s5 + $0x4e8] sm:$0xff]
  %v4584 = vld [vmem:[%s5 + $0x4f0] sm:$0xff]
  %v4585 = vld [vmem:[%s5 + $0x4f8] sm:$0xff]
  %v4586 = vld [vmem:[%s5 + $0x500] sm:$0xff]
  %v4587 = vld [vmem:[%s5 + $0x508] sm:$0xff]
  %v4588 = vld [vmem:[%s5 + $0x510] sm:$0xff]
  %v4589 = vld [vmem:[%s5 + $0x518] sm:$0xff]
  %v4590 = vld [vmem:[%s5 + $0x520] sm:$0xff]
  %v4591 = vld [vmem:[%s5 + $0x528] sm:$0xff]
  %v4592 = vld [vmem:[%s5 + $0x530] sm:$0xff]
  %v4593 = vld [vmem:[%s5 + $0x538] sm:$0xff]
  %v4594 = vld [vmem:[%s5 + $0x540] sm:$0xff]
  %v4595 = vld [vmem:[%s5 + $0x548] sm:$0xff]
  %v4596 = vld [vmem:[%s5 + $0x550] sm:$0xff]
  %v4597 = vld [vmem:[%s5 + $0x558] sm:$0xff]
  %v4598 = vld [vmem:[%s5 + $0x560] sm:$0xff]
  %v4599 = vld [vmem:[%s5 + $0x568] sm:$0xff]
  %v4600 = vld [vmem:[%s5 + $0x570] sm:$0xff]
  %v4601 = vld [vmem:[%s5 + $0x578] sm:$0xff]
  %v4602 = vld [vmem:[%s5 + $0x580] sm:$0xff]
  %v4603 = vld [vmem:[%s5 + $0x588] sm:$0xff]
  %v4604 = vld [vmem:[%s5 + $0x590] sm:$0xff]
  %v4605 = vld [vmem:[%s5 + $0x598] sm:$0xff]
  %v4606 = vld [vmem:[%s5 + $0x5a0] sm:$0xff]
  %v4607 = vld [vmem:[%s5 + $0x5a8] sm:$0xff]
  %v4608 = vld [vmem:[%s5 + $0x5b0] sm:$0xff]
  %v4609 = vld [vmem:[%s5 + $0x5b8] sm:$0xff]
  %v4610 = vld [vmem:[%s5 + $0x5c0] sm:$0xff]
  %v4611 = vld [vmem:[%s5 + $0x5c8] sm:$0xff]
  %v4612 = vld [vmem:[%s5 + $0x5d0] sm:$0xff]
  %v4613 = vld [vmem:[%s5 + $0x5d8] sm:$0xff]
  %v4614 = vld [vmem:[%s5 + $0x5e0] sm:$0xff]
  %v4615 = vld [vmem:[%s5 + $0x5e8] sm:$0xff]
  %v4616 = vld [vmem:[%s5 + $0x5f0] sm:$0xff]
  %v4617 = vld [vmem:[%s5 + $0x5f8] sm:$0xff]
  %v4618 = vld [vmem:[%s5 + $0x600] sm:$0xff]
  %v4619 = vld [vmem:[%s5 + $0x608] sm:$0xff]
  %v4620 = vld [vmem:[%s5 + $0x610] sm:$0xff]
  %v4621 = vld [vmem:[%s5 + $0x618] sm:$0xff]
  %v4622 = vld [vmem:[%s5 + $0x620] sm:$0xff]
  %v4623 = vld [vmem:[%s5 + $0x628] sm:$0xff]
  %v4624 = vld [vmem:[%s5 + $0x630] sm:$0xff]
  %v4625 = vld [vmem:[%s5 + $0x638] sm:$0xff]
  %v4626 = vld [vmem:[%s5 + $0x640] sm:$0xff]
  %v4627 = vld [vmem:[%s5 + $0x648] sm:$0xff]
  %v4628 = vld [vmem:[%s5 + $0x650] sm:$0xff]
  %v4629 = vld [vmem:[%s5 + $0x658] sm:$0xff]
  %v4630 = vld [vmem:[%s5 + $0x660] sm:$0xff]
  %v4631 = vld [vmem:[%s5 + $0x668] sm:$0xff]
  %v4632 = vld [vmem:[%s5 + $0x670] sm:$0xff]
  %v4633 = vld [vmem:[%s5 + $0x678] sm:$0xff]
  %v4634 = vld [vmem:[%s5 + $0x680] sm:$0xff]
  %v4635 = vld [vmem:[%s5 + $0x688] sm:$0xff]
  %v4636 = vld [vmem:[%s5 + $0x690] sm:$0xff]
  %v4637 = vld [vmem:[%s5 + $0x698] sm:$0xff]
  %v4638 = vld [vmem:[%s5 + $0x6a0] sm:$0xff]
  %v4639 = vld [vmem:[%s5 + $0x6a8] sm:$0xff]
  %v4640 = vld [vmem:[%s5 + $0x6b0] sm:$0xff]
  %v4641 = vld [vmem:[%s5 + $0x6b8] sm:$0xff]
  %v4642 = vld [vmem:[%s5 + $0x6c0] sm:$0xff]
  %v4643 = vld [vmem:[%s5 + $0x6c8] sm:$0xff]
  %v4644 = vld [vmem:[%s5 + $0x6d0] sm:$0xff]
  %v4645 = vld [vmem:[%s5 + $0x6d8] sm:$0xff]
  %v4646 = vld [vmem:[%s5 + $0x6e0] sm:$0xff]
  %v4647 = vld [vmem:[%s5 + $0x6e8] sm:$0xff]
  %v4648 = vld [vmem:[%s5 + $0x6f0] sm:$0xff]
  %v4649 = vld [vmem:[%s5 + $0x6f8] sm:$0xff]
  %v4650 = vld [vmem:[%s5 + $0x700] sm:$0xff]
  %v4651 = vld [vmem:[%s5 + $0x708] sm:$0xff]
  %v4652 = vld [vmem:[%s5 + $0x710] sm:$0xff]
  %v4653 = vld [vmem:[%s5 + $0x718] sm:$0xff]
  %v4654 = vld [vmem:[%s5 + $0x720] sm:$0xff]
  %v4655 = vld [vmem:[%s5 + $0x728] sm:$0xff]
  %v4656 = vld [vmem:[%s5 + $0x730] sm:$0xff]
  %v4657 = vld [vmem:[%s5 + $0x738] sm:$0xff]
  %v4658 = vld [vmem:[%s5 + $0x740] sm:$0xff]
  %v4659 = vld [vmem:[%s5 + $0x748] sm:$0xff]
  %v4660 = vld [vmem:[%s5 + $0x750] sm:$0xff]
  %v4661 = vld [vmem:[%s5 + $0x758] sm:$0xff]
  %v4662 = vld [vmem:[%s5 + $0x760] sm:$0xff]
  %v4663 = vld [vmem:[%s5 + $0x768] sm:$0xff]
  %v4664 = vld [vmem:[%s5 + $0x770] sm:$0xff]
  %v4665 = vld [vmem:[%s5 + $0x778] sm:$0xff]
  %v4666 = vld [vmem:[%s5 + $0x780] sm:$0xff]
  %v4667 = vld [vmem:[%s5 + $0x788] sm:$0xff]
  %v4668 = vld [vmem:[%s5 + $0x790] sm:$0xff]
  %v4669 = vld [vmem:[%s5 + $0x798] sm:$0xff]
  %v4670 = vld [vmem:[%s5 + $0x7a0] sm:$0xff]
  %v4671 = vld [vmem:[%s5 + $0x7a8] sm:$0xff]
  %v4672 = vld [vmem:[%s5 + $0x7b0] sm:$0xff]
  %v4673 = vld [vmem:[%s5 + $0x7b8] sm:$0xff]
  %v4674 = vld [vmem:[%s5 + $0x7c0] sm:$0xff]
  %v4675 = vld [vmem:[%s5 + $0x7c8] sm:$0xff]
  %v4676 = vld [vmem:[%s5 + $0x7d0] sm:$0xff]
  %v4677 = vld [vmem:[%s5 + $0x7d8] sm:$0xff]
  %v4678 = vld [vmem:[%s5 + $0x7e0] sm:$0xff]
  %v4679 = vld [vmem:[%s5 + $0x7e8] sm:$0xff]
  %v4680 = vld [vmem:[%s5 + $0x7f0] sm:$0xff]
  %v4681 = vld [vmem:[%s5 + $0x7f8] sm:$0xff]
  %v4682 = vld [vmem:[%s5 + $0x800] sm:$0xff]
  %v4683 = vld [vmem:[%s5 + $0x808] sm:$0xff]
  %v4684 = vld [vmem:[%s5 + $0x810] sm:$0xff]
  %v4685 = vld [vmem:[%s5 + $0x818] sm:$0xff]
  %v4686 = vld [vmem:[%s5 + $0x820] sm:$0xff]
  %v4687 = vld [vmem:[%s5 + $0x828] sm:$0xff]
  %v4688 = vld [vmem:[%s5 + $0x830] sm:$0xff]
  %v4689 = vld [vmem:[%s5 + $0x838] sm:$0xff]
  %v4690 = vld [vmem:[%s5 + $0x840] sm:$0xff]
  %v4691 = vld [vmem:[%s5 + $0x848] sm:$0xff]
  %v4692 = vld [vmem:[%s5 + $0x850] sm:$0xff]
  %v4693 = vld [vmem:[%s5 + $0x858] sm:$0xff]
  %v4694 = vld [vmem:[%s5 + $0x860] sm:$0xff]
  %v4695 = vld [vmem:[%s5 + $0x868] sm:$0xff]
  %v4696 = vld [vmem:[%s5 + $0x870] sm:$0xff]
  %v4697 = vld [vmem:[%s5 + $0x878] sm:$0xff]
  %v4698 = vld [vmem:[%s5 + $0x880] sm:$0xff]
  %v4699 = vld [vmem:[%s5 + $0x888] sm:$0xff]
  %v4700 = vld [vmem:[%s5 + $0x890] sm:$0xff]
  %v4701 = vld [vmem:[%s5 + $0x898] sm:$0xff]
  %v4702 = vld [vmem:[%s5 + $0x8a0] sm:$0xff]
  %v4703 = vld [vmem:[%s5 + $0x8a8] sm:$0xff]
  %v4704 = vld [vmem:[%s5 + $0x8b0] sm:$0xff]
  %v4705 = vld [vmem:[%s5 + $0x8b8] sm:$0xff]
  %v4706 = vld [vmem:[%s5 + $0x8c0] sm:$0xff]
  %v4707 = vld [vmem:[%s5 + $0x8c8] sm:$0xff]
  %v4708 = vld [vmem:[%s5 + $0x8d0] sm:$0xff]
  %v4709 = vld [vmem:[%s5 + $0x8d8] sm:$0xff]
  %v4710 = vld [vmem:[%s5 + $0x8e0] sm:$0xff]
  %v4711 = vld [vmem:[%s5 + $0x8e8] sm:$0xff]
  %v4712 = vld [vmem:[%s5 + $0x8f0] sm:$0xff]
  %v4713 = vld [vmem:[%s5 + $0x8f8] sm:$0xff]
  %v4714 = vld [vmem:[%s5 + $0x900] sm:$0xff]
  %v4715 = vld [vmem:[%s5 + $0x908] sm:$0xff]
  %v4716 = vld [vmem:[%s5 + $0x910] sm:$0xff]
  %v4717 = vld [vmem:[%s5 + $0x918] sm:$0xff]
  %v4718 = vld [vmem:[%s5 + $0x920] sm:$0xff]
  %v4719 = vld [vmem:[%s5 + $0x928] sm:$0xff]
  %v4720 = vld [vmem:[%s5 + $0x930] sm:$0xff]
  %v4721 = vld [vmem:[%s5 + $0x938] sm:$0xff]
  %v4722 = vld [vmem:[%s5 + $0x940] sm:$0xff]
  %v4723 = vld [vmem:[%s5 + $0x948] sm:$0xff]
  %v4724 = vld [vmem:[%s5 + $0x950] sm:$0xff]
  %v4725 = vld [vmem:[%s5 + $0x958] sm:$0xff]
  %v4726 = vld [vmem:[%s5 + $0x960] sm:$0xff]
  %v4727 = vld [vmem:[%s5 + $0x968] sm:$0xff]
  %v4728 = vld [vmem:[%s5 + $0x970] sm:$0xff]
  %v4729 = vld [vmem:[%s5 + $0x978] sm:$0xff]
  %v4730 = vld [vmem:[%s5 + $0x980] sm:$0xff]
  %v4731 = vld [vmem:[%s5 + $0x988] sm:$0xff]
  %v4732 = vld [vmem:[%s5 + $0x990] sm:$0xff]
  %v4733 = vld [vmem:[%s5 + $0x998] sm:$0xff]
  %v4734 = vld [vmem:[%s5 + $0x9a0] sm:$0xff]
  %v4735 = vld [vmem:[%s5 + $0x9a8] sm:$0xff]
  %v4736 = vld [vmem:[%s5 + $0x9b0] sm:$0xff]
  %v4737 = vld [vmem:[%s5 + $0x9b8] sm:$0xff]
  %v4738 = vld [vmem:[%s5 + $0x9c0] sm:$0xff]
  %v4739 = vld [vmem:[%s5 + $0x9c8] sm:$0xff]
  %v4740 = vld [vmem:[%s5 + $0x9d0] sm:$0xff]
  %v4741 = vld [vmem:[%s5 + $0x9d8] sm:$0xff]
  %v4742 = vld [vmem:[%s5 + $0x9e0] sm:$0xff]
  %v4743 = vld [vmem:[%s5 + $0x9e8] sm:$0xff]
  %v4744 = vld [vmem:[%s5 + $0x9f0] sm:$0xff]
  %v4745 = vld [vmem:[%s5 + $0x9f8] sm:$0xff]
  %v4746 = vld [vmem:[%s5 + $0xa00] sm:$0xff]
  %v4747 = vld [vmem:[%s5 + $0xa08] sm:$0xff]
  %v4748 = vld [vmem:[%s5 + $0xa10] sm:$0xff]
  %v4749 = vld [vmem:[%s5 + $0xa18] sm:$0xff]
  %v4750 = vld [vmem:[%s5 + $0xa20] sm:$0xff]
  %v4751 = vld [vmem:[%s5 + $0xa28] sm:$0xff]
  %v4752 = vld [vmem:[%s5 + $0xa30] sm:$0xff]
  %v4753 = vld [vmem:[%s5 + $0xa38] sm:$0xff]
  %v4754 = vld [vmem:[%s5 + $0xa40] sm:$0xff]
  %v4755 = vld [vmem:[%s5 + $0xa48] sm:$0xff]
  %v4756 = vld [vmem:[%s5 + $0xa50] sm:$0xff]
  %v4757 = vld [vmem:[%s5 + $0xa58] sm:$0xff]
  %v4758 = vld [vmem:[%s5 + $0xa60] sm:$0xff]
  %v4759 = vld [vmem:[%s5 + $0xa68] sm:$0xff]
  %v4760 = vld [vmem:[%s5 + $0xa70] sm:$0xff]
  %v4761 = vld [vmem:[%s5 + $0xa78] sm:$0xff]
  %v4762 = vld [vmem:[%s5 + $0xa80] sm:$0xff]
  %v4763 = vld [vmem:[%s5 + $0xa88] sm:$0xff]
  %v4764 = vld [vmem:[%s5 + $0xa90] sm:$0xff]
  %v4765 = vld [vmem:[%s5 + $0xa98] sm:$0xff]
  %v4766 = vld [vmem:[%s5 + $0xaa0] sm:$0xff]
  %v4767 = vld [vmem:[%s5 + $0xaa8] sm:$0xff]
  %v4768 = vld [vmem:[%s5 + $0xab0] sm:$0xff]
  %v4769 = vld [vmem:[%s5 + $0xab8] sm:$0xff]
  %v4770 = vld [vmem:[%s5 + $0xac0] sm:$0xff]
  %v4771 = vld [vmem:[%s5 + $0xac8] sm:$0xff]
  %v4772 = vld [vmem:[%s5 + $0xad0] sm:$0xff]
  %v4773 = vld [vmem:[%s5 + $0xad8] sm:$0xff]
  %v4774 = vld [vmem:[%s5 + $0xae0] sm:$0xff]
  %v4775 = vld [vmem:[%s5 + $0xae8] sm:$0xff]
  %v4776 = vld [vmem:[%s5 + $0xaf0] sm:$0xff]
  %v4777 = vld [vmem:[%s5 + $0xaf8] sm:$0xff]
  %v4778 = vld [vmem:[%s5 + $0xb00] sm:$0xff]
  %v4779 = vld [vmem:[%s5 + $0xb08] sm:$0xff]
  %v4780 = vld [vmem:[%s5 + $0xb10] sm:$0xff]
  %v4781 = vld [vmem:[%s5 + $0xb18] sm:$0xff]
  %v4782 = vld [vmem:[%s5 + $0xb20] sm:$0xff]
  %v4783 = vld [vmem:[%s5 + $0xb28] sm:$0xff]
  %v4784 = vld [vmem:[%s5 + $0xb30] sm:$0xff]
  %v4785 = vld [vmem:[%s5 + $0xb38] sm:$0xff]
  %v4786 = vld [vmem:[%s5 + $0xb40] sm:$0xff]
  %v4787 = vld [vmem:[%s5 + $0xb48] sm:$0xff]
  %v4788 = vld [vmem:[%s5 + $0xb50] sm:$0xff]
  %v4789 = vld [vmem:[%s5 + $0xb58] sm:$0xff]
  %v4790 = vld [vmem:[%s5 + $0xb60] sm:$0xff]
  %v4791 = vld [vmem:[%s5 + $0xb68] sm:$0xff]
  %v4792 = vld [vmem:[%s5 + $0xb70] sm:$0xff]
  %v4793 = vld [vmem:[%s5 + $0xb78] sm:$0xff]
  %v4794 = vld [vmem:[%s5 + $0xb80] sm:$0xff]
  %v4795 = vld [vmem:[%s5 + $0xb88] sm:$0xff]
  %v4796 = vld [vmem:[%s5 + $0xb90] sm:$0xff]
  %v4797 = vld [vmem:[%s5 + $0xb98] sm:$0xff]
  %v4798 = vld [vmem:[%s5 + $0xba0] sm:$0xff]
  %v4799 = vld [vmem:[%s5 + $0xba8] sm:$0xff]
  %v4800 = vld [vmem:[%s5 + $0xbb0] sm:$0xff]
  %v4801 = vld [vmem:[%s5 + $0xbb8] sm:$0xff]
  %v4802 = vld [vmem:[%s5 + $0xbc0] sm:$0xff]
  %v4803 = vld [vmem:[%s5 + $0xbc8] sm:$0xff]
  %v4804 = vld [vmem:[%s5 + $0xbd0] sm:$0xff]
  %v4805 = vld [vmem:[%s5 + $0xbd8] sm:$0xff]
  %v4806 = vld [vmem:[%s5 + $0xbe0] sm:$0xff]
  %v4807 = vld [vmem:[%s5 + $0xbe8] sm:$0xff]
  %v4808 = vld [vmem:[%s5 + $0xbf0] sm:$0xff]
  %v4809 = vld [vmem:[%s5 + $0xbf8] sm:$0xff]
  %v4810 = vld [vmem:[%s5 + $0xc00] sm:$0xff]
  %v4811 = vld [vmem:[%s5 + $0xc08] sm:$0xff]
  %v4812 = vld [vmem:[%s5 + $0xc10] sm:$0xff]
  %v4813 = vld [vmem:[%s5 + $0xc18] sm:$0xff]
  %v4814 = vld [vmem:[%s5 + $0xc20] sm:$0xff]
  %v4815 = vld [vmem:[%s5 + $0xc28] sm:$0xff]
  %v4816 = vld [vmem:[%s5 + $0xc30] sm:$0xff]
  %v4817 = vld [vmem:[%s5 + $0xc38] sm:$0xff]
  %v4818 = vld [vmem:[%s5 + $0xc40] sm:$0xff]
  %v4819 = vld [vmem:[%s5 + $0xc48] sm:$0xff]
  %v4820 = vld [vmem:[%s5 + $0xc50] sm:$0xff]
  %v4821 = vld [vmem:[%s5 + $0xc58] sm:$0xff]
  %v4822 = vld [vmem:[%s5 + $0xc60] sm:$0xff]
  %v4823 = vld [vmem:[%s5 + $0xc68] sm:$0xff]
  %v4824 = vld [vmem:[%s5 + $0xc70] sm:$0xff]
  %v4825 = vld [vmem:[%s5 + $0xc78] sm:$0xff]
  %v4826 = vld [vmem:[%s5 + $0xc80] sm:$0xff]
  %v4827 = vld [vmem:[%s5 + $0xc88] sm:$0xff]
  %v4828 = vld [vmem:[%s5 + $0xc90] sm:$0xff]
  %v4829 = vld [vmem:[%s5 + $0xc98] sm:$0xff]
  %v4830 = vld [vmem:[%s5 + $0xca0] sm:$0xff]
  %v4831 = vld [vmem:[%s5 + $0xca8] sm:$0xff]
  %v4832 = vld [vmem:[%s5 + $0xcb0] sm:$0xff]
  %v4833 = vld [vmem:[%s5 + $0xcb8] sm:$0xff]
  %v4834 = vld [vmem:[%s5 + $0xcc0] sm:$0xff]
  %v4835 = vld [vmem:[%s5 + $0xcc8] sm:$0xff]
  %v4836 = vld [vmem:[%s5 + $0xcd0] sm:$0xff]
  %v4837 = vld [vmem:[%s5 + $0xcd8] sm:$0xff]
  %v4838 = vld [vmem:[%s5 + $0xce0] sm:$0xff]
  %v4839 = vld [vmem:[%s5 + $0xce8] sm:$0xff]
  %v4840 = vld [vmem:[%s5 + $0xcf0] sm:$0xff]
  %v4841 = vld [vmem:[%s5 + $0xcf8] sm:$0xff]
  %v4842 = vld [vmem:[%s5 + $0xd00] sm:$0xff]
  %v4843 = vld [vmem:[%s5 + $0xd08] sm:$0xff]
  %v4844 = vld [vmem:[%s5 + $0xd10] sm:$0xff]
  %v4845 = vld [vmem:[%s5 + $0xd18] sm:$0xff]
  %v4846 = vld [vmem:[%s5 + $0xd20] sm:$0xff]
  %v4847 = vld [vmem:[%s5 + $0xd28] sm:$0xff]
  %v4848 = vld [vmem:[%s5 + $0xd30] sm:$0xff]
  %v4849 = vld [vmem:[%s5 + $0xd38] sm:$0xff]
  %v4850 = vld [vmem:[%s5 + $0xd40] sm:$0xff]
  %v4851 = vld [vmem:[%s5 + $0xd48] sm:$0xff]
  %v4852 = vld [vmem:[%s5 + $0xd50] sm:$0xff]
  %v4853 = vld [vmem:[%s5 + $0xd58] sm:$0xff]
  %v4854 = vld [vmem:[%s5 + $0xd60] sm:$0xff]
  %v4855 = vld [vmem:[%s5 + $0xd68] sm:$0xff]
  %v4856 = vld [vmem:[%s5 + $0xd70] sm:$0xff]
  %v4857 = vld [vmem:[%s5 + $0xd78] sm:$0xff]
  %v4858 = vld [vmem:[%s5 + $0xd80] sm:$0xff]
  %v4859 = vld [vmem:[%s5 + $0xd88] sm:$0xff]
  %v4860 = vld [vmem:[%s5 + $0xd90] sm:$0xff]
  %v4861 = vld [vmem:[%s5 + $0xd98] sm:$0xff]
  %v4862 = vld [vmem:[%s5 + $0xda0] sm:$0xff]
  %v4863 = vld [vmem:[%s5 + $0xda8] sm:$0xff]
  %v4864 = vld [vmem:[%s5 + $0xdb0] sm:$0xff]
  %v4865 = vld [vmem:[%s5 + $0xdb8] sm:$0xff]
  %v4866 = vld [vmem:[%s5 + $0xdc0] sm:$0xff]
  %v4867 = vld [vmem:[%s5 + $0xdc8] sm:$0xff]
  %v4868 = vld [vmem:[%s5 + $0xdd0] sm:$0xff]
  %v4869 = vld [vmem:[%s5 + $0xdd8] sm:$0xff]
  %v4870 = vld [vmem:[%s5 + $0xde0] sm:$0xff]
  %v4871 = vld [vmem:[%s5 + $0xde8] sm:$0xff]
  %v4872 = vld [vmem:[%s5 + $0xdf0] sm:$0xff]
  %v4873 = vld [vmem:[%s5 + $0xdf8] sm:$0xff]
  %v4874 = vld [vmem:[%s5 + $0xe00] sm:$0xff]
  %v4875 = vld [vmem:[%s5 + $0xe08] sm:$0xff]
  %v4876 = vld [vmem:[%s5 + $0xe10] sm:$0xff]
  %v4877 = vld [vmem:[%s5 + $0xe18] sm:$0xff]
  %v4878 = vld [vmem:[%s5 + $0xe20] sm:$0xff]
  %v4879 = vld [vmem:[%s5 + $0xe28] sm:$0xff]
  %v4880 = vld [vmem:[%s5 + $0xe30] sm:$0xff]
  %v4881 = vld [vmem:[%s5 + $0xe38] sm:$0xff]
  %v4882 = vld [vmem:[%s5 + $0xe40] sm:$0xff]
  %v4883 = vld [vmem:[%s5 + $0xe48] sm:$0xff]
  %v4884 = vld [vmem:[%s5 + $0xe50] sm:$0xff]
  %v4885 = vld [vmem:[%s5 + $0xe58] sm:$0xff]
  %v4886 = vld [vmem:[%s5 + $0xe60] sm:$0xff]
  %v4887 = vld [vmem:[%s5 + $0xe68] sm:$0xff]
  %v4888 = vld [vmem:[%s5 + $0xe70] sm:$0xff]
  %v4889 = vld [vmem:[%s5 + $0xe78] sm:$0xff]
  %v4890 = vld [vmem:[%s5 + $0xe80] sm:$0xff]
  %v4891 = vld [vmem:[%s5 + $0xe88] sm:$0xff]
  %v4892 = vld [vmem:[%s5 + $0xe90] sm:$0xff]
  %v4893 = vld [vmem:[%s5 + $0xe98] sm:$0xff]
  %v4894 = vld [vmem:[%s5 + $0xea0] sm:$0xff]
  %v4895 = vld [vmem:[%s5 + $0xea8] sm:$0xff]
  %v4896 = vld [vmem:[%s5 + $0xeb0] sm:$0xff]
  %v4897 = vld [vmem:[%s5 + $0xeb8] sm:$0xff]
  %v4898 = vld [vmem:[%s5 + $0xec0] sm:$0xff]
  %v4899 = vld [vmem:[%s5 + $0xec8] sm:$0xff]
  %v4900 = vld [vmem:[%s5 + $0xed0] sm:$0xff]
  %v4901 = vld [vmem:[%s5 + $0xed8] sm:$0xff]
  %v4902 = vld [vmem:[%s5 + $0xee0] sm:$0xff]
  %v4903 = vld [vmem:[%s5 + $0xee8] sm:$0xff]
  %v4904 = vld [vmem:[%s5 + $0xef0] sm:$0xff]
  %v4905 = vld [vmem:[%s5 + $0xef8] sm:$0xff]
  %v4906 = vld [vmem:[%s5 + $0xf00] sm:$0xff]
  %v4907 = vld [vmem:[%s5 + $0xf08] sm:$0xff]
  %v4908 = vld [vmem:[%s5 + $0xf10] sm:$0xff]
  %v4909 = vld [vmem:[%s5 + $0xf18] sm:$0xff]
  %v4910 = vld [vmem:[%s5 + $0xf20] sm:$0xff]
  %v4911 = vld [vmem:[%s5 + $0xf28] sm:$0xff]
  %v4912 = vld [vmem:[%s5 + $0xf30] sm:$0xff]
  %v4913 = vld [vmem:[%s5 + $0xf38] sm:$0xff]
  %v4914 = vld [vmem:[%s5 + $0xf40] sm:$0xff]
  %v4915 = vld [vmem:[%s5 + $0xf48] sm:$0xff]
  %v4916 = vld [vmem:[%s5 + $0xf50] sm:$0xff]
  %v4917 = vld [vmem:[%s5 + $0xf58] sm:$0xff]
  %v4918 = vld [vmem:[%s5 + $0xf60] sm:$0xff]
  %v4919 = vld [vmem:[%s5 + $0xf68] sm:$0xff]
  %v4920 = vld [vmem:[%s5 + $0xf70] sm:$0xff]
  %v4921 = vld [vmem:[%s5 + $0xf78] sm:$0xff]
  %v4922 = vld [vmem:[%s5 + $0xf80] sm:$0xff]
  %v4923 = vld [vmem:[%s5 + $0xf88] sm:$0xff]
  %v4924 = vld [vmem:[%s5 + $0xf90] sm:$0xff]
  %v4925 = vld [vmem:[%s5 + $0xf98] sm:$0xff]
  %v4926 = vld [vmem:[%s5 + $0xfa0] sm:$0xff]
  %v4927 = vld [vmem:[%s5 + $0xfa8] sm:$0xff]
  %v4928 = vld [vmem:[%s5 + $0xfb0] sm:$0xff]
  %v4929 = vld [vmem:[%s5 + $0xfb8] sm:$0xff]
  %v4930 = vld [vmem:[%s5 + $0xfc0] sm:$0xff]
  %v4931 = vld [vmem:[%s5 + $0xfc8] sm:$0xff]
  %v4932 = vld [vmem:[%s5 + $0xfd0] sm:$0xff]
  %v4933 = vld [vmem:[%s5 + $0xfd8] sm:$0xff]
  %v4934 = vld [vmem:[%s5 + $0xfe0] sm:$0xff]
  %v4935 = vld [vmem:[%s5 + $0xfe8] sm:$0xff]
  %v4936 = vld [vmem:[%s5 + $0xff0] sm:$0xff]
  %v4937 = vld [vmem:[%s5 + $0xff8] sm:$0xff]
  %v4938 = vld [vmem:[%s6] sm:$0xff]
  %v4940 = vlaneseq
  %v4941 = vshrl.u32 %v4940, 7
  %v4942 = vsub.s32 0, %v4941
  %v4943 = vrot.slane %v4938, %v4942
  %v4944 = vlaneseq
  %v4945 = vshrl.u32 %v4944, 7
  %v4946 = vsub.s32 1, %v4945
  %v4947 = vrot.slane %v4938, %v4946
  %v4948 = vlaneseq
  %v4949 = vshrl.u32 %v4948, 7
  %v4950 = vsub.s32 2, %v4949
  %v4951 = vrot.slane %v4938, %v4950
  %v4952 = vlaneseq
  %v4953 = vshrl.u32 %v4952, 7
  %v4954 = vsub.s32 3, %v4953
  %v4955 = vrot.slane %v4938, %v4954
  %v4956 = vlaneseq
  %v4957 = vshrl.u32 %v4956, 7
  %v4958 = vsub.s32 4, %v4957
  %v4959 = vrot.slane %v4938, %v4958
  %v4960 = vlaneseq
  %v4961 = vshrl.u32 %v4960, 7
  %v4962 = vsub.s32 5, %v4961
  %v4963 = vrot.slane %v4938, %v4962
  %v4964 = vlaneseq
  %v4965 = vshrl.u32 %v4964, 7
  %v4966 = vsub.s32 6, %v4965
  %v4967 = vrot.slane %v4938, %v4966
  %v4968 = vlaneseq
  %v4969 = vshrl.u32 %v4968, 7
  %v4970 = vsub.s32 7, %v4969
  %v4971 = vrot.slane %v4938, %v4970
  %v5492 = vunpack.c.l.b16 %v4426
  %v5493 = vunpack.c.h.b16 %v4426
  %v5494 = vunpack.c.l.b16 %v4427
  %v5495 = vunpack.c.h.b16 %v4427
  %v5496 = vunpack.c.l.b16 %v4428
  %v5497 = vunpack.c.h.b16 %v4428
  %v5498 = vunpack.c.l.b16 %v4429
  %v5499 = vunpack.c.h.b16 %v4429
  %v5500 = vunpack.c.l.b16 %v4430
  %v5501 = vunpack.c.h.b16 %v4430
  %v5502 = vunpack.c.l.b16 %v4431
  %v5503 = vunpack.c.h.b16 %v4431
  %v5504 = vunpack.c.l.b16 %v4432
  %v5505 = vunpack.c.h.b16 %v4432
  %v5506 = vunpack.c.l.b16 %v4433
  %v5507 = vunpack.c.h.b16 %v4433
  %v5508 = vunpack.c.l.b16 %v4434
  %v5509 = vunpack.c.h.b16 %v4434
  %v5510 = vunpack.c.l.b16 %v4435
  %v5511 = vunpack.c.h.b16 %v4435
  %v5512 = vunpack.c.l.b16 %v4436
  %v5513 = vunpack.c.h.b16 %v4436
  %v5514 = vunpack.c.l.b16 %v4437
  %v5515 = vunpack.c.h.b16 %v4437
  %v5516 = vunpack.c.l.b16 %v4438
  %v5517 = vunpack.c.h.b16 %v4438
  %v5518 = vunpack.c.l.b16 %v4439
  %v5519 = vunpack.c.h.b16 %v4439
  %v5520 = vunpack.c.l.b16 %v4440
  %v5521 = vunpack.c.h.b16 %v4440
  %v5522 = vunpack.c.l.b16 %v4441
  %v5523 = vunpack.c.h.b16 %v4441
  %v5524 = vunpack.c.l.b16 %v4442
  %v5525 = vunpack.c.h.b16 %v4442
  %v5526 = vunpack.c.l.b16 %v4443
  %v5527 = vunpack.c.h.b16 %v4443
  %v5528 = vunpack.c.l.b16 %v4444
  %v5529 = vunpack.c.h.b16 %v4444
  %v5530 = vunpack.c.l.b16 %v4445
  %v5531 = vunpack.c.h.b16 %v4445
  %v5532 = vunpack.c.l.b16 %v4446
  %v5533 = vunpack.c.h.b16 %v4446
  %v5534 = vunpack.c.l.b16 %v4447
  %v5535 = vunpack.c.h.b16 %v4447
  %v5536 = vunpack.c.l.b16 %v4448
  %v5537 = vunpack.c.h.b16 %v4448
  %v5538 = vunpack.c.l.b16 %v4449
  %v5539 = vunpack.c.h.b16 %v4449
  %v5540 = vunpack.c.l.b16 %v4450
  %v5541 = vunpack.c.h.b16 %v4450
  %v5542 = vunpack.c.l.b16 %v4451
  %v5543 = vunpack.c.h.b16 %v4451
  %v5544 = vunpack.c.l.b16 %v4452
  %v5545 = vunpack.c.h.b16 %v4452
  %v5546 = vunpack.c.l.b16 %v4453
  %v5547 = vunpack.c.h.b16 %v4453
  %v5548 = vunpack.c.l.b16 %v4454
  %v5549 = vunpack.c.h.b16 %v4454
  %v5550 = vunpack.c.l.b16 %v4455
  %v5551 = vunpack.c.h.b16 %v4455
  %v5552 = vunpack.c.l.b16 %v4456
  %v5553 = vunpack.c.h.b16 %v4456
  %v5554 = vunpack.c.l.b16 %v4457
  %v5555 = vunpack.c.h.b16 %v4457
  %v5556 = vunpack.c.l.b16 %v4458
  %v5557 = vunpack.c.h.b16 %v4458
  %v5558 = vunpack.c.l.b16 %v4459
  %v5559 = vunpack.c.h.b16 %v4459
  %v5560 = vunpack.c.l.b16 %v4460
  %v5561 = vunpack.c.h.b16 %v4460
  %v5562 = vunpack.c.l.b16 %v4461
  %v5563 = vunpack.c.h.b16 %v4461
  %v5564 = vunpack.c.l.b16 %v4462
  %v5565 = vunpack.c.h.b16 %v4462
  %v5566 = vunpack.c.l.b16 %v4463
  %v5567 = vunpack.c.h.b16 %v4463
  %v5568 = vunpack.c.l.b16 %v4464
  %v5569 = vunpack.c.h.b16 %v4464
  %v5570 = vunpack.c.l.b16 %v4465
  %v5571 = vunpack.c.h.b16 %v4465
  %v5572 = vunpack.c.l.b16 %v4466
  %v5573 = vunpack.c.h.b16 %v4466
  %v5574 = vunpack.c.l.b16 %v4467
  %v5575 = vunpack.c.h.b16 %v4467
  %v5576 = vunpack.c.l.b16 %v4468
  %v5577 = vunpack.c.h.b16 %v4468
  %v5578 = vunpack.c.l.b16 %v4469
  %v5579 = vunpack.c.h.b16 %v4469
  %v5580 = vunpack.c.l.b16 %v4470
  %v5581 = vunpack.c.h.b16 %v4470
  %v5582 = vunpack.c.l.b16 %v4471
  %v5583 = vunpack.c.h.b16 %v4471
  %v5584 = vunpack.c.l.b16 %v4472
  %v5585 = vunpack.c.h.b16 %v4472
  %v5586 = vunpack.c.l.b16 %v4473
  %v5587 = vunpack.c.h.b16 %v4473
  %v5588 = vunpack.c.l.b16 %v4474
  %v5589 = vunpack.c.h.b16 %v4474
  %v5590 = vunpack.c.l.b16 %v4475
  %v5591 = vunpack.c.h.b16 %v4475
  %v5592 = vunpack.c.l.b16 %v4476
  %v5593 = vunpack.c.h.b16 %v4476
  %v5594 = vunpack.c.l.b16 %v4477
  %v5595 = vunpack.c.h.b16 %v4477
  %v5596 = vunpack.c.l.b16 %v4478
  %v5597 = vunpack.c.h.b16 %v4478
  %v5598 = vunpack.c.l.b16 %v4479
  %v5599 = vunpack.c.h.b16 %v4479
  %v5600 = vunpack.c.l.b16 %v4480
  %v5601 = vunpack.c.h.b16 %v4480
  %v5602 = vunpack.c.l.b16 %v4481
  %v5603 = vunpack.c.h.b16 %v4481
  %v5604 = vunpack.c.l.b16 %v4482
  %v5605 = vunpack.c.h.b16 %v4482
  %v5606 = vunpack.c.l.b16 %v4483
  %v5607 = vunpack.c.h.b16 %v4483
  %v5608 = vunpack.c.l.b16 %v4484
  %v5609 = vunpack.c.h.b16 %v4484
  %v5610 = vunpack.c.l.b16 %v4485
  %v5611 = vunpack.c.h.b16 %v4485
  %v5612 = vunpack.c.l.b16 %v4486
  %v5613 = vunpack.c.h.b16 %v4486
  %v5614 = vunpack.c.l.b16 %v4487
  %v5615 = vunpack.c.h.b16 %v4487
  %v5616 = vunpack.c.l.b16 %v4488
  %v5617 = vunpack.c.h.b16 %v4488
  %v5618 = vunpack.c.l.b16 %v4489
  %v5619 = vunpack.c.h.b16 %v4489
  %v5620 = vunpack.c.l.b16 %v4490
  %v5621 = vunpack.c.h.b16 %v4490
  %v5622 = vunpack.c.l.b16 %v4491
  %v5623 = vunpack.c.h.b16 %v4491
  %v5624 = vunpack.c.l.b16 %v4492
  %v5625 = vunpack.c.h.b16 %v4492
  %v5626 = vunpack.c.l.b16 %v4493
  %v5627 = vunpack.c.h.b16 %v4493
  %v5628 = vunpack.c.l.b16 %v4494
  %v5629 = vunpack.c.h.b16 %v4494
  %v5630 = vunpack.c.l.b16 %v4495
  %v5631 = vunpack.c.h.b16 %v4495
  %v5632 = vunpack.c.l.b16 %v4496
  %v5633 = vunpack.c.h.b16 %v4496
  %v5634 = vunpack.c.l.b16 %v4497
  %v5635 = vunpack.c.h.b16 %v4497
  %v5636 = vunpack.c.l.b16 %v4498
  %v5637 = vunpack.c.h.b16 %v4498
  %v5638 = vunpack.c.l.b16 %v4499
  %v5639 = vunpack.c.h.b16 %v4499
  %v5640 = vunpack.c.l.b16 %v4500
  %v5641 = vunpack.c.h.b16 %v4500
  %v5642 = vunpack.c.l.b16 %v4501
  %v5643 = vunpack.c.h.b16 %v4501
  %v5644 = vunpack.c.l.b16 %v4502
  %v5645 = vunpack.c.h.b16 %v4502
  %v5646 = vunpack.c.l.b16 %v4503
  %v5647 = vunpack.c.h.b16 %v4503
  %v5648 = vunpack.c.l.b16 %v4504
  %v5649 = vunpack.c.h.b16 %v4504
  %v5650 = vunpack.c.l.b16 %v4505
  %v5651 = vunpack.c.h.b16 %v4505
  %v5652 = vunpack.c.l.b16 %v4506
  %v5653 = vunpack.c.h.b16 %v4506
  %v5654 = vunpack.c.l.b16 %v4507
  %v5655 = vunpack.c.h.b16 %v4507
  %v5656 = vunpack.c.l.b16 %v4508
  %v5657 = vunpack.c.h.b16 %v4508
  %v5658 = vunpack.c.l.b16 %v4509
  %v5659 = vunpack.c.h.b16 %v4509
  %v5660 = vunpack.c.l.b16 %v4510
  %v5661 = vunpack.c.h.b16 %v4510
  %v5662 = vunpack.c.l.b16 %v4511
  %v5663 = vunpack.c.h.b16 %v4511
  %v5664 = vunpack.c.l.b16 %v4512
  %v5665 = vunpack.c.h.b16 %v4512
  %v5666 = vunpack.c.l.b16 %v4513
  %v5667 = vunpack.c.h.b16 %v4513
  %v5668 = vunpack.c.l.b16 %v4514
  %v5669 = vunpack.c.h.b16 %v4514
  %v5670 = vunpack.c.l.b16 %v4515
  %v5671 = vunpack.c.h.b16 %v4515
  %v5672 = vunpack.c.l.b16 %v4516
  %v5673 = vunpack.c.h.b16 %v4516
  %v5674 = vunpack.c.l.b16 %v4517
  %v5675 = vunpack.c.h.b16 %v4517
  %v5676 = vunpack.c.l.b16 %v4518
  %v5677 = vunpack.c.h.b16 %v4518
  %v5678 = vunpack.c.l.b16 %v4519
  %v5679 = vunpack.c.h.b16 %v4519
  %v5680 = vunpack.c.l.b16 %v4520
  %v5681 = vunpack.c.h.b16 %v4520
  %v5682 = vunpack.c.l.b16 %v4521
  %v5683 = vunpack.c.h.b16 %v4521
  %v5684 = vunpack.c.l.b16 %v4522
  %v5685 = vunpack.c.h.b16 %v4522
  %v5686 = vunpack.c.l.b16 %v4523
  %v5687 = vunpack.c.h.b16 %v4523
  %v5688 = vunpack.c.l.b16 %v4524
  %v5689 = vunpack.c.h.b16 %v4524
  %v5690 = vunpack.c.l.b16 %v4525
  %v5691 = vunpack.c.h.b16 %v4525
  %v5692 = vunpack.c.l.b16 %v4526
  %v5693 = vunpack.c.h.b16 %v4526
  %v5694 = vunpack.c.l.b16 %v4527
  %v5695 = vunpack.c.h.b16 %v4527
  %v5696 = vunpack.c.l.b16 %v4528
  %v5697 = vunpack.c.h.b16 %v4528
  %v5698 = vunpack.c.l.b16 %v4529
  %v5699 = vunpack.c.h.b16 %v4529
  %v5700 = vunpack.c.l.b16 %v4530
  %v5701 = vunpack.c.h.b16 %v4530
  %v5702 = vunpack.c.l.b16 %v4531
  %v5703 = vunpack.c.h.b16 %v4531
  %v5704 = vunpack.c.l.b16 %v4532
  %v5705 = vunpack.c.h.b16 %v4532
  %v5706 = vunpack.c.l.b16 %v4533
  %v5707 = vunpack.c.h.b16 %v4533
  %v5708 = vunpack.c.l.b16 %v4534
  %v5709 = vunpack.c.h.b16 %v4534
  %v5710 = vunpack.c.l.b16 %v4535
  %v5711 = vunpack.c.h.b16 %v4535
  %v5712 = vunpack.c.l.b16 %v4536
  %v5713 = vunpack.c.h.b16 %v4536
  %v5714 = vunpack.c.l.b16 %v4537
  %v5715 = vunpack.c.h.b16 %v4537
  %v5716 = vunpack.c.l.b16 %v4538
  %v5717 = vunpack.c.h.b16 %v4538
  %v5718 = vunpack.c.l.b16 %v4539
  %v5719 = vunpack.c.h.b16 %v4539
  %v5720 = vunpack.c.l.b16 %v4540
  %v5721 = vunpack.c.h.b16 %v4540
  %v5722 = vunpack.c.l.b16 %v4541
  %v5723 = vunpack.c.h.b16 %v4541
  %v5724 = vunpack.c.l.b16 %v4542
  %v5725 = vunpack.c.h.b16 %v4542
  %v5726 = vunpack.c.l.b16 %v4543
  %v5727 = vunpack.c.h.b16 %v4543
  %v5728 = vunpack.c.l.b16 %v4544
  %v5729 = vunpack.c.h.b16 %v4544
  %v5730 = vunpack.c.l.b16 %v4545
  %v5731 = vunpack.c.h.b16 %v4545
  %v5732 = vunpack.c.l.b16 %v4546
  %v5733 = vunpack.c.h.b16 %v4546
  %v5734 = vunpack.c.l.b16 %v4547
  %v5735 = vunpack.c.h.b16 %v4547
  %v5736 = vunpack.c.l.b16 %v4548
  %v5737 = vunpack.c.h.b16 %v4548
  %v5738 = vunpack.c.l.b16 %v4549
  %v5739 = vunpack.c.h.b16 %v4549
  %v5740 = vunpack.c.l.b16 %v4550
  %v5741 = vunpack.c.h.b16 %v4550
  %v5742 = vunpack.c.l.b16 %v4551
  %v5743 = vunpack.c.h.b16 %v4551
  %v5744 = vunpack.c.l.b16 %v4552
  %v5745 = vunpack.c.h.b16 %v4552
  %v5746 = vunpack.c.l.b16 %v4553
  %v5747 = vunpack.c.h.b16 %v4553
  %v5748 = vunpack.c.l.b16 %v4554
  %v5749 = vunpack.c.h.b16 %v4554
  %v5750 = vunpack.c.l.b16 %v4555
  %v5751 = vunpack.c.h.b16 %v4555
  %v5752 = vunpack.c.l.b16 %v4556
  %v5753 = vunpack.c.h.b16 %v4556
  %v5754 = vunpack.c.l.b16 %v4557
  %v5755 = vunpack.c.h.b16 %v4557
  %v5756 = vunpack.c.l.b16 %v4558
  %v5757 = vunpack.c.h.b16 %v4558
  %v5758 = vunpack.c.l.b16 %v4559
  %v5759 = vunpack.c.h.b16 %v4559
  %v5760 = vunpack.c.l.b16 %v4560
  %v5761 = vunpack.c.h.b16 %v4560
  %v5762 = vunpack.c.l.b16 %v4561
  %v5763 = vunpack.c.h.b16 %v4561
  %v5764 = vunpack.c.l.b16 %v4562
  %v5765 = vunpack.c.h.b16 %v4562
  %v5766 = vunpack.c.l.b16 %v4563
  %v5767 = vunpack.c.h.b16 %v4563
  %v5768 = vunpack.c.l.b16 %v4564
  %v5769 = vunpack.c.h.b16 %v4564
  %v5770 = vunpack.c.l.b16 %v4565
  %v5771 = vunpack.c.h.b16 %v4565
  %v5772 = vunpack.c.l.b16 %v4566
  %v5773 = vunpack.c.h.b16 %v4566
  %v5774 = vunpack.c.l.b16 %v4567
  %v5775 = vunpack.c.h.b16 %v4567
  %v5776 = vunpack.c.l.b16 %v4568
  %v5777 = vunpack.c.h.b16 %v4568
  %v5778 = vunpack.c.l.b16 %v4569
  %v5779 = vunpack.c.h.b16 %v4569
  %v5780 = vunpack.c.l.b16 %v4570
  %v5781 = vunpack.c.h.b16 %v4570
  %v5782 = vunpack.c.l.b16 %v4571
  %v5783 = vunpack.c.h.b16 %v4571
  %v5784 = vunpack.c.l.b16 %v4572
  %v5785 = vunpack.c.h.b16 %v4572
  %v5786 = vunpack.c.l.b16 %v4573
  %v5787 = vunpack.c.h.b16 %v4573
  %v5788 = vunpack.c.l.b16 %v4574
  %v5789 = vunpack.c.h.b16 %v4574
  %v5790 = vunpack.c.l.b16 %v4575
  %v5791 = vunpack.c.h.b16 %v4575
  %v5792 = vunpack.c.l.b16 %v4576
  %v5793 = vunpack.c.h.b16 %v4576
  %v5794 = vunpack.c.l.b16 %v4577
  %v5795 = vunpack.c.h.b16 %v4577
  %v5796 = vunpack.c.l.b16 %v4578
  %v5797 = vunpack.c.h.b16 %v4578
  %v5798 = vunpack.c.l.b16 %v4579
  %v5799 = vunpack.c.h.b16 %v4579
  %v5800 = vunpack.c.l.b16 %v4580
  %v5801 = vunpack.c.h.b16 %v4580
  %v5802 = vunpack.c.l.b16 %v4581
  %v5803 = vunpack.c.h.b16 %v4581
  %v5804 = vunpack.c.l.b16 %v4582
  %v5805 = vunpack.c.h.b16 %v4582
  %v5806 = vunpack.c.l.b16 %v4583
  %v5807 = vunpack.c.h.b16 %v4583
  %v5808 = vunpack.c.l.b16 %v4584
  %v5809 = vunpack.c.h.b16 %v4584
  %v5810 = vunpack.c.l.b16 %v4585
  %v5811 = vunpack.c.h.b16 %v4585
  %v5812 = vunpack.c.l.b16 %v4586
  %v5813 = vunpack.c.h.b16 %v4586
  %v5814 = vunpack.c.l.b16 %v4587
  %v5815 = vunpack.c.h.b16 %v4587
  %v5816 = vunpack.c.l.b16 %v4588
  %v5817 = vunpack.c.h.b16 %v4588
  %v5818 = vunpack.c.l.b16 %v4589
  %v5819 = vunpack.c.h.b16 %v4589
  %v5820 = vunpack.c.l.b16 %v4590
  %v5821 = vunpack.c.h.b16 %v4590
  %v5822 = vunpack.c.l.b16 %v4591
  %v5823 = vunpack.c.h.b16 %v4591
  %v5824 = vunpack.c.l.b16 %v4592
  %v5825 = vunpack.c.h.b16 %v4592
  %v5826 = vunpack.c.l.b16 %v4593
  %v5827 = vunpack.c.h.b16 %v4593
  %v5828 = vunpack.c.l.b16 %v4594
  %v5829 = vunpack.c.h.b16 %v4594
  %v5830 = vunpack.c.l.b16 %v4595
  %v5831 = vunpack.c.h.b16 %v4595
  %v5832 = vunpack.c.l.b16 %v4596
  %v5833 = vunpack.c.h.b16 %v4596
  %v5834 = vunpack.c.l.b16 %v4597
  %v5835 = vunpack.c.h.b16 %v4597
  %v5836 = vunpack.c.l.b16 %v4598
  %v5837 = vunpack.c.h.b16 %v4598
  %v5838 = vunpack.c.l.b16 %v4599
  %v5839 = vunpack.c.h.b16 %v4599
  %v5840 = vunpack.c.l.b16 %v4600
  %v5841 = vunpack.c.h.b16 %v4600
  %v5842 = vunpack.c.l.b16 %v4601
  %v5843 = vunpack.c.h.b16 %v4601
  %v5844 = vunpack.c.l.b16 %v4602
  %v5845 = vunpack.c.h.b16 %v4602
  %v5846 = vunpack.c.l.b16 %v4603
  %v5847 = vunpack.c.h.b16 %v4603
  %v5848 = vunpack.c.l.b16 %v4604
  %v5849 = vunpack.c.h.b16 %v4604
  %v5850 = vunpack.c.l.b16 %v4605
  %v5851 = vunpack.c.h.b16 %v4605
  %v5852 = vunpack.c.l.b16 %v4606
  %v5853 = vunpack.c.h.b16 %v4606
  %v5854 = vunpack.c.l.b16 %v4607
  %v5855 = vunpack.c.h.b16 %v4607
  %v5856 = vunpack.c.l.b16 %v4608
  %v5857 = vunpack.c.h.b16 %v4608
  %v5858 = vunpack.c.l.b16 %v4609
  %v5859 = vunpack.c.h.b16 %v4609
  %v5860 = vunpack.c.l.b16 %v4610
  %v5861 = vunpack.c.h.b16 %v4610
  %v5862 = vunpack.c.l.b16 %v4611
  %v5863 = vunpack.c.h.b16 %v4611
  %v5864 = vunpack.c.l.b16 %v4612
  %v5865 = vunpack.c.h.b16 %v4612
  %v5866 = vunpack.c.l.b16 %v4613
  %v5867 = vunpack.c.h.b16 %v4613
  %v5868 = vunpack.c.l.b16 %v4614
  %v5869 = vunpack.c.h.b16 %v4614
  %v5870 = vunpack.c.l.b16 %v4615
  %v5871 = vunpack.c.h.b16 %v4615
  %v5872 = vunpack.c.l.b16 %v4616
  %v5873 = vunpack.c.h.b16 %v4616
  %v5874 = vunpack.c.l.b16 %v4617
  %v5875 = vunpack.c.h.b16 %v4617
  %v5876 = vunpack.c.l.b16 %v4618
  %v5877 = vunpack.c.h.b16 %v4618
  %v5878 = vunpack.c.l.b16 %v4619
  %v5879 = vunpack.c.h.b16 %v4619
  %v5880 = vunpack.c.l.b16 %v4620
  %v5881 = vunpack.c.h.b16 %v4620
  %v5882 = vunpack.c.l.b16 %v4621
  %v5883 = vunpack.c.h.b16 %v4621
  %v5884 = vunpack.c.l.b16 %v4622
  %v5885 = vunpack.c.h.b16 %v4622
  %v5886 = vunpack.c.l.b16 %v4623
  %v5887 = vunpack.c.h.b16 %v4623
  %v5888 = vunpack.c.l.b16 %v4624
  %v5889 = vunpack.c.h.b16 %v4624
  %v5890 = vunpack.c.l.b16 %v4625
  %v5891 = vunpack.c.h.b16 %v4625
  %v5892 = vunpack.c.l.b16 %v4626
  %v5893 = vunpack.c.h.b16 %v4626
  %v5894 = vunpack.c.l.b16 %v4627
  %v5895 = vunpack.c.h.b16 %v4627
  %v5896 = vunpack.c.l.b16 %v4628
  %v5897 = vunpack.c.h.b16 %v4628
  %v5898 = vunpack.c.l.b16 %v4629
  %v5899 = vunpack.c.h.b16 %v4629
  %v5900 = vunpack.c.l.b16 %v4630
  %v5901 = vunpack.c.h.b16 %v4630
  %v5902 = vunpack.c.l.b16 %v4631
  %v5903 = vunpack.c.h.b16 %v4631
  %v5904 = vunpack.c.l.b16 %v4632
  %v5905 = vunpack.c.h.b16 %v4632
  %v5906 = vunpack.c.l.b16 %v4633
  %v5907 = vunpack.c.h.b16 %v4633
  %v5908 = vunpack.c.l.b16 %v4634
  %v5909 = vunpack.c.h.b16 %v4634
  %v5910 = vunpack.c.l.b16 %v4635
  %v5911 = vunpack.c.h.b16 %v4635
  %v5912 = vunpack.c.l.b16 %v4636
  %v5913 = vunpack.c.h.b16 %v4636
  %v5914 = vunpack.c.l.b16 %v4637
  %v5915 = vunpack.c.h.b16 %v4637
  %v5916 = vunpack.c.l.b16 %v4638
  %v5917 = vunpack.c.h.b16 %v4638
  %v5918 = vunpack.c.l.b16 %v4639
  %v5919 = vunpack.c.h.b16 %v4639
  %v5920 = vunpack.c.l.b16 %v4640
  %v5921 = vunpack.c.h.b16 %v4640
  %v5922 = vunpack.c.l.b16 %v4641
  %v5923 = vunpack.c.h.b16 %v4641
  %v5924 = vunpack.c.l.b16 %v4642
  %v5925 = vunpack.c.h.b16 %v4642
  %v5926 = vunpack.c.l.b16 %v4643
  %v5927 = vunpack.c.h.b16 %v4643
  %v5928 = vunpack.c.l.b16 %v4644
  %v5929 = vunpack.c.h.b16 %v4644
  %v5930 = vunpack.c.l.b16 %v4645
  %v5931 = vunpack.c.h.b16 %v4645
  %v5932 = vunpack.c.l.b16 %v4646
  %v5933 = vunpack.c.h.b16 %v4646
  %v5934 = vunpack.c.l.b16 %v4647
  %v5935 = vunpack.c.h.b16 %v4647
  %v5936 = vunpack.c.l.b16 %v4648
  %v5937 = vunpack.c.h.b16 %v4648
  %v5938 = vunpack.c.l.b16 %v4649
  %v5939 = vunpack.c.h.b16 %v4649
  %v5940 = vunpack.c.l.b16 %v4650
  %v5941 = vunpack.c.h.b16 %v4650
  %v5942 = vunpack.c.l.b16 %v4651
  %v5943 = vunpack.c.h.b16 %v4651
  %v5944 = vunpack.c.l.b16 %v4652
  %v5945 = vunpack.c.h.b16 %v4652
  %v5946 = vunpack.c.l.b16 %v4653
  %v5947 = vunpack.c.h.b16 %v4653
  %v5948 = vunpack.c.l.b16 %v4654
  %v5949 = vunpack.c.h.b16 %v4654
  %v5950 = vunpack.c.l.b16 %v4655
  %v5951 = vunpack.c.h.b16 %v4655
  %v5952 = vunpack.c.l.b16 %v4656
  %v5953 = vunpack.c.h.b16 %v4656
  %v5954 = vunpack.c.l.b16 %v4657
  %v5955 = vunpack.c.h.b16 %v4657
  %v5956 = vunpack.c.l.b16 %v4658
  %v5957 = vunpack.c.h.b16 %v4658
  %v5958 = vunpack.c.l.b16 %v4659
  %v5959 = vunpack.c.h.b16 %v4659
  %v5960 = vunpack.c.l.b16 %v4660
  %v5961 = vunpack.c.h.b16 %v4660
  %v5962 = vunpack.c.l.b16 %v4661
  %v5963 = vunpack.c.h.b16 %v4661
  %v5964 = vunpack.c.l.b16 %v4662
  %v5965 = vunpack.c.h.b16 %v4662
  %v5966 = vunpack.c.l.b16 %v4663
  %v5967 = vunpack.c.h.b16 %v4663
  %v5968 = vunpack.c.l.b16 %v4664
  %v5969 = vunpack.c.h.b16 %v4664
  %v5970 = vunpack.c.l.b16 %v4665
  %v5971 = vunpack.c.h.b16 %v4665
  %v5972 = vunpack.c.l.b16 %v4666
  %v5973 = vunpack.c.h.b16 %v4666
  %v5974 = vunpack.c.l.b16 %v4667
  %v5975 = vunpack.c.h.b16 %v4667
  %v5976 = vunpack.c.l.b16 %v4668
  %v5977 = vunpack.c.h.b16 %v4668
  %v5978 = vunpack.c.l.b16 %v4669
  %v5979 = vunpack.c.h.b16 %v4669
  %v5980 = vunpack.c.l.b16 %v4670
  %v5981 = vunpack.c.h.b16 %v4670
  %v5982 = vunpack.c.l.b16 %v4671
  %v5983 = vunpack.c.h.b16 %v4671
  %v5984 = vunpack.c.l.b16 %v4672
  %v5985 = vunpack.c.h.b16 %v4672
  %v5986 = vunpack.c.l.b16 %v4673
  %v5987 = vunpack.c.h.b16 %v4673
  %v5988 = vunpack.c.l.b16 %v4674
  %v5989 = vunpack.c.h.b16 %v4674
  %v5990 = vunpack.c.l.b16 %v4675
  %v5991 = vunpack.c.h.b16 %v4675
  %v5992 = vunpack.c.l.b16 %v4676
  %v5993 = vunpack.c.h.b16 %v4676
  %v5994 = vunpack.c.l.b16 %v4677
  %v5995 = vunpack.c.h.b16 %v4677
  %v5996 = vunpack.c.l.b16 %v4678
  %v5997 = vunpack.c.h.b16 %v4678
  %v5998 = vunpack.c.l.b16 %v4679
  %v5999 = vunpack.c.h.b16 %v4679
  %v6000 = vunpack.c.l.b16 %v4680
  %v6001 = vunpack.c.h.b16 %v4680
  %v6002 = vunpack.c.l.b16 %v4681
  %v6003 = vunpack.c.h.b16 %v4681
  %v6004 = vunpack.c.l.b16 %v4682
  %v6005 = vunpack.c.h.b16 %v4682
  %v6006 = vunpack.c.l.b16 %v4683
  %v6007 = vunpack.c.h.b16 %v4683
  %v6008 = vunpack.c.l.b16 %v4684
  %v6009 = vunpack.c.h.b16 %v4684
  %v6010 = vunpack.c.l.b16 %v4685
  %v6011 = vunpack.c.h.b16 %v4685
  %v6012 = vunpack.c.l.b16 %v4686
  %v6013 = vunpack.c.h.b16 %v4686
  %v6014 = vunpack.c.l.b16 %v4687
  %v6015 = vunpack.c.h.b16 %v4687
  %v6016 = vunpack.c.l.b16 %v4688
  %v6017 = vunpack.c.h.b16 %v4688
  %v6018 = vunpack.c.l.b16 %v4689
  %v6019 = vunpack.c.h.b16 %v4689
  %v6020 = vunpack.c.l.b16 %v4690
  %v6021 = vunpack.c.h.b16 %v4690
  %v6022 = vunpack.c.l.b16 %v4691
  %v6023 = vunpack.c.h.b16 %v4691
  %v6024 = vunpack.c.l.b16 %v4692
  %v6025 = vunpack.c.h.b16 %v4692
  %v6026 = vunpack.c.l.b16 %v4693
  %v6027 = vunpack.c.h.b16 %v4693
  %v6028 = vunpack.c.l.b16 %v4694
  %v6029 = vunpack.c.h.b16 %v4694
  %v6030 = vunpack.c.l.b16 %v4695
  %v6031 = vunpack.c.h.b16 %v4695
  %v6032 = vunpack.c.l.b16 %v4696
  %v6033 = vunpack.c.h.b16 %v4696
  %v6034 = vunpack.c.l.b16 %v4697
  %v6035 = vunpack.c.h.b16 %v4697
  %v6036 = vunpack.c.l.b16 %v4698
  %v6037 = vunpack.c.h.b16 %v4698
  %v6038 = vunpack.c.l.b16 %v4699
  %v6039 = vunpack.c.h.b16 %v4699
  %v6040 = vunpack.c.l.b16 %v4700
  %v6041 = vunpack.c.h.b16 %v4700
  %v6042 = vunpack.c.l.b16 %v4701
  %v6043 = vunpack.c.h.b16 %v4701
  %v6044 = vunpack.c.l.b16 %v4702
  %v6045 = vunpack.c.h.b16 %v4702
  %v6046 = vunpack.c.l.b16 %v4703
  %v6047 = vunpack.c.h.b16 %v4703
  %v6048 = vunpack.c.l.b16 %v4704
  %v6049 = vunpack.c.h.b16 %v4704
  %v6050 = vunpack.c.l.b16 %v4705
  %v6051 = vunpack.c.h.b16 %v4705
  %v6052 = vunpack.c.l.b16 %v4706
  %v6053 = vunpack.c.h.b16 %v4706
  %v6054 = vunpack.c.l.b16 %v4707
  %v6055 = vunpack.c.h.b16 %v4707
  %v6056 = vunpack.c.l.b16 %v4708
  %v6057 = vunpack.c.h.b16 %v4708
  %v6058 = vunpack.c.l.b16 %v4709
  %v6059 = vunpack.c.h.b16 %v4709
  %v6060 = vunpack.c.l.b16 %v4710
  %v6061 = vunpack.c.h.b16 %v4710
  %v6062 = vunpack.c.l.b16 %v4711
  %v6063 = vunpack.c.h.b16 %v4711
  %v6064 = vunpack.c.l.b16 %v4712
  %v6065 = vunpack.c.h.b16 %v4712
  %v6066 = vunpack.c.l.b16 %v4713
  %v6067 = vunpack.c.h.b16 %v4713
  %v6068 = vunpack.c.l.b16 %v4714
  %v6069 = vunpack.c.h.b16 %v4714
  %v6070 = vunpack.c.l.b16 %v4715
  %v6071 = vunpack.c.h.b16 %v4715
  %v6072 = vunpack.c.l.b16 %v4716
  %v6073 = vunpack.c.h.b16 %v4716
  %v6074 = vunpack.c.l.b16 %v4717
  %v6075 = vunpack.c.h.b16 %v4717
  %v6076 = vunpack.c.l.b16 %v4718
  %v6077 = vunpack.c.h.b16 %v4718
  %v6078 = vunpack.c.l.b16 %v4719
  %v6079 = vunpack.c.h.b16 %v4719
  %v6080 = vunpack.c.l.b16 %v4720
  %v6081 = vunpack.c.h.b16 %v4720
  %v6082 = vunpack.c.l.b16 %v4721
  %v6083 = vunpack.c.h.b16 %v4721
  %v6084 = vunpack.c.l.b16 %v4722
  %v6085 = vunpack.c.h.b16 %v4722
  %v6086 = vunpack.c.l.b16 %v4723
  %v6087 = vunpack.c.h.b16 %v4723
  %v6088 = vunpack.c.l.b16 %v4724
  %v6089 = vunpack.c.h.b16 %v4724
  %v6090 = vunpack.c.l.b16 %v4725
  %v6091 = vunpack.c.h.b16 %v4725
  %v6092 = vunpack.c.l.b16 %v4726
  %v6093 = vunpack.c.h.b16 %v4726
  %v6094 = vunpack.c.l.b16 %v4727
  %v6095 = vunpack.c.h.b16 %v4727
  %v6096 = vunpack.c.l.b16 %v4728
  %v6097 = vunpack.c.h.b16 %v4728
  %v6098 = vunpack.c.l.b16 %v4729
  %v6099 = vunpack.c.h.b16 %v4729
  %v6100 = vunpack.c.l.b16 %v4730
  %v6101 = vunpack.c.h.b16 %v4730
  %v6102 = vunpack.c.l.b16 %v4731
  %v6103 = vunpack.c.h.b16 %v4731
  %v6104 = vunpack.c.l.b16 %v4732
  %v6105 = vunpack.c.h.b16 %v4732
  %v6106 = vunpack.c.l.b16 %v4733
  %v6107 = vunpack.c.h.b16 %v4733
  %v6108 = vunpack.c.l.b16 %v4734
  %v6109 = vunpack.c.h.b16 %v4734
  %v6110 = vunpack.c.l.b16 %v4735
  %v6111 = vunpack.c.h.b16 %v4735
  %v6112 = vunpack.c.l.b16 %v4736
  %v6113 = vunpack.c.h.b16 %v4736
  %v6114 = vunpack.c.l.b16 %v4737
  %v6115 = vunpack.c.h.b16 %v4737
  %v6116 = vunpack.c.l.b16 %v4738
  %v6117 = vunpack.c.h.b16 %v4738
  %v6118 = vunpack.c.l.b16 %v4739
  %v6119 = vunpack.c.h.b16 %v4739
  %v6120 = vunpack.c.l.b16 %v4740
  %v6121 = vunpack.c.h.b16 %v4740
  %v6122 = vunpack.c.l.b16 %v4741
  %v6123 = vunpack.c.h.b16 %v4741
  %v6124 = vunpack.c.l.b16 %v4742
  %v6125 = vunpack.c.h.b16 %v4742
  %v6126 = vunpack.c.l.b16 %v4743
  %v6127 = vunpack.c.h.b16 %v4743
  %v6128 = vunpack.c.l.b16 %v4744
  %v6129 = vunpack.c.h.b16 %v4744
  %v6130 = vunpack.c.l.b16 %v4745
  %v6131 = vunpack.c.h.b16 %v4745
  %v6132 = vunpack.c.l.b16 %v4746
  %v6133 = vunpack.c.h.b16 %v4746
  %v6134 = vunpack.c.l.b16 %v4747
  %v6135 = vunpack.c.h.b16 %v4747
  %v6136 = vunpack.c.l.b16 %v4748
  %v6137 = vunpack.c.h.b16 %v4748
  %v6138 = vunpack.c.l.b16 %v4749
  %v6139 = vunpack.c.h.b16 %v4749
  %v6140 = vunpack.c.l.b16 %v4750
  %v6141 = vunpack.c.h.b16 %v4750
  %v6142 = vunpack.c.l.b16 %v4751
  %v6143 = vunpack.c.h.b16 %v4751
  %v6144 = vunpack.c.l.b16 %v4752
  %v6145 = vunpack.c.h.b16 %v4752
  %v6146 = vunpack.c.l.b16 %v4753
  %v6147 = vunpack.c.h.b16 %v4753
  %v6148 = vunpack.c.l.b16 %v4754
  %v6149 = vunpack.c.h.b16 %v4754
  %v6150 = vunpack.c.l.b16 %v4755
  %v6151 = vunpack.c.h.b16 %v4755
  %v6152 = vunpack.c.l.b16 %v4756
  %v6153 = vunpack.c.h.b16 %v4756
  %v6154 = vunpack.c.l.b16 %v4757
  %v6155 = vunpack.c.h.b16 %v4757
  %v6156 = vunpack.c.l.b16 %v4758
  %v6157 = vunpack.c.h.b16 %v4758
  %v6158 = vunpack.c.l.b16 %v4759
  %v6159 = vunpack.c.h.b16 %v4759
  %v6160 = vunpack.c.l.b16 %v4760
  %v6161 = vunpack.c.h.b16 %v4760
  %v6162 = vunpack.c.l.b16 %v4761
  %v6163 = vunpack.c.h.b16 %v4761
  %v6164 = vunpack.c.l.b16 %v4762
  %v6165 = vunpack.c.h.b16 %v4762
  %v6166 = vunpack.c.l.b16 %v4763
  %v6167 = vunpack.c.h.b16 %v4763
  %v6168 = vunpack.c.l.b16 %v4764
  %v6169 = vunpack.c.h.b16 %v4764
  %v6170 = vunpack.c.l.b16 %v4765
  %v6171 = vunpack.c.h.b16 %v4765
  %v6172 = vunpack.c.l.b16 %v4766
  %v6173 = vunpack.c.h.b16 %v4766
  %v6174 = vunpack.c.l.b16 %v4767
  %v6175 = vunpack.c.h.b16 %v4767
  %v6176 = vunpack.c.l.b16 %v4768
  %v6177 = vunpack.c.h.b16 %v4768
  %v6178 = vunpack.c.l.b16 %v4769
  %v6179 = vunpack.c.h.b16 %v4769
  %v6180 = vunpack.c.l.b16 %v4770
  %v6181 = vunpack.c.h.b16 %v4770
  %v6182 = vunpack.c.l.b16 %v4771
  %v6183 = vunpack.c.h.b16 %v4771
  %v6184 = vunpack.c.l.b16 %v4772
  %v6185 = vunpack.c.h.b16 %v4772
  %v6186 = vunpack.c.l.b16 %v4773
  %v6187 = vunpack.c.h.b16 %v4773
  %v6188 = vunpack.c.l.b16 %v4774
  %v6189 = vunpack.c.h.b16 %v4774
  %v6190 = vunpack.c.l.b16 %v4775
  %v6191 = vunpack.c.h.b16 %v4775
  %v6192 = vunpack.c.l.b16 %v4776
  %v6193 = vunpack.c.h.b16 %v4776
  %v6194 = vunpack.c.l.b16 %v4777
  %v6195 = vunpack.c.h.b16 %v4777
  %v6196 = vunpack.c.l.b16 %v4778
  %v6197 = vunpack.c.h.b16 %v4778
  %v6198 = vunpack.c.l.b16 %v4779
  %v6199 = vunpack.c.h.b16 %v4779
  %v6200 = vunpack.c.l.b16 %v4780
  %v6201 = vunpack.c.h.b16 %v4780
  %v6202 = vunpack.c.l.b16 %v4781
  %v6203 = vunpack.c.h.b16 %v4781
  %v6204 = vunpack.c.l.b16 %v4782
  %v6205 = vunpack.c.h.b16 %v4782
  %v6206 = vunpack.c.l.b16 %v4783
  %v6207 = vunpack.c.h.b16 %v4783
  %v6208 = vunpack.c.l.b16 %v4784
  %v6209 = vunpack.c.h.b16 %v4784
  %v6210 = vunpack.c.l.b16 %v4785
  %v6211 = vunpack.c.h.b16 %v4785
  %v6212 = vunpack.c.l.b16 %v4786
  %v6213 = vunpack.c.h.b16 %v4786
  %v6214 = vunpack.c.l.b16 %v4787
  %v6215 = vunpack.c.h.b16 %v4787
  %v6216 = vunpack.c.l.b16 %v4788
  %v6217 = vunpack.c.h.b16 %v4788
  %v6218 = vunpack.c.l.b16 %v4789
  %v6219 = vunpack.c.h.b16 %v4789
  %v6220 = vunpack.c.l.b16 %v4790
  %v6221 = vunpack.c.h.b16 %v4790
  %v6222 = vunpack.c.l.b16 %v4791
  %v6223 = vunpack.c.h.b16 %v4791
  %v6224 = vunpack.c.l.b16 %v4792
  %v6225 = vunpack.c.h.b16 %v4792
  %v6226 = vunpack.c.l.b16 %v4793
  %v6227 = vunpack.c.h.b16 %v4793
  %v6228 = vunpack.c.l.b16 %v4794
  %v6229 = vunpack.c.h.b16 %v4794
  %v6230 = vunpack.c.l.b16 %v4795
  %v6231 = vunpack.c.h.b16 %v4795
  %v6232 = vunpack.c.l.b16 %v4796
  %v6233 = vunpack.c.h.b16 %v4796
  %v6234 = vunpack.c.l.b16 %v4797
  %v6235 = vunpack.c.h.b16 %v4797
  %v6236 = vunpack.c.l.b16 %v4798
  %v6237 = vunpack.c.h.b16 %v4798
  %v6238 = vunpack.c.l.b16 %v4799
  %v6239 = vunpack.c.h.b16 %v4799
  %v6240 = vunpack.c.l.b16 %v4800
  %v6241 = vunpack.c.h.b16 %v4800
  %v6242 = vunpack.c.l.b16 %v4801
  %v6243 = vunpack.c.h.b16 %v4801
  %v6244 = vunpack.c.l.b16 %v4802
  %v6245 = vunpack.c.h.b16 %v4802
  %v6246 = vunpack.c.l.b16 %v4803
  %v6247 = vunpack.c.h.b16 %v4803
  %v6248 = vunpack.c.l.b16 %v4804
  %v6249 = vunpack.c.h.b16 %v4804
  %v6250 = vunpack.c.l.b16 %v4805
  %v6251 = vunpack.c.h.b16 %v4805
  %v6252 = vunpack.c.l.b16 %v4806
  %v6253 = vunpack.c.h.b16 %v4806
  %v6254 = vunpack.c.l.b16 %v4807
  %v6255 = vunpack.c.h.b16 %v4807
  %v6256 = vunpack.c.l.b16 %v4808
  %v6257 = vunpack.c.h.b16 %v4808
  %v6258 = vunpack.c.l.b16 %v4809
  %v6259 = vunpack.c.h.b16 %v4809
  %v6260 = vunpack.c.l.b16 %v4810
  %v6261 = vunpack.c.h.b16 %v4810
  %v6262 = vunpack.c.l.b16 %v4811
  %v6263 = vunpack.c.h.b16 %v4811
  %v6264 = vunpack.c.l.b16 %v4812
  %v6265 = vunpack.c.h.b16 %v4812
  %v6266 = vunpack.c.l.b16 %v4813
  %v6267 = vunpack.c.h.b16 %v4813
  %v6268 = vunpack.c.l.b16 %v4814
  %v6269 = vunpack.c.h.b16 %v4814
  %v6270 = vunpack.c.l.b16 %v4815
  %v6271 = vunpack.c.h.b16 %v4815
  %v6272 = vunpack.c.l.b16 %v4816
  %v6273 = vunpack.c.h.b16 %v4816
  %v6274 = vunpack.c.l.b16 %v4817
  %v6275 = vunpack.c.h.b16 %v4817
  %v6276 = vunpack.c.l.b16 %v4818
  %v6277 = vunpack.c.h.b16 %v4818
  %v6278 = vunpack.c.l.b16 %v4819
  %v6279 = vunpack.c.h.b16 %v4819
  %v6280 = vunpack.c.l.b16 %v4820
  %v6281 = vunpack.c.h.b16 %v4820
  %v6282 = vunpack.c.l.b16 %v4821
  %v6283 = vunpack.c.h.b16 %v4821
  %v6284 = vunpack.c.l.b16 %v4822
  %v6285 = vunpack.c.h.b16 %v4822
  %v6286 = vunpack.c.l.b16 %v4823
  %v6287 = vunpack.c.h.b16 %v4823
  %v6288 = vunpack.c.l.b16 %v4824
  %v6289 = vunpack.c.h.b16 %v4824
  %v6290 = vunpack.c.l.b16 %v4825
  %v6291 = vunpack.c.h.b16 %v4825
  %v6292 = vunpack.c.l.b16 %v4826
  %v6293 = vunpack.c.h.b16 %v4826
  %v6294 = vunpack.c.l.b16 %v4827
  %v6295 = vunpack.c.h.b16 %v4827
  %v6296 = vunpack.c.l.b16 %v4828
  %v6297 = vunpack.c.h.b16 %v4828
  %v6298 = vunpack.c.l.b16 %v4829
  %v6299 = vunpack.c.h.b16 %v4829
  %v6300 = vunpack.c.l.b16 %v4830
  %v6301 = vunpack.c.h.b16 %v4830
  %v6302 = vunpack.c.l.b16 %v4831
  %v6303 = vunpack.c.h.b16 %v4831
  %v6304 = vunpack.c.l.b16 %v4832
  %v6305 = vunpack.c.h.b16 %v4832
  %v6306 = vunpack.c.l.b16 %v4833
  %v6307 = vunpack.c.h.b16 %v4833
  %v6308 = vunpack.c.l.b16 %v4834
  %v6309 = vunpack.c.h.b16 %v4834
  %v6310 = vunpack.c.l.b16 %v4835
  %v6311 = vunpack.c.h.b16 %v4835
  %v6312 = vunpack.c.l.b16 %v4836
  %v6313 = vunpack.c.h.b16 %v4836
  %v6314 = vunpack.c.l.b16 %v4837
  %v6315 = vunpack.c.h.b16 %v4837
  %v6316 = vunpack.c.l.b16 %v4838
  %v6317 = vunpack.c.h.b16 %v4838
  %v6318 = vunpack.c.l.b16 %v4839
  %v6319 = vunpack.c.h.b16 %v4839
  %v6320 = vunpack.c.l.b16 %v4840
  %v6321 = vunpack.c.h.b16 %v4840
  %v6322 = vunpack.c.l.b16 %v4841
  %v6323 = vunpack.c.h.b16 %v4841
  %v6324 = vunpack.c.l.b16 %v4842
  %v6325 = vunpack.c.h.b16 %v4842
  %v6326 = vunpack.c.l.b16 %v4843
  %v6327 = vunpack.c.h.b16 %v4843
  %v6328 = vunpack.c.l.b16 %v4844
  %v6329 = vunpack.c.h.b16 %v4844
  %v6330 = vunpack.c.l.b16 %v4845
  %v6331 = vunpack.c.h.b16 %v4845
  %v6332 = vunpack.c.l.b16 %v4846
  %v6333 = vunpack.c.h.b16 %v4846
  %v6334 = vunpack.c.l.b16 %v4847
  %v6335 = vunpack.c.h.b16 %v4847
  %v6336 = vunpack.c.l.b16 %v4848
  %v6337 = vunpack.c.h.b16 %v4848
  %v6338 = vunpack.c.l.b16 %v4849
  %v6339 = vunpack.c.h.b16 %v4849
  %v6340 = vunpack.c.l.b16 %v4850
  %v6341 = vunpack.c.h.b16 %v4850
  %v6342 = vunpack.c.l.b16 %v4851
  %v6343 = vunpack.c.h.b16 %v4851
  %v6344 = vunpack.c.l.b16 %v4852
  %v6345 = vunpack.c.h.b16 %v4852
  %v6346 = vunpack.c.l.b16 %v4853
  %v6347 = vunpack.c.h.b16 %v4853
  %v6348 = vunpack.c.l.b16 %v4854
  %v6349 = vunpack.c.h.b16 %v4854
  %v6350 = vunpack.c.l.b16 %v4855
  %v6351 = vunpack.c.h.b16 %v4855
  %v6352 = vunpack.c.l.b16 %v4856
  %v6353 = vunpack.c.h.b16 %v4856
  %v6354 = vunpack.c.l.b16 %v4857
  %v6355 = vunpack.c.h.b16 %v4857
  %v6356 = vunpack.c.l.b16 %v4858
  %v6357 = vunpack.c.h.b16 %v4858
  %v6358 = vunpack.c.l.b16 %v4859
  %v6359 = vunpack.c.h.b16 %v4859
  %v6360 = vunpack.c.l.b16 %v4860
  %v6361 = vunpack.c.h.b16 %v4860
  %v6362 = vunpack.c.l.b16 %v4861
  %v6363 = vunpack.c.h.b16 %v4861
  %v6364 = vunpack.c.l.b16 %v4862
  %v6365 = vunpack.c.h.b16 %v4862
  %v6366 = vunpack.c.l.b16 %v4863
  %v6367 = vunpack.c.h.b16 %v4863
  %v6368 = vunpack.c.l.b16 %v4864
  %v6369 = vunpack.c.h.b16 %v4864
  %v6370 = vunpack.c.l.b16 %v4865
  %v6371 = vunpack.c.h.b16 %v4865
  %v6372 = vunpack.c.l.b16 %v4866
  %v6373 = vunpack.c.h.b16 %v4866
  %v6374 = vunpack.c.l.b16 %v4867
  %v6375 = vunpack.c.h.b16 %v4867
  %v6376 = vunpack.c.l.b16 %v4868
  %v6377 = vunpack.c.h.b16 %v4868
  %v6378 = vunpack.c.l.b16 %v4869
  %v6379 = vunpack.c.h.b16 %v4869
  %v6380 = vunpack.c.l.b16 %v4870
  %v6381 = vunpack.c.h.b16 %v4870
  %v6382 = vunpack.c.l.b16 %v4871
  %v6383 = vunpack.c.h.b16 %v4871
  %v6384 = vunpack.c.l.b16 %v4872
  %v6385 = vunpack.c.h.b16 %v4872
  %v6386 = vunpack.c.l.b16 %v4873
  %v6387 = vunpack.c.h.b16 %v4873
  %v6388 = vunpack.c.l.b16 %v4874
  %v6389 = vunpack.c.h.b16 %v4874
  %v6390 = vunpack.c.l.b16 %v4875
  %v6391 = vunpack.c.h.b16 %v4875
  %v6392 = vunpack.c.l.b16 %v4876
  %v6393 = vunpack.c.h.b16 %v4876
  %v6394 = vunpack.c.l.b16 %v4877
  %v6395 = vunpack.c.h.b16 %v4877
  %v6396 = vunpack.c.l.b16 %v4878
  %v6397 = vunpack.c.h.b16 %v4878
  %v6398 = vunpack.c.l.b16 %v4879
  %v6399 = vunpack.c.h.b16 %v4879
  %v6400 = vunpack.c.l.b16 %v4880
  %v6401 = vunpack.c.h.b16 %v4880
  %v6402 = vunpack.c.l.b16 %v4881
  %v6403 = vunpack.c.h.b16 %v4881
  %v6404 = vunpack.c.l.b16 %v4882
  %v6405 = vunpack.c.h.b16 %v4882
  %v6406 = vunpack.c.l.b16 %v4883
  %v6407 = vunpack.c.h.b16 %v4883
  %v6408 = vunpack.c.l.b16 %v4884
  %v6409 = vunpack.c.h.b16 %v4884
  %v6410 = vunpack.c.l.b16 %v4885
  %v6411 = vunpack.c.h.b16 %v4885
  %v6412 = vunpack.c.l.b16 %v4886
  %v6413 = vunpack.c.h.b16 %v4886
  %v6414 = vunpack.c.l.b16 %v4887
  %v6415 = vunpack.c.h.b16 %v4887
  %v6416 = vunpack.c.l.b16 %v4888
  %v6417 = vunpack.c.h.b16 %v4888
  %v6418 = vunpack.c.l.b16 %v4889
  %v6419 = vunpack.c.h.b16 %v4889
  %v6420 = vunpack.c.l.b16 %v4890
  %v6421 = vunpack.c.h.b16 %v4890
  %v6422 = vunpack.c.l.b16 %v4891
  %v6423 = vunpack.c.h.b16 %v4891
  %v6424 = vunpack.c.l.b16 %v4892
  %v6425 = vunpack.c.h.b16 %v4892
  %v6426 = vunpack.c.l.b16 %v4893
  %v6427 = vunpack.c.h.b16 %v4893
  %v6428 = vunpack.c.l.b16 %v4894
  %v6429 = vunpack.c.h.b16 %v4894
  %v6430 = vunpack.c.l.b16 %v4895
  %v6431 = vunpack.c.h.b16 %v4895
  %v6432 = vunpack.c.l.b16 %v4896
  %v6433 = vunpack.c.h.b16 %v4896
  %v6434 = vunpack.c.l.b16 %v4897
  %v6435 = vunpack.c.h.b16 %v4897
  %v6436 = vunpack.c.l.b16 %v4898
  %v6437 = vunpack.c.h.b16 %v4898
  %v6438 = vunpack.c.l.b16 %v4899
  %v6439 = vunpack.c.h.b16 %v4899
  %v6440 = vunpack.c.l.b16 %v4900
  %v6441 = vunpack.c.h.b16 %v4900
  %v6442 = vunpack.c.l.b16 %v4901
  %v6443 = vunpack.c.h.b16 %v4901
  %v6444 = vunpack.c.l.b16 %v4902
  %v6445 = vunpack.c.h.b16 %v4902
  %v6446 = vunpack.c.l.b16 %v4903
  %v6447 = vunpack.c.h.b16 %v4903
  %v6448 = vunpack.c.l.b16 %v4904
  %v6449 = vunpack.c.h.b16 %v4904
  %v6450 = vunpack.c.l.b16 %v4905
  %v6451 = vunpack.c.h.b16 %v4905
  %v6452 = vunpack.c.l.b16 %v4906
  %v6453 = vunpack.c.h.b16 %v4906
  %v6454 = vunpack.c.l.b16 %v4907
  %v6455 = vunpack.c.h.b16 %v4907
  %v6456 = vunpack.c.l.b16 %v4908
  %v6457 = vunpack.c.h.b16 %v4908
  %v6458 = vunpack.c.l.b16 %v4909
  %v6459 = vunpack.c.h.b16 %v4909
  %v6460 = vunpack.c.l.b16 %v4910
  %v6461 = vunpack.c.h.b16 %v4910
  %v6462 = vunpack.c.l.b16 %v4911
  %v6463 = vunpack.c.h.b16 %v4911
  %v6464 = vunpack.c.l.b16 %v4912
  %v6465 = vunpack.c.h.b16 %v4912
  %v6466 = vunpack.c.l.b16 %v4913
  %v6467 = vunpack.c.h.b16 %v4913
  %v6468 = vunpack.c.l.b16 %v4914
  %v6469 = vunpack.c.h.b16 %v4914
  %v6470 = vunpack.c.l.b16 %v4915
  %v6471 = vunpack.c.h.b16 %v4915
  %v6472 = vunpack.c.l.b16 %v4916
  %v6473 = vunpack.c.h.b16 %v4916
  %v6474 = vunpack.c.l.b16 %v4917
  %v6475 = vunpack.c.h.b16 %v4917
  %v6476 = vunpack.c.l.b16 %v4918
  %v6477 = vunpack.c.h.b16 %v4918
  %v6478 = vunpack.c.l.b16 %v4919
  %v6479 = vunpack.c.h.b16 %v4919
  %v6480 = vunpack.c.l.b16 %v4920
  %v6481 = vunpack.c.h.b16 %v4920
  %v6482 = vunpack.c.l.b16 %v4921
  %v6483 = vunpack.c.h.b16 %v4921
  %v6484 = vunpack.c.l.b16 %v4922
  %v6485 = vunpack.c.h.b16 %v4922
  %v6486 = vunpack.c.l.b16 %v4923
  %v6487 = vunpack.c.h.b16 %v4923
  %v6488 = vunpack.c.l.b16 %v4924
  %v6489 = vunpack.c.h.b16 %v4924
  %v6490 = vunpack.c.l.b16 %v4925
  %v6491 = vunpack.c.h.b16 %v4925
  %v6492 = vunpack.c.l.b16 %v4926
  %v6493 = vunpack.c.h.b16 %v4926
  %v6494 = vunpack.c.l.b16 %v4927
  %v6495 = vunpack.c.h.b16 %v4927
  %v6496 = vunpack.c.l.b16 %v4928
  %v6497 = vunpack.c.h.b16 %v4928
  %v6498 = vunpack.c.l.b16 %v4929
  %v6499 = vunpack.c.h.b16 %v4929
  %v6500 = vunpack.c.l.b16 %v4930
  %v6501 = vunpack.c.h.b16 %v4930
  %v6502 = vunpack.c.l.b16 %v4931
  %v6503 = vunpack.c.h.b16 %v4931
  %v6504 = vunpack.c.l.b16 %v4932
  %v6505 = vunpack.c.h.b16 %v4932
  %v6506 = vunpack.c.l.b16 %v4933
  %v6507 = vunpack.c.h.b16 %v4933
  %v6508 = vunpack.c.l.b16 %v4934
  %v6509 = vunpack.c.h.b16 %v4934
  %v6510 = vunpack.c.l.b16 %v4935
  %v6511 = vunpack.c.h.b16 %v4935
  %v6512 = vunpack.c.l.b16 %v4936
  %v6513 = vunpack.c.h.b16 %v4936
  %v6514 = vunpack.c.l.b16 %v4937
  %v6515 = vunpack.c.h.b16 %v4937
  %v6516 = vpack.c.b16 %v5500, %v5492
  %v6517 = vpack.c.b16 %v5501, %v5493
  %v6518 = vpack.c.b16 %v5502, %v5494
  %v6519 = vpack.c.b16 %v5503, %v5495
  %v6520 = vpack.c.b16 %v5504, %v5496
  %v6521 = vpack.c.b16 %v5505, %v5497
  %v6522 = vpack.c.b16 %v5506, %v5498
  %v6523 = vpack.c.b16 %v5507, %v5499
  %v6524 = vpack.c.b16 %v5516, %v5508
  %v6525 = vpack.c.b16 %v5517, %v5509
  %v6526 = vpack.c.b16 %v5518, %v5510
  %v6527 = vpack.c.b16 %v5519, %v5511
  %v6528 = vpack.c.b16 %v5520, %v5512
  %v6529 = vpack.c.b16 %v5521, %v5513
  %v6530 = vpack.c.b16 %v5522, %v5514
  %v6531 = vpack.c.b16 %v5523, %v5515
  %v6532 = vpack.c.b16 %v5532, %v5524
  %v6533 = vpack.c.b16 %v5533, %v5525
  %v6534 = vpack.c.b16 %v5534, %v5526
  %v6535 = vpack.c.b16 %v5535, %v5527
  %v6536 = vpack.c.b16 %v5536, %v5528
  %v6537 = vpack.c.b16 %v5537, %v5529
  %v6538 = vpack.c.b16 %v5538, %v5530
  %v6539 = vpack.c.b16 %v5539, %v5531
  %v6540 = vpack.c.b16 %v5548, %v5540
  %v6541 = vpack.c.b16 %v5549, %v5541
  %v6542 = vpack.c.b16 %v5550, %v5542
  %v6543 = vpack.c.b16 %v5551, %v5543
  %v6544 = vpack.c.b16 %v5552, %v5544
  %v6545 = vpack.c.b16 %v5553, %v5545
  %v6546 = vpack.c.b16 %v5554, %v5546
  %v6547 = vpack.c.b16 %v5555, %v5547
  %v6548 = vpack.c.b16 %v5564, %v5556
  %v6549 = vpack.c.b16 %v5565, %v5557
  %v6550 = vpack.c.b16 %v5566, %v5558
  %v6551 = vpack.c.b16 %v5567, %v5559
  %v6552 = vpack.c.b16 %v5568, %v5560
  %v6553 = vpack.c.b16 %v5569, %v5561
  %v6554 = vpack.c.b16 %v5570, %v5562
  %v6555 = vpack.c.b16 %v5571, %v5563
  %v6556 = vpack.c.b16 %v5580, %v5572
  %v6557 = vpack.c.b16 %v5581, %v5573
  %v6558 = vpack.c.b16 %v5582, %v5574
  %v6559 = vpack.c.b16 %v5583, %v5575
  %v6560 = vpack.c.b16 %v5584, %v5576
  %v6561 = vpack.c.b16 %v5585, %v5577
  %v6562 = vpack.c.b16 %v5586, %v5578
  %v6563 = vpack.c.b16 %v5587, %v5579
  %v6564 = vpack.c.b16 %v5596, %v5588
  %v6565 = vpack.c.b16 %v5597, %v5589
  %v6566 = vpack.c.b16 %v5598, %v5590
  %v6567 = vpack.c.b16 %v5599, %v5591
  %v6568 = vpack.c.b16 %v5600, %v5592
  %v6569 = vpack.c.b16 %v5601, %v5593
  %v6570 = vpack.c.b16 %v5602, %v5594
  %v6571 = vpack.c.b16 %v5603, %v5595
  %v6572 = vpack.c.b16 %v5612, %v5604
  %v6573 = vpack.c.b16 %v5613, %v5605
  %v6574 = vpack.c.b16 %v5614, %v5606
  %v6575 = vpack.c.b16 %v5615, %v5607
  %v6576 = vpack.c.b16 %v5616, %v5608
  %v6577 = vpack.c.b16 %v5617, %v5609
  %v6578 = vpack.c.b16 %v5618, %v5610
  %v6579 = vpack.c.b16 %v5619, %v5611
  %v6580 = vpack.c.b16 %v5628, %v5620
  %v6581 = vpack.c.b16 %v5629, %v5621
  %v6582 = vpack.c.b16 %v5630, %v5622
  %v6583 = vpack.c.b16 %v5631, %v5623
  %v6584 = vpack.c.b16 %v5632, %v5624
  %v6585 = vpack.c.b16 %v5633, %v5625
  %v6586 = vpack.c.b16 %v5634, %v5626
  %v6587 = vpack.c.b16 %v5635, %v5627
  %v6588 = vpack.c.b16 %v5644, %v5636
  %v6589 = vpack.c.b16 %v5645, %v5637
  %v6590 = vpack.c.b16 %v5646, %v5638
  %v6591 = vpack.c.b16 %v5647, %v5639
  %v6592 = vpack.c.b16 %v5648, %v5640
  %v6593 = vpack.c.b16 %v5649, %v5641
  %v6594 = vpack.c.b16 %v5650, %v5642
  %v6595 = vpack.c.b16 %v5651, %v5643
  %v6596 = vpack.c.b16 %v5660, %v5652
  %v6597 = vpack.c.b16 %v5661, %v5653
  %v6598 = vpack.c.b16 %v5662, %v5654
  %v6599 = vpack.c.b16 %v5663, %v5655
  %v6600 = vpack.c.b16 %v5664, %v5656
  %v6601 = vpack.c.b16 %v5665, %v5657
  %v6602 = vpack.c.b16 %v5666, %v5658
  %v6603 = vpack.c.b16 %v5667, %v5659
  %v6604 = vpack.c.b16 %v5676, %v5668
  %v6605 = vpack.c.b16 %v5677, %v5669
  %v6606 = vpack.c.b16 %v5678, %v5670
  %v6607 = vpack.c.b16 %v5679, %v5671
  %v6608 = vpack.c.b16 %v5680, %v5672
  %v6609 = vpack.c.b16 %v5681, %v5673
  %v6610 = vpack.c.b16 %v5682, %v5674
  %v6611 = vpack.c.b16 %v5683, %v5675
  %v6612 = vpack.c.b16 %v5692, %v5684
  %v6613 = vpack.c.b16 %v5693, %v5685
  %v6614 = vpack.c.b16 %v5694, %v5686
  %v6615 = vpack.c.b16 %v5695, %v5687
  %v6616 = vpack.c.b16 %v5696, %v5688
  %v6617 = vpack.c.b16 %v5697, %v5689
  %v6618 = vpack.c.b16 %v5698, %v5690
  %v6619 = vpack.c.b16 %v5699, %v5691
  %v6620 = vpack.c.b16 %v5708, %v5700
  %v6621 = vpack.c.b16 %v5709, %v5701
  %v6622 = vpack.c.b16 %v5710, %v5702
  %v6623 = vpack.c.b16 %v5711, %v5703
  %v6624 = vpack.c.b16 %v5712, %v5704
  %v6625 = vpack.c.b16 %v5713, %v5705
  %v6626 = vpack.c.b16 %v5714, %v5706
  %v6627 = vpack.c.b16 %v5715, %v5707
  %v6628 = vpack.c.b16 %v5724, %v5716
  %v6629 = vpack.c.b16 %v5725, %v5717
  %v6630 = vpack.c.b16 %v5726, %v5718
  %v6631 = vpack.c.b16 %v5727, %v5719
  %v6632 = vpack.c.b16 %v5728, %v5720
  %v6633 = vpack.c.b16 %v5729, %v5721
  %v6634 = vpack.c.b16 %v5730, %v5722
  %v6635 = vpack.c.b16 %v5731, %v5723
  %v6636 = vpack.c.b16 %v5740, %v5732
  %v6637 = vpack.c.b16 %v5741, %v5733
  %v6638 = vpack.c.b16 %v5742, %v5734
  %v6639 = vpack.c.b16 %v5743, %v5735
  %v6640 = vpack.c.b16 %v5744, %v5736
  %v6641 = vpack.c.b16 %v5745, %v5737
  %v6642 = vpack.c.b16 %v5746, %v5738
  %v6643 = vpack.c.b16 %v5747, %v5739
  %v6644 = vpack.c.b16 %v5756, %v5748
  %v6645 = vpack.c.b16 %v5757, %v5749
  %v6646 = vpack.c.b16 %v5758, %v5750
  %v6647 = vpack.c.b16 %v5759, %v5751
  %v6648 = vpack.c.b16 %v5760, %v5752
  %v6649 = vpack.c.b16 %v5761, %v5753
  %v6650 = vpack.c.b16 %v5762, %v5754
  %v6651 = vpack.c.b16 %v5763, %v5755
  %v6652 = vpack.c.b16 %v5772, %v5764
  %v6653 = vpack.c.b16 %v5773, %v5765
  %v6654 = vpack.c.b16 %v5774, %v5766
  %v6655 = vpack.c.b16 %v5775, %v5767
  %v6656 = vpack.c.b16 %v5776, %v5768
  %v6657 = vpack.c.b16 %v5777, %v5769
  %v6658 = vpack.c.b16 %v5778, %v5770
  %v6659 = vpack.c.b16 %v5779, %v5771
  %v6660 = vpack.c.b16 %v5788, %v5780
  %v6661 = vpack.c.b16 %v5789, %v5781
  %v6662 = vpack.c.b16 %v5790, %v5782
  %v6663 = vpack.c.b16 %v5791, %v5783
  %v6664 = vpack.c.b16 %v5792, %v5784
  %v6665 = vpack.c.b16 %v5793, %v5785
  %v6666 = vpack.c.b16 %v5794, %v5786
  %v6667 = vpack.c.b16 %v5795, %v5787
  %v6668 = vpack.c.b16 %v5804, %v5796
  %v6669 = vpack.c.b16 %v5805, %v5797
  %v6670 = vpack.c.b16 %v5806, %v5798
  %v6671 = vpack.c.b16 %v5807, %v5799
  %v6672 = vpack.c.b16 %v5808, %v5800
  %v6673 = vpack.c.b16 %v5809, %v5801
  %v6674 = vpack.c.b16 %v5810, %v5802
  %v6675 = vpack.c.b16 %v5811, %v5803
  %v6676 = vpack.c.b16 %v5820, %v5812
  %v6677 = vpack.c.b16 %v5821, %v5813
  %v6678 = vpack.c.b16 %v5822, %v5814
  %v6679 = vpack.c.b16 %v5823, %v5815
  %v6680 = vpack.c.b16 %v5824, %v5816
  %v6681 = vpack.c.b16 %v5825, %v5817
  %v6682 = vpack.c.b16 %v5826, %v5818
  %v6683 = vpack.c.b16 %v5827, %v5819
  %v6684 = vpack.c.b16 %v5836, %v5828
  %v6685 = vpack.c.b16 %v5837, %v5829
  %v6686 = vpack.c.b16 %v5838, %v5830
  %v6687 = vpack.c.b16 %v5839, %v5831
  %v6688 = vpack.c.b16 %v5840, %v5832
  %v6689 = vpack.c.b16 %v5841, %v5833
  %v6690 = vpack.c.b16 %v5842, %v5834
  %v6691 = vpack.c.b16 %v5843, %v5835
  %v6692 = vpack.c.b16 %v5852, %v5844
  %v6693 = vpack.c.b16 %v5853, %v5845
  %v6694 = vpack.c.b16 %v5854, %v5846
  %v6695 = vpack.c.b16 %v5855, %v5847
  %v6696 = vpack.c.b16 %v5856, %v5848
  %v6697 = vpack.c.b16 %v5857, %v5849
  %v6698 = vpack.c.b16 %v5858, %v5850
  %v6699 = vpack.c.b16 %v5859, %v5851
  %v6700 = vpack.c.b16 %v5868, %v5860
  %v6701 = vpack.c.b16 %v5869, %v5861
  %v6702 = vpack.c.b16 %v5870, %v5862
  %v6703 = vpack.c.b16 %v5871, %v5863
  %v6704 = vpack.c.b16 %v5872, %v5864
  %v6705 = vpack.c.b16 %v5873, %v5865
  %v6706 = vpack.c.b16 %v5874, %v5866
  %v6707 = vpack.c.b16 %v5875, %v5867
  %v6708 = vpack.c.b16 %v5884, %v5876
  %v6709 = vpack.c.b16 %v5885, %v5877
  %v6710 = vpack.c.b16 %v5886, %v5878
  %v6711 = vpack.c.b16 %v5887, %v5879
  %v6712 = vpack.c.b16 %v5888, %v5880
  %v6713 = vpack.c.b16 %v5889, %v5881
  %v6714 = vpack.c.b16 %v5890, %v5882
  %v6715 = vpack.c.b16 %v5891, %v5883
  %v6716 = vpack.c.b16 %v5900, %v5892
  %v6717 = vpack.c.b16 %v5901, %v5893
  %v6718 = vpack.c.b16 %v5902, %v5894
  %v6719 = vpack.c.b16 %v5903, %v5895
  %v6720 = vpack.c.b16 %v5904, %v5896
  %v6721 = vpack.c.b16 %v5905, %v5897
  %v6722 = vpack.c.b16 %v5906, %v5898
  %v6723 = vpack.c.b16 %v5907, %v5899
  %v6724 = vpack.c.b16 %v5916, %v5908
  %v6725 = vpack.c.b16 %v5917, %v5909
  %v6726 = vpack.c.b16 %v5918, %v5910
  %v6727 = vpack.c.b16 %v5919, %v5911
  %v6728 = vpack.c.b16 %v5920, %v5912
  %v6729 = vpack.c.b16 %v5921, %v5913
  %v6730 = vpack.c.b16 %v5922, %v5914
  %v6731 = vpack.c.b16 %v5923, %v5915
  %v6732 = vpack.c.b16 %v5932, %v5924
  %v6733 = vpack.c.b16 %v5933, %v5925
  %v6734 = vpack.c.b16 %v5934, %v5926
  %v6735 = vpack.c.b16 %v5935, %v5927
  %v6736 = vpack.c.b16 %v5936, %v5928
  %v6737 = vpack.c.b16 %v5937, %v5929
  %v6738 = vpack.c.b16 %v5938, %v5930
  %v6739 = vpack.c.b16 %v5939, %v5931
  %v6740 = vpack.c.b16 %v5948, %v5940
  %v6741 = vpack.c.b16 %v5949, %v5941
  %v6742 = vpack.c.b16 %v5950, %v5942
  %v6743 = vpack.c.b16 %v5951, %v5943
  %v6744 = vpack.c.b16 %v5952, %v5944
  %v6745 = vpack.c.b16 %v5953, %v5945
  %v6746 = vpack.c.b16 %v5954, %v5946
  %v6747 = vpack.c.b16 %v5955, %v5947
  %v6748 = vpack.c.b16 %v5964, %v5956
  %v6749 = vpack.c.b16 %v5965, %v5957
  %v6750 = vpack.c.b16 %v5966, %v5958
  %v6751 = vpack.c.b16 %v5967, %v5959
  %v6752 = vpack.c.b16 %v5968, %v5960
  %v6753 = vpack.c.b16 %v5969, %v5961
  %v6754 = vpack.c.b16 %v5970, %v5962
  %v6755 = vpack.c.b16 %v5971, %v5963
  %v6756 = vpack.c.b16 %v5980, %v5972
  %v6757 = vpack.c.b16 %v5981, %v5973
  %v6758 = vpack.c.b16 %v5982, %v5974
  %v6759 = vpack.c.b16 %v5983, %v5975
  %v6760 = vpack.c.b16 %v5984, %v5976
  %v6761 = vpack.c.b16 %v5985, %v5977
  %v6762 = vpack.c.b16 %v5986, %v5978
  %v6763 = vpack.c.b16 %v5987, %v5979
  %v6764 = vpack.c.b16 %v5996, %v5988
  %v6765 = vpack.c.b16 %v5997, %v5989
  %v6766 = vpack.c.b16 %v5998, %v5990
  %v6767 = vpack.c.b16 %v5999, %v5991
  %v6768 = vpack.c.b16 %v6000, %v5992
  %v6769 = vpack.c.b16 %v6001, %v5993
  %v6770 = vpack.c.b16 %v6002, %v5994
  %v6771 = vpack.c.b16 %v6003, %v5995
  %v6772 = vpack.c.b16 %v6012, %v6004
  %v6773 = vpack.c.b16 %v6013, %v6005
  %v6774 = vpack.c.b16 %v6014, %v6006
  %v6775 = vpack.c.b16 %v6015, %v6007
  %v6776 = vpack.c.b16 %v6016, %v6008
  %v6777 = vpack.c.b16 %v6017, %v6009
  %v6778 = vpack.c.b16 %v6018, %v6010
  %v6779 = vpack.c.b16 %v6019, %v6011
  %v6780 = vpack.c.b16 %v6028, %v6020
  %v6781 = vpack.c.b16 %v6029, %v6021
  %v6782 = vpack.c.b16 %v6030, %v6022
  %v6783 = vpack.c.b16 %v6031, %v6023
  %v6784 = vpack.c.b16 %v6032, %v6024
  %v6785 = vpack.c.b16 %v6033, %v6025
  %v6786 = vpack.c.b16 %v6034, %v6026
  %v6787 = vpack.c.b16 %v6035, %v6027
  %v6788 = vpack.c.b16 %v6044, %v6036
  %v6789 = vpack.c.b16 %v6045, %v6037
  %v6790 = vpack.c.b16 %v6046, %v6038
  %v6791 = vpack.c.b16 %v6047, %v6039
  %v6792 = vpack.c.b16 %v6048, %v6040
  %v6793 = vpack.c.b16 %v6049, %v6041
  %v6794 = vpack.c.b16 %v6050, %v6042
  %v6795 = vpack.c.b16 %v6051, %v6043
  %v6796 = vpack.c.b16 %v6060, %v6052
  %v6797 = vpack.c.b16 %v6061, %v6053
  %v6798 = vpack.c.b16 %v6062, %v6054
  %v6799 = vpack.c.b16 %v6063, %v6055
  %v6800 = vpack.c.b16 %v6064, %v6056
  %v6801 = vpack.c.b16 %v6065, %v6057
  %v6802 = vpack.c.b16 %v6066, %v6058
  %v6803 = vpack.c.b16 %v6067, %v6059
  %v6804 = vpack.c.b16 %v6076, %v6068
  %v6805 = vpack.c.b16 %v6077, %v6069
  %v6806 = vpack.c.b16 %v6078, %v6070
  %v6807 = vpack.c.b16 %v6079, %v6071
  %v6808 = vpack.c.b16 %v6080, %v6072
  %v6809 = vpack.c.b16 %v6081, %v6073
  %v6810 = vpack.c.b16 %v6082, %v6074
  %v6811 = vpack.c.b16 %v6083, %v6075
  %v6812 = vpack.c.b16 %v6092, %v6084
  %v6813 = vpack.c.b16 %v6093, %v6085
  %v6814 = vpack.c.b16 %v6094, %v6086
  %v6815 = vpack.c.b16 %v6095, %v6087
  %v6816 = vpack.c.b16 %v6096, %v6088
  %v6817 = vpack.c.b16 %v6097, %v6089
  %v6818 = vpack.c.b16 %v6098, %v6090
  %v6819 = vpack.c.b16 %v6099, %v6091
  %v6820 = vpack.c.b16 %v6108, %v6100
  %v6821 = vpack.c.b16 %v6109, %v6101
  %v6822 = vpack.c.b16 %v6110, %v6102
  %v6823 = vpack.c.b16 %v6111, %v6103
  %v6824 = vpack.c.b16 %v6112, %v6104
  %v6825 = vpack.c.b16 %v6113, %v6105
  %v6826 = vpack.c.b16 %v6114, %v6106
  %v6827 = vpack.c.b16 %v6115, %v6107
  %v6828 = vpack.c.b16 %v6124, %v6116
  %v6829 = vpack.c.b16 %v6125, %v6117
  %v6830 = vpack.c.b16 %v6126, %v6118
  %v6831 = vpack.c.b16 %v6127, %v6119
  %v6832 = vpack.c.b16 %v6128, %v6120
  %v6833 = vpack.c.b16 %v6129, %v6121
  %v6834 = vpack.c.b16 %v6130, %v6122
  %v6835 = vpack.c.b16 %v6131, %v6123
  %v6836 = vpack.c.b16 %v6140, %v6132
  %v6837 = vpack.c.b16 %v6141, %v6133
  %v6838 = vpack.c.b16 %v6142, %v6134
  %v6839 = vpack.c.b16 %v6143, %v6135
  %v6840 = vpack.c.b16 %v6144, %v6136
  %v6841 = vpack.c.b16 %v6145, %v6137
  %v6842 = vpack.c.b16 %v6146, %v6138
  %v6843 = vpack.c.b16 %v6147, %v6139
  %v6844 = vpack.c.b16 %v6156, %v6148
  %v6845 = vpack.c.b16 %v6157, %v6149
  %v6846 = vpack.c.b16 %v6158, %v6150
  %v6847 = vpack.c.b16 %v6159, %v6151
  %v6848 = vpack.c.b16 %v6160, %v6152
  %v6849 = vpack.c.b16 %v6161, %v6153
  %v6850 = vpack.c.b16 %v6162, %v6154
  %v6851 = vpack.c.b16 %v6163, %v6155
  %v6852 = vpack.c.b16 %v6172, %v6164
  %v6853 = vpack.c.b16 %v6173, %v6165
  %v6854 = vpack.c.b16 %v6174, %v6166
  %v6855 = vpack.c.b16 %v6175, %v6167
  %v6856 = vpack.c.b16 %v6176, %v6168
  %v6857 = vpack.c.b16 %v6177, %v6169
  %v6858 = vpack.c.b16 %v6178, %v6170
  %v6859 = vpack.c.b16 %v6179, %v6171
  %v6860 = vpack.c.b16 %v6188, %v6180
  %v6861 = vpack.c.b16 %v6189, %v6181
  %v6862 = vpack.c.b16 %v6190, %v6182
  %v6863 = vpack.c.b16 %v6191, %v6183
  %v6864 = vpack.c.b16 %v6192, %v6184
  %v6865 = vpack.c.b16 %v6193, %v6185
  %v6866 = vpack.c.b16 %v6194, %v6186
  %v6867 = vpack.c.b16 %v6195, %v6187
  %v6868 = vpack.c.b16 %v6204, %v6196
  %v6869 = vpack.c.b16 %v6205, %v6197
  %v6870 = vpack.c.b16 %v6206, %v6198
  %v6871 = vpack.c.b16 %v6207, %v6199
  %v6872 = vpack.c.b16 %v6208, %v6200
  %v6873 = vpack.c.b16 %v6209, %v6201
  %v6874 = vpack.c.b16 %v6210, %v6202
  %v6875 = vpack.c.b16 %v6211, %v6203
  %v6876 = vpack.c.b16 %v6220, %v6212
  %v6877 = vpack.c.b16 %v6221, %v6213
  %v6878 = vpack.c.b16 %v6222, %v6214
  %v6879 = vpack.c.b16 %v6223, %v6215
  %v6880 = vpack.c.b16 %v6224, %v6216
  %v6881 = vpack.c.b16 %v6225, %v6217
  %v6882 = vpack.c.b16 %v6226, %v6218
  %v6883 = vpack.c.b16 %v6227, %v6219
  %v6884 = vpack.c.b16 %v6236, %v6228
  %v6885 = vpack.c.b16 %v6237, %v6229
  %v6886 = vpack.c.b16 %v6238, %v6230
  %v6887 = vpack.c.b16 %v6239, %v6231
  %v6888 = vpack.c.b16 %v6240, %v6232
  %v6889 = vpack.c.b16 %v6241, %v6233
  %v6890 = vpack.c.b16 %v6242, %v6234
  %v6891 = vpack.c.b16 %v6243, %v6235
  %v6892 = vpack.c.b16 %v6252, %v6244
  %v6893 = vpack.c.b16 %v6253, %v6245
  %v6894 = vpack.c.b16 %v6254, %v6246
  %v6895 = vpack.c.b16 %v6255, %v6247
  %v6896 = vpack.c.b16 %v6256, %v6248
  %v6897 = vpack.c.b16 %v6257, %v6249
  %v6898 = vpack.c.b16 %v6258, %v6250
  %v6899 = vpack.c.b16 %v6259, %v6251
  %v6900 = vpack.c.b16 %v6268, %v6260
  %v6901 = vpack.c.b16 %v6269, %v6261
  %v6902 = vpack.c.b16 %v6270, %v6262
  %v6903 = vpack.c.b16 %v6271, %v6263
  %v6904 = vpack.c.b16 %v6272, %v6264
  %v6905 = vpack.c.b16 %v6273, %v6265
  %v6906 = vpack.c.b16 %v6274, %v6266
  %v6907 = vpack.c.b16 %v6275, %v6267
  %v6908 = vpack.c.b16 %v6284, %v6276
  %v6909 = vpack.c.b16 %v6285, %v6277
  %v6910 = vpack.c.b16 %v6286, %v6278
  %v6911 = vpack.c.b16 %v6287, %v6279
  %v6912 = vpack.c.b16 %v6288, %v6280
  %v6913 = vpack.c.b16 %v6289, %v6281
  %v6914 = vpack.c.b16 %v6290, %v6282
  %v6915 = vpack.c.b16 %v6291, %v6283
  %v6916 = vpack.c.b16 %v6300, %v6292
  %v6917 = vpack.c.b16 %v6301, %v6293
  %v6918 = vpack.c.b16 %v6302, %v6294
  %v6919 = vpack.c.b16 %v6303, %v6295
  %v6920 = vpack.c.b16 %v6304, %v6296
  %v6921 = vpack.c.b16 %v6305, %v6297
  %v6922 = vpack.c.b16 %v6306, %v6298
  %v6923 = vpack.c.b16 %v6307, %v6299
  %v6924 = vpack.c.b16 %v6316, %v6308
  %v6925 = vpack.c.b16 %v6317, %v6309
  %v6926 = vpack.c.b16 %v6318, %v6310
  %v6927 = vpack.c.b16 %v6319, %v6311
  %v6928 = vpack.c.b16 %v6320, %v6312
  %v6929 = vpack.c.b16 %v6321, %v6313
  %v6930 = vpack.c.b16 %v6322, %v6314
  %v6931 = vpack.c.b16 %v6323, %v6315
  %v6932 = vpack.c.b16 %v6332, %v6324
  %v6933 = vpack.c.b16 %v6333, %v6325
  %v6934 = vpack.c.b16 %v6334, %v6326
  %v6935 = vpack.c.b16 %v6335, %v6327
  %v6936 = vpack.c.b16 %v6336, %v6328
  %v6937 = vpack.c.b16 %v6337, %v6329
  %v6938 = vpack.c.b16 %v6338, %v6330
  %v6939 = vpack.c.b16 %v6339, %v6331
  %v6940 = vpack.c.b16 %v6348, %v6340
  %v6941 = vpack.c.b16 %v6349, %v6341
  %v6942 = vpack.c.b16 %v6350, %v6342
  %v6943 = vpack.c.b16 %v6351, %v6343
  %v6944 = vpack.c.b16 %v6352, %v6344
  %v6945 = vpack.c.b16 %v6353, %v6345
  %v6946 = vpack.c.b16 %v6354, %v6346
  %v6947 = vpack.c.b16 %v6355, %v6347
  %v6948 = vpack.c.b16 %v6364, %v6356
  %v6949 = vpack.c.b16 %v6365, %v6357
  %v6950 = vpack.c.b16 %v6366, %v6358
  %v6951 = vpack.c.b16 %v6367, %v6359
  %v6952 = vpack.c.b16 %v6368, %v6360
  %v6953 = vpack.c.b16 %v6369, %v6361
  %v6954 = vpack.c.b16 %v6370, %v6362
  %v6955 = vpack.c.b16 %v6371, %v6363
  %v6956 = vpack.c.b16 %v6380, %v6372
  %v6957 = vpack.c.b16 %v6381, %v6373
  %v6958 = vpack.c.b16 %v6382, %v6374
  %v6959 = vpack.c.b16 %v6383, %v6375
  %v6960 = vpack.c.b16 %v6384, %v6376
  %v6961 = vpack.c.b16 %v6385, %v6377
  %v6962 = vpack.c.b16 %v6386, %v6378
  %v6963 = vpack.c.b16 %v6387, %v6379
  %v6964 = vpack.c.b16 %v6396, %v6388
  %v6965 = vpack.c.b16 %v6397, %v6389
  %v6966 = vpack.c.b16 %v6398, %v6390
  %v6967 = vpack.c.b16 %v6399, %v6391
  %v6968 = vpack.c.b16 %v6400, %v6392
  %v6969 = vpack.c.b16 %v6401, %v6393
  %v6970 = vpack.c.b16 %v6402, %v6394
  %v6971 = vpack.c.b16 %v6403, %v6395
  %v6972 = vpack.c.b16 %v6412, %v6404
  %v6973 = vpack.c.b16 %v6413, %v6405
  %v6974 = vpack.c.b16 %v6414, %v6406
  %v6975 = vpack.c.b16 %v6415, %v6407
  %v6976 = vpack.c.b16 %v6416, %v6408
  %v6977 = vpack.c.b16 %v6417, %v6409
  %v6978 = vpack.c.b16 %v6418, %v6410
  %v6979 = vpack.c.b16 %v6419, %v6411
  %v6980 = vpack.c.b16 %v6428, %v6420
  %v6981 = vpack.c.b16 %v6429, %v6421
  %v6982 = vpack.c.b16 %v6430, %v6422
  %v6983 = vpack.c.b16 %v6431, %v6423
  %v6984 = vpack.c.b16 %v6432, %v6424
  %v6985 = vpack.c.b16 %v6433, %v6425
  %v6986 = vpack.c.b16 %v6434, %v6426
  %v6987 = vpack.c.b16 %v6435, %v6427
  %v6988 = vpack.c.b16 %v6444, %v6436
  %v6989 = vpack.c.b16 %v6445, %v6437
  %v6990 = vpack.c.b16 %v6446, %v6438
  %v6991 = vpack.c.b16 %v6447, %v6439
  %v6992 = vpack.c.b16 %v6448, %v6440
  %v6993 = vpack.c.b16 %v6449, %v6441
  %v6994 = vpack.c.b16 %v6450, %v6442
  %v6995 = vpack.c.b16 %v6451, %v6443
  %v6996 = vpack.c.b16 %v6460, %v6452
  %v6997 = vpack.c.b16 %v6461, %v6453
  %v6998 = vpack.c.b16 %v6462, %v6454
  %v6999 = vpack.c.b16 %v6463, %v6455
  %v7000 = vpack.c.b16 %v6464, %v6456
  %v7001 = vpack.c.b16 %v6465, %v6457
  %v7002 = vpack.c.b16 %v6466, %v6458
  %v7003 = vpack.c.b16 %v6467, %v6459
  %v7004 = vpack.c.b16 %v6476, %v6468
  %v7005 = vpack.c.b16 %v6477, %v6469
  %v7006 = vpack.c.b16 %v6478, %v6470
  %v7007 = vpack.c.b16 %v6479, %v6471
  %v7008 = vpack.c.b16 %v6480, %v6472
  %v7009 = vpack.c.b16 %v6481, %v6473
  %v7010 = vpack.c.b16 %v6482, %v6474
  %v7011 = vpack.c.b16 %v6483, %v6475
  %v7012 = vpack.c.b16 %v6492, %v6484
  %v7013 = vpack.c.b16 %v6493, %v6485
  %v7014 = vpack.c.b16 %v6494, %v6486
  %v7015 = vpack.c.b16 %v6495, %v6487
  %v7016 = vpack.c.b16 %v6496, %v6488
  %v7017 = vpack.c.b16 %v6497, %v6489
  %v7018 = vpack.c.b16 %v6498, %v6490
  %v7019 = vpack.c.b16 %v6499, %v6491
  %v7020 = vpack.c.b16 %v6508, %v6500
  %v7021 = vpack.c.b16 %v6509, %v6501
  %v7022 = vpack.c.b16 %v6510, %v6502
  %v7023 = vpack.c.b16 %v6511, %v6503
  %v7024 = vpack.c.b16 %v6512, %v6504
  %v7025 = vpack.c.b16 %v6513, %v6505
  %v7026 = vpack.c.b16 %v6514, %v6506
  %v7027 = vpack.c.b16 %v6515, %v6507
  %7540 = vmatprep.subr.bf16.mxu0 %v6517
  %7541 = vmatpush1.bf16.msra.mxu0 %v6516
  %7542 = vmatprep.subr.bf16.mxu0 %v6525
  %7543 = vmatpush1.bf16.msra.mxu0 %v6524
  %7544 = vmatprep.subr.bf16.mxu0 %v6533
  %7545 = vmatpush1.bf16.msra.mxu0 %v6532
  %7546 = vmatprep.subr.bf16.mxu0 %v6541
  %7547 = vmatpush1.bf16.msra.mxu0 %v6540
  %7548 = vmatprep.subr.bf16.mxu0 %v6549
  %7549 = vmatpush1.bf16.msra.mxu0 %v6548
  %7550 = vmatprep.subr.bf16.mxu0 %v6557
  %7551 = vmatpush1.bf16.msra.mxu0 %v6556
  %7552 = vmatprep.subr.bf16.mxu0 %v6565
  %7553 = vmatpush1.bf16.msra.mxu0 %v6564
  %7554 = vmatprep.subr.bf16.mxu0 %v6573
  %7555 = vmatpush1.bf16.msra.mxu0 %v6572
  %7556 = vmatprep.subr.bf16.mxu0 %v6581
  %7557 = vmatpush1.bf16.msra.mxu0 %v6580
  %7558 = vmatprep.subr.bf16.mxu0 %v6589
  %7559 = vmatpush1.bf16.msra.mxu0 %v6588
  %7560 = vmatprep.subr.bf16.mxu0 %v6597
  %7561 = vmatpush1.bf16.msra.mxu0 %v6596
  %7562 = vmatprep.subr.bf16.mxu0 %v6605
  %7563 = vmatpush1.bf16.msra.mxu0 %v6604
  %7564 = vmatprep.subr.bf16.mxu0 %v6613
  %7565 = vmatpush1.bf16.msra.mxu0 %v6612
  %7566 = vmatprep.subr.bf16.mxu0 %v6621
  %7567 = vmatpush1.bf16.msra.mxu0 %v6620
  %7568 = vmatprep.subr.bf16.mxu0 %v6629
  %7569 = vmatpush1.bf16.msra.mxu0 %v6628
  %7570 = vmatprep.subr.bf16.mxu0 %v6637
  %7571 = vmatpush1.bf16.msra.mxu0 %v6636
  %7572 = vmatprep.mubr.bf16.mxu0 %v4419
  %7573 = vmatmul.mubr.bf16.gmra.mrb[0].mxu0 %v4418
  %v7574 = vpop.f32.mrb[0].mxu0
  %v7575 = vadd.f32 %v4943, %v7574
  %v7576 = vpop.f32.mrb[0].mxu0
  %v7577 = vadd.f32 %v4947, %v7576
  %v7578 = vpop.f32.mrb[0].mxu0
  %v7579 = vpop.f32.mrb[0].mxu0
  %7580 = vdwg.mxu0
  %7581 = vmatprep.subr.bf16.mxu0 %v6645
  %7582 = vmatpush1.bf16.msra.mxu0 %v6644
  %7583 = vmatprep.subr.bf16.mxu0 %v6653
  %7584 = vmatpush1.bf16.msra.mxu0 %v6652
  %7585 = vmatprep.subr.bf16.mxu0 %v6661
  %7586 = vmatpush1.bf16.msra.mxu0 %v6660
  %7587 = vmatprep.subr.bf16.mxu0 %v6669
  %7588 = vmatpush1.bf16.msra.mxu0 %v6668
  %7589 = vmatprep.subr.bf16.mxu0 %v6677
  %7590 = vmatpush1.bf16.msra.mxu0 %v6676
  %7591 = vmatprep.subr.bf16.mxu0 %v6685
  %7592 = vmatpush1.bf16.msra.mxu0 %v6684
  %7593 = vmatprep.subr.bf16.mxu0 %v6693
  %7594 = vmatpush1.bf16.msra.mxu0 %v6692
  %7595 = vmatprep.subr.bf16.mxu0 %v6701
  %7596 = vmatpush1.bf16.msra.mxu0 %v6700
  %7597 = vmatprep.subr.bf16.mxu0 %v6709
  %7598 = vmatpush1.bf16.msra.mxu0 %v6708
  %7599 = vmatprep.subr.bf16.mxu0 %v6717
  %7600 = vmatpush1.bf16.msra.mxu0 %v6716
  %7601 = vmatprep.subr.bf16.mxu0 %v6725
  %7602 = vmatpush1.bf16.msra.mxu0 %v6724
  %7603 = vmatprep.subr.bf16.mxu0 %v6733
  %7604 = vmatpush1.bf16.msra.mxu0 %v6732
  %7605 = vmatprep.subr.bf16.mxu0 %v6741
  %7606 = vmatpush1.bf16.msra.mxu0 %v6740
  %7607 = vmatprep.subr.bf16.mxu0 %v6749
  %7608 = vmatpush1.bf16.msra.mxu0 %v6748
  %7609 = vmatprep.subr.bf16.mxu0 %v6757
  %7610 = vmatpush1.bf16.msra.mxu0 %v6756
  %7611 = vmatprep.subr.bf16.mxu0 %v6765
  %7612 = vmatpush1.bf16.msra.mxu0 %v6764
  %7613 = vmatprep.mubr.bf16.mxu0 %v4421
  %7614 = vmatmul.mubr.bf16.gmra.mrb[0].mxu0 %v4420
  %v7615 = vpop.f32.mrb[0].mxu0
  %v7616 = vadd.f32 %v7575, %v7615
  %v7617 = vpop.f32.mrb[0].mxu0
  %v7618 = vadd.f32 %v7577, %v7617
  %v7619 = vpop.f32.mrb[0].mxu0
  %v7620 = vpop.f32.mrb[0].mxu0
  %7621 = vdwg.mxu0
  %7622 = vmatprep.subr.bf16.mxu0 %v6773
  %7623 = vmatpush1.bf16.msra.mxu0 %v6772
  %7624 = vmatprep.subr.bf16.mxu0 %v6781
  %7625 = vmatpush1.bf16.msra.mxu0 %v6780
  %7626 = vmatprep.subr.bf16.mxu0 %v6789
  %7627 = vmatpush1.bf16.msra.mxu0 %v6788
  %7628 = vmatprep.subr.bf16.mxu0 %v6797
  %7629 = vmatpush1.bf16.msra.mxu0 %v6796
  %7630 = vmatprep.subr.bf16.mxu0 %v6805
  %7631 = vmatpush1.bf16.msra.mxu0 %v6804
  %7632 = vmatprep.subr.bf16.mxu0 %v6813
  %7633 = vmatpush1.bf16.msra.mxu0 %v6812
  %7634 = vmatprep.subr.bf16.mxu0 %v6821
  %7635 = vmatpush1.bf16.msra.mxu0 %v6820
  %7636 = vmatprep.subr.bf16.mxu0 %v6829
  %7637 = vmatpush1.bf16.msra.mxu0 %v6828
  %7638 = vmatprep.subr.bf16.mxu0 %v6837
  %7639 = vmatpush1.bf16.msra.mxu0 %v6836
  %7640 = vmatprep.subr.bf16.mxu0 %v6845
  %7641 = vmatpush1.bf16.msra.mxu0 %v6844
  %7642 = vmatprep.subr.bf16.mxu0 %v6853
  %7643 = vmatpush1.bf16.msra.mxu0 %v6852
  %7644 = vmatprep.subr.bf16.mxu0 %v6861
  %7645 = vmatpush1.bf16.msra.mxu0 %v6860
  %7646 = vmatprep.subr.bf16.mxu0 %v6869
  %7647 = vmatpush1.bf16.msra.mxu0 %v6868
  %7648 = vmatprep.subr.bf16.mxu0 %v6877
  %7649 = vmatpush1.bf16.msra.mxu0 %v6876
  %7650 = vmatprep.subr.bf16.mxu0 %v6885
  %7651 = vmatpush1.bf16.msra.mxu0 %v6884
  %7652 = vmatprep.subr.bf16.mxu0 %v6893
  %7653 = vmatpush1.bf16.msra.mxu0 %v6892
  %7654 = vmatprep.mubr.bf16.mxu0 %v4423
  %7655 = vmatmul.mubr.bf16.gmra.mrb[0].mxu0 %v4422
  %v7656 = vpop.f32.mrb[0].mxu0
  %v7657 = vadd.f32 %v7616, %v7656
  %v7658 = vpop.f32.mrb[0].mxu0
  %v7659 = vadd.f32 %v7618, %v7658
  %v7660 = vpop.f32.mrb[0].mxu0
  %v7661 = vpop.f32.mrb[0].mxu0
  %7662 = vdwg.mxu0
  %7663 = vmatprep.subr.bf16.mxu0 %v6901
  %7664 = vmatpush1.bf16.msra.mxu0 %v6900
  %7665 = vmatprep.subr.bf16.mxu0 %v6909
  %7666 = vmatpush1.bf16.msra.mxu0 %v6908
  %7667 = vmatprep.subr.bf16.mxu0 %v6917
  %7668 = vmatpush1.bf16.msra.mxu0 %v6916
  %7669 = vmatprep.subr.bf16.mxu0 %v6925
  %7670 = vmatpush1.bf16.msra.mxu0 %v6924
  %7671 = vmatprep.subr.bf16.mxu0 %v6933
  %7672 = vmatpush1.bf16.msra.mxu0 %v6932
  %7673 = vmatprep.subr.bf16.mxu0 %v6941
  %7674 = vmatpush1.bf16.msra.mxu0 %v6940
  %7675 = vmatprep.subr.bf16.mxu0 %v6949
  %7676 = vmatpush1.bf16.msra.mxu0 %v6948
  %7677 = vmatprep.subr.bf16.mxu0 %v6957
  %7678 = vmatpush1.bf16.msra.mxu0 %v6956
  %7679 = vmatprep.subr.bf16.mxu0 %v6965
  %7680 = vmatpush1.bf16.msra.mxu0 %v6964
  %7681 = vmatprep.subr.bf16.mxu0 %v6973
  %7682 = vmatpush1.bf16.msra.mxu0 %v6972
  %7683 = vmatprep.subr.bf16.mxu0 %v6981
  %7684 = vmatpush1.bf16.msra.mxu0 %v6980
  %7685 = vmatprep.subr.bf16.mxu0 %v6989
  %7686 = vmatpush1.bf16.msra.mxu0 %v6988
  %7687 = vmatprep.subr.bf16.mxu0 %v6997
  %7688 = vmatpush1.bf16.msra.mxu0 %v6996
  %7689 = vmatprep.subr.bf16.mxu0 %v7005
  %7690 = vmatpush1.bf16.msra.mxu0 %v7004
  %7691 = vmatprep.subr.bf16.mxu0 %v7013
  %7692 = vmatpush1.bf16.msra.mxu0 %v7012
  %7693 = vmatprep.subr.bf16.mxu0 %v7021
  %7694 = vmatpush1.bf16.msra.mxu0 %v7020
  %7695 = vmatprep.mubr.bf16.mxu0 %v4425
  %7696 = vmatmul.mubr.bf16.gmra.mrb[0].mxu0 %v4424
  %v7697 = vpop.f32.mrb[0].mxu0
  %v7698 = vadd.f32 %v7657, %v7697
  %v7699 = vpop.f32.mrb[0].mxu0
  %v7700 = vadd.f32 %v7659, %v7699
  %v7701 = vpop.f32.mrb[0].mxu0
  %v7702 = vpop.f32.mrb[0].mxu0
  %7703 = vdwg.mxu0
  %7704 = vmatprep.subr.bf16.mxu0 %v6519
  %7705 = vmatpush1.bf16.msra.mxu0 %v6518
  %7706 = vmatprep.subr.bf16.mxu0 %v6527
  %7707 = vmatpush1.bf16.msra.mxu0 %v6526
  %7708 = vmatprep.subr.bf16.mxu0 %v6535
  %7709 = vmatpush1.bf16.msra.mxu0 %v6534
  %7710 = vmatprep.subr.bf16.mxu0 %v6543
  %7711 = vmatpush1.bf16.msra.mxu0 %v6542
  %7712 = vmatprep.subr.bf16.mxu0 %v6551
  %7713 = vmatpush1.bf16.msra.mxu0 %v6550
  %7714 = vmatprep.subr.bf16.mxu0 %v6559
  %7715 = vmatpush1.bf16.msra.mxu0 %v6558
  %7716 = vmatprep.subr.bf16.mxu0 %v6567
  %7717 = vmatpush1.bf16.msra.mxu0 %v6566
  %7718 = vmatprep.subr.bf16.mxu0 %v6575
  %7719 = vmatpush1.bf16.msra.mxu0 %v6574
  %7720 = vmatprep.subr.bf16.mxu0 %v6583
  %7721 = vmatpush1.bf16.msra.mxu0 %v6582
  %7722 = vmatprep.subr.bf16.mxu0 %v6591
  %7723 = vmatpush1.bf16.msra.mxu0 %v6590
  %7724 = vmatprep.subr.bf16.mxu0 %v6599
  %7725 = vmatpush1.bf16.msra.mxu0 %v6598
  %7726 = vmatprep.subr.bf16.mxu0 %v6607
  %7727 = vmatpush1.bf16.msra.mxu0 %v6606
  %7728 = vmatprep.subr.bf16.mxu0 %v6615
  %7729 = vmatpush1.bf16.msra.mxu0 %v6614
  %7730 = vmatprep.subr.bf16.mxu0 %v6623
  %7731 = vmatpush1.bf16.msra.mxu0 %v6622
  %7732 = vmatprep.subr.bf16.mxu0 %v6631
  %7733 = vmatpush1.bf16.msra.mxu0 %v6630
  %7734 = vmatprep.subr.bf16.mxu0 %v6639
  %7735 = vmatpush1.bf16.msra.mxu0 %v6638
  %7736 = vmatprep.mubr.bf16.mxu0 %v4419
  %7737 = vmatmul.mubr.bf16.gmra.mrb[0].mxu0 %v4418
  %v7738 = vpop.f32.mrb[0].mxu0
  %v7739 = vadd.f32 %v4951, %v7738
  %v7740 = vpop.f32.mrb[0].mxu0
  %v7741 = vadd.f32 %v4955, %v7740
  %v7742 = vpop.f32.mrb[0].mxu0
  %v7743 = vpop.f32.mrb[0].mxu0
  %7744 = vdwg.mxu0
  %7745 = vmatprep.subr.bf16.mxu0 %v6647
  %7746 = vmatpush1.bf16.msra.mxu0 %v6646
  %7747 = vmatprep.subr.bf16.mxu0 %v6655
  %7748 = vmatpush1.bf16.msra.mxu0 %v6654
  %7749 = vmatprep.subr.bf16.mxu0 %v6663
  %7750 = vmatpush1.bf16.msra.mxu0 %v6662
  %7751 = vmatprep.subr.bf16.mxu0 %v6671
  %7752 = vmatpush1.bf16.msra.mxu0 %v6670
  %7753 = vmatprep.subr.bf16.mxu0 %v6679
  %7754 = vmatpush1.bf16.msra.mxu0 %v6678
  %7755 = vmatprep.subr.bf16.mxu0 %v6687
  %7756 = vmatpush1.bf16.msra.mxu0 %v6686
  %7757 = vmatprep.subr.bf16.mxu0 %v6695
  %7758 = vmatpush1.bf16.msra.mxu0 %v6694
  %7759 = vmatprep.subr.bf16.mxu0 %v6703
  %7760 = vmatpush1.bf16.msra.mxu0 %v6702
  %7761 = vmatprep.subr.bf16.mxu0 %v6711
  %7762 = vmatpush1.bf16.msra.mxu0 %v6710
  %7763 = vmatprep.subr.bf16.mxu0 %v6719
  %7764 = vmatpush1.bf16.msra.mxu0 %v6718
  %7765 = vmatprep.subr.bf16.mxu0 %v6727
  %7766 = vmatpush1.bf16.msra.mxu0 %v6726
  %7767 = vmatprep.subr.bf16.mxu0 %v6735
  %7768 = vmatpush1.bf16.msra.mxu0 %v6734
  %7769 = vmatprep.subr.bf16.mxu0 %v6743
  %7770 = vmatpush1.bf16.msra.mxu0 %v6742
  %7771 = vmatprep.subr.bf16.mxu0 %v6751
  %7772 = vmatpush1.bf16.msra.mxu0 %v6750
  %7773 = vmatprep.subr.bf16.mxu0 %v6759
  %7774 = vmatpush1.bf16.msra.mxu0 %v6758
  %7775 = vmatprep.subr.bf16.mxu0 %v6767
  %7776 = vmatpush1.bf16.msra.mxu0 %v6766
  %7777 = vmatprep.mubr.bf16.mxu0 %v4421
  %7778 = vmatmul.mubr.bf16.gmra.mrb[0].mxu0 %v4420
  %v7779 = vpop.f32.mrb[0].mxu0
  %v7780 = vadd.f32 %v7739, %v7779
  %v7781 = vpop.f32.mrb[0].mxu0
  %v7782 = vadd.f32 %v7741, %v7781
  %v7783 = vpop.f32.mrb[0].mxu0
  %v7784 = vpop.f32.mrb[0].mxu0
  %7785 = vdwg.mxu0
  %7786 = vmatprep.subr.bf16.mxu0 %v6775
  %7787 = vmatpush1.bf16.msra.mxu0 %v6774
  %7788 = vmatprep.subr.bf16.mxu0 %v6783
  %7789 = vmatpush1.bf16.msra.mxu0 %v6782
  %7790 = vmatprep.subr.bf16.mxu0 %v6791
  %7791 = vmatpush1.bf16.msra.mxu0 %v6790
  %7792 = vmatprep.subr.bf16.mxu0 %v6799
  %7793 = vmatpush1.bf16.msra.mxu0 %v6798
  %7794 = vmatprep.subr.bf16.mxu0 %v6807
  %7795 = vmatpush1.bf16.msra.mxu0 %v6806
  %7796 = vmatprep.subr.bf16.mxu0 %v6815
  %7797 = vmatpush1.bf16.msra.mxu0 %v6814
  %7798 = vmatprep.subr.bf16.mxu0 %v6823
  %7799 = vmatpush1.bf16.msra.mxu0 %v6822
  %7800 = vmatprep.subr.bf16.mxu0 %v6831
  %7801 = vmatpush1.bf16.msra.mxu0 %v6830
  %7802 = vmatprep.subr.bf16.mxu0 %v6839
  %7803 = vmatpush1.bf16.msra.mxu0 %v6838
  %7804 = vmatprep.subr.bf16.mxu0 %v6847
  %7805 = vmatpush1.bf16.msra.mxu0 %v6846
  %7806 = vmatprep.subr.bf16.mxu0 %v6855
  %7807 = vmatpush1.bf16.msra.mxu0 %v6854
  %7808 = vmatprep.subr.bf16.mxu0 %v6863
  %7809 = vmatpush1.bf16.msra.mxu0 %v6862
  %7810 = vmatprep.subr.bf16.mxu0 %v6871
  %7811 = vmatpush1.bf16.msra.mxu0 %v6870
  %7812 = vmatprep.subr.bf16.mxu0 %v6879
  %7813 = vmatpush1.bf16.msra.mxu0 %v6878
  %7814 = vmatprep.subr.bf16.mxu0 %v6887
  %7815 = vmatpush1.bf16.msra.mxu0 %v6886
  %7816 = vmatprep.subr.bf16.mxu0 %v6895
  %7817 = vmatpush1.bf16.msra.mxu0 %v6894
  %7818 = vmatprep.mubr.bf16.mxu0 %v4423
  %7819 = vmatmul.mubr.bf16.gmra.mrb[0].mxu0 %v4422
  %v7820 = vpop.f32.mrb[0].mxu0
  %v7821 = vadd.f32 %v7780, %v7820
  %v7822 = vpop.f32.mrb[0].mxu0
  %v7823 = vadd.f32 %v7782, %v7822
  %v7824 = vpop.f32.mrb[0].mxu0
  %v7825 = vpop.f32.mrb[0].mxu0
  %7826 = vdwg.mxu0
  %7827 = vmatprep.subr.bf16.mxu0 %v6903
  %7828 = vmatpush1.bf16.msra.mxu0 %v6902
  %7829 = vmatprep.subr.bf16.mxu0 %v6911
  %7830 = vmatpush1.bf16.msra.mxu0 %v6910
  %7831 = vmatprep.subr.bf16.mxu0 %v6919
  %7832 = vmatpush1.bf16.msra.mxu0 %v6918
  %7833 = vmatprep.subr.bf16.mxu0 %v6927
  %7834 = vmatpush1.bf16.msra.mxu0 %v6926
  %7835 = vmatprep.subr.bf16.mxu0 %v6935
  %7836 = vmatpush1.bf16.msra.mxu0 %v6934
  %7837 = vmatprep.subr.bf16.mxu0 %v6943
  %7838 = vmatpush1.bf16.msra.mxu0 %v6942
  %7839 = vmatprep.subr.bf16.mxu0 %v6951
  %7840 = vmatpush1.bf16.msra.mxu0 %v6950
  %7841 = vmatprep.subr.bf16.mxu0 %v6959
  %7842 = vmatpush1.bf16.msra.mxu0 %v6958
  %7843 = vmatprep.subr.bf16.mxu0 %v6967
  %7844 = vmatpush1.bf16.msra.mxu0 %v6966
  %7845 = vmatprep.subr.bf16.mxu0 %v6975
  %7846 = vmatpush1.bf16.msra.mxu0 %v6974
  %7847 = vmatprep.subr.bf16.mxu0 %v6983
  %7848 = vmatpush1.bf16.msra.mxu0 %v6982
  %7849 = vmatprep.subr.bf16.mxu0 %v6991
  %7850 = vmatpush1.bf16.msra.mxu0 %v6990
  %7851 = vmatprep.subr.bf16.mxu0 %v6999
  %7852 = vmatpush1.bf16.msra.mxu0 %v6998
  %7853 = vmatprep.subr.bf16.mxu0 %v7007
  %7854 = vmatpush1.bf16.msra.mxu0 %v7006
  %7855 = vmatprep.subr.bf16.mxu0 %v7015
  %7856 = vmatpush1.bf16.msra.mxu0 %v7014
  %7857 = vmatprep.subr.bf16.mxu0 %v7023
  %7858 = vmatpush1.bf16.msra.mxu0 %v7022
  %7859 = vmatprep.mubr.bf16.mxu0 %v4425
  %7860 = vmatmul.mubr.bf16.gmra.mrb[0].mxu0 %v4424
  %v7861 = vpop.f32.mrb[0].mxu0
  %v7862 = vadd.f32 %v7821, %v7861
  %v7863 = vpop.f32.mrb[0].mxu0
  %v7864 = vadd.f32 %v7823, %v7863
  %v7865 = vpop.f32.mrb[0].mxu0
  %v7866 = vpop.f32.mrb[0].mxu0
  %7867 = vdwg.mxu0
  %7868 = vmatprep.subr.bf16.mxu0 %v6521
  %7869 = vmatpush1.bf16.msra.mxu0 %v6520
  %7870 = vmatprep.subr.bf16.mxu0 %v6529
  %7871 = vmatpush1.bf16.msra.mxu0 %v6528
  %7872 = vmatprep.subr.bf16.mxu0 %v6537
  %7873 = vmatpush1.bf16.msra.mxu0 %v6536
  %7874 = vmatprep.subr.bf16.mxu0 %v6545
  %7875 = vmatpush1.bf16.msra.mxu0 %v6544
  %7876 = vmatprep.subr.bf16.mxu0 %v6553
  %7877 = vmatpush1.bf16.msra.mxu0 %v6552
  %7878 = vmatprep.subr.bf16.mxu0 %v6561
  %7879 = vmatpush1.bf16.msra.mxu0 %v6560
  %7880 = vmatprep.subr.bf16.mxu0 %v6569
  %7881 = vmatpush1.bf16.msra.mxu0 %v6568
  %7882 = vmatprep.subr.bf16.mxu0 %v6577
  %7883 = vmatpush1.bf16.msra.mxu0 %v6576
  %7884 = vmatprep.subr.bf16.mxu0 %v6585
  %7885 = vmatpush1.bf16.msra.mxu0 %v6584
  %7886 = vmatprep.subr.bf16.mxu0 %v6593
  %7887 = vmatpush1.bf16.msra.mxu0 %v6592
  %7888 = vmatprep.subr.bf16.mxu0 %v6601
  %7889 = vmatpush1.bf16.msra.mxu0 %v6600
  %7890 = vmatprep.subr.bf16.mxu0 %v6609
  %7891 = vmatpush1.bf16.msra.mxu0 %v6608
  %7892 = vmatprep.subr.bf16.mxu0 %v6617
  %7893 = vmatpush1.bf16.msra.mxu0 %v6616
  %7894 = vmatprep.subr.bf16.mxu0 %v6625
  %7895 = vmatpush1.bf16.msra.mxu0 %v6624
  %7896 = vmatprep.subr.bf16.mxu0 %v6633
  %7897 = vmatpush1.bf16.msra.mxu0 %v6632
  %7898 = vmatprep.subr.bf16.mxu0 %v6641
  %7899 = vmatpush1.bf16.msra.mxu0 %v6640
  %7900 = vmatprep.mubr.bf16.mxu0 %v4419
  %7901 = vmatmul.mubr.bf16.gmra.mrb[0].mxu0 %v4418
  %v7902 = vpop.f32.mrb[0].mxu0
  %v7903 = vadd.f32 %v4959, %v7902
  %v7904 = vpop.f32.mrb[0].mxu0
  %v7905 = vadd.f32 %v4963, %v7904
  %v7906 = vpop.f32.mrb[0].mxu0
  %v7907 = vpop.f32.mrb[0].mxu0
  %7908 = vdwg.mxu0
  %7909 = vmatprep.subr.bf16.mxu0 %v6649
  %7910 = vmatpush1.bf16.msra.mxu0 %v6648
  %7911 = vmatprep.subr.bf16.mxu0 %v6657
  %7912 = vmatpush1.bf16.msra.mxu0 %v6656
  %7913 = vmatprep.subr.bf16.mxu0 %v6665
  %7914 = vmatpush1.bf16.msra.mxu0 %v6664
  %7915 = vmatprep.subr.bf16.mxu0 %v6673
  %7916 = vmatpush1.bf16.msra.mxu0 %v6672
  %7917 = vmatprep.subr.bf16.mxu0 %v6681
  %7918 = vmatpush1.bf16.msra.mxu0 %v6680
  %7919 = vmatprep.subr.bf16.mxu0 %v6689
  %7920 = vmatpush1.bf16.msra.mxu0 %v6688
  %7921 = vmatprep.subr.bf16.mxu0 %v6697
  %7922 = vmatpush1.bf16.msra.mxu0 %v6696
  %7923 = vmatprep.subr.bf16.mxu0 %v6705
  %7924 = vmatpush1.bf16.msra.mxu0 %v6704
  %7925 = vmatprep.subr.bf16.mxu0 %v6713
  %7926 = vmatpush1.bf16.msra.mxu0 %v6712
  %7927 = vmatprep.subr.bf16.mxu0 %v6721
  %7928 = vmatpush1.bf16.msra.mxu0 %v6720
  %7929 = vmatprep.subr.bf16.mxu0 %v6729
  %7930 = vmatpush1.bf16.msra.mxu0 %v6728
  %7931 = vmatprep.subr.bf16.mxu0 %v6737
  %7932 = vmatpush1.bf16.msra.mxu0 %v6736
  %7933 = vmatprep.subr.bf16.mxu0 %v6745
  %7934 = vmatpush1.bf16.msra.mxu0 %v6744
  %7935 = vmatprep.subr.bf16.mxu0 %v6753
  %7936 = vmatpush1.bf16.msra.mxu0 %v6752
  %7937 = vmatprep.subr.bf16.mxu0 %v6761
  %7938 = vmatpush1.bf16.msra.mxu0 %v6760
  %7939 = vmatprep.subr.bf16.mxu0 %v6769
  %7940 = vmatpush1.bf16.msra.mxu0 %v6768
  %7941 = vmatprep.mubr.bf16.mxu0 %v4421
  %7942 = vmatmul.mubr.bf16.gmra.mrb[0].mxu0 %v4420
  %v7943 = vpop.f32.mrb[0].mxu0
  %v7944 = vadd.f32 %v7903, %v7943
  %v7945 = vpop.f32.mrb[0].mxu0
  %v7946 = vadd.f32 %v7905, %v7945
  %v7947 = vpop.f32.mrb[0].mxu0
  %v7948 = vpop.f32.mrb[0].mxu0
  %7949 = vdwg.mxu0
  %7950 = vmatprep.subr.bf16.mxu0 %v6777
  %7951 = vmatpush1.bf16.msra.mxu0 %v6776
  %7952 = vmatprep.subr.bf16.mxu0 %v6785
  %7953 = vmatpush1.bf16.msra.mxu0 %v6784
  %7954 = vmatprep.subr.bf16.mxu0 %v6793
  %7955 = vmatpush1.bf16.msra.mxu0 %v6792
  %7956 = vmatprep.subr.bf16.mxu0 %v6801
  %7957 = vmatpush1.bf16.msra.mxu0 %v6800
  %7958 = vmatprep.subr.bf16.mxu0 %v6809
  %7959 = vmatpush1.bf16.msra.mxu0 %v6808
  %7960 = vmatprep.subr.bf16.mxu0 %v6817
  %7961 = vmatpush1.bf16.msra.mxu0 %v6816
  %7962 = vmatprep.subr.bf16.mxu0 %v6825
  %7963 = vmatpush1.bf16.msra.mxu0 %v6824
  %7964 = vmatprep.subr.bf16.mxu0 %v6833
  %7965 = vmatpush1.bf16.msra.mxu0 %v6832
  %7966 = vmatprep.subr.bf16.mxu0 %v6841
  %7967 = vmatpush1.bf16.msra.mxu0 %v6840
  %7968 = vmatprep.subr.bf16.mxu0 %v6849
  %7969 = vmatpush1.bf16.msra.mxu0 %v6848
  %7970 = vmatprep.subr.bf16.mxu0 %v6857
  %7971 = vmatpush1.bf16.msra.mxu0 %v6856
  %7972 = vmatprep.subr.bf16.mxu0 %v6865
  %7973 = vmatpush1.bf16.msra.mxu0 %v6864
  %7974 = vmatprep.subr.bf16.mxu0 %v6873
  %7975 = vmatpush1.bf16.msra.mxu0 %v6872
  %7976 = vmatprep.subr.bf16.mxu0 %v6881
  %7977 = vmatpush1.bf16.msra.mxu0 %v6880
  %7978 = vmatprep.subr.bf16.mxu0 %v6889
  %7979 = vmatpush1.bf16.msra.mxu0 %v6888
  %7980 = vmatprep.subr.bf16.mxu0 %v6897
  %7981 = vmatpush1.bf16.msra.mxu0 %v6896
  %7982 = vmatprep.mubr.bf16.mxu0 %v4423
  %7983 = vmatmul.mubr.bf16.gmra.mrb[0].mxu0 %v4422
  %v7984 = vpop.f32.mrb[0].mxu0
  %v7985 = vadd.f32 %v7944, %v7984
  %v7986 = vpop.f32.mrb[0].mxu0
  %v7987 = vadd.f32 %v7946, %v7986
  %v7988 = vpop.f32.mrb[0].mxu0
  %v7989 = vpop.f32.mrb[0].mxu0
  %7990 = vdwg.mxu0
  %7991 = vmatprep.subr.bf16.mxu0 %v6905
  %7992 = vmatpush1.bf16.msra.mxu0 %v6904
  %7993 = vmatprep.subr.bf16.mxu0 %v6913
  %7994 = vmatpush1.bf16.msra.mxu0 %v6912
  %7995 = vmatprep.subr.bf16.mxu0 %v6921
  %7996 = vmatpush1.bf16.msra.mxu0 %v6920
  %7997 = vmatprep.subr.bf16.mxu0 %v6929
  %7998 = vmatpush1.bf16.msra.mxu0 %v6928
  %7999 = vmatprep.subr.bf16.mxu0 %v6937
  %8000 = vmatpush1.bf16.msra.mxu0 %v6936
  %8001 = vmatprep.subr.bf16.mxu0 %v6945
  %8002 = vmatpush1.bf16.msra.mxu0 %v6944
  %8003 = vmatprep.subr.bf16.mxu0 %v6953
  %8004 = vmatpush1.bf16.msra.mxu0 %v6952
  %8005 = vmatprep.subr.bf16.mxu0 %v6961
  %8006 = vmatpush1.bf16.msra.mxu0 %v6960
  %8007 = vmatprep.subr.bf16.mxu0 %v6969
  %8008 = vmatpush1.bf16.msra.mxu0 %v6968
  %8009 = vmatprep.subr.bf16.mxu0 %v6977
  %8010 = vmatpush1.bf16.msra.mxu0 %v6976
  %8011 = vmatprep.subr.bf16.mxu0 %v6985
  %8012 = vmatpush1.bf16.msra.mxu0 %v6984
  %8013 = vmatprep.subr.bf16.mxu0 %v6993
  %8014 = vmatpush1.bf16.msra.mxu0 %v6992
  %8015 = vmatprep.subr.bf16.mxu0 %v7001
  %8016 = vmatpush1.bf16.msra.mxu0 %v7000
  %8017 = vmatprep.subr.bf16.mxu0 %v7009
  %8018 = vmatpush1.bf16.msra.mxu0 %v7008
  %8019 = vmatprep.subr.bf16.mxu0 %v7017
  %8020 = vmatpush1.bf16.msra.mxu0 %v7016
  %8021 = vmatprep.subr.bf16.mxu0 %v7025
  %8022 = vmatpush1.bf16.msra.mxu0 %v7024
  %8023 = vmatprep.mubr.bf16.mxu0 %v4425
  %8024 = vmatmul.mubr.bf16.gmra.mrb[0].mxu0 %v4424
  %v8025 = vpop.f32.mrb[0].mxu0
  %v8026 = vadd.f32 %v7985, %v8025
  %v8027 = vpop.f32.mrb[0].mxu0
  %v8028 = vadd.f32 %v7987, %v8027
  %v8029 = vpop.f32.mrb[0].mxu0
  %v8030 = vpop.f32.mrb[0].mxu0
  %8031 = vdwg.mxu0
  %8032 = vmatprep.subr.bf16.mxu0 %v6523
  %8033 = vmatpush1.bf16.msra.mxu0 %v6522
  %8034 = vmatprep.subr.bf16.mxu0 %v6531
  %8035 = vmatpush1.bf16.msra.mxu0 %v6530
  %8036 = vmatprep.subr.bf16.mxu0 %v6539
  %8037 = vmatpush1.bf16.msra.mxu0 %v6538
  %8038 = vmatprep.subr.bf16.mxu0 %v6547
  %8039 = vmatpush1.bf16.msra.mxu0 %v6546
  %8040 = vmatprep.subr.bf16.mxu0 %v6555
  %8041 = vmatpush1.bf16.msra.mxu0 %v6554
  %8042 = vmatprep.subr.bf16.mxu0 %v6563
  %8043 = vmatpush1.bf16.msra.mxu0 %v6562
  %8044 = vmatprep.subr.bf16.mxu0 %v6571
  %8045 = vmatpush1.bf16.msra.mxu0 %v6570
  %8046 = vmatprep.subr.bf16.mxu0 %v6579
  %8047 = vmatpush1.bf16.msra.mxu0 %v6578
  %8048 = vmatprep.subr.bf16.mxu0 %v6587
  %8049 = vmatpush1.bf16.msra.mxu0 %v6586
  %8050 = vmatprep.subr.bf16.mxu0 %v6595
  %8051 = vmatpush1.bf16.msra.mxu0 %v6594
  %8052 = vmatprep.subr.bf16.mxu0 %v6603
  %8053 = vmatpush1.bf16.msra.mxu0 %v6602
  %8054 = vmatprep.subr.bf16.mxu0 %v6611
  %8055 = vmatpush1.bf16.msra.mxu0 %v6610
  %8056 = vmatprep.subr.bf16.mxu0 %v6619
  %8057 = vmatpush1.bf16.msra.mxu0 %v6618
  %8058 = vmatprep.subr.bf16.mxu0 %v6627
  %8059 = vmatpush1.bf16.msra.mxu0 %v6626
  %8060 = vmatprep.subr.bf16.mxu0 %v6635
  %8061 = vmatpush1.bf16.msra.mxu0 %v6634
  %8062 = vmatprep.subr.bf16.mxu0 %v6643
  %8063 = vmatpush1.bf16.msra.mxu0 %v6642
  %8064 = vmatprep.mubr.bf16.mxu0 %v4419
  %8065 = vmatmul.mubr.bf16.gmra.mrb[0].mxu0 %v4418
  %v8066 = vpop.f32.mrb[0].mxu0
  %v8067 = vadd.f32 %v4967, %v8066
  %v8068 = vpop.f32.mrb[0].mxu0
  %v8069 = vadd.f32 %v4971, %v8068
  %v8070 = vpop.f32.mrb[0].mxu0
  %v8071 = vpop.f32.mrb[0].mxu0
  %8072 = vdwg.mxu0
  %8073 = vmatprep.subr.bf16.mxu0 %v6651
  %8074 = vmatpush1.bf16.msra.mxu0 %v6650
  %8075 = vmatprep.subr.bf16.mxu0 %v6659
  %8076 = vmatpush1.bf16.msra.mxu0 %v6658
  %8077 = vmatprep.subr.bf16.mxu0 %v6667
  %8078 = vmatpush1.bf16.msra.mxu0 %v6666
  %8079 = vmatprep.subr.bf16.mxu0 %v6675
  %8080 = vmatpush1.bf16.msra.mxu0 %v6674
  %8081 = vmatprep.subr.bf16.mxu0 %v6683
  %8082 = vmatpush1.bf16.msra.mxu0 %v6682
  %8083 = vmatprep.subr.bf16.mxu0 %v6691
  %8084 = vmatpush1.bf16.msra.mxu0 %v6690
  %8085 = vmatprep.subr.bf16.mxu0 %v6699
  %8086 = vmatpush1.bf16.msra.mxu0 %v6698
  %8087 = vmatprep.subr.bf16.mxu0 %v6707
  %8088 = vmatpush1.bf16.msra.mxu0 %v6706
  %8089 = vmatprep.subr.bf16.mxu0 %v6715
  %8090 = vmatpush1.bf16.msra.mxu0 %v6714
  %8091 = vmatprep.subr.bf16.mxu0 %v6723
  %8092 = vmatpush1.bf16.msra.mxu0 %v6722
  %8093 = vmatprep.subr.bf16.mxu0 %v6731
  %8094 = vmatpush1.bf16.msra.mxu0 %v6730
  %8095 = vmatprep.subr.bf16.mxu0 %v6739
  %8096 = vmatpush1.bf16.msra.mxu0 %v6738
  %8097 = vmatprep.subr.bf16.mxu0 %v6747
  %8098 = vmatpush1.bf16.msra.mxu0 %v6746
  %8099 = vmatprep.subr.bf16.mxu0 %v6755
  %8100 = vmatpush1.bf16.msra.mxu0 %v6754
  %8101 = vmatprep.subr.bf16.mxu0 %v6763
  %8102 = vmatpush1.bf16.msra.mxu0 %v6762
  %8103 = vmatprep.subr.bf16.mxu0 %v6771
  %8104 = vmatpush1.bf16.msra.mxu0 %v6770
  %8105 = vmatprep.mubr.bf16.mxu0 %v4421
  %8106 = vmatmul.mubr.bf16.gmra.mrb[0].mxu0 %v4420
  %v8107 = vpop.f32.mrb[0].mxu0
  %v8108 = vadd.f32 %v8067, %v8107
  %v8109 = vpop.f32.mrb[0].mxu0
  %v8110 = vadd.f32 %v8069, %v8109
  %v8111 = vpop.f32.mrb[0].mxu0
  %v8112 = vpop.f32.mrb[0].mxu0
  %8113 = vdwg.mxu0
  %8114 = vmatprep.subr.bf16.mxu0 %v6779
  %8115 = vmatpush1.bf16.msra.mxu0 %v6778
  %8116 = vmatprep.subr.bf16.mxu0 %v6787
  %8117 = vmatpush1.bf16.msra.mxu0 %v6786
  %8118 = vmatprep.subr.bf16.mxu0 %v6795
  %8119 = vmatpush1.bf16.msra.mxu0 %v6794
  %8120 = vmatprep.subr.bf16.mxu0 %v6803
  %8121 = vmatpush1.bf16.msra.mxu0 %v6802
  %8122 = vmatprep.subr.bf16.mxu0 %v6811
  %8123 = vmatpush1.bf16.msra.mxu0 %v6810
  %8124 = vmatprep.subr.bf16.mxu0 %v6819
  %8125 = vmatpush1.bf16.msra.mxu0 %v6818
  %8126 = vmatprep.subr.bf16.mxu0 %v6827
  %8127 = vmatpush1.bf16.msra.mxu0 %v6826
  %8128 = vmatprep.subr.bf16.mxu0 %v6835
  %8129 = vmatpush1.bf16.msra.mxu0 %v6834
  %8130 = vmatprep.subr.bf16.mxu0 %v6843
  %8131 = vmatpush1.bf16.msra.mxu0 %v6842
  %8132 = vmatprep.subr.bf16.mxu0 %v6851
  %8133 = vmatpush1.bf16.msra.mxu0 %v6850
  %8134 = vmatprep.subr.bf16.mxu0 %v6859
  %8135 = vmatpush1.bf16.msra.mxu0 %v6858
  %8136 = vmatprep.subr.bf16.mxu0 %v6867
  %8137 = vmatpush1.bf16.msra.mxu0 %v6866
  %8138 = vmatprep.subr.bf16.mxu0 %v6875
  %8139 = vmatpush1.bf16.msra.mxu0 %v6874
  %8140 = vmatprep.subr.bf16.mxu0 %v6883
  %8141 = vmatpush1.bf16.msra.mxu0 %v6882
  %8142 = vmatprep.subr.bf16.mxu0 %v6891
  %8143 = vmatpush1.bf16.msra.mxu0 %v6890
  %8144 = vmatprep.subr.bf16.mxu0 %v6899
  %8145 = vmatpush1.bf16.msra.mxu0 %v6898
  %8146 = vmatprep.mubr.bf16.mxu0 %v4423
  %8147 = vmatmul.mubr.bf16.gmra.mrb[0].mxu0 %v4422
  %v8148 = vpop.f32.mrb[0].mxu0
  %v8149 = vadd.f32 %v8108, %v8148
  %v8150 = vpop.f32.mrb[0].mxu0
  %v8151 = vadd.f32 %v8110, %v8150
  %v8152 = vpop.f32.mrb[0].mxu0
  %v8153 = vpop.f32.mrb[0].mxu0
  %8154 = vdwg.mxu0
  %8155 = vmatprep.subr.bf16.mxu0 %v6907
  %8156 = vmatpush1.bf16.msra.mxu0 %v6906
  %8157 = vmatprep.subr.bf16.mxu0 %v6915
  %8158 = vmatpush1.bf16.msra.mxu0 %v6914
  %8159 = vmatprep.subr.bf16.mxu0 %v6923
  %8160 = vmatpush1.bf16.msra.mxu0 %v6922
  %8161 = vmatprep.subr.bf16.mxu0 %v6931
  %8162 = vmatpush1.bf16.msra.mxu0 %v6930
  %8163 = vmatprep.subr.bf16.mxu0 %v6939
  %8164 = vmatpush1.bf16.msra.mxu0 %v6938
  %8165 = vmatprep.subr.bf16.mxu0 %v6947
  %8166 = vmatpush1.bf16.msra.mxu0 %v6946
  %8167 = vmatprep.subr.bf16.mxu0 %v6955
  %8168 = vmatpush1.bf16.msra.mxu0 %v6954
  %8169 = vmatprep.subr.bf16.mxu0 %v6963
  %8170 = vmatpush1.bf16.msra.mxu0 %v6962
  %8171 = vmatprep.subr.bf16.mxu0 %v6971
  %8172 = vmatpush1.bf16.msra.mxu0 %v6970
  %8173 = vmatprep.subr.bf16.mxu0 %v6979
  %8174 = vmatpush1.bf16.msra.mxu0 %v6978
  %8175 = vmatprep.subr.bf16.mxu0 %v6987
  %8176 = vmatpush1.bf16.msra.mxu0 %v6986
  %8177 = vmatprep.subr.bf16.mxu0 %v6995
  %8178 = vmatpush1.bf16.msra.mxu0 %v6994
  %8179 = vmatprep.subr.bf16.mxu0 %v7003
  %8180 = vmatpush1.bf16.msra.mxu0 %v7002
  %8181 = vmatprep.subr.bf16.mxu0 %v7011
  %8182 = vmatpush1.bf16.msra.mxu0 %v7010
  %8183 = vmatprep.subr.bf16.mxu0 %v7019
  %8184 = vmatpush1.bf16.msra.mxu0 %v7018
  %8185 = vmatprep.subr.bf16.mxu0 %v7027
  %8186 = vmatpush1.bf16.msra.mxu0 %v7026
  %8187 = vmatprep.mubr.bf16.mxu0 %v4425
  %8188 = vmatmul.mubr.bf16.gmra.mrb[0].mxu0 %v4424
  %v8189 = vpop.f32.mrb[0].mxu0
  %v8190 = vadd.f32 %v8149, %v8189
  %v8191 = vpop.f32.mrb[0].mxu0
  %v8192 = vadd.f32 %v8151, %v8191
  %v8193 = vpop.f32.mrb[0].mxu0
  %v8194 = vpop.f32.mrb[0].mxu0
  %8195 = vdwg.mxu0
  %v8196 = vmax.f32 %v7698, 0.0
  %v8197 = vmax.f32 %v7700, 0.0
  %v8198 = vmax.f32 %v7862, 0.0
  %v8199 = vmax.f32 %v7864, 0.0
  %v8200 = vmax.f32 %v8026, 0.0
  %v8201 = vmax.f32 %v8028, 0.0
  %v8202 = vmax.f32 %v8190, 0.0
  %v8203 = vmax.f32 %v8192, 0.0
  %v8204 = vpack.c.bf16 %v8196, %v8196
  %v8205 = vpack.c.bf16 %v8197, %v8197
  %v8206 = vpack.c.bf16 %v8198, %v8198
  %v8207 = vpack.c.bf16 %v8199, %v8199
  %v8208 = vpack.c.bf16 %v8200, %v8200
  %v8209 = vpack.c.bf16 %v8201, %v8201
  %v8210 = vpack.c.bf16 %v8202, %v8202
  %v8211 = vpack.c.bf16 %v8203, %v8203
  %v8212 = vld [vmem:[%s7] sm:$0xf]
  %v8213 = vld [vmem:[%s7 + $0x4] sm:$0xf]
  %v8214 = vld [vmem:[%s7 + $0x8] sm:$0xf]
  %v8215 = vld [vmem:[%s7 + $0xc] sm:$0xf]
  %v8216 = vld [vmem:[%s7 + $0x10] sm:$0xf]
  %v8217 = vld [vmem:[%s7 + $0x14] sm:$0xf]
  %v8218 = vld [vmem:[%s7 + $0x18] sm:$0xf]
  %v8219 = vld [vmem:[%s7 + $0x1c] sm:$0xf]
  %v8220 = vld [vmem:[%s7 + $0x20] sm:$0xf]
  %v8221 = vld [vmem:[%s7 + $0x24] sm:$0xf]
  %v8222 = vld [vmem:[%s7 + $0x28] sm:$0xf]
  %v8223 = vld [vmem:[%s7 + $0x2c] sm:$0xf]
  %v8224 = vld [vmem:[%s7 + $0x30] sm:$0xf]
  %v8225 = vld [vmem:[%s7 + $0x34] sm:$0xf]
  %v8226 = vld [vmem:[%s7 + $0x38] sm:$0xf]
  %v8227 = vld [vmem:[%s7 + $0x3c] sm:$0xf]
  %v8228 = vld [vmem:[%s7 + $0x40] sm:$0xf]
  %v8229 = vld [vmem:[%s7 + $0x44] sm:$0xf]
  %v8230 = vld [vmem:[%s7 + $0x48] sm:$0xf]
  %v8231 = vld [vmem:[%s7 + $0x4c] sm:$0xf]
  %v8232 = vld [vmem:[%s7 + $0x50] sm:$0xf]
  %v8233 = vld [vmem:[%s7 + $0x54] sm:$0xf]
  %v8234 = vld [vmem:[%s7 + $0x58] sm:$0xf]
  %v8235 = vld [vmem:[%s7 + $0x5c] sm:$0xf]
  %v8236 = vld [vmem:[%s7 + $0x60] sm:$0xf]
  %v8237 = vld [vmem:[%s7 + $0x64] sm:$0xf]
  %v8238 = vld [vmem:[%s7 + $0x68] sm:$0xf]
  %v8239 = vld [vmem:[%s7 + $0x6c] sm:$0xf]
  %v8240 = vld [vmem:[%s7 + $0x70] sm:$0xf]
  %v8241 = vld [vmem:[%s7 + $0x74] sm:$0xf]
  %v8242 = vld [vmem:[%s7 + $0x78] sm:$0xf]
  %v8243 = vld [vmem:[%s7 + $0x7c] sm:$0xf]
  %v8244 = vld [vmem:[%s7 + $0x80] sm:$0xf]
  %v8245 = vld [vmem:[%s7 + $0x84] sm:$0xf]
  %v8246 = vld [vmem:[%s7 + $0x88] sm:$0xf]
  %v8247 = vld [vmem:[%s7 + $0x8c] sm:$0xf]
  %v8248 = vld [vmem:[%s7 + $0x90] sm:$0xf]
  %v8249 = vld [vmem:[%s7 + $0x94] sm:$0xf]
  %v8250 = vld [vmem:[%s7 + $0x98] sm:$0xf]
  %v8251 = vld [vmem:[%s7 + $0x9c] sm:$0xf]
  %v8252 = vld [vmem:[%s7 + $0xa0] sm:$0xf]
  %v8253 = vld [vmem:[%s7 + $0xa4] sm:$0xf]
  %v8254 = vld [vmem:[%s7 + $0xa8] sm:$0xf]
  %v8255 = vld [vmem:[%s7 + $0xac] sm:$0xf]
  %v8256 = vld [vmem:[%s7 + $0xb0] sm:$0xf]
  %v8257 = vld [vmem:[%s7 + $0xb4] sm:$0xf]
  %v8258 = vld [vmem:[%s7 + $0xb8] sm:$0xf]
  %v8259 = vld [vmem:[%s7 + $0xbc] sm:$0xf]
  %v8260 = vld [vmem:[%s7 + $0xc0] sm:$0xf]
  %v8261 = vld [vmem:[%s7 + $0xc4] sm:$0xf]
  %v8262 = vld [vmem:[%s7 + $0xc8] sm:$0xf]
  %v8263 = vld [vmem:[%s7 + $0xcc] sm:$0xf]
  %v8264 = vld [vmem:[%s7 + $0xd0] sm:$0xf]
  %v8265 = vld [vmem:[%s7 + $0xd4] sm:$0xf]
  %v8266 = vld [vmem:[%s7 + $0xd8] sm:$0xf]
  %v8267 = vld [vmem:[%s7 + $0xdc] sm:$0xf]
  %v8268 = vld [vmem:[%s7 + $0xe0] sm:$0xf]
  %v8269 = vld [vmem:[%s7 + $0xe4] sm:$0xf]
  %v8270 = vld [vmem:[%s7 + $0xe8] sm:$0xf]
  %v8271 = vld [vmem:[%s7 + $0xec] sm:$0xf]
  %v8272 = vld [vmem:[%s7 + $0xf0] sm:$0xf]
  %v8273 = vld [vmem:[%s7 + $0xf4] sm:$0xf]
  %v8274 = vld [vmem:[%s7 + $0xf8] sm:$0xf]
  %v8275 = vld [vmem:[%s7 + $0xfc] sm:$0xf]
  %v8276 = vld [vmem:[%s7 + $0x100] sm:$0xf]
  %v8277 = vld [vmem:[%s7 + $0x104] sm:$0xf]
  %v8278 = vld [vmem:[%s7 + $0x108] sm:$0xf]
  %v8279 = vld [vmem:[%s7 + $0x10c] sm:$0xf]
  %v8280 = vld [vmem:[%s7 + $0x110] sm:$0xf]
  %v8281 = vld [vmem:[%s7 + $0x114] sm:$0xf]
  %v8282 = vld [vmem:[%s7 + $0x118] sm:$0xf]
  %v8283 = vld [vmem:[%s7 + $0x11c] sm:$0xf]
  %v8284 = vld [vmem:[%s7 + $0x120] sm:$0xf]
  %v8285 = vld [vmem:[%s7 + $0x124] sm:$0xf]
  %v8286 = vld [vmem:[%s7 + $0x128] sm:$0xf]
  %v8287 = vld [vmem:[%s7 + $0x12c] sm:$0xf]
  %v8288 = vld [vmem:[%s7 + $0x130] sm:$0xf]
  %v8289 = vld [vmem:[%s7 + $0x134] sm:$0xf]
  %v8290 = vld [vmem:[%s7 + $0x138] sm:$0xf]
  %v8291 = vld [vmem:[%s7 + $0x13c] sm:$0xf]
  %v8292 = vld [vmem:[%s7 + $0x140] sm:$0xf]
  %v8293 = vld [vmem:[%s7 + $0x144] sm:$0xf]
  %v8294 = vld [vmem:[%s7 + $0x148] sm:$0xf]
  %v8295 = vld [vmem:[%s7 + $0x14c] sm:$0xf]
  %v8296 = vld [vmem:[%s7 + $0x150] sm:$0xf]
  %v8297 = vld [vmem:[%s7 + $0x154] sm:$0xf]
  %v8298 = vld [vmem:[%s7 + $0x158] sm:$0xf]
  %v8299 = vld [vmem:[%s7 + $0x15c] sm:$0xf]
  %v8300 = vld [vmem:[%s7 + $0x160] sm:$0xf]
  %v8301 = vld [vmem:[%s7 + $0x164] sm:$0xf]
  %v8302 = vld [vmem:[%s7 + $0x168] sm:$0xf]
  %v8303 = vld [vmem:[%s7 + $0x16c] sm:$0xf]
  %v8304 = vld [vmem:[%s7 + $0x170] sm:$0xf]
  %v8305 = vld [vmem:[%s7 + $0x174] sm:$0xf]
  %v8306 = vld [vmem:[%s7 + $0x178] sm:$0xf]
  %v8307 = vld [vmem:[%s7 + $0x17c] sm:$0xf]
  %v8308 = vld [vmem:[%s7 + $0x180] sm:$0xf]
  %v8309 = vld [vmem:[%s7 + $0x184] sm:$0xf]
  %v8310 = vld [vmem:[%s7 + $0x188] sm:$0xf]
  %v8311 = vld [vmem:[%s7 + $0x18c] sm:$0xf]
  %v8312 = vld [vmem:[%s7 + $0x190] sm:$0xf]
  %v8313 = vld [vmem:[%s7 + $0x194] sm:$0xf]
  %v8314 = vld [vmem:[%s7 + $0x198] sm:$0xf]
  %v8315 = vld [vmem:[%s7 + $0x19c] sm:$0xf]
  %v8316 = vld [vmem:[%s7 + $0x1a0] sm:$0xf]
  %v8317 = vld [vmem:[%s7 + $0x1a4] sm:$0xf]
  %v8318 = vld [vmem:[%s7 + $0x1a8] sm:$0xf]
  %v8319 = vld [vmem:[%s7 + $0x1ac] sm:$0xf]
  %v8320 = vld [vmem:[%s7 + $0x1b0] sm:$0xf]
  %v8321 = vld [vmem:[%s7 + $0x1b4] sm:$0xf]
  %v8322 = vld [vmem:[%s7 + $0x1b8] sm:$0xf]
  %v8323 = vld [vmem:[%s7 + $0x1bc] sm:$0xf]
  %v8324 = vld [vmem:[%s7 + $0x1c0] sm:$0xf]
  %v8325 = vld [vmem:[%s7 + $0x1c4] sm:$0xf]
  %v8326 = vld [vmem:[%s7 + $0x1c8] sm:$0xf]
  %v8327 = vld [vmem:[%s7 + $0x1cc] sm:$0xf]
  %v8328 = vld [vmem:[%s7 + $0x1d0] sm:$0xf]
  %v8329 = vld [vmem:[%s7 + $0x1d4] sm:$0xf]
  %v8330 = vld [vmem:[%s7 + $0x1d8] sm:$0xf]
  %v8331 = vld [vmem:[%s7 + $0x1dc] sm:$0xf]
  %v8332 = vld [vmem:[%s7 + $0x1e0] sm:$0xf]
  %v8333 = vld [vmem:[%s7 + $0x1e4] sm:$0xf]
  %v8334 = vld [vmem:[%s7 + $0x1e8] sm:$0xf]
  %v8335 = vld [vmem:[%s7 + $0x1ec] sm:$0xf]
  %v8336 = vld [vmem:[%s7 + $0x1f0] sm:$0xf]
  %v8337 = vld [vmem:[%s7 + $0x1f4] sm:$0xf]
  %v8338 = vld [vmem:[%s7 + $0x1f8] sm:$0xf]
  %v8339 = vld [vmem:[%s7 + $0x1fc] sm:$0xf]
  %v8340 = vld [vmem:[%s8] sm:$0x1]
  %v8342 = vlaneseq
  %v8343 = vshrl.u32 %v8342, 7
  %v8344 = vsub.s32 0, %v8343
  %v8345 = vrot.slane %v8340, %v8344
  %v8475 = vunpack.c.l.b16 %v8212
  %v8476 = vunpack.c.l.b16 %v8213
  %v8477 = vunpack.c.l.b16 %v8214
  %v8478 = vunpack.c.l.b16 %v8215
  %v8479 = vunpack.c.l.b16 %v8216
  %v8480 = vunpack.c.l.b16 %v8217
  %v8481 = vunpack.c.l.b16 %v8218
  %v8482 = vunpack.c.l.b16 %v8219
  %v8483 = vunpack.c.l.b16 %v8220
  %v8484 = vunpack.c.l.b16 %v8221
  %v8485 = vunpack.c.l.b16 %v8222
  %v8486 = vunpack.c.l.b16 %v8223
  %v8487 = vunpack.c.l.b16 %v8224
  %v8488 = vunpack.c.l.b16 %v8225
  %v8489 = vunpack.c.l.b16 %v8226
  %v8490 = vunpack.c.l.b16 %v8227
  %v8491 = vunpack.c.l.b16 %v8228
  %v8492 = vunpack.c.l.b16 %v8229
  %v8493 = vunpack.c.l.b16 %v8230
  %v8494 = vunpack.c.l.b16 %v8231
  %v8495 = vunpack.c.l.b16 %v8232
  %v8496 = vunpack.c.l.b16 %v8233
  %v8497 = vunpack.c.l.b16 %v8234
  %v8498 = vunpack.c.l.b16 %v8235
  %v8499 = vunpack.c.l.b16 %v8236
  %v8500 = vunpack.c.l.b16 %v8237
  %v8501 = vunpack.c.l.b16 %v8238
  %v8502 = vunpack.c.l.b16 %v8239
  %v8503 = vunpack.c.l.b16 %v8240
  %v8504 = vunpack.c.l.b16 %v8241
  %v8505 = vunpack.c.l.b16 %v8242
  %v8506 = vunpack.c.l.b16 %v8243
  %v8507 = vunpack.c.l.b16 %v8244
  %v8508 = vunpack.c.l.b16 %v8245
  %v8509 = vunpack.c.l.b16 %v8246
  %v8510 = vunpack.c.l.b16 %v8247
  %v8511 = vunpack.c.l.b16 %v8248
  %v8512 = vunpack.c.l.b16 %v8249
  %v8513 = vunpack.c.l.b16 %v8250
  %v8514 = vunpack.c.l.b16 %v8251
  %v8515 = vunpack.c.l.b16 %v8252
  %v8516 = vunpack.c.l.b16 %v8253
  %v8517 = vunpack.c.l.b16 %v8254
  %v8518 = vunpack.c.l.b16 %v8255
  %v8519 = vunpack.c.l.b16 %v8256
  %v8520 = vunpack.c.l.b16 %v8257
  %v8521 = vunpack.c.l.b16 %v8258
  %v8522 = vunpack.c.l.b16 %v8259
  %v8523 = vunpack.c.l.b16 %v8260
  %v8524 = vunpack.c.l.b16 %v8261
  %v8525 = vunpack.c.l.b16 %v8262
  %v8526 = vunpack.c.l.b16 %v8263
  %v8527 = vunpack.c.l.b16 %v8264
  %v8528 = vunpack.c.l.b16 %v8265
  %v8529 = vunpack.c.l.b16 %v8266
  %v8530 = vunpack.c.l.b16 %v8267
  %v8531 = vunpack.c.l.b16 %v8268
  %v8532 = vunpack.c.l.b16 %v8269
  %v8533 = vunpack.c.l.b16 %v8270
  %v8534 = vunpack.c.l.b16 %v8271
  %v8535 = vunpack.c.l.b16 %v8272
  %v8536 = vunpack.c.l.b16 %v8273
  %v8537 = vunpack.c.l.b16 %v8274
  %v8538 = vunpack.c.l.b16 %v8275
  %v8539 = vunpack.c.l.b16 %v8276
  %v8540 = vunpack.c.l.b16 %v8277
  %v8541 = vunpack.c.l.b16 %v8278
  %v8542 = vunpack.c.l.b16 %v8279
  %v8543 = vunpack.c.l.b16 %v8280
  %v8544 = vunpack.c.l.b16 %v8281
  %v8545 = vunpack.c.l.b16 %v8282
  %v8546 = vunpack.c.l.b16 %v8283
  %v8547 = vunpack.c.l.b16 %v8284
  %v8548 = vunpack.c.l.b16 %v8285
  %v8549 = vunpack.c.l.b16 %v8286
  %v8550 = vunpack.c.l.b16 %v8287
  %v8551 = vunpack.c.l.b16 %v8288
  %v8552 = vunpack.c.l.b16 %v8289
  %v8553 = vunpack.c.l.b16 %v8290
  %v8554 = vunpack.c.l.b16 %v8291
  %v8555 = vunpack.c.l.b16 %v8292
  %v8556 = vunpack.c.l.b16 %v8293
  %v8557 = vunpack.c.l.b16 %v8294
  %v8558 = vunpack.c.l.b16 %v8295
  %v8559 = vunpack.c.l.b16 %v8296
  %v8560 = vunpack.c.l.b16 %v8297
  %v8561 = vunpack.c.l.b16 %v8298
  %v8562 = vunpack.c.l.b16 %v8299
  %v8563 = vunpack.c.l.b16 %v8300
  %v8564 = vunpack.c.l.b16 %v8301
  %v8565 = vunpack.c.l.b16 %v8302
  %v8566 = vunpack.c.l.b16 %v8303
  %v8567 = vunpack.c.l.b16 %v8304
  %v8568 = vunpack.c.l.b16 %v8305
  %v8569 = vunpack.c.l.b16 %v8306
  %v8570 = vunpack.c.l.b16 %v8307
  %v8571 = vunpack.c.l.b16 %v8308
  %v8572 = vunpack.c.l.b16 %v8309
  %v8573 = vunpack.c.l.b16 %v8310
  %v8574 = vunpack.c.l.b16 %v8311
  %v8575 = vunpack.c.l.b16 %v8312
  %v8576 = vunpack.c.l.b16 %v8313
  %v8577 = vunpack.c.l.b16 %v8314
  %v8578 = vunpack.c.l.b16 %v8315
  %v8579 = vunpack.c.l.b16 %v8316
  %v8580 = vunpack.c.l.b16 %v8317
  %v8581 = vunpack.c.l.b16 %v8318
  %v8582 = vunpack.c.l.b16 %v8319
  %v8583 = vunpack.c.l.b16 %v8320
  %v8584 = vunpack.c.l.b16 %v8321
  %v8585 = vunpack.c.l.b16 %v8322
  %v8586 = vunpack.c.l.b16 %v8323
  %v8587 = vunpack.c.l.b16 %v8324
  %v8588 = vunpack.c.l.b16 %v8325
  %v8589 = vunpack.c.l.b16 %v8326
  %v8590 = vunpack.c.l.b16 %v8327
  %v8591 = vunpack.c.l.b16 %v8328
  %v8592 = vunpack.c.l.b16 %v8329
  %v8593 = vunpack.c.l.b16 %v8330
  %v8594 = vunpack.c.l.b16 %v8331
  %v8595 = vunpack.c.l.b16 %v8332
  %v8596 = vunpack.c.l.b16 %v8333
  %v8597 = vunpack.c.l.b16 %v8334
  %v8598 = vunpack.c.l.b16 %v8335
  %v8599 = vunpack.c.l.b16 %v8336
  %v8600 = vunpack.c.l.b16 %v8337
  %v8601 = vunpack.c.l.b16 %v8338
  %v8602 = vunpack.c.l.b16 %v8339
  %v8603 = vpack.c.b16 %v8476, %v8475
  %v8604 = vpack.c.b16 %v8478, %v8477
  %v8605 = vpack.c.b16 %v8480, %v8479
  %v8606 = vpack.c.b16 %v8482, %v8481
  %v8607 = vpack.c.b16 %v8484, %v8483
  %v8608 = vpack.c.b16 %v8486, %v8485
  %v8609 = vpack.c.b16 %v8488, %v8487
  %v8610 = vpack.c.b16 %v8490, %v8489
  %v8611 = vpack.c.b16 %v8492, %v8491
  %v8612 = vpack.c.b16 %v8494, %v8493
  %v8613 = vpack.c.b16 %v8496, %v8495
  %v8614 = vpack.c.b16 %v8498, %v8497
  %v8615 = vpack.c.b16 %v8500, %v8499
  %v8616 = vpack.c.b16 %v8502, %v8501
  %v8617 = vpack.c.b16 %v8504, %v8503
  %v8618 = vpack.c.b16 %v8506, %v8505
  %v8619 = vpack.c.b16 %v8508, %v8507
  %v8620 = vpack.c.b16 %v8510, %v8509
  %v8621 = vpack.c.b16 %v8512, %v8511
  %v8622 = vpack.c.b16 %v8514, %v8513
  %v8623 = vpack.c.b16 %v8516, %v8515
  %v8624 = vpack.c.b16 %v8518, %v8517
  %v8625 = vpack.c.b16 %v8520, %v8519
  %v8626 = vpack.c.b16 %v8522, %v8521
  %v8627 = vpack.c.b16 %v8524, %v8523
  %v8628 = vpack.c.b16 %v8526, %v8525
  %v8629 = vpack.c.b16 %v8528, %v8527
  %v8630 = vpack.c.b16 %v8530, %v8529
  %v8631 = vpack.c.b16 %v8532, %v8531
  %v8632 = vpack.c.b16 %v8534, %v8533
  %v8633 = vpack.c.b16 %v8536, %v8535
  %v8634 = vpack.c.b16 %v8538, %v8537
  %v8635 = vpack.c.b16 %v8540, %v8539
  %v8636 = vpack.c.b16 %v8542, %v8541
  %v8637 = vpack.c.b16 %v8544, %v8543
  %v8638 = vpack.c.b16 %v8546, %v8545
  %v8639 = vpack.c.b16 %v8548, %v8547
  %v8640 = vpack.c.b16 %v8550, %v8549
  %v8641 = vpack.c.b16 %v8552, %v8551
  %v8642 = vpack.c.b16 %v8554, %v8553
  %v8643 = vpack.c.b16 %v8556, %v8555
  %v8644 = vpack.c.b16 %v8558, %v8557
  %v8645 = vpack.c.b16 %v8560, %v8559
  %v8646 = vpack.c.b16 %v8562, %v8561
  %v8647 = vpack.c.b16 %v8564, %v8563
  %v8648 = vpack.c.b16 %v8566, %v8565
  %v8649 = vpack.c.b16 %v8568, %v8567
  %v8650 = vpack.c.b16 %v8570, %v8569
  %v8651 = vpack.c.b16 %v8572, %v8571
  %v8652 = vpack.c.b16 %v8574, %v8573
  %v8653 = vpack.c.b16 %v8576, %v8575
  %v8654 = vpack.c.b16 %v8578, %v8577
  %v8655 = vpack.c.b16 %v8580, %v8579
  %v8656 = vpack.c.b16 %v8582, %v8581
  %v8657 = vpack.c.b16 %v8584, %v8583
  %v8658 = vpack.c.b16 %v8586, %v8585
  %v8659 = vpack.c.b16 %v8588, %v8587
  %v8660 = vpack.c.b16 %v8590, %v8589
  %v8661 = vpack.c.b16 %v8592, %v8591
  %v8662 = vpack.c.b16 %v8594, %v8593
  %v8663 = vpack.c.b16 %v8596, %v8595
  %v8664 = vpack.c.b16 %v8598, %v8597
  %v8665 = vpack.c.b16 %v8600, %v8599
  %v8666 = vpack.c.b16 %v8602, %v8601
  %8731 = vmatprep.subr.bf16.mxu0 0
  %8732 = vmatpush1.bf16.msra.mxu0 %v8603
  %8733 = vmatprep.subr.bf16.mxu0 0
  %8734 = vmatpush1.bf16.msra.mxu0 %v8604
  %8735 = vmatprep.subr.bf16.mxu0 0
  %8736 = vmatpush1.bf16.msra.mxu0 %v8605
  %8737 = vmatprep.subr.bf16.mxu0 0
  %8738 = vmatpush1.bf16.msra.mxu0 %v8606
  %8739 = vmatprep.subr.bf16.mxu0 0
  %8740 = vmatpush1.bf16.msra.mxu0 %v8607
  %8741 = vmatprep.subr.bf16.mxu0 0
  %8742 = vmatpush1.bf16.msra.mxu0 %v8608
  %8743 = vmatprep.subr.bf16.mxu0 0
  %8744 = vmatpush1.bf16.msra.mxu0 %v8609
  %8745 = vmatprep.subr.bf16.mxu0 0
  %8746 = vmatpush1.bf16.msra.mxu0 %v8610
  %8747 = vmatprep.subr.bf16.mxu0 0
  %8748 = vmatpush1.bf16.msra.mxu0 %v8611
  %8749 = vmatprep.subr.bf16.mxu0 0
  %8750 = vmatpush1.bf16.msra.mxu0 %v8612
  %8751 = vmatprep.subr.bf16.mxu0 0
  %8752 = vmatpush1.bf16.msra.mxu0 %v8613
  %8753 = vmatprep.subr.bf16.mxu0 0
  %8754 = vmatpush1.bf16.msra.mxu0 %v8614
  %8755 = vmatprep.subr.bf16.mxu0 0
  %8756 = vmatpush1.bf16.msra.mxu0 %v8615
  %8757 = vmatprep.subr.bf16.mxu0 0
  %8758 = vmatpush1.bf16.msra.mxu0 %v8616
  %8759 = vmatprep.subr.bf16.mxu0 0
  %8760 = vmatpush1.bf16.msra.mxu0 %v8617
  %8761 = vmatprep.subr.bf16.mxu0 0
  %8762 = vmatpush1.bf16.msra.mxu0 %v8618
  %8763 = vmatprep.mubr.bf16.mxu0 %v8205
  %8764 = vmatmul.mubr.bf16.gmra.mrb[0].mxu0 %v8204
  %v8765 = vpop.f32.mrb[0].mxu0
  %v8766 = vadd.f32 %v8345, %v8765
  %v8767 = vpop.f32.mrb[0].mxu0
  %v8768 = vpop.f32.mrb[0].mxu0
  %v8769 = vpop.f32.mrb[0].mxu0
  %8770 = vdwg.mxu0
  %8771 = vmatprep.subr.bf16.mxu0 0
  %8772 = vmatpush1.bf16.msra.mxu0 %v8619
  %8773 = vmatprep.subr.bf16.mxu0 0
  %8774 = vmatpush1.bf16.msra.mxu0 %v8620
  %8775 = vmatprep.subr.bf16.mxu0 0
  %8776 = vmatpush1.bf16.msra.mxu0 %v8621
  %8777 = vmatprep.subr.bf16.mxu0 0
  %8778 = vmatpush1.bf16.msra.mxu0 %v8622
  %8779 = vmatprep.subr.bf16.mxu0 0
  %8780 = vmatpush1.bf16.msra.mxu0 %v8623
  %8781 = vmatprep.subr.bf16.mxu0 0
  %8782 = vmatpush1.bf16.msra.mxu0 %v8624
  %8783 = vmatprep.subr.bf16.mxu0 0
  %8784 = vmatpush1.bf16.msra.mxu0 %v8625
  %8785 = vmatprep.subr.bf16.mxu0 0
  %8786 = vmatpush1.bf16.msra.mxu0 %v8626
  %8787 = vmatprep.subr.bf16.mxu0 0
  %8788 = vmatpush1.bf16.msra.mxu0 %v8627
  %8789 = vmatprep.subr.bf16.mxu0 0
  %8790 = vmatpush1.bf16.msra.mxu0 %v8628
  %8791 = vmatprep.subr.bf16.mxu0 0
  %8792 = vmatpush1.bf16.msra.mxu0 %v8629
  %8793 = vmatprep.subr.bf16.mxu0 0
  %8794 = vmatpush1.bf16.msra.mxu0 %v8630
  %8795 = vmatprep.subr.bf16.mxu0 0
  %8796 = vmatpush1.bf16.msra.mxu0 %v8631
  %8797 = vmatprep.subr.bf16.mxu0 0
  %8798 = vmatpush1.bf16.msra.mxu0 %v8632
  %8799 = vmatprep.subr.bf16.mxu0 0
  %8800 = vmatpush1.bf16.msra.mxu0 %v8633
  %8801 = vmatprep.subr.bf16.mxu0 0
  %8802 = vmatpush1.bf16.msra.mxu0 %v8634
  %8803 = vmatprep.mubr.bf16.mxu0 %v8207
  %8804 = vmatmul.mubr.bf16.gmra.mrb[0].mxu0 %v8206
  %v8805 = vpop.f32.mrb[0].mxu0
  %v8806 = vadd.f32 %v8766, %v8805
  %v8807 = vpop.f32.mrb[0].mxu0
  %v8808 = vpop.f32.mrb[0].mxu0
  %v8809 = vpop.f32.mrb[0].mxu0
  %8810 = vdwg.mxu0
  %8811 = vmatprep.subr.bf16.mxu0 0
  %8812 = vmatpush1.bf16.msra.mxu0 %v8635
  %8813 = vmatprep.subr.bf16.mxu0 0
  %8814 = vmatpush1.bf16.msra.mxu0 %v8636
  %8815 = vmatprep.subr.bf16.mxu0 0
  %8816 = vmatpush1.bf16.msra.mxu0 %v8637
  %8817 = vmatprep.subr.bf16.mxu0 0
  %8818 = vmatpush1.bf16.msra.mxu0 %v8638
  %8819 = vmatprep.subr.bf16.mxu0 0
  %8820 = vmatpush1.bf16.msra.mxu0 %v8639
  %8821 = vmatprep.subr.bf16.mxu0 0
  %8822 = vmatpush1.bf16.msra.mxu0 %v8640
  %8823 = vmatprep.subr.bf16.mxu0 0
  %8824 = vmatpush1.bf16.msra.mxu0 %v8641
  %8825 = vmatprep.subr.bf16.mxu0 0
  %8826 = vmatpush1.bf16.msra.mxu0 %v8642
  %8827 = vmatprep.subr.bf16.mxu0 0
  %8828 = vmatpush1.bf16.msra.mxu0 %v8643
  %8829 = vmatprep.subr.bf16.mxu0 0
  %8830 = vmatpush1.bf16.msra.mxu0 %v8644
  %8831 = vmatprep.subr.bf16.mxu0 0
  %8832 = vmatpush1.bf16.msra.mxu0 %v8645
  %8833 = vmatprep.subr.bf16.mxu0 0
  %8834 = vmatpush1.bf16.msra.mxu0 %v8646
  %8835 = vmatprep.subr.bf16.mxu0 0
  %8836 = vmatpush1.bf16.msra.mxu0 %v8647
  %8837 = vmatprep.subr.bf16.mxu0 0
  %8838 = vmatpush1.bf16.msra.mxu0 %v8648
  %8839 = vmatprep.subr.bf16.mxu0 0
  %8840 = vmatpush1.bf16.msra.mxu0 %v8649
  %8841 = vmatprep.subr.bf16.mxu0 0
  %8842 = vmatpush1.bf16.msra.mxu0 %v8650
  %8843 = vmatprep.mubr.bf16.mxu0 %v8209
  %8844 = vmatmul.mubr.bf16.gmra.mrb[0].mxu0 %v8208
  %v8845 = vpop.f32.mrb[0].mxu0
  %v8846 = vadd.f32 %v8806, %v8845
  %v8847 = vpop.f32.mrb[0].mxu0
  %v8848 = vpop.f32.mrb[0].mxu0
  %v8849 = vpop.f32.mrb[0].mxu0
  %8850 = vdwg.mxu0
  %8851 = vmatprep.subr.bf16.mxu0 0
  %8852 = vmatpush1.bf16.msra.mxu0 %v8651
  %8853 = vmatprep.subr.bf16.mxu0 0
  %8854 = vmatpush1.bf16.msra.mxu0 %v8652
  %8855 = vmatprep.subr.bf16.mxu0 0
  %8856 = vmatpush1.bf16.msra.mxu0 %v8653
  %8857 = vmatprep.subr.bf16.mxu0 0
  %8858 = vmatpush1.bf16.msra.mxu0 %v8654
  %8859 = vmatprep.subr.bf16.mxu0 0
  %8860 = vmatpush1.bf16.msra.mxu0 %v8655
  %8861 = vmatprep.subr.bf16.mxu0 0
  %8862 = vmatpush1.bf16.msra.mxu0 %v8656
  %8863 = vmatprep.subr.bf16.mxu0 0
  %8864 = vmatpush1.bf16.msra.mxu0 %v8657
  %8865 = vmatprep.subr.bf16.mxu0 0
  %8866 = vmatpush1.bf16.msra.mxu0 %v8658
  %8867 = vmatprep.subr.bf16.mxu0 0
  %8868 = vmatpush1.bf16.msra.mxu0 %v8659
  %8869 = vmatprep.subr.bf16.mxu0 0
  %8870 = vmatpush1.bf16.msra.mxu0 %v8660
  %8871 = vmatprep.subr.bf16.mxu0 0
  %8872 = vmatpush1.bf16.msra.mxu0 %v8661
  %8873 = vmatprep.subr.bf16.mxu0 0
  %8874 = vmatpush1.bf16.msra.mxu0 %v8662
  %8875 = vmatprep.subr.bf16.mxu0 0
  %8876 = vmatpush1.bf16.msra.mxu0 %v8663
  %8877 = vmatprep.subr.bf16.mxu0 0
  %8878 = vmatpush1.bf16.msra.mxu0 %v8664
  %8879 = vmatprep.subr.bf16.mxu0 0
  %8880 = vmatpush1.bf16.msra.mxu0 %v8665
  %8881 = vmatprep.subr.bf16.mxu0 0
  %8882 = vmatpush1.bf16.msra.mxu0 %v8666
  %8883 = vmatprep.mubr.bf16.mxu0 %v8211
  %8884 = vmatmul.mubr.bf16.gmra.mrb[0].mxu0 %v8210
  %v8885 = vpop.f32.mrb[0].mxu0
  %v8886 = vadd.f32 %v8846, %v8885
  %v8887 = vpop.f32.mrb[0].mxu0
  %v8888 = vpop.f32.mrb[0].mxu0
  %v8889 = vpop.f32.mrb[0].mxu0
  %8890 = vdwg.mxu0
  %8891 = vst [vmem:[%s9] sm:$0xff] %v8886
  // Predicated region
  $region38: #{dqn_forward.1} parent=0 // pred_check
    _
  $region39: #{dqn_forward.1} parent=0 // pred_check_branch
    %8893 = sbr.rel (0) target = $region41
  $region40: #{dqn_forward.1} parent=0 // pred_region
    _
  $region41: #{dqn_forward.1} parent=0 // pred_fallthru
    _
  // Predicated region
  $region42: #{dqn_forward.1} parent=0 // pred_check
    _
  $region43: #{dqn_forward.1} parent=0 // pred_check_branch
    %8895 = sbr.rel (0) target = $region45
  $region44: #{dqn_forward.1} parent=0 // pred_region
    _
  $region45: #{dqn_forward.1} parent=0 // pred_fallthru
    _

</llo_original>
